<compile_context>
chip_gen: v7x
topology: tpu7x:2x2x1
jax: 0.10.0
libtpu: 0.0.40
codegen_flags: <defaults>
</compile_context>

<pallas_src>
from functools import partial

import jax
import jax.numpy as jnp
from jax.experimental import pallas as pl
from jax.experimental.pallas import tpu as pltpu


# ----------------------------- Pallas kernels ------------------------------ #

def _conv5x5_relu_pool_kernel(xe_ref, xo_ref, w_ref, b_ref, o_ref):
    """One (batch b, pooled output row ho) step.

    xe_ref/xo_ref: (1, H+4, (W+4)//2, Cin) -- even / odd padded input columns (whole
                   image resident; same block revisited for every ho of a batch item).
    w_ref: (25*Cin, Cout) conv weights, tap-major ((kh*5+kw)*Cin + c).
    b_ref: (1, Cout).
    o_ref: (1, 1, Wo, Cout) -- one pooled output row: relu(conv)+2x2 max-pool fused.
    """
    wo = o_ref.shape[2]
    cin = xe_ref.shape[3]
    row0 = 2 * pl.program_id(1)                      # first padded input row needed
    rows_e = xe_ref[0, pl.ds(row0, 6), :, :]         # (6, We, Cin)
    rows_o = xo_ref[0, pl.ds(row0, 6), :, :]         # (6, We, Cin)

    def conv_at(dy, dx):
        # conv output values at (2*ho + dy, 2*wo + dx) for all wo -> (Wo, Cout)
        pieces = []
        for kh in range(5):
            for kw in range(5):
                s = dx + kw                          # padded column offset parity
                rows = rows_e if s % 2 == 0 else rows_o
                m = s // 2
                pieces.append(rows[dy + kh, m:m + wo, :])        # (Wo, Cin)
        if cin == 1:
            # Cin == 1: 25 broadcast multiply-accumulates on the VPU
            # (avoids a 1-lane concatenate and a K=1 matmul).
            acc = None
            for t, piece in enumerate(pieces):
                contrib = piece * w_ref[t:t + 1, :]              # (Wo,1)*(1,Cout)
                acc = contrib if acc is None else acc + contrib
            return acc
        patch = jnp.concatenate(pieces, axis=-1)                 # (Wo, 25*Cin)
        return jnp.dot(patch, w_ref[...], preferred_element_type=jnp.float32)

    best = None
    for dy in range(2):                              # 2x2 pooling window members
        for dx in range(2):
            y = conv_at(dy, dx)
            best = y if best is None else jnp.maximum(best, y)
    # relu(max(conv) + b) == max over window of relu(conv + b)  (bias shared, relu monotone)
    o_ref[0, 0] = jnp.maximum(best + b_ref[...], 0.0).astype(o_ref.dtype)


def _fc1_relu_fc2_kernel(x_ref, w1_ref, b1_ref, w2_ref, b2_ref, o_ref):
    """Fused fc1 (bf16 weights) + ReLU + fc2 (bf16, N padded to 128); grid over fc1-N tiles.

    The logits output block is resident across the grid and used as the accumulator.
    """
    j = pl.program_id(0)

    @pl.when(j == 0)
    def _init():
        o_ref[...] = jnp.zeros_like(o_ref)

    xb = x_ref[...].astype(jnp.bfloat16)
    h = jnp.dot(xb, w1_ref[...], preferred_element_type=jnp.float32) + b1_ref[...]
    h = jnp.maximum(h, 0.0)
    # TODO(synk): dropout(p=0.5) is identity in eval mode; training-mode stochastic mask
    #             (pltpu.prng_seed / prng_random_bits) not implemented.
    o_ref[...] += jnp.dot(h.astype(jnp.bfloat16), w2_ref[...],
                          preferred_element_type=jnp.float32)

    @pl.when(j == pl.num_programs(0) - 1)
    def _finalize():
        o_ref[...] = o_ref[...] + b2_ref[...]


# ------------------------------ Pallas wrappers ---------------------------- #

def conv5x5_relu_pool(x_nhwc, w2d, b2d):
    """Fused 5x5 SAME conv + bias + ReLU + 2x2/2 max-pool (NHWC in, pooled NHWC out)."""
    B, H, W, Cin = x_nhwc.shape
    kk_cin, Cout = w2d.shape
    assert kk_cin == 25 * Cin and H % 2 == 0 and W % 2 == 0
    Ho, Wo = H // 2, W // 2
    Hp, We = H + 4, (W + 4) // 2

    # cheap JAX glue: SAME-pad once, split into even/odd column planes so the kernel's
    # stride-2 pooled-column accesses become contiguous slices.
    xp = jnp.pad(x_nhwc, ((0, 0), (2, 2), (2, 2), (0, 0)))
    xe = xp[:, :, 0::2, :]
    xo = xp[:, :, 1::2, :]

    return pl.pallas_call(
        _conv5x5_relu_pool_kernel,
        out_shape=jax.ShapeDtypeStruct((B, Ho, Wo, Cout), jnp.float32),
        grid=(B, Ho),
        in_specs=[
            pl.BlockSpec((1, Hp, We, Cin), lambda b, h: (b, 0, 0, 0)),
            pl.BlockSpec((1, Hp, We, Cin), lambda b, h: (b, 0, 0, 0)),
            pl.BlockSpec((25 * Cin, Cout), lambda b, h: (0, 0)),
            pl.BlockSpec((1, Cout), lambda b, h: (0, 0)),
        ],
        out_specs=pl.BlockSpec((1, 1, Wo, Cout), lambda b, h: (b, h, 0, 0)),
        compiler_params=pltpu.CompilerParams(
            dimension_semantics=("parallel", "arbitrary")),
    )(xe, xo, w2d, b2d)


def mlp_fc1_relu_fc2(x, w1, b1, w2, b2, *, tn=512):
    """logits = relu(x @ w1 + b1) @ w2 + b2, fused; grid reduces over fc1's N in tn tiles.

    tn=512 with bf16 weights -> ~3.2 MiB per fc1 weight tile (6.4 MiB double-buffered),
    well inside v5e's 16 MiB scoped-VMEM default and v7x's 32 MiB.
    """
    M, K1 = x.shape
    K1w, N1 = w1.shape
    N2 = w2.shape[1]
    assert K1 == K1w and w2.shape[0] == N1 and N1 % tn == 0
    return pl.pallas_call(
        _fc1_relu_fc2_kernel,
        out_shape=jax.ShapeDtypeStruct((M, N2), jnp.float32),
        grid=(N1 // tn,),
        in_specs=[
            pl.BlockSpec((M, K1), lambda j: (0, 0)),    # activations resident
            pl.BlockSpec((K1, tn), lambda j: (0, j)),   # fc1 weight tile (bf16)
            pl.BlockSpec((1, tn), lambda j: (0, j)),    # fc1 bias tile
            pl.BlockSpec((tn, N2), lambda j: (j, 0)),   # fc2 weight tile (bf16, N padded)
            pl.BlockSpec((1, N2), lambda j: (0, 0)),    # fc2 bias (added on last step)
        ],
        out_specs=pl.BlockSpec((M, N2), lambda j: (0, 0)),   # resident logits accumulator
        compiler_params=pltpu.CompilerParams(dimension_semantics=("arbitrary",)),
    )(x, w1, b1, w2, b2)


# --------------------------------- params ---------------------------------- #

def init_params(key):
    """Random params in a 'torch checkpoint like' layout (conv HWIO, fc1 rows in (C,H,W) order).

    Note: statistics differ from torch's kaiming-uniform default; forward math is identical.
    """
    ks = jax.random.split(key, 8)
    f32 = jnp.float32

    def scaled(k, shape, fan_in):
        return jax.random.normal(k, shape, f32) / jnp.sqrt(jnp.asarray(fan_in, f32))

    return {
        "w1": scaled(ks[0], (5, 5, 1, 32), 25),          # HWIO
        "b1": 0.01 * jax.random.normal(ks[1], (32,), f32),
        "w2": scaled(ks[2], (5, 5, 32, 64), 25 * 32),
        "b2": 0.01 * jax.random.normal(ks[3], (64,), f32),
        "wfc1_chw": scaled(ks[4], (7 * 7 * 64, 2048), 7 * 7 * 64),  # rows in torch (C,H,W) order
        "bfc1": 0.01 * jax.random.normal(ks[5], (2048,), f32),
        "wfc2": scaled(ks[6], (2048, 47), 2048),
        "bfc2": 0.01 * jax.random.normal(ks[7], (47,), f32),
    }


def prepare_params(p, *, num_classes=47, padded_classes=128):
    """One-time, zero-runtime-cost weight preprocessing for the kernels."""
    f32 = jnp.float32
    # fc1: permute rows from torch's (C,H,W) flatten order to (H,W,C) so NHWC conv output
    # can be flattened directly (drops the runtime transpose); stream in bf16.
    wfc1_hwc = jnp.transpose(p["wfc1_chw"].reshape(64, 7, 7, 2048),
                             (1, 2, 0, 3)).reshape(7 * 7 * 64, 2048)
    # fc2: zero-pad N 47 -> 128 for lane-dense stores; logits sliced back in the wrapper.
    wfc2_pad = jnp.zeros((2048, padded_classes), f32).at[:, :num_classes].set(p["wfc2"])
    bfc2_pad = jnp.zeros((padded_classes,), f32).at[:num_classes].set(p["bfc2"])
    return {
        "w1": p["w1"].reshape(25 * 1, 32),               # (25*Cin, Cout), tap-major
        "b1": p["b1"].reshape(1, 32),
        "w2": p["w2"].reshape(25 * 32, 64),
        "b2": p["b2"].reshape(1, 64),
        "wfc1": wfc1_hwc.astype(jnp.bfloat16),
        "bfc1": p["bfc1"].reshape(1, 2048),
        "wfc2": wfc2_pad.astype(jnp.bfloat16),
        "bfc2": bfc2_pad.reshape(1, padded_classes),
    }


# --------------------------------- forward --------------------------------- #

def emnist_forward(x_nchw, params, *, num_classes=47):
    B = x_nchw.shape[0]
    x = jnp.transpose(x_nchw, (0, 2, 3, 1))                       # NCHW -> NHWC
    y1 = conv5x5_relu_pool(x, params["w1"], params["b1"])         # (B, 14, 14, 32)
    y2 = conv5x5_relu_pool(y1, params["w2"], params["b2"])        # (B, 7, 7, 64)
    feat = y2.reshape(B, 7 * 7 * 64)                              # HWC flatten (weights pre-permuted)
    logits = mlp_fc1_relu_fc2(feat, params["wfc1"], params["bfc1"],
                              params["wfc2"], params["bfc2"])     # (B, 128)
    return logits[:, :num_classes]


# ------------------------------ reference path ------------------------------ #

def _im2col(x_nhwc, k=5, pad=2):
    B, H, W, C = x_nhwc.shape
    xp = jnp.pad(x_nhwc, ((0, 0), (pad, pad), (pad, pad), (0, 0)))
    cols = [xp[:, kh:kh + H, kw:kw + W, :] for kh in range(k) for kw in range(k)]
    patches = jnp.stack(cols, axis=3)              # (B, H, W, k*k, Cin), tap-major
    return patches.reshape(B * H * W, k * k * C)


def emnist_forward_reference(x_nchw, raw):
    """Pure-jnp mirror with torch semantics ((C,H,W) flatten, unpermuted/unpadded fc weights),
    precision-matched to the kernels (bf16 fc weights/activations, f32 accumulation)."""
    B = x_nchw.shape[0]
    x = jnp.transpose(x_nchw, (0, 2, 3, 1))

    def conv_relu(xn, w, b):
        Bc, H, W, Cin = xn.shape
        Cout = w.shape[-1]
        y = jnp.maximum(_im2col(xn) @ w.reshape(25 * Cin, Cout) + b, 0.0)
        return y.reshape(Bc, H, W, Cout)

    def pool(y):
        Bc, H, W, C = y.shape
        return y.reshape(Bc, H // 2, 2, W // 2, 2, C).max(axis=(2, 4))

    y1 = pool(conv_relu(x, raw["w1"], raw["b1"]))
    y2 = pool(conv_relu(y1, raw["w2"], raw["b2"]))
    feat = jnp.transpose(y2, (0, 3, 1, 2)).reshape(B, 7 * 7 * 64)     # torch .view order
    w1b = raw["wfc1_chw"].astype(jnp.bfloat16)
    h = jnp.maximum(jnp.dot(feat.astype(jnp.bfloat16), w1b,
                            preferred_element_type=jnp.float32) + raw["bfc1"], 0.0)
    w2b = raw["wfc2"].astype(jnp.bfloat16)
    return jnp.dot(h.astype(jnp.bfloat16), w2b,
                   preferred_element_type=jnp.float32) + raw["bfc2"]


# ----------------------------------- main ----------------------------------- #

if __name__ == "__main__":
    key = jax.random.PRNGKey(0)
    k_params, k_x = jax.random.split(key)

    raw = init_params(k_params)
    params = prepare_params(raw)

    # EMNIST images are 1x28x28 (required by fc1's 7*7*64 input); batch=2.
    x = jax.random.normal(k_x, (2, 1, 28, 28), jnp.float32)

    logits = jax.jit(emnist_forward)(x, params)
    logits = jax.block_until_ready(logits)
    assert logits.shape == (2, 47) and logits.dtype == jnp.float32

    ref = jax.block_until_ready(jax.jit(emnist_forward_reference)(x, raw))
    assert jnp.allclose(logits, ref, rtol=5e-2, atol=5e-2), "Pallas output mismatch"

    print("KERNEL_OK")
</pallas_src>

<mosaic_0001>
module attributes {stable_mosaic.version = 11 : i64} {
  func.func @_conv5x5_relu_pool_kernel(%arg0: i32, %arg1: i32, %arg2: memref<1x32x16x1xf32, #tpu.memory_space<vmem>>, %arg3: memref<1x32x16x1xf32, #tpu.memory_space<vmem>>, %arg4: memref<25x32xf32, #tpu.memory_space<vmem>>, %arg5: memref<1x32xf32, #tpu.memory_space<vmem>>, %arg6: memref<1x1x14x32xf32, #tpu.memory_space<vmem>>) attributes {dimension_semantics = [#tpu.dimension_semantics<parallel>, #tpu.dimension_semantics<arbitrary>], iteration_bounds = array<i64: 2, 14>, scalar_prefetch = 0 : i64, scratch_operands = 0 : i64, tpu.core_type = #tpu.core_type<tc>, window_params = [{transform_indices = @transform_0, window_bounds = array<i64: 1, 32, 16, 1>}, {transform_indices = @transform_1, window_bounds = array<i64: 1, 32, 16, 1>}, {pipeline_mode = #tpu.pipeline_mode<synchronous>, transform_indices = @transform_2, window_bounds = array<i64: 25, 32>}, {pipeline_mode = #tpu.pipeline_mode<synchronous>, transform_indices = @transform_3, window_bounds = array<i64: 1, 32>}, {transform_indices = @transform_4, window_bounds = array<i64: 1, 1, 14, 32>}]} {
    %c2_i32 = arith.constant 2 : i32
    %0 = arith.muli %c2_i32, %arg1 : i32
    %c0 = arith.constant 0 : index
    %1 = arith.index_cast %0 : i32 to index
    %c0_0 = arith.constant 0 : index
    %c0_1 = arith.constant 0 : index
    %2 = vector.load %arg2[%c0, %1, %c0_0, %c0_1] : memref<1x32x16x1xf32, #tpu.memory_space<vmem>>, vector<1x6x16x1xf32>
    %3 = vector.shape_cast %2 : vector<1x6x16x1xf32> to vector<6x16x1xf32>
    %c0_2 = arith.constant 0 : index
    %4 = arith.index_cast %0 : i32 to index
    %c0_3 = arith.constant 0 : index
    %c0_4 = arith.constant 0 : index
    %5 = vector.load %arg3[%c0_2, %4, %c0_3, %c0_4] : memref<1x32x16x1xf32, #tpu.memory_space<vmem>>, vector<1x6x16x1xf32>
    %6 = vector.shape_cast %5 : vector<1x6x16x1xf32> to vector<6x16x1xf32>
    %7 = vector.extract_strided_slice %3 {offsets = [0, 0, 0], sizes = [1, 14, 1], strides = [1, 1, 1]} : vector<6x16x1xf32> to vector<1x14x1xf32>
    %8 = vector.shape_cast %7 : vector<1x14x1xf32> to vector<14x1xf32>
    %9 = vector.extract_strided_slice %6 {offsets = [0, 0, 0], sizes = [1, 14, 1], strides = [1, 1, 1]} : vector<6x16x1xf32> to vector<1x14x1xf32>
    %10 = vector.shape_cast %9 : vector<1x14x1xf32> to vector<14x1xf32>
    %11 = vector.extract_strided_slice %3 {offsets = [0, 1, 0], sizes = [1, 14, 1], strides = [1, 1, 1]} : vector<6x16x1xf32> to vector<1x14x1xf32>
    %12 = vector.shape_cast %11 : vector<1x14x1xf32> to vector<14x1xf32>
    %13 = vector.extract_strided_slice %6 {offsets = [0, 1, 0], sizes = [1, 14, 1], strides = [1, 1, 1]} : vector<6x16x1xf32> to vector<1x14x1xf32>
    %14 = vector.shape_cast %13 : vector<1x14x1xf32> to vector<14x1xf32>
    %15 = vector.extract_strided_slice %3 {offsets = [0, 2, 0], sizes = [1, 14, 1], strides = [1, 1, 1]} : vector<6x16x1xf32> to vector<1x14x1xf32>
    %16 = vector.shape_cast %15 : vector<1x14x1xf32> to vector<14x1xf32>
    %17 = vector.extract_strided_slice %3 {offsets = [1, 0, 0], sizes = [1, 14, 1], strides = [1, 1, 1]} : vector<6x16x1xf32> to vector<1x14x1xf32>
    %18 = vector.shape_cast %17 : vector<1x14x1xf32> to vector<14x1xf32>
    %19 = vector.extract_strided_slice %6 {offsets = [1, 0, 0], sizes = [1, 14, 1], strides = [1, 1, 1]} : vector<6x16x1xf32> to vector<1x14x1xf32>
    %20 = vector.shape_cast %19 : vector<1x14x1xf32> to vector<14x1xf32>
    %21 = vector.extract_strided_slice %3 {offsets = [1, 1, 0], sizes = [1, 14, 1], strides = [1, 1, 1]} : vector<6x16x1xf32> to vector<1x14x1xf32>
    %22 = vector.shape_cast %21 : vector<1x14x1xf32> to vector<14x1xf32>
    %23 = vector.extract_strided_slice %6 {offsets = [1, 1, 0], sizes = [1, 14, 1], strides = [1, 1, 1]} : vector<6x16x1xf32> to vector<1x14x1xf32>
    %24 = vector.shape_cast %23 : vector<1x14x1xf32> to vector<14x1xf32>
    %25 = vector.extract_strided_slice %3 {offsets = [1, 2, 0], sizes = [1, 14, 1], strides = [1, 1, 1]} : vector<6x16x1xf32> to vector<1x14x1xf32>
    %26 = vector.shape_cast %25 : vector<1x14x1xf32> to vector<14x1xf32>
    %27 = vector.extract_strided_slice %3 {offsets = [2, 0, 0], sizes = [1, 14, 1], strides = [1, 1, 1]} : vector<6x16x1xf32> to vector<1x14x1xf32>
    %28 = vector.shape_cast %27 : vector<1x14x1xf32> to vector<14x1xf32>
    %29 = vector.extract_strided_slice %6 {offsets = [2, 0, 0], sizes = [1, 14, 1], strides = [1, 1, 1]} : vector<6x16x1xf32> to vector<1x14x1xf32>
    %30 = vector.shape_cast %29 : vector<1x14x1xf32> to vector<14x1xf32>
    %31 = vector.extract_strided_slice %3 {offsets = [2, 1, 0], sizes = [1, 14, 1], strides = [1, 1, 1]} : vector<6x16x1xf32> to vector<1x14x1xf32>
    %32 = vector.shape_cast %31 : vector<1x14x1xf32> to vector<14x1xf32>
    %33 = vector.extract_strided_slice %6 {offsets = [2, 1, 0], sizes = [1, 14, 1], strides = [1, 1, 1]} : vector<6x16x1xf32> to vector<1x14x1xf32>
    %34 = vector.shape_cast %33 : vector<1x14x1xf32> to vector<14x1xf32>
    %35 = vector.extract_strided_slice %3 {offsets = [2, 2, 0], sizes = [1, 14, 1], strides = [1, 1, 1]} : vector<6x16x1xf32> to vector<1x14x1xf32>
    %36 = vector.shape_cast %35 : vector<1x14x1xf32> to vector<14x1xf32>
    %37 = vector.extract_strided_slice %3 {offsets = [3, 0, 0], sizes = [1, 14, 1], strides = [1, 1, 1]} : vector<6x16x1xf32> to vector<1x14x1xf32>
    %38 = vector.shape_cast %37 : vector<1x14x1xf32> to vector<14x1xf32>
    %39 = vector.extract_strided_slice %6 {offsets = [3, 0, 0], sizes = [1, 14, 1], strides = [1, 1, 1]} : vector<6x16x1xf32> to vector<1x14x1xf32>
    %40 = vector.shape_cast %39 : vector<1x14x1xf32> to vector<14x1xf32>
    %41 = vector.extract_strided_slice %3 {offsets = [3, 1, 0], sizes = [1, 14, 1], strides = [1, 1, 1]} : vector<6x16x1xf32> to vector<1x14x1xf32>
    %42 = vector.shape_cast %41 : vector<1x14x1xf32> to vector<14x1xf32>
    %43 = vector.extract_strided_slice %6 {offsets = [3, 1, 0], sizes = [1, 14, 1], strides = [1, 1, 1]} : vector<6x16x1xf32> to vector<1x14x1xf32>
    %44 = vector.shape_cast %43 : vector<1x14x1xf32> to vector<14x1xf32>
    %45 = vector.extract_strided_slice %3 {offsets = [3, 2, 0], sizes = [1, 14, 1], strides = [1, 1, 1]} : vector<6x16x1xf32> to vector<1x14x1xf32>
    %46 = vector.shape_cast %45 : vector<1x14x1xf32> to vector<14x1xf32>
    %47 = vector.extract_strided_slice %3 {offsets = [4, 0, 0], sizes = [1, 14, 1], strides = [1, 1, 1]} : vector<6x16x1xf32> to vector<1x14x1xf32>
    %48 = vector.shape_cast %47 : vector<1x14x1xf32> to vector<14x1xf32>
    %49 = vector.extract_strided_slice %6 {offsets = [4, 0, 0], sizes = [1, 14, 1], strides = [1, 1, 1]} : vector<6x16x1xf32> to vector<1x14x1xf32>
    %50 = vector.shape_cast %49 : vector<1x14x1xf32> to vector<14x1xf32>
    %51 = vector.extract_strided_slice %3 {offsets = [4, 1, 0], sizes = [1, 14, 1], strides = [1, 1, 1]} : vector<6x16x1xf32> to vector<1x14x1xf32>
    %52 = vector.shape_cast %51 : vector<1x14x1xf32> to vector<14x1xf32>
    %53 = vector.extract_strided_slice %6 {offsets = [4, 1, 0], sizes = [1, 14, 1], strides = [1, 1, 1]} : vector<6x16x1xf32> to vector<1x14x1xf32>
    %54 = vector.shape_cast %53 : vector<1x14x1xf32> to vector<14x1xf32>
    %55 = vector.extract_strided_slice %3 {offsets = [4, 2, 0], sizes = [1, 14, 1], strides = [1, 1, 1]} : vector<6x16x1xf32> to vector<1x14x1xf32>
    %56 = vector.shape_cast %55 : vector<1x14x1xf32> to vector<14x1xf32>
    %c0_5 = arith.constant 0 : index
    %c0_6 = arith.constant 0 : index
    %57 = vector.load %arg4[%c0_5, %c0_6] : memref<25x32xf32, #tpu.memory_space<vmem>>, vector<1x32xf32>
    %58 = vector.broadcast %8 : vector<14x1xf32> to vector<14x32xf32>
    %59 = vector.broadcast %57 : vector<1x32xf32> to vector<14x32xf32>
    %60 = arith.mulf %58, %59 : vector<14x32xf32>
    %c1 = arith.constant 1 : index
    %c0_7 = arith.constant 0 : index
    %61 = vector.load %arg4[%c1, %c0_7] : memref<25x32xf32, #tpu.memory_space<vmem>>, vector<1x32xf32>
    %62 = vector.broadcast %10 : vector<14x1xf32> to vector<14x32xf32>
    %63 = vector.broadcast %61 : vector<1x32xf32> to vector<14x32xf32>
    %64 = arith.mulf %62, %63 : vector<14x32xf32>
    %65 = arith.addf %60, %64 : vector<14x32xf32>
    %c2 = arith.constant 2 : index
    %c0_8 = arith.constant 0 : index
    %66 = vector.load %arg4[%c2, %c0_8] : memref<25x32xf32, #tpu.memory_space<vmem>>, vector<1x32xf32>
    %67 = vector.broadcast %12 : vector<14x1xf32> to vector<14x32xf32>
    %68 = vector.broadcast %66 : vector<1x32xf32> to vector<14x32xf32>
    %69 = arith.mulf %67, %68 : vector<14x32xf32>
    %70 = arith.addf %65, %69 : vector<14x32xf32>
    %c3 = arith.constant 3 : index
    %c0_9 = arith.constant 0 : index
    %71 = vector.load %arg4[%c3, %c0_9] : memref<25x32xf32, #tpu.memory_space<vmem>>, vector<1x32xf32>
    %72 = vector.broadcast %14 : vector<14x1xf32> to vector<14x32xf32>
    %73 = vector.broadcast %71 : vector<1x32xf32> to vector<14x32xf32>
    %74 = arith.mulf %72, %73 : vector<14x32xf32>
    %75 = arith.addf %70, %74 : vector<14x32xf32>
    %c4 = arith.constant 4 : index
    %c0_10 = arith.constant 0 : index
    %76 = vector.load %arg4[%c4, %c0_10] : memref<25x32xf32, #tpu.memory_space<vmem>>, vector<1x32xf32>
    %77 = vector.broadcast %16 : vector<14x1xf32> to vector<14x32xf32>
    %78 = vector.broadcast %76 : vector<1x32xf32> to vector<14x32xf32>
    %79 = arith.mulf %77, %78 : vector<14x32xf32>
    %80 = arith.addf %75, %79 : vector<14x32xf32>
    %c5 = arith.constant 5 : index
    %c0_11 = arith.constant 0 : index
    %81 = vector.load %arg4[%c5, %c0_11] : memref<25x32xf32, #tpu.memory_space<vmem>>, vector<1x32xf32>
    %82 = vector.broadcast %18 : vector<14x1xf32> to vector<14x32xf32>
    %83 = vector.broadcast %81 : vector<1x32xf32> to vector<14x32xf32>
    %84 = arith.mulf %82, %83 : vector<14x32xf32>
    %85 = arith.addf %80, %84 : vector<14x32xf32>
    %c6 = arith.constant 6 : index
    %c0_12 = arith.constant 0 : index
    %86 = vector.load %arg4[%c6, %c0_12] : memref<25x32xf32, #tpu.memory_space<vmem>>, vector<1x32xf32>
    %87 = vector.broadcast %20 : vector<14x1xf32> to vector<14x32xf32>
    %88 = vector.broadcast %86 : vector<1x32xf32> to vector<14x32xf32>
    %89 = arith.mulf %87, %88 : vector<14x32xf32>
    %90 = arith.addf %85, %89 : vector<14x32xf32>
    %c7 = arith.constant 7 : index
    %c0_13 = arith.constant 0 : index
    %91 = vector.load %arg4[%c7, %c0_13] : memref<25x32xf32, #tpu.memory_space<vmem>>, vector<1x32xf32>
    %92 = vector.broadcast %22 : vector<14x1xf32> to vector<14x32xf32>
    %93 = vector.broadcast %91 : vector<1x32xf32> to vector<14x32xf32>
    %94 = arith.mulf %92, %93 : vector<14x32xf32>
    %95 = arith.addf %90, %94 : vector<14x32xf32>
    %c8 = arith.constant 8 : index
    %c0_14 = arith.constant 0 : index
    %96 = vector.load %arg4[%c8, %c0_14] : memref<25x32xf32, #tpu.memory_space<vmem>>, vector<1x32xf32>
    %97 = vector.broadcast %24 : vector<14x1xf32> to vector<14x32xf32>
    %98 = vector.broadcast %96 : vector<1x32xf32> to vector<14x32xf32>
    %99 = arith.mulf %97, %98 : vector<14x32xf32>
    %100 = arith.addf %95, %99 : vector<14x32xf32>
    %c9 = arith.constant 9 : index
    %c0_15 = arith.constant 0 : index
    %101 = vector.load %arg4[%c9, %c0_15] : memref<25x32xf32, #tpu.memory_space<vmem>>, vector<1x32xf32>
    %102 = vector.broadcast %26 : vector<14x1xf32> to vector<14x32xf32>
    %103 = vector.broadcast %101 : vector<1x32xf32> to vector<14x32xf32>
    %104 = arith.mulf %102, %103 : vector<14x32xf32>
    %105 = arith.addf %100, %104 : vector<14x32xf32>
    %c10 = arith.constant 10 : index
    %c0_16 = arith.constant 0 : index
    %106 = vector.load %arg4[%c10, %c0_16] : memref<25x32xf32, #tpu.memory_space<vmem>>, vector<1x32xf32>
    %107 = vector.broadcast %28 : vector<14x1xf32> to vector<14x32xf32>
    %108 = vector.broadcast %106 : vector<1x32xf32> to vector<14x32xf32>
    %109 = arith.mulf %107, %108 : vector<14x32xf32>
    %110 = arith.addf %105, %109 : vector<14x32xf32>
    %c11 = arith.constant 11 : index
    %c0_17 = arith.constant 0 : index
    %111 = vector.load %arg4[%c11, %c0_17] : memref<25x32xf32, #tpu.memory_space<vmem>>, vector<1x32xf32>
    %112 = vector.broadcast %30 : vector<14x1xf32> to vector<14x32xf32>
    %113 = vector.broadcast %111 : vector<1x32xf32> to vector<14x32xf32>
    %114 = arith.mulf %112, %113 : vector<14x32xf32>
    %115 = arith.addf %110, %114 : vector<14x32xf32>
    %c12 = arith.constant 12 : index
    %c0_18 = arith.constant 0 : index
    %116 = vector.load %arg4[%c12, %c0_18] : memref<25x32xf32, #tpu.memory_space<vmem>>, vector<1x32xf32>
    %117 = vector.broadcast %32 : vector<14x1xf32> to vector<14x32xf32>
    %118 = vector.broadcast %116 : vector<1x32xf32> to vector<14x32xf32>
    %119 = arith.mulf %117, %118 : vector<14x32xf32>
    %120 = arith.addf %115, %119 : vector<14x32xf32>
    %c13 = arith.constant 13 : index
    %c0_19 = arith.constant 0 : index
    %121 = vector.load %arg4[%c13, %c0_19] : memref<25x32xf32, #tpu.memory_space<vmem>>, vector<1x32xf32>
    %122 = vector.broadcast %34 : vector<14x1xf32> to vector<14x32xf32>
    %123 = vector.broadcast %121 : vector<1x32xf32> to vector<14x32xf32>
    %124 = arith.mulf %122, %123 : vector<14x32xf32>
    %125 = arith.addf %120, %124 : vector<14x32xf32>
    %c14 = arith.constant 14 : index
    %c0_20 = arith.constant 0 : index
    %126 = vector.load %arg4[%c14, %c0_20] : memref<25x32xf32, #tpu.memory_space<vmem>>, vector<1x32xf32>
    %127 = vector.broadcast %36 : vector<14x1xf32> to vector<14x32xf32>
    %128 = vector.broadcast %126 : vector<1x32xf32> to vector<14x32xf32>
    %129 = arith.mulf %127, %128 : vector<14x32xf32>
    %130 = arith.addf %125, %129 : vector<14x32xf32>
    %c15 = arith.constant 15 : index
    %c0_21 = arith.constant 0 : index
    %131 = vector.load %arg4[%c15, %c0_21] : memref<25x32xf32, #tpu.memory_space<vmem>>, vector<1x32xf32>
    %132 = vector.broadcast %38 : vector<14x1xf32> to vector<14x32xf32>
    %133 = vector.broadcast %131 : vector<1x32xf32> to vector<14x32xf32>
    %134 = arith.mulf %132, %133 : vector<14x32xf32>
    %135 = arith.addf %130, %134 : vector<14x32xf32>
    %c16 = arith.constant 16 : index
    %c0_22 = arith.constant 0 : index
    %136 = vector.load %arg4[%c16, %c0_22] : memref<25x32xf32, #tpu.memory_space<vmem>>, vector<1x32xf32>
    %137 = vector.broadcast %40 : vector<14x1xf32> to vector<14x32xf32>
    %138 = vector.broadcast %136 : vector<1x32xf32> to vector<14x32xf32>
    %139 = arith.mulf %137, %138 : vector<14x32xf32>
    %140 = arith.addf %135, %139 : vector<14x32xf32>
    %c17 = arith.constant 17 : index
    %c0_23 = arith.constant 0 : index
    %141 = vector.load %arg4[%c17, %c0_23] : memref<25x32xf32, #tpu.memory_space<vmem>>, vector<1x32xf32>
    %142 = vector.broadcast %42 : vector<14x1xf32> to vector<14x32xf32>
    %143 = vector.broadcast %141 : vector<1x32xf32> to vector<14x32xf32>
    %144 = arith.mulf %142, %143 : vector<14x32xf32>
    %145 = arith.addf %140, %144 : vector<14x32xf32>
    %c18 = arith.constant 18 : index
    %c0_24 = arith.constant 0 : index
    %146 = vector.load %arg4[%c18, %c0_24] : memref<25x32xf32, #tpu.memory_space<vmem>>, vector<1x32xf32>
    %147 = vector.broadcast %44 : vector<14x1xf32> to vector<14x32xf32>
    %148 = vector.broadcast %146 : vector<1x32xf32> to vector<14x32xf32>
    %149 = arith.mulf %147, %148 : vector<14x32xf32>
    %150 = arith.addf %145, %149 : vector<14x32xf32>
    %c19 = arith.constant 19 : index
    %c0_25 = arith.constant 0 : index
    %151 = vector.load %arg4[%c19, %c0_25] : memref<25x32xf32, #tpu.memory_space<vmem>>, vector<1x32xf32>
    %152 = vector.broadcast %46 : vector<14x1xf32> to vector<14x32xf32>
    %153 = vector.broadcast %151 : vector<1x32xf32> to vector<14x32xf32>
    %154 = arith.mulf %152, %153 : vector<14x32xf32>
    %155 = arith.addf %150, %154 : vector<14x32xf32>
    %c20 = arith.constant 20 : index
    %c0_26 = arith.constant 0 : index
    %156 = vector.load %arg4[%c20, %c0_26] : memref<25x32xf32, #tpu.memory_space<vmem>>, vector<1x32xf32>
    %157 = vector.broadcast %48 : vector<14x1xf32> to vector<14x32xf32>
    %158 = vector.broadcast %156 : vector<1x32xf32> to vector<14x32xf32>
    %159 = arith.mulf %157, %158 : vector<14x32xf32>
    %160 = arith.addf %155, %159 : vector<14x32xf32>
    %c21 = arith.constant 21 : index
    %c0_27 = arith.constant 0 : index
    %161 = vector.load %arg4[%c21, %c0_27] : memref<25x32xf32, #tpu.memory_space<vmem>>, vector<1x32xf32>
    %162 = vector.broadcast %50 : vector<14x1xf32> to vector<14x32xf32>
    %163 = vector.broadcast %161 : vector<1x32xf32> to vector<14x32xf32>
    %164 = arith.mulf %162, %163 : vector<14x32xf32>
    %165 = arith.addf %160, %164 : vector<14x32xf32>
    %c22 = arith.constant 22 : index
    %c0_28 = arith.constant 0 : index
    %166 = vector.load %arg4[%c22, %c0_28] : memref<25x32xf32, #tpu.memory_space<vmem>>, vector<1x32xf32>
    %167 = vector.broadcast %52 : vector<14x1xf32> to vector<14x32xf32>
    %168 = vector.broadcast %166 : vector<1x32xf32> to vector<14x32xf32>
    %169 = arith.mulf %167, %168 : vector<14x32xf32>
    %170 = arith.addf %165, %169 : vector<14x32xf32>
    %c23 = arith.constant 23 : index
    %c0_29 = arith.constant 0 : index
    %171 = vector.load %arg4[%c23, %c0_29] : memref<25x32xf32, #tpu.memory_space<vmem>>, vector<1x32xf32>
    %172 = vector.broadcast %54 : vector<14x1xf32> to vector<14x32xf32>
    %173 = vector.broadcast %171 : vector<1x32xf32> to vector<14x32xf32>
    %174 = arith.mulf %172, %173 : vector<14x32xf32>
    %175 = arith.addf %170, %174 : vector<14x32xf32>
    %c24 = arith.constant 24 : index
    %c0_30 = arith.constant 0 : index
    %176 = vector.load %arg4[%c24, %c0_30] : memref<25x32xf32, #tpu.memory_space<vmem>>, vector<1x32xf32>
    %177 = vector.broadcast %56 : vector<14x1xf32> to vector<14x32xf32>
    %178 = vector.broadcast %176 : vector<1x32xf32> to vector<14x32xf32>
    %179 = arith.mulf %177, %178 : vector<14x32xf32>
    %180 = arith.addf %175, %179 : vector<14x32xf32>
    %181 = vector.extract_strided_slice %6 {offsets = [0, 0, 0], sizes = [1, 14, 1], strides = [1, 1, 1]} : vector<6x16x1xf32> to vector<1x14x1xf32>
    %182 = vector.shape_cast %181 : vector<1x14x1xf32> to vector<14x1xf32>
    %183 = vector.extract_strided_slice %3 {offsets = [0, 1, 0], sizes = [1, 14, 1], strides = [1, 1, 1]} : vector<6x16x1xf32> to vector<1x14x1xf32>
    %184 = vector.shape_cast %183 : vector<1x14x1xf32> to vector<14x1xf32>
    %185 = vector.extract_strided_slice %6 {offsets = [0, 1, 0], sizes = [1, 14, 1], strides = [1, 1, 1]} : vector<6x16x1xf32> to vector<1x14x1xf32>
    %186 = vector.shape_cast %185 : vector<1x14x1xf32> to vector<14x1xf32>
    %187 = vector.extract_strided_slice %3 {offsets = [0, 2, 0], sizes = [1, 14, 1], strides = [1, 1, 1]} : vector<6x16x1xf32> to vector<1x14x1xf32>
    %188 = vector.shape_cast %187 : vector<1x14x1xf32> to vector<14x1xf32>
    %189 = vector.extract_strided_slice %6 {offsets = [0, 2, 0], sizes = [1, 14, 1], strides = [1, 1, 1]} : vector<6x16x1xf32> to vector<1x14x1xf32>
    %190 = vector.shape_cast %189 : vector<1x14x1xf32> to vector<14x1xf32>
    %191 = vector.extract_strided_slice %6 {offsets = [1, 0, 0], sizes = [1, 14, 1], strides = [1, 1, 1]} : vector<6x16x1xf32> to vector<1x14x1xf32>
    %192 = vector.shape_cast %191 : vector<1x14x1xf32> to vector<14x1xf32>
    %193 = vector.extract_strided_slice %3 {offsets = [1, 1, 0], sizes = [1, 14, 1], strides = [1, 1, 1]} : vector<6x16x1xf32> to vector<1x14x1xf32>
    %194 = vector.shape_cast %193 : vector<1x14x1xf32> to vector<14x1xf32>
    %195 = vector.extract_strided_slice %6 {offsets = [1, 1, 0], sizes = [1, 14, 1], strides = [1, 1, 1]} : vector<6x16x1xf32> to vector<1x14x1xf32>
    %196 = vector.shape_cast %195 : vector<1x14x1xf32> to vector<14x1xf32>
    %197 = vector.extract_strided_slice %3 {offsets = [1, 2, 0], sizes = [1, 14, 1], strides = [1, 1, 1]} : vector<6x16x1xf32> to vector<1x14x1xf32>
    %198 = vector.shape_cast %197 : vector<1x14x1xf32> to vector<14x1xf32>
    %199 = vector.extract_strided_slice %6 {offsets = [1, 2, 0], sizes = [1, 14, 1], strides = [1, 1, 1]} : vector<6x16x1xf32> to vector<1x14x1xf32>
    %200 = vector.shape_cast %199 : vector<1x14x1xf32> to vector<14x1xf32>
    %201 = vector.extract_strided_slice %6 {offsets = [2, 0, 0], sizes = [1, 14, 1], strides = [1, 1, 1]} : vector<6x16x1xf32> to vector<1x14x1xf32>
    %202 = vector.shape_cast %201 : vector<1x14x1xf32> to vector<14x1xf32>
    %203 = vector.extract_strided_slice %3 {offsets = [2, 1, 0], sizes = [1, 14, 1], strides = [1, 1, 1]} : vector<6x16x1xf32> to vector<1x14x1xf32>
    %204 = vector.shape_cast %203 : vector<1x14x1xf32> to vector<14x1xf32>
    %205 = vector.extract_strided_slice %6 {offsets = [2, 1, 0], sizes = [1, 14, 1], strides = [1, 1, 1]} : vector<6x16x1xf32> to vector<1x14x1xf32>
    %206 = vector.shape_cast %205 : vector<1x14x1xf32> to vector<14x1xf32>
    %207 = vector.extract_strided_slice %3 {offsets = [2, 2, 0], sizes = [1, 14, 1], strides = [1, 1, 1]} : vector<6x16x1xf32> to vector<1x14x1xf32>
    %208 = vector.shape_cast %207 : vector<1x14x1xf32> to vector<14x1xf32>
    %209 = vector.extract_strided_slice %6 {offsets = [2, 2, 0], sizes = [1, 14, 1], strides = [1, 1, 1]} : vector<6x16x1xf32> to vector<1x14x1xf32>
    %210 = vector.shape_cast %209 : vector<1x14x1xf32> to vector<14x1xf32>
    %211 = vector.extract_strided_slice %6 {offsets = [3, 0, 0], sizes = [1, 14, 1], strides = [1, 1, 1]} : vector<6x16x1xf32> to vector<1x14x1xf32>
    %212 = vector.shape_cast %211 : vector<1x14x1xf32> to vector<14x1xf32>
    %213 = vector.extract_strided_slice %3 {offsets = [3, 1, 0], sizes = [1, 14, 1], strides = [1, 1, 1]} : vector<6x16x1xf32> to vector<1x14x1xf32>
    %214 = vector.shape_cast %213 : vector<1x14x1xf32> to vector<14x1xf32>
    %215 = vector.extract_strided_slice %6 {offsets = [3, 1, 0], sizes = [1, 14, 1], strides = [1, 1, 1]} : vector<6x16x1xf32> to vector<1x14x1xf32>
    %216 = vector.shape_cast %215 : vector<1x14x1xf32> to vector<14x1xf32>
    %217 = vector.extract_strided_slice %3 {offsets = [3, 2, 0], sizes = [1, 14, 1], strides = [1, 1, 1]} : vector<6x16x1xf32> to vector<1x14x1xf32>
    %218 = vector.shape_cast %217 : vector<1x14x1xf32> to vector<14x1xf32>
    %219 = vector.extract_strided_slice %6 {offsets = [3, 2, 0], sizes = [1, 14, 1], strides = [1, 1, 1]} : vector<6x16x1xf32> to vector<1x14x1xf32>
    %220 = vector.shape_cast %219 : vector<1x14x1xf32> to vector<14x1xf32>
    %221 = vector.extract_strided_slice %6 {offsets = [4, 0, 0], sizes = [1, 14, 1], strides = [1, 1, 1]} : vector<6x16x1xf32> to vector<1x14x1xf32>
    %222 = vector.shape_cast %221 : vector<1x14x1xf32> to vector<14x1xf32>
    %223 = vector.extract_strided_slice %3 {offsets = [4, 1, 0], sizes = [1, 14, 1], strides = [1, 1, 1]} : vector<6x16x1xf32> to vector<1x14x1xf32>
    %224 = vector.shape_cast %223 : vector<1x14x1xf32> to vector<14x1xf32>
    %225 = vector.extract_strided_slice %6 {offsets = [4, 1, 0], sizes = [1, 14, 1], strides = [1, 1, 1]} : vector<6x16x1xf32> to vector<1x14x1xf32>
    %226 = vector.shape_cast %225 : vector<1x14x1xf32> to vector<14x1xf32>
    %227 = vector.extract_strided_slice %3 {offsets = [4, 2, 0], sizes = [1, 14, 1], strides = [1, 1, 1]} : vector<6x16x1xf32> to vector<1x14x1xf32>
    %228 = vector.shape_cast %227 : vector<1x14x1xf32> to vector<14x1xf32>
    %229 = vector.extract_strided_slice %6 {offsets = [4, 2, 0], sizes = [1, 14, 1], strides = [1, 1, 1]} : vector<6x16x1xf32> to vector<1x14x1xf32>
    %230 = vector.shape_cast %229 : vector<1x14x1xf32> to vector<14x1xf32>
    %c0_31 = arith.constant 0 : index
    %c0_32 = arith.constant 0 : index
    %231 = vector.load %arg4[%c0_31, %c0_32] : memref<25x32xf32, #tpu.memory_space<vmem>>, vector<1x32xf32>
    %232 = vector.broadcast %182 : vector<14x1xf32> to vector<14x32xf32>
    %233 = vector.broadcast %231 : vector<1x32xf32> to vector<14x32xf32>
    %234 = arith.mulf %232, %233 : vector<14x32xf32>
    %c1_33 = arith.constant 1 : index
    %c0_34 = arith.constant 0 : index
    %235 = vector.load %arg4[%c1_33, %c0_34] : memref<25x32xf32, #tpu.memory_space<vmem>>, vector<1x32xf32>
    %236 = vector.broadcast %184 : vector<14x1xf32> to vector<14x32xf32>
    %237 = vector.broadcast %235 : vector<1x32xf32> to vector<14x32xf32>
    %238 = arith.mulf %236, %237 : vector<14x32xf32>
    %239 = arith.addf %234, %238 : vector<14x32xf32>
    %c2_35 = arith.constant 2 : index
    %c0_36 = arith.constant 0 : index
    %240 = vector.load %arg4[%c2_35, %c0_36] : memref<25x32xf32, #tpu.memory_space<vmem>>, vector<1x32xf32>
    %241 = vector.broadcast %186 : vector<14x1xf32> to vector<14x32xf32>
    %242 = vector.broadcast %240 : vector<1x32xf32> to vector<14x32xf32>
    %243 = arith.mulf %241, %242 : vector<14x32xf32>
    %244 = arith.addf %239, %243 : vector<14x32xf32>
    %c3_37 = arith.constant 3 : index
    %c0_38 = arith.constant 0 : index
    %245 = vector.load %arg4[%c3_37, %c0_38] : memref<25x32xf32, #tpu.memory_space<vmem>>, vector<1x32xf32>
    %246 = vector.broadcast %188 : vector<14x1xf32> to vector<14x32xf32>
    %247 = vector.broadcast %245 : vector<1x32xf32> to vector<14x32xf32>
    %248 = arith.mulf %246, %247 : vector<14x32xf32>
    %249 = arith.addf %244, %248 : vector<14x32xf32>
    %c4_39 = arith.constant 4 : index
    %c0_40 = arith.constant 0 : index
    %250 = vector.load %arg4[%c4_39, %c0_40] : memref<25x32xf32, #tpu.memory_space<vmem>>, vector<1x32xf32>
    %251 = vector.broadcast %190 : vector<14x1xf32> to vector<14x32xf32>
    %252 = vector.broadcast %250 : vector<1x32xf32> to vector<14x32xf32>
    %253 = arith.mulf %251, %252 : vector<14x32xf32>
    %254 = arith.addf %249, %253 : vector<14x32xf32>
    %c5_41 = arith.constant 5 : index
    %c0_42 = arith.constant 0 : index
    %255 = vector.load %arg4[%c5_41, %c0_42] : memref<25x32xf32, #tpu.memory_space<vmem>>, vector<1x32xf32>
    %256 = vector.broadcast %192 : vector<14x1xf32> to vector<14x32xf32>
    %257 = vector.broadcast %255 : vector<1x32xf32> to vector<14x32xf32>
    %258 = arith.mulf %256, %257 : vector<14x32xf32>
    %259 = arith.addf %254, %258 : vector<14x32xf32>
    %c6_43 = arith.constant 6 : index
    %c0_44 = arith.constant 0 : index
    %260 = vector.load %arg4[%c6_43, %c0_44] : memref<25x32xf32, #tpu.memory_space<vmem>>, vector<1x32xf32>
    %261 = vector.broadcast %194 : vector<14x1xf32> to vector<14x32xf32>
    %262 = vector.broadcast %260 : vector<1x32xf32> to vector<14x32xf32>
    %263 = arith.mulf %261, %262 : vector<14x32xf32>
    %264 = arith.addf %259, %263 : vector<14x32xf32>
    %c7_45 = arith.constant 7 : index
    %c0_46 = arith.constant 0 : index
    %265 = vector.load %arg4[%c7_45, %c0_46] : memref<25x32xf32, #tpu.memory_space<vmem>>, vector<1x32xf32>
    %266 = vector.broadcast %196 : vector<14x1xf32> to vector<14x32xf32>
    %267 = vector.broadcast %265 : vector<1x32xf32> to vector<14x32xf32>
    %268 = arith.mulf %266, %267 : vector<14x32xf32>
    %269 = arith.addf %264, %268 : vector<14x32xf32>
    %c8_47 = arith.constant 8 : index
    %c0_48 = arith.constant 0 : index
    %270 = vector.load %arg4[%c8_47, %c0_48] : memref<25x32xf32, #tpu.memory_space<vmem>>, vector<1x32xf32>
    %271 = vector.broadcast %198 : vector<14x1xf32> to vector<14x32xf32>
    %272 = vector.broadcast %270 : vector<1x32xf32> to vector<14x32xf32>
    %273 = arith.mulf %271, %272 : vector<14x32xf32>
    %274 = arith.addf %269, %273 : vector<14x32xf32>
    %c9_49 = arith.constant 9 : index
    %c0_50 = arith.constant 0 : index
    %275 = vector.load %arg4[%c9_49, %c0_50] : memref<25x32xf32, #tpu.memory_space<vmem>>, vector<1x32xf32>
    %276 = vector.broadcast %200 : vector<14x1xf32> to vector<14x32xf32>
    %277 = vector.broadcast %275 : vector<1x32xf32> to vector<14x32xf32>
    %278 = arith.mulf %276, %277 : vector<14x32xf32>
    %279 = arith.addf %274, %278 : vector<14x32xf32>
    %c10_51 = arith.constant 10 : index
    %c0_52 = arith.constant 0 : index
    %280 = vector.load %arg4[%c10_51, %c0_52] : memref<25x32xf32, #tpu.memory_space<vmem>>, vector<1x32xf32>
    %281 = vector.broadcast %202 : vector<14x1xf32> to vector<14x32xf32>
    %282 = vector.broadcast %280 : vector<1x32xf32> to vector<14x32xf32>
    %283 = arith.mulf %281, %282 : vector<14x32xf32>
    %284 = arith.addf %279, %283 : vector<14x32xf32>
    %c11_53 = arith.constant 11 : index
    %c0_54 = arith.constant 0 : index
    %285 = vector.load %arg4[%c11_53, %c0_54] : memref<25x32xf32, #tpu.memory_space<vmem>>, vector<1x32xf32>
    %286 = vector.broadcast %204 : vector<14x1xf32> to vector<14x32xf32>
    %287 = vector.broadcast %285 : vector<1x32xf32> to vector<14x32xf32>
    %288 = arith.mulf %286, %287 : vector<14x32xf32>
    %289 = arith.addf %284, %288 : vector<14x32xf32>
    %c12_55 = arith.constant 12 : index
    %c0_56 = arith.constant 0 : index
    %290 = vector.load %arg4[%c12_55, %c0_56] : memref<25x32xf32, #tpu.memory_space<vmem>>, vector<1x32xf32>
    %291 = vector.broadcast %206 : vector<14x1xf32> to vector<14x32xf32>
    %292 = vector.broadcast %290 : vector<1x32xf32> to vector<14x32xf32>
    %293 = arith.mulf %291, %292 : vector<14x32xf32>
    %294 = arith.addf %289, %293 : vector<14x32xf32>
    %c13_57 = arith.constant 13 : index
    %c0_58 = arith.constant 0 : index
    %295 = vector.load %arg4[%c13_57, %c0_58] : memref<25x32xf32, #tpu.memory_space<vmem>>, vector<1x32xf32>
    %296 = vector.broadcast %208 : vector<14x1xf32> to vector<14x32xf32>
    %297 = vector.broadcast %295 : vector<1x32xf32> to vector<14x32xf32>
    %298 = arith.mulf %296, %297 : vector<14x32xf32>
    %299 = arith.addf %294, %298 : vector<14x32xf32>
    %c14_59 = arith.constant 14 : index
    %c0_60 = arith.constant 0 : index
    %300 = vector.load %arg4[%c14_59, %c0_60] : memref<25x32xf32, #tpu.memory_space<vmem>>, vector<1x32xf32>
    %301 = vector.broadcast %210 : vector<14x1xf32> to vector<14x32xf32>
    %302 = vector.broadcast %300 : vector<1x32xf32> to vector<14x32xf32>
    %303 = arith.mulf %301, %302 : vector<14x32xf32>
    %304 = arith.addf %299, %303 : vector<14x32xf32>
    %c15_61 = arith.constant 15 : index
    %c0_62 = arith.constant 0 : index
    %305 = vector.load %arg4[%c15_61, %c0_62] : memref<25x32xf32, #tpu.memory_space<vmem>>, vector<1x32xf32>
    %306 = vector.broadcast %212 : vector<14x1xf32> to vector<14x32xf32>
    %307 = vector.broadcast %305 : vector<1x32xf32> to vector<14x32xf32>
    %308 = arith.mulf %306, %307 : vector<14x32xf32>
    %309 = arith.addf %304, %308 : vector<14x32xf32>
    %c16_63 = arith.constant 16 : index
    %c0_64 = arith.constant 0 : index
    %310 = vector.load %arg4[%c16_63, %c0_64] : memref<25x32xf32, #tpu.memory_space<vmem>>, vector<1x32xf32>
    %311 = vector.broadcast %214 : vector<14x1xf32> to vector<14x32xf32>
    %312 = vector.broadcast %310 : vector<1x32xf32> to vector<14x32xf32>
    %313 = arith.mulf %311, %312 : vector<14x32xf32>
    %314 = arith.addf %309, %313 : vector<14x32xf32>
    %c17_65 = arith.constant 17 : index
    %c0_66 = arith.constant 0 : index
    %315 = vector.load %arg4[%c17_65, %c0_66] : memref<25x32xf32, #tpu.memory_space<vmem>>, vector<1x32xf32>
    %316 = vector.broadcast %216 : vector<14x1xf32> to vector<14x32xf32>
    %317 = vector.broadcast %315 : vector<1x32xf32> to vector<14x32xf32>
    %318 = arith.mulf %316, %317 : vector<14x32xf32>
    %319 = arith.addf %314, %318 : vector<14x32xf32>
    %c18_67 = arith.constant 18 : index
    %c0_68 = arith.constant 0 : index
    %320 = vector.load %arg4[%c18_67, %c0_68] : memref<25x32xf32, #tpu.memory_space<vmem>>, vector<1x32xf32>
    %321 = vector.broadcast %218 : vector<14x1xf32> to vector<14x32xf32>
    %322 = vector.broadcast %320 : vector<1x32xf32> to vector<14x32xf32>
    %323 = arith.mulf %321, %322 : vector<14x32xf32>
    %324 = arith.addf %319, %323 : vector<14x32xf32>
    %c19_69 = arith.constant 19 : index
    %c0_70 = arith.constant 0 : index
    %325 = vector.load %arg4[%c19_69, %c0_70] : memref<25x32xf32, #tpu.memory_space<vmem>>, vector<1x32xf32>
    %326 = vector.broadcast %220 : vector<14x1xf32> to vector<14x32xf32>
    %327 = vector.broadcast %325 : vector<1x32xf32> to vector<14x32xf32>
    %328 = arith.mulf %326, %327 : vector<14x32xf32>
    %329 = arith.addf %324, %328 : vector<14x32xf32>
    %c20_71 = arith.constant 20 : index
    %c0_72 = arith.constant 0 : index
    %330 = vector.load %arg4[%c20_71, %c0_72] : memref<25x32xf32, #tpu.memory_space<vmem>>, vector<1x32xf32>
    %331 = vector.broadcast %222 : vector<14x1xf32> to vector<14x32xf32>
    %332 = vector.broadcast %330 : vector<1x32xf32> to vector<14x32xf32>
    %333 = arith.mulf %331, %332 : vector<14x32xf32>
    %334 = arith.addf %329, %333 : vector<14x32xf32>
    %c21_73 = arith.constant 21 : index
    %c0_74 = arith.constant 0 : index
    %335 = vector.load %arg4[%c21_73, %c0_74] : memref<25x32xf32, #tpu.memory_space<vmem>>, vector<1x32xf32>
    %336 = vector.broadcast %224 : vector<14x1xf32> to vector<14x32xf32>
    %337 = vector.broadcast %335 : vector<1x32xf32> to vector<14x32xf32>
    %338 = arith.mulf %336, %337 : vector<14x32xf32>
    %339 = arith.addf %334, %338 : vector<14x32xf32>
    %c22_75 = arith.constant 22 : index
    %c0_76 = arith.constant 0 : index
    %340 = vector.load %arg4[%c22_75, %c0_76] : memref<25x32xf32, #tpu.memory_space<vmem>>, vector<1x32xf32>
    %341 = vector.broadcast %226 : vector<14x1xf32> to vector<14x32xf32>
    %342 = vector.broadcast %340 : vector<1x32xf32> to vector<14x32xf32>
    %343 = arith.mulf %341, %342 : vector<14x32xf32>
    %344 = arith.addf %339, %343 : vector<14x32xf32>
    %c23_77 = arith.constant 23 : index
    %c0_78 = arith.constant 0 : index
    %345 = vector.load %arg4[%c23_77, %c0_78] : memref<25x32xf32, #tpu.memory_space<vmem>>, vector<1x32xf32>
    %346 = vector.broadcast %228 : vector<14x1xf32> to vector<14x32xf32>
    %347 = vector.broadcast %345 : vector<1x32xf32> to vector<14x32xf32>
    %348 = arith.mulf %346, %347 : vector<14x32xf32>
    %349 = arith.addf %344, %348 : vector<14x32xf32>
    %c24_79 = arith.constant 24 : index
    %c0_80 = arith.constant 0 : index
    %350 = vector.load %arg4[%c24_79, %c0_80] : memref<25x32xf32, #tpu.memory_space<vmem>>, vector<1x32xf32>
    %351 = vector.broadcast %230 : vector<14x1xf32> to vector<14x32xf32>
    %352 = vector.broadcast %350 : vector<1x32xf32> to vector<14x32xf32>
    %353 = arith.mulf %351, %352 : vector<14x32xf32>
    %354 = arith.addf %349, %353 : vector<14x32xf32>
    %355 = arith.maximumf %180, %354 : vector<14x32xf32>
    %356 = vector.extract_strided_slice %3 {offsets = [1, 0, 0], sizes = [1, 14, 1], strides = [1, 1, 1]} : vector<6x16x1xf32> to vector<1x14x1xf32>
    %357 = vector.shape_cast %356 : vector<1x14x1xf32> to vector<14x1xf32>
    %358 = vector.extract_strided_slice %6 {offsets = [1, 0, 0], sizes = [1, 14, 1], strides = [1, 1, 1]} : vector<6x16x1xf32> to vector<1x14x1xf32>
    %359 = vector.shape_cast %358 : vector<1x14x1xf32> to vector<14x1xf32>
    %360 = vector.extract_strided_slice %3 {offsets = [1, 1, 0], sizes = [1, 14, 1], strides = [1, 1, 1]} : vector<6x16x1xf32> to vector<1x14x1xf32>
    %361 = vector.shape_cast %360 : vector<1x14x1xf32> to vector<14x1xf32>
    %362 = vector.extract_strided_slice %6 {offsets = [1, 1, 0], sizes = [1, 14, 1], strides = [1, 1, 1]} : vector<6x16x1xf32> to vector<1x14x1xf32>
    %363 = vector.shape_cast %362 : vector<1x14x1xf32> to vector<14x1xf32>
    %364 = vector.extract_strided_slice %3 {offsets = [1, 2, 0], sizes = [1, 14, 1], strides = [1, 1, 1]} : vector<6x16x1xf32> to vector<1x14x1xf32>
    %365 = vector.shape_cast %364 : vector<1x14x1xf32> to vector<14x1xf32>
    %366 = vector.extract_strided_slice %3 {offsets = [2, 0, 0], sizes = [1, 14, 1], strides = [1, 1, 1]} : vector<6x16x1xf32> to vector<1x14x1xf32>
    %367 = vector.shape_cast %366 : vector<1x14x1xf32> to vector<14x1xf32>
    %368 = vector.extract_strided_slice %6 {offsets = [2, 0, 0], sizes = [1, 14, 1], strides = [1, 1, 1]} : vector<6x16x1xf32> to vector<1x14x1xf32>
    %369 = vector.shape_cast %368 : vector<1x14x1xf32> to vector<14x1xf32>
    %370 = vector.extract_strided_slice %3 {offsets = [2, 1, 0], sizes = [1, 14, 1], strides = [1, 1, 1]} : vector<6x16x1xf32> to vector<1x14x1xf32>
    %371 = vector.shape_cast %370 : vector<1x14x1xf32> to vector<14x1xf32>
    %372 = vector.extract_strided_slice %6 {offsets = [2, 1, 0], sizes = [1, 14, 1], strides = [1, 1, 1]} : vector<6x16x1xf32> to vector<1x14x1xf32>
    %373 = vector.shape_cast %372 : vector<1x14x1xf32> to vector<14x1xf32>
    %374 = vector.extract_strided_slice %3 {offsets = [2, 2, 0], sizes = [1, 14, 1], strides = [1, 1, 1]} : vector<6x16x1xf32> to vector<1x14x1xf32>
    %375 = vector.shape_cast %374 : vector<1x14x1xf32> to vector<14x1xf32>
    %376 = vector.extract_strided_slice %3 {offsets = [3, 0, 0], sizes = [1, 14, 1], strides = [1, 1, 1]} : vector<6x16x1xf32> to vector<1x14x1xf32>
    %377 = vector.shape_cast %376 : vector<1x14x1xf32> to vector<14x1xf32>
    %378 = vector.extract_strided_slice %6 {offsets = [3, 0, 0], sizes = [1, 14, 1], strides = [1, 1, 1]} : vector<6x16x1xf32> to vector<1x14x1xf32>
    %379 = vector.shape_cast %378 : vector<1x14x1xf32> to vector<14x1xf32>
    %380 = vector.extract_strided_slice %3 {offsets = [3, 1, 0], sizes = [1, 14, 1], strides = [1, 1, 1]} : vector<6x16x1xf32> to vector<1x14x1xf32>
    %381 = vector.shape_cast %380 : vector<1x14x1xf32> to vector<14x1xf32>
    %382 = vector.extract_strided_slice %6 {offsets = [3, 1, 0], sizes = [1, 14, 1], strides = [1, 1, 1]} : vector<6x16x1xf32> to vector<1x14x1xf32>
    %383 = vector.shape_cast %382 : vector<1x14x1xf32> to vector<14x1xf32>
    %384 = vector.extract_strided_slice %3 {offsets = [3, 2, 0], sizes = [1, 14, 1], strides = [1, 1, 1]} : vector<6x16x1xf32> to vector<1x14x1xf32>
    %385 = vector.shape_cast %384 : vector<1x14x1xf32> to vector<14x1xf32>
    %386 = vector.extract_strided_slice %3 {offsets = [4, 0, 0], sizes = [1, 14, 1], strides = [1, 1, 1]} : vector<6x16x1xf32> to vector<1x14x1xf32>
    %387 = vector.shape_cast %386 : vector<1x14x1xf32> to vector<14x1xf32>
    %388 = vector.extract_strided_slice %6 {offsets = [4, 0, 0], sizes = [1, 14, 1], strides = [1, 1, 1]} : vector<6x16x1xf32> to vector<1x14x1xf32>
    %389 = vector.shape_cast %388 : vector<1x14x1xf32> to vector<14x1xf32>
    %390 = vector.extract_strided_slice %3 {offsets = [4, 1, 0], sizes = [1, 14, 1], strides = [1, 1, 1]} : vector<6x16x1xf32> to vector<1x14x1xf32>
    %391 = vector.shape_cast %390 : vector<1x14x1xf32> to vector<14x1xf32>
    %392 = vector.extract_strided_slice %6 {offsets = [4, 1, 0], sizes = [1, 14, 1], strides = [1, 1, 1]} : vector<6x16x1xf32> to vector<1x14x1xf32>
    %393 = vector.shape_cast %392 : vector<1x14x1xf32> to vector<14x1xf32>
    %394 = vector.extract_strided_slice %3 {offsets = [4, 2, 0], sizes = [1, 14, 1], strides = [1, 1, 1]} : vector<6x16x1xf32> to vector<1x14x1xf32>
    %395 = vector.shape_cast %394 : vector<1x14x1xf32> to vector<14x1xf32>
    %396 = vector.extract_strided_slice %3 {offsets = [5, 0, 0], sizes = [1, 14, 1], strides = [1, 1, 1]} : vector<6x16x1xf32> to vector<1x14x1xf32>
    %397 = vector.shape_cast %396 : vector<1x14x1xf32> to vector<14x1xf32>
    %398 = vector.extract_strided_slice %6 {offsets = [5, 0, 0], sizes = [1, 14, 1], strides = [1, 1, 1]} : vector<6x16x1xf32> to vector<1x14x1xf32>
    %399 = vector.shape_cast %398 : vector<1x14x1xf32> to vector<14x1xf32>
    %400 = vector.extract_strided_slice %3 {offsets = [5, 1, 0], sizes = [1, 14, 1], strides = [1, 1, 1]} : vector<6x16x1xf32> to vector<1x14x1xf32>
    %401 = vector.shape_cast %400 : vector<1x14x1xf32> to vector<14x1xf32>
    %402 = vector.extract_strided_slice %6 {offsets = [5, 1, 0], sizes = [1, 14, 1], strides = [1, 1, 1]} : vector<6x16x1xf32> to vector<1x14x1xf32>
    %403 = vector.shape_cast %402 : vector<1x14x1xf32> to vector<14x1xf32>
    %404 = vector.extract_strided_slice %3 {offsets = [5, 2, 0], sizes = [1, 14, 1], strides = [1, 1, 1]} : vector<6x16x1xf32> to vector<1x14x1xf32>
    %405 = vector.shape_cast %404 : vector<1x14x1xf32> to vector<14x1xf32>
    %c0_81 = arith.constant 0 : index
    %c0_82 = arith.constant 0 : index
    %406 = vector.load %arg4[%c0_81, %c0_82] : memref<25x32xf32, #tpu.memory_space<vmem>>, vector<1x32xf32>
    %407 = vector.broadcast %357 : vector<14x1xf32> to vector<14x32xf32>
    %408 = vector.broadcast %406 : vector<1x32xf32> to vector<14x32xf32>
    %409 = arith.mulf %407, %408 : vector<14x32xf32>
    %c1_83 = arith.constant 1 : index
    %c0_84 = arith.constant 0 : index
    %410 = vector.load %arg4[%c1_83, %c0_84] : memref<25x32xf32, #tpu.memory_space<vmem>>, vector<1x32xf32>
    %411 = vector.broadcast %359 : vector<14x1xf32> to vector<14x32xf32>
    %412 = vector.broadcast %410 : vector<1x32xf32> to vector<14x32xf32>
    %413 = arith.mulf %411, %412 : vector<14x32xf32>
    %414 = arith.addf %409, %413 : vector<14x32xf32>
    %c2_85 = arith.constant 2 : index
    %c0_86 = arith.constant 0 : index
    %415 = vector.load %arg4[%c2_85, %c0_86] : memref<25x32xf32, #tpu.memory_space<vmem>>, vector<1x32xf32>
    %416 = vector.broadcast %361 : vector<14x1xf32> to vector<14x32xf32>
    %417 = vector.broadcast %415 : vector<1x32xf32> to vector<14x32xf32>
    %418 = arith.mulf %416, %417 : vector<14x32xf32>
    %419 = arith.addf %414, %418 : vector<14x32xf32>
    %c3_87 = arith.constant 3 : index
    %c0_88 = arith.constant 0 : index
    %420 = vector.load %arg4[%c3_87, %c0_88] : memref<25x32xf32, #tpu.memory_space<vmem>>, vector<1x32xf32>
    %421 = vector.broadcast %363 : vector<14x1xf32> to vector<14x32xf32>
    %422 = vector.broadcast %420 : vector<1x32xf32> to vector<14x32xf32>
    %423 = arith.mulf %421, %422 : vector<14x32xf32>
    %424 = arith.addf %419, %423 : vector<14x32xf32>
    %c4_89 = arith.constant 4 : index
    %c0_90 = arith.constant 0 : index
    %425 = vector.load %arg4[%c4_89, %c0_90] : memref<25x32xf32, #tpu.memory_space<vmem>>, vector<1x32xf32>
    %426 = vector.broadcast %365 : vector<14x1xf32> to vector<14x32xf32>
    %427 = vector.broadcast %425 : vector<1x32xf32> to vector<14x32xf32>
    %428 = arith.mulf %426, %427 : vector<14x32xf32>
    %429 = arith.addf %424, %428 : vector<14x32xf32>
    %c5_91 = arith.constant 5 : index
    %c0_92 = arith.constant 0 : index
    %430 = vector.load %arg4[%c5_91, %c0_92] : memref<25x32xf32, #tpu.memory_space<vmem>>, vector<1x32xf32>
    %431 = vector.broadcast %367 : vector<14x1xf32> to vector<14x32xf32>
    %432 = vector.broadcast %430 : vector<1x32xf32> to vector<14x32xf32>
    %433 = arith.mulf %431, %432 : vector<14x32xf32>
    %434 = arith.addf %429, %433 : vector<14x32xf32>
    %c6_93 = arith.constant 6 : index
    %c0_94 = arith.constant 0 : index
    %435 = vector.load %arg4[%c6_93, %c0_94] : memref<25x32xf32, #tpu.memory_space<vmem>>, vector<1x32xf32>
    %436 = vector.broadcast %369 : vector<14x1xf32> to vector<14x32xf32>
    %437 = vector.broadcast %435 : vector<1x32xf32> to vector<14x32xf32>
    %438 = arith.mulf %436, %437 : vector<14x32xf32>
    %439 = arith.addf %434, %438 : vector<14x32xf32>
    %c7_95 = arith.constant 7 : index
    %c0_96 = arith.constant 0 : index
    %440 = vector.load %arg4[%c7_95, %c0_96] : memref<25x32xf32, #tpu.memory_space<vmem>>, vector<1x32xf32>
    %441 = vector.broadcast %371 : vector<14x1xf32> to vector<14x32xf32>
    %442 = vector.broadcast %440 : vector<1x32xf32> to vector<14x32xf32>
    %443 = arith.mulf %441, %442 : vector<14x32xf32>
    %444 = arith.addf %439, %443 : vector<14x32xf32>
    %c8_97 = arith.constant 8 : index
    %c0_98 = arith.constant 0 : index
    %445 = vector.load %arg4[%c8_97, %c0_98] : memref<25x32xf32, #tpu.memory_space<vmem>>, vector<1x32xf32>
    %446 = vector.broadcast %373 : vector<14x1xf32> to vector<14x32xf32>
    %447 = vector.broadcast %445 : vector<1x32xf32> to vector<14x32xf32>
    %448 = arith.mulf %446, %447 : vector<14x32xf32>
    %449 = arith.addf %444, %448 : vector<14x32xf32>
    %c9_99 = arith.constant 9 : index
    %c0_100 = arith.constant 0 : index
    %450 = vector.load %arg4[%c9_99, %c0_100] : memref<25x32xf32, #tpu.memory_space<vmem>>, vector<1x32xf32>
    %451 = vector.broadcast %375 : vector<14x1xf32> to vector<14x32xf32>
    %452 = vector.broadcast %450 : vector<1x32xf32> to vector<14x32xf32>
    %453 = arith.mulf %451, %452 : vector<14x32xf32>
    %454 = arith.addf %449, %453 : vector<14x32xf32>
    %c10_101 = arith.constant 10 : index
    %c0_102 = arith.constant 0 : index
    %455 = vector.load %arg4[%c10_101, %c0_102] : memref<25x32xf32, #tpu.memory_space<vmem>>, vector<1x32xf32>
    %456 = vector.broadcast %377 : vector<14x1xf32> to vector<14x32xf32>
    %457 = vector.broadcast %455 : vector<1x32xf32> to vector<14x32xf32>
    %458 = arith.mulf %456, %457 : vector<14x32xf32>
    %459 = arith.addf %454, %458 : vector<14x32xf32>
    %c11_103 = arith.constant 11 : index
    %c0_104 = arith.constant 0 : index
    %460 = vector.load %arg4[%c11_103, %c0_104] : memref<25x32xf32, #tpu.memory_space<vmem>>, vector<1x32xf32>
    %461 = vector.broadcast %379 : vector<14x1xf32> to vector<14x32xf32>
    %462 = vector.broadcast %460 : vector<1x32xf32> to vector<14x32xf32>
    %463 = arith.mulf %461, %462 : vector<14x32xf32>
    %464 = arith.addf %459, %463 : vector<14x32xf32>
    %c12_105 = arith.constant 12 : index
    %c0_106 = arith.constant 0 : index
    %465 = vector.load %arg4[%c12_105, %c0_106] : memref<25x32xf32, #tpu.memory_space<vmem>>, vector<1x32xf32>
    %466 = vector.broadcast %381 : vector<14x1xf32> to vector<14x32xf32>
    %467 = vector.broadcast %465 : vector<1x32xf32> to vector<14x32xf32>
    %468 = arith.mulf %466, %467 : vector<14x32xf32>
    %469 = arith.addf %464, %468 : vector<14x32xf32>
    %c13_107 = arith.constant 13 : index
    %c0_108 = arith.constant 0 : index
    %470 = vector.load %arg4[%c13_107, %c0_108] : memref<25x32xf32, #tpu.memory_space<vmem>>, vector<1x32xf32>
    %471 = vector.broadcast %383 : vector<14x1xf32> to vector<14x32xf32>
    %472 = vector.broadcast %470 : vector<1x32xf32> to vector<14x32xf32>
    %473 = arith.mulf %471, %472 : vector<14x32xf32>
    %474 = arith.addf %469, %473 : vector<14x32xf32>
    %c14_109 = arith.constant 14 : index
    %c0_110 = arith.constant 0 : index
    %475 = vector.load %arg4[%c14_109, %c0_110] : memref<25x32xf32, #tpu.memory_space<vmem>>, vector<1x32xf32>
    %476 = vector.broadcast %385 : vector<14x1xf32> to vector<14x32xf32>
    %477 = vector.broadcast %475 : vector<1x32xf32> to vector<14x32xf32>
    %478 = arith.mulf %476, %477 : vector<14x32xf32>
    %479 = arith.addf %474, %478 : vector<14x32xf32>
    %c15_111 = arith.constant 15 : index
    %c0_112 = arith.constant 0 : index
    %480 = vector.load %arg4[%c15_111, %c0_112] : memref<25x32xf32, #tpu.memory_space<vmem>>, vector<1x32xf32>
    %481 = vector.broadcast %387 : vector<14x1xf32> to vector<14x32xf32>
    %482 = vector.broadcast %480 : vector<1x32xf32> to vector<14x32xf32>
    %483 = arith.mulf %481, %482 : vector<14x32xf32>
    %484 = arith.addf %479, %483 : vector<14x32xf32>
    %c16_113 = arith.constant 16 : index
    %c0_114 = arith.constant 0 : index
    %485 = vector.load %arg4[%c16_113, %c0_114] : memref<25x32xf32, #tpu.memory_space<vmem>>, vector<1x32xf32>
    %486 = vector.broadcast %389 : vector<14x1xf32> to vector<14x32xf32>
    %487 = vector.broadcast %485 : vector<1x32xf32> to vector<14x32xf32>
    %488 = arith.mulf %486, %487 : vector<14x32xf32>
    %489 = arith.addf %484, %488 : vector<14x32xf32>
    %c17_115 = arith.constant 17 : index
    %c0_116 = arith.constant 0 : index
    %490 = vector.load %arg4[%c17_115, %c0_116] : memref<25x32xf32, #tpu.memory_space<vmem>>, vector<1x32xf32>
    %491 = vector.broadcast %391 : vector<14x1xf32> to vector<14x32xf32>
    %492 = vector.broadcast %490 : vector<1x32xf32> to vector<14x32xf32>
    %493 = arith.mulf %491, %492 : vector<14x32xf32>
    %494 = arith.addf %489, %493 : vector<14x32xf32>
    %c18_117 = arith.constant 18 : index
    %c0_118 = arith.constant 0 : index
    %495 = vector.load %arg4[%c18_117, %c0_118] : memref<25x32xf32, #tpu.memory_space<vmem>>, vector<1x32xf32>
    %496 = vector.broadcast %393 : vector<14x1xf32> to vector<14x32xf32>
    %497 = vector.broadcast %495 : vector<1x32xf32> to vector<14x32xf32>
    %498 = arith.mulf %496, %497 : vector<14x32xf32>
    %499 = arith.addf %494, %498 : vector<14x32xf32>
    %c19_119 = arith.constant 19 : index
    %c0_120 = arith.constant 0 : index
    %500 = vector.load %arg4[%c19_119, %c0_120] : memref<25x32xf32, #tpu.memory_space<vmem>>, vector<1x32xf32>
    %501 = vector.broadcast %395 : vector<14x1xf32> to vector<14x32xf32>
    %502 = vector.broadcast %500 : vector<1x32xf32> to vector<14x32xf32>
    %503 = arith.mulf %501, %502 : vector<14x32xf32>
    %504 = arith.addf %499, %503 : vector<14x32xf32>
    %c20_121 = arith.constant 20 : index
    %c0_122 = arith.constant 0 : index
    %505 = vector.load %arg4[%c20_121, %c0_122] : memref<25x32xf32, #tpu.memory_space<vmem>>, vector<1x32xf32>
    %506 = vector.broadcast %397 : vector<14x1xf32> to vector<14x32xf32>
    %507 = vector.broadcast %505 : vector<1x32xf32> to vector<14x32xf32>
    %508 = arith.mulf %506, %507 : vector<14x32xf32>
    %509 = arith.addf %504, %508 : vector<14x32xf32>
    %c21_123 = arith.constant 21 : index
    %c0_124 = arith.constant 0 : index
    %510 = vector.load %arg4[%c21_123, %c0_124] : memref<25x32xf32, #tpu.memory_space<vmem>>, vector<1x32xf32>
    %511 = vector.broadcast %399 : vector<14x1xf32> to vector<14x32xf32>
    %512 = vector.broadcast %510 : vector<1x32xf32> to vector<14x32xf32>
    %513 = arith.mulf %511, %512 : vector<14x32xf32>
    %514 = arith.addf %509, %513 : vector<14x32xf32>
    %c22_125 = arith.constant 22 : index
    %c0_126 = arith.constant 0 : index
    %515 = vector.load %arg4[%c22_125, %c0_126] : memref<25x32xf32, #tpu.memory_space<vmem>>, vector<1x32xf32>
    %516 = vector.broadcast %401 : vector<14x1xf32> to vector<14x32xf32>
    %517 = vector.broadcast %515 : vector<1x32xf32> to vector<14x32xf32>
    %518 = arith.mulf %516, %517 : vector<14x32xf32>
    %519 = arith.addf %514, %518 : vector<14x32xf32>
    %c23_127 = arith.constant 23 : index
    %c0_128 = arith.constant 0 : index
    %520 = vector.load %arg4[%c23_127, %c0_128] : memref<25x32xf32, #tpu.memory_space<vmem>>, vector<1x32xf32>
    %521 = vector.broadcast %403 : vector<14x1xf32> to vector<14x32xf32>
    %522 = vector.broadcast %520 : vector<1x32xf32> to vector<14x32xf32>
    %523 = arith.mulf %521, %522 : vector<14x32xf32>
    %524 = arith.addf %519, %523 : vector<14x32xf32>
    %c24_129 = arith.constant 24 : index
    %c0_130 = arith.constant 0 : index
    %525 = vector.load %arg4[%c24_129, %c0_130] : memref<25x32xf32, #tpu.memory_space<vmem>>, vector<1x32xf32>
    %526 = vector.broadcast %405 : vector<14x1xf32> to vector<14x32xf32>
    %527 = vector.broadcast %525 : vector<1x32xf32> to vector<14x32xf32>
    %528 = arith.mulf %526, %527 : vector<14x32xf32>
    %529 = arith.addf %524, %528 : vector<14x32xf32>
    %530 = arith.maximumf %355, %529 : vector<14x32xf32>
    %531 = vector.extract_strided_slice %6 {offsets = [1, 0, 0], sizes = [1, 14, 1], strides = [1, 1, 1]} : vector<6x16x1xf32> to vector<1x14x1xf32>
    %532 = vector.shape_cast %531 : vector<1x14x1xf32> to vector<14x1xf32>
    %533 = vector.extract_strided_slice %3 {offsets = [1, 1, 0], sizes = [1, 14, 1], strides = [1, 1, 1]} : vector<6x16x1xf32> to vector<1x14x1xf32>
    %534 = vector.shape_cast %533 : vector<1x14x1xf32> to vector<14x1xf32>
    %535 = vector.extract_strided_slice %6 {offsets = [1, 1, 0], sizes = [1, 14, 1], strides = [1, 1, 1]} : vector<6x16x1xf32> to vector<1x14x1xf32>
    %536 = vector.shape_cast %535 : vector<1x14x1xf32> to vector<14x1xf32>
    %537 = vector.extract_strided_slice %3 {offsets = [1, 2, 0], sizes = [1, 14, 1], strides = [1, 1, 1]} : vector<6x16x1xf32> to vector<1x14x1xf32>
    %538 = vector.shape_cast %537 : vector<1x14x1xf32> to vector<14x1xf32>
    %539 = vector.extract_strided_slice %6 {offsets = [1, 2, 0], sizes = [1, 14, 1], strides = [1, 1, 1]} : vector<6x16x1xf32> to vector<1x14x1xf32>
    %540 = vector.shape_cast %539 : vector<1x14x1xf32> to vector<14x1xf32>
    %541 = vector.extract_strided_slice %6 {offsets = [2, 0, 0], sizes = [1, 14, 1], strides = [1, 1, 1]} : vector<6x16x1xf32> to vector<1x14x1xf32>
    %542 = vector.shape_cast %541 : vector<1x14x1xf32> to vector<14x1xf32>
    %543 = vector.extract_strided_slice %3 {offsets = [2, 1, 0], sizes = [1, 14, 1], strides = [1, 1, 1]} : vector<6x16x1xf32> to vector<1x14x1xf32>
    %544 = vector.shape_cast %543 : vector<1x14x1xf32> to vector<14x1xf32>
    %545 = vector.extract_strided_slice %6 {offsets = [2, 1, 0], sizes = [1, 14, 1], strides = [1, 1, 1]} : vector<6x16x1xf32> to vector<1x14x1xf32>
    %546 = vector.shape_cast %545 : vector<1x14x1xf32> to vector<14x1xf32>
    %547 = vector.extract_strided_slice %3 {offsets = [2, 2, 0], sizes = [1, 14, 1], strides = [1, 1, 1]} : vector<6x16x1xf32> to vector<1x14x1xf32>
    %548 = vector.shape_cast %547 : vector<1x14x1xf32> to vector<14x1xf32>
    %549 = vector.extract_strided_slice %6 {offsets = [2, 2, 0], sizes = [1, 14, 1], strides = [1, 1, 1]} : vector<6x16x1xf32> to vector<1x14x1xf32>
    %550 = vector.shape_cast %549 : vector<1x14x1xf32> to vector<14x1xf32>
    %551 = vector.extract_strided_slice %6 {offsets = [3, 0, 0], sizes = [1, 14, 1], strides = [1, 1, 1]} : vector<6x16x1xf32> to vector<1x14x1xf32>
    %552 = vector.shape_cast %551 : vector<1x14x1xf32> to vector<14x1xf32>
    %553 = vector.extract_strided_slice %3 {offsets = [3, 1, 0], sizes = [1, 14, 1], strides = [1, 1, 1]} : vector<6x16x1xf32> to vector<1x14x1xf32>
    %554 = vector.shape_cast %553 : vector<1x14x1xf32> to vector<14x1xf32>
    %555 = vector.extract_strided_slice %6 {offsets = [3, 1, 0], sizes = [1, 14, 1], strides = [1, 1, 1]} : vector<6x16x1xf32> to vector<1x14x1xf32>
    %556 = vector.shape_cast %555 : vector<1x14x1xf32> to vector<14x1xf32>
    %557 = vector.extract_strided_slice %3 {offsets = [3, 2, 0], sizes = [1, 14, 1], strides = [1, 1, 1]} : vector<6x16x1xf32> to vector<1x14x1xf32>
    %558 = vector.shape_cast %557 : vector<1x14x1xf32> to vector<14x1xf32>
    %559 = vector.extract_strided_slice %6 {offsets = [3, 2, 0], sizes = [1, 14, 1], strides = [1, 1, 1]} : vector<6x16x1xf32> to vector<1x14x1xf32>
    %560 = vector.shape_cast %559 : vector<1x14x1xf32> to vector<14x1xf32>
    %561 = vector.extract_strided_slice %6 {offsets = [4, 0, 0], sizes = [1, 14, 1], strides = [1, 1, 1]} : vector<6x16x1xf32> to vector<1x14x1xf32>
    %562 = vector.shape_cast %561 : vector<1x14x1xf32> to vector<14x1xf32>
    %563 = vector.extract_strided_slice %3 {offsets = [4, 1, 0], sizes = [1, 14, 1], strides = [1, 1, 1]} : vector<6x16x1xf32> to vector<1x14x1xf32>
    %564 = vector.shape_cast %563 : vector<1x14x1xf32> to vector<14x1xf32>
    %565 = vector.extract_strided_slice %6 {offsets = [4, 1, 0], sizes = [1, 14, 1], strides = [1, 1, 1]} : vector<6x16x1xf32> to vector<1x14x1xf32>
    %566 = vector.shape_cast %565 : vector<1x14x1xf32> to vector<14x1xf32>
    %567 = vector.extract_strided_slice %3 {offsets = [4, 2, 0], sizes = [1, 14, 1], strides = [1, 1, 1]} : vector<6x16x1xf32> to vector<1x14x1xf32>
    %568 = vector.shape_cast %567 : vector<1x14x1xf32> to vector<14x1xf32>
    %569 = vector.extract_strided_slice %6 {offsets = [4, 2, 0], sizes = [1, 14, 1], strides = [1, 1, 1]} : vector<6x16x1xf32> to vector<1x14x1xf32>
    %570 = vector.shape_cast %569 : vector<1x14x1xf32> to vector<14x1xf32>
    %571 = vector.extract_strided_slice %6 {offsets = [5, 0, 0], sizes = [1, 14, 1], strides = [1, 1, 1]} : vector<6x16x1xf32> to vector<1x14x1xf32>
    %572 = vector.shape_cast %571 : vector<1x14x1xf32> to vector<14x1xf32>
    %573 = vector.extract_strided_slice %3 {offsets = [5, 1, 0], sizes = [1, 14, 1], strides = [1, 1, 1]} : vector<6x16x1xf32> to vector<1x14x1xf32>
    %574 = vector.shape_cast %573 : vector<1x14x1xf32> to vector<14x1xf32>
    %575 = vector.extract_strided_slice %6 {offsets = [5, 1, 0], sizes = [1, 14, 1], strides = [1, 1, 1]} : vector<6x16x1xf32> to vector<1x14x1xf32>
    %576 = vector.shape_cast %575 : vector<1x14x1xf32> to vector<14x1xf32>
    %577 = vector.extract_strided_slice %3 {offsets = [5, 2, 0], sizes = [1, 14, 1], strides = [1, 1, 1]} : vector<6x16x1xf32> to vector<1x14x1xf32>
    %578 = vector.shape_cast %577 : vector<1x14x1xf32> to vector<14x1xf32>
    %579 = vector.extract_strided_slice %6 {offsets = [5, 2, 0], sizes = [1, 14, 1], strides = [1, 1, 1]} : vector<6x16x1xf32> to vector<1x14x1xf32>
    %580 = vector.shape_cast %579 : vector<1x14x1xf32> to vector<14x1xf32>
    %c0_131 = arith.constant 0 : index
    %c0_132 = arith.constant 0 : index
    %581 = vector.load %arg4[%c0_131, %c0_132] : memref<25x32xf32, #tpu.memory_space<vmem>>, vector<1x32xf32>
    %582 = vector.broadcast %532 : vector<14x1xf32> to vector<14x32xf32>
    %583 = vector.broadcast %581 : vector<1x32xf32> to vector<14x32xf32>
    %584 = arith.mulf %582, %583 : vector<14x32xf32>
    %c1_133 = arith.constant 1 : index
    %c0_134 = arith.constant 0 : index
    %585 = vector.load %arg4[%c1_133, %c0_134] : memref<25x32xf32, #tpu.memory_space<vmem>>, vector<1x32xf32>
    %586 = vector.broadcast %534 : vector<14x1xf32> to vector<14x32xf32>
    %587 = vector.broadcast %585 : vector<1x32xf32> to vector<14x32xf32>
    %588 = arith.mulf %586, %587 : vector<14x32xf32>
    %589 = arith.addf %584, %588 : vector<14x32xf32>
    %c2_135 = arith.constant 2 : index
    %c0_136 = arith.constant 0 : index
    %590 = vector.load %arg4[%c2_135, %c0_136] : memref<25x32xf32, #tpu.memory_space<vmem>>, vector<1x32xf32>
    %591 = vector.broadcast %536 : vector<14x1xf32> to vector<14x32xf32>
    %592 = vector.broadcast %590 : vector<1x32xf32> to vector<14x32xf32>
    %593 = arith.mulf %591, %592 : vector<14x32xf32>
    %594 = arith.addf %589, %593 : vector<14x32xf32>
    %c3_137 = arith.constant 3 : index
    %c0_138 = arith.constant 0 : index
    %595 = vector.load %arg4[%c3_137, %c0_138] : memref<25x32xf32, #tpu.memory_space<vmem>>, vector<1x32xf32>
    %596 = vector.broadcast %538 : vector<14x1xf32> to vector<14x32xf32>
    %597 = vector.broadcast %595 : vector<1x32xf32> to vector<14x32xf32>
    %598 = arith.mulf %596, %597 : vector<14x32xf32>
    %599 = arith.addf %594, %598 : vector<14x32xf32>
    %c4_139 = arith.constant 4 : index
    %c0_140 = arith.constant 0 : index
    %600 = vector.load %arg4[%c4_139, %c0_140] : memref<25x32xf32, #tpu.memory_space<vmem>>, vector<1x32xf32>
    %601 = vector.broadcast %540 : vector<14x1xf32> to vector<14x32xf32>
    %602 = vector.broadcast %600 : vector<1x32xf32> to vector<14x32xf32>
    %603 = arith.mulf %601, %602 : vector<14x32xf32>
    %604 = arith.addf %599, %603 : vector<14x32xf32>
    %c5_141 = arith.constant 5 : index
    %c0_142 = arith.constant 0 : index
    %605 = vector.load %arg4[%c5_141, %c0_142] : memref<25x32xf32, #tpu.memory_space<vmem>>, vector<1x32xf32>
    %606 = vector.broadcast %542 : vector<14x1xf32> to vector<14x32xf32>
    %607 = vector.broadcast %605 : vector<1x32xf32> to vector<14x32xf32>
    %608 = arith.mulf %606, %607 : vector<14x32xf32>
    %609 = arith.addf %604, %608 : vector<14x32xf32>
    %c6_143 = arith.constant 6 : index
    %c0_144 = arith.constant 0 : index
    %610 = vector.load %arg4[%c6_143, %c0_144] : memref<25x32xf32, #tpu.memory_space<vmem>>, vector<1x32xf32>
    %611 = vector.broadcast %544 : vector<14x1xf32> to vector<14x32xf32>
    %612 = vector.broadcast %610 : vector<1x32xf32> to vector<14x32xf32>
    %613 = arith.mulf %611, %612 : vector<14x32xf32>
    %614 = arith.addf %609, %613 : vector<14x32xf32>
    %c7_145 = arith.constant 7 : index
    %c0_146 = arith.constant 0 : index
    %615 = vector.load %arg4[%c7_145, %c0_146] : memref<25x32xf32, #tpu.memory_space<vmem>>, vector<1x32xf32>
    %616 = vector.broadcast %546 : vector<14x1xf32> to vector<14x32xf32>
    %617 = vector.broadcast %615 : vector<1x32xf32> to vector<14x32xf32>
    %618 = arith.mulf %616, %617 : vector<14x32xf32>
    %619 = arith.addf %614, %618 : vector<14x32xf32>
    %c8_147 = arith.constant 8 : index
    %c0_148 = arith.constant 0 : index
    %620 = vector.load %arg4[%c8_147, %c0_148] : memref<25x32xf32, #tpu.memory_space<vmem>>, vector<1x32xf32>
    %621 = vector.broadcast %548 : vector<14x1xf32> to vector<14x32xf32>
    %622 = vector.broadcast %620 : vector<1x32xf32> to vector<14x32xf32>
    %623 = arith.mulf %621, %622 : vector<14x32xf32>
    %624 = arith.addf %619, %623 : vector<14x32xf32>
    %c9_149 = arith.constant 9 : index
    %c0_150 = arith.constant 0 : index
    %625 = vector.load %arg4[%c9_149, %c0_150] : memref<25x32xf32, #tpu.memory_space<vmem>>, vector<1x32xf32>
    %626 = vector.broadcast %550 : vector<14x1xf32> to vector<14x32xf32>
    %627 = vector.broadcast %625 : vector<1x32xf32> to vector<14x32xf32>
    %628 = arith.mulf %626, %627 : vector<14x32xf32>
    %629 = arith.addf %624, %628 : vector<14x32xf32>
    %c10_151 = arith.constant 10 : index
    %c0_152 = arith.constant 0 : index
    %630 = vector.load %arg4[%c10_151, %c0_152] : memref<25x32xf32, #tpu.memory_space<vmem>>, vector<1x32xf32>
    %631 = vector.broadcast %552 : vector<14x1xf32> to vector<14x32xf32>
    %632 = vector.broadcast %630 : vector<1x32xf32> to vector<14x32xf32>
    %633 = arith.mulf %631, %632 : vector<14x32xf32>
    %634 = arith.addf %629, %633 : vector<14x32xf32>
    %c11_153 = arith.constant 11 : index
    %c0_154 = arith.constant 0 : index
    %635 = vector.load %arg4[%c11_153, %c0_154] : memref<25x32xf32, #tpu.memory_space<vmem>>, vector<1x32xf32>
    %636 = vector.broadcast %554 : vector<14x1xf32> to vector<14x32xf32>
    %637 = vector.broadcast %635 : vector<1x32xf32> to vector<14x32xf32>
    %638 = arith.mulf %636, %637 : vector<14x32xf32>
    %639 = arith.addf %634, %638 : vector<14x32xf32>
    %c12_155 = arith.constant 12 : index
    %c0_156 = arith.constant 0 : index
    %640 = vector.load %arg4[%c12_155, %c0_156] : memref<25x32xf32, #tpu.memory_space<vmem>>, vector<1x32xf32>
    %641 = vector.broadcast %556 : vector<14x1xf32> to vector<14x32xf32>
    %642 = vector.broadcast %640 : vector<1x32xf32> to vector<14x32xf32>
    %643 = arith.mulf %641, %642 : vector<14x32xf32>
    %644 = arith.addf %639, %643 : vector<14x32xf32>
    %c13_157 = arith.constant 13 : index
    %c0_158 = arith.constant 0 : index
    %645 = vector.load %arg4[%c13_157, %c0_158] : memref<25x32xf32, #tpu.memory_space<vmem>>, vector<1x32xf32>
    %646 = vector.broadcast %558 : vector<14x1xf32> to vector<14x32xf32>
    %647 = vector.broadcast %645 : vector<1x32xf32> to vector<14x32xf32>
    %648 = arith.mulf %646, %647 : vector<14x32xf32>
    %649 = arith.addf %644, %648 : vector<14x32xf32>
    %c14_159 = arith.constant 14 : index
    %c0_160 = arith.constant 0 : index
    %650 = vector.load %arg4[%c14_159, %c0_160] : memref<25x32xf32, #tpu.memory_space<vmem>>, vector<1x32xf32>
    %651 = vector.broadcast %560 : vector<14x1xf32> to vector<14x32xf32>
    %652 = vector.broadcast %650 : vector<1x32xf32> to vector<14x32xf32>
    %653 = arith.mulf %651, %652 : vector<14x32xf32>
    %654 = arith.addf %649, %653 : vector<14x32xf32>
    %c15_161 = arith.constant 15 : index
    %c0_162 = arith.constant 0 : index
    %655 = vector.load %arg4[%c15_161, %c0_162] : memref<25x32xf32, #tpu.memory_space<vmem>>, vector<1x32xf32>
    %656 = vector.broadcast %562 : vector<14x1xf32> to vector<14x32xf32>
    %657 = vector.broadcast %655 : vector<1x32xf32> to vector<14x32xf32>
    %658 = arith.mulf %656, %657 : vector<14x32xf32>
    %659 = arith.addf %654, %658 : vector<14x32xf32>
    %c16_163 = arith.constant 16 : index
    %c0_164 = arith.constant 0 : index
    %660 = vector.load %arg4[%c16_163, %c0_164] : memref<25x32xf32, #tpu.memory_space<vmem>>, vector<1x32xf32>
    %661 = vector.broadcast %564 : vector<14x1xf32> to vector<14x32xf32>
    %662 = vector.broadcast %660 : vector<1x32xf32> to vector<14x32xf32>
    %663 = arith.mulf %661, %662 : vector<14x32xf32>
    %664 = arith.addf %659, %663 : vector<14x32xf32>
    %c17_165 = arith.constant 17 : index
    %c0_166 = arith.constant 0 : index
    %665 = vector.load %arg4[%c17_165, %c0_166] : memref<25x32xf32, #tpu.memory_space<vmem>>, vector<1x32xf32>
    %666 = vector.broadcast %566 : vector<14x1xf32> to vector<14x32xf32>
    %667 = vector.broadcast %665 : vector<1x32xf32> to vector<14x32xf32>
    %668 = arith.mulf %666, %667 : vector<14x32xf32>
    %669 = arith.addf %664, %668 : vector<14x32xf32>
    %c18_167 = arith.constant 18 : index
    %c0_168 = arith.constant 0 : index
    %670 = vector.load %arg4[%c18_167, %c0_168] : memref<25x32xf32, #tpu.memory_space<vmem>>, vector<1x32xf32>
    %671 = vector.broadcast %568 : vector<14x1xf32> to vector<14x32xf32>
    %672 = vector.broadcast %670 : vector<1x32xf32> to vector<14x32xf32>
    %673 = arith.mulf %671, %672 : vector<14x32xf32>
    %674 = arith.addf %669, %673 : vector<14x32xf32>
    %c19_169 = arith.constant 19 : index
    %c0_170 = arith.constant 0 : index
    %675 = vector.load %arg4[%c19_169, %c0_170] : memref<25x32xf32, #tpu.memory_space<vmem>>, vector<1x32xf32>
    %676 = vector.broadcast %570 : vector<14x1xf32> to vector<14x32xf32>
    %677 = vector.broadcast %675 : vector<1x32xf32> to vector<14x32xf32>
    %678 = arith.mulf %676, %677 : vector<14x32xf32>
    %679 = arith.addf %674, %678 : vector<14x32xf32>
    %c20_171 = arith.constant 20 : index
    %c0_172 = arith.constant 0 : index
    %680 = vector.load %arg4[%c20_171, %c0_172] : memref<25x32xf32, #tpu.memory_space<vmem>>, vector<1x32xf32>
    %681 = vector.broadcast %572 : vector<14x1xf32> to vector<14x32xf32>
    %682 = vector.broadcast %680 : vector<1x32xf32> to vector<14x32xf32>
    %683 = arith.mulf %681, %682 : vector<14x32xf32>
    %684 = arith.addf %679, %683 : vector<14x32xf32>
    %c21_173 = arith.constant 21 : index
    %c0_174 = arith.constant 0 : index
    %685 = vector.load %arg4[%c21_173, %c0_174] : memref<25x32xf32, #tpu.memory_space<vmem>>, vector<1x32xf32>
    %686 = vector.broadcast %574 : vector<14x1xf32> to vector<14x32xf32>
    %687 = vector.broadcast %685 : vector<1x32xf32> to vector<14x32xf32>
    %688 = arith.mulf %686, %687 : vector<14x32xf32>
    %689 = arith.addf %684, %688 : vector<14x32xf32>
    %c22_175 = arith.constant 22 : index
    %c0_176 = arith.constant 0 : index
    %690 = vector.load %arg4[%c22_175, %c0_176] : memref<25x32xf32, #tpu.memory_space<vmem>>, vector<1x32xf32>
    %691 = vector.broadcast %576 : vector<14x1xf32> to vector<14x32xf32>
    %692 = vector.broadcast %690 : vector<1x32xf32> to vector<14x32xf32>
    %693 = arith.mulf %691, %692 : vector<14x32xf32>
    %694 = arith.addf %689, %693 : vector<14x32xf32>
    %c23_177 = arith.constant 23 : index
    %c0_178 = arith.constant 0 : index
    %695 = vector.load %arg4[%c23_177, %c0_178] : memref<25x32xf32, #tpu.memory_space<vmem>>, vector<1x32xf32>
    %696 = vector.broadcast %578 : vector<14x1xf32> to vector<14x32xf32>
    %697 = vector.broadcast %695 : vector<1x32xf32> to vector<14x32xf32>
    %698 = arith.mulf %696, %697 : vector<14x32xf32>
    %699 = arith.addf %694, %698 : vector<14x32xf32>
    %c24_179 = arith.constant 24 : index
    %c0_180 = arith.constant 0 : index
    %700 = vector.load %arg4[%c24_179, %c0_180] : memref<25x32xf32, #tpu.memory_space<vmem>>, vector<1x32xf32>
    %701 = vector.broadcast %580 : vector<14x1xf32> to vector<14x32xf32>
    %702 = vector.broadcast %700 : vector<1x32xf32> to vector<14x32xf32>
    %703 = arith.mulf %701, %702 : vector<14x32xf32>
    %704 = arith.addf %699, %703 : vector<14x32xf32>
    %705 = arith.maximumf %530, %704 : vector<14x32xf32>
    %c0_181 = arith.constant 0 : index
    %c0_182 = arith.constant 0 : index
    %706 = vector.load %arg5[%c0_181, %c0_182] : memref<1x32xf32, #tpu.memory_space<vmem>>, vector<1x32xf32>
    %707 = vector.broadcast %706 : vector<1x32xf32> to vector<14x32xf32>
    %708 = arith.addf %705, %707 : vector<14x32xf32>
    %cst = arith.constant 0.000000e+00 : f32
    %709 = vector.broadcast %cst : f32 to vector<14x32xf32>
    %710 = arith.maximumf %708, %709 : vector<14x32xf32>
    %c0_183 = arith.constant 0 : index
    %c0_184 = arith.constant 0 : index
    %c0_185 = arith.constant 0 : index
    %c0_186 = arith.constant 0 : index
    %711 = vector.load %arg6[%c0_183, %c0_184, %c0_185, %c0_186] : memref<1x1x14x32xf32, #tpu.memory_space<vmem>>, vector<1x1x14x32xf32>
    %712 = vector.shape_cast %711 : vector<1x1x14x32xf32> to vector<14x32xf32>
    %713 = vector.shape_cast %710 : vector<14x32xf32> to vector<1x1x14x32xf32>
    tpu.vector_store %arg6[%c0_183, %c0_184, %c0_185, %c0_186], %713 {strides = array<i32>} : memref<1x1x14x32xf32, #tpu.memory_space<vmem>>, vector<1x1x14x32xf32>,
    return
  }
  func.func @transform_0(%arg0: i32, %arg1: i32) -> (i32, i32, i32, i32) {
    %c0_i32 = arith.constant 0 : i32
    %c0_i32_0 = arith.constant 0 : i32
    %c0_i32_1 = arith.constant 0 : i32
    %c0_i32_2 = arith.constant 0 : i32
    return %arg0, %c0_i32, %c0_i32_0, %c0_i32_1 : i32, i32, i32, i32
  }
  func.func @transform_1(%arg0: i32, %arg1: i32) -> (i32, i32, i32, i32) {
    %c0_i32 = arith.constant 0 : i32
    %c0_i32_0 = arith.constant 0 : i32
    %c0_i32_1 = arith.constant 0 : i32
    %c0_i32_2 = arith.constant 0 : i32
    return %arg0, %c0_i32, %c0_i32_0, %c0_i32_1 : i32, i32, i32, i32
  }
  func.func @transform_2(%arg0: i32, %arg1: i32) -> (i32, i32) {
    %c0_i32 = arith.constant 0 : i32
    %c0_i32_0 = arith.constant 0 : i32
    %c0_i32_1 = arith.constant 0 : i32
    return %c0_i32, %c0_i32_0 : i32, i32
  }
  func.func @transform_3(%arg0: i32, %arg1: i32) -> (i32, i32) {
    %c0_i32 = arith.constant 0 : i32
    %c0_i32_0 = arith.constant 0 : i32
    %c0_i32_1 = arith.constant 0 : i32
    return %c0_i32, %c0_i32_0 : i32, i32
  }
  func.func @transform_4(%arg0: i32, %arg1: i32) -> (i32, i32, i32, i32) {
    %c0_i32 = arith.constant 0 : i32
    %c0_i32_0 = arith.constant 0 : i32
    %c0_i32_1 = arith.constant 0 : i32
    return %arg0, %arg1, %c0_i32, %c0_i32_0 : i32, i32, i32, i32
  }
}

module attributes {stable_mosaic.version = 11 : i64} {
  func.func @_conv5x5_relu_pool_kernel(%arg0: i32, %arg1: i32, %arg2: memref<1x18x9x32xf32, #tpu.memory_space<vmem>>, %arg3: memref<1x18x9x32xf32, #tpu.memory_space<vmem>>, %arg4: memref<800x64xf32, #tpu.memory_space<vmem>>, %arg5: memref<1x64xf32, #tpu.memory_space<vmem>>, %arg6: memref<1x1x7x64xf32, #tpu.memory_space<vmem>>) attributes {dimension_semantics = [#tpu.dimension_semantics<parallel>, #tpu.dimension_semantics<arbitrary>], iteration_bounds = array<i64: 2, 7>, scalar_prefetch = 0 : i64, scratch_operands = 0 : i64, tpu.core_type = #tpu.core_type<tc>, window_params = [{transform_indices = @transform_0, window_bounds = array<i64: 1, 18, 9, 32>}, {transform_indices = @transform_1, window_bounds = array<i64: 1, 18, 9, 32>}, {pipeline_mode = #tpu.pipeline_mode<synchronous>, transform_indices = @transform_2, window_bounds = array<i64: 800, 64>}, {pipeline_mode = #tpu.pipeline_mode<synchronous>, transform_indices = @transform_3, window_bounds = array<i64: 1, 64>}, {transform_indices = @transform_4, window_bounds = array<i64: 1, 1, 7, 64>}]} {
    %c2_i32 = arith.constant 2 : i32
    %0 = arith.muli %c2_i32, %arg1 : i32
    %c0 = arith.constant 0 : index
    %1 = arith.index_cast %0 : i32 to index
    %c0_0 = arith.constant 0 : index
    %c0_1 = arith.constant 0 : index
    %2 = vector.load %arg2[%c0, %1, %c0_0, %c0_1] : memref<1x18x9x32xf32, #tpu.memory_space<vmem>>, vector<1x6x9x32xf32>
    %3 = vector.shape_cast %2 : vector<1x6x9x32xf32> to vector<6x9x32xf32>
    %c0_2 = arith.constant 0 : index
    %4 = arith.index_cast %0 : i32 to index
    %c0_3 = arith.constant 0 : index
    %c0_4 = arith.constant 0 : index
    %5 = vector.load %arg3[%c0_2, %4, %c0_3, %c0_4] : memref<1x18x9x32xf32, #tpu.memory_space<vmem>>, vector<1x6x9x32xf32>
    %6 = vector.shape_cast %5 : vector<1x6x9x32xf32> to vector<6x9x32xf32>
    %7 = vector.extract_strided_slice %3 {offsets = [0, 0, 0], sizes = [1, 7, 32], strides = [1, 1, 1]} : vector<6x9x32xf32> to vector<1x7x32xf32>
    %8 = vector.shape_cast %7 : vector<1x7x32xf32> to vector<7x32xf32>
    %9 = vector.extract_strided_slice %6 {offsets = [0, 0, 0], sizes = [1, 7, 32], strides = [1, 1, 1]} : vector<6x9x32xf32> to vector<1x7x32xf32>
    %10 = vector.shape_cast %9 : vector<1x7x32xf32> to vector<7x32xf32>
    %11 = vector.extract_strided_slice %3 {offsets = [0, 1, 0], sizes = [1, 7, 32], strides = [1, 1, 1]} : vector<6x9x32xf32> to vector<1x7x32xf32>
    %12 = vector.shape_cast %11 : vector<1x7x32xf32> to vector<7x32xf32>
    %13 = vector.extract_strided_slice %6 {offsets = [0, 1, 0], sizes = [1, 7, 32], strides = [1, 1, 1]} : vector<6x9x32xf32> to vector<1x7x32xf32>
    %14 = vector.shape_cast %13 : vector<1x7x32xf32> to vector<7x32xf32>
    %15 = vector.extract_strided_slice %3 {offsets = [0, 2, 0], sizes = [1, 7, 32], strides = [1, 1, 1]} : vector<6x9x32xf32> to vector<1x7x32xf32>
    %16 = vector.shape_cast %15 : vector<1x7x32xf32> to vector<7x32xf32>
    %17 = vector.extract_strided_slice %3 {offsets = [1, 0, 0], sizes = [1, 7, 32], strides = [1, 1, 1]} : vector<6x9x32xf32> to vector<1x7x32xf32>
    %18 = vector.shape_cast %17 : vector<1x7x32xf32> to vector<7x32xf32>
    %19 = vector.extract_strided_slice %6 {offsets = [1, 0, 0], sizes = [1, 7, 32], strides = [1, 1, 1]} : vector<6x9x32xf32> to vector<1x7x32xf32>
    %20 = vector.shape_cast %19 : vector<1x7x32xf32> to vector<7x32xf32>
    %21 = vector.extract_strided_slice %3 {offsets = [1, 1, 0], sizes = [1, 7, 32], strides = [1, 1, 1]} : vector<6x9x32xf32> to vector<1x7x32xf32>
    %22 = vector.shape_cast %21 : vector<1x7x32xf32> to vector<7x32xf32>
    %23 = vector.extract_strided_slice %6 {offsets = [1, 1, 0], sizes = [1, 7, 32], strides = [1, 1, 1]} : vector<6x9x32xf32> to vector<1x7x32xf32>
    %24 = vector.shape_cast %23 : vector<1x7x32xf32> to vector<7x32xf32>
    %25 = vector.extract_strided_slice %3 {offsets = [1, 2, 0], sizes = [1, 7, 32], strides = [1, 1, 1]} : vector<6x9x32xf32> to vector<1x7x32xf32>
    %26 = vector.shape_cast %25 : vector<1x7x32xf32> to vector<7x32xf32>
    %27 = vector.extract_strided_slice %3 {offsets = [2, 0, 0], sizes = [1, 7, 32], strides = [1, 1, 1]} : vector<6x9x32xf32> to vector<1x7x32xf32>
    %28 = vector.shape_cast %27 : vector<1x7x32xf32> to vector<7x32xf32>
    %29 = vector.extract_strided_slice %6 {offsets = [2, 0, 0], sizes = [1, 7, 32], strides = [1, 1, 1]} : vector<6x9x32xf32> to vector<1x7x32xf32>
    %30 = vector.shape_cast %29 : vector<1x7x32xf32> to vector<7x32xf32>
    %31 = vector.extract_strided_slice %3 {offsets = [2, 1, 0], sizes = [1, 7, 32], strides = [1, 1, 1]} : vector<6x9x32xf32> to vector<1x7x32xf32>
    %32 = vector.shape_cast %31 : vector<1x7x32xf32> to vector<7x32xf32>
    %33 = vector.extract_strided_slice %6 {offsets = [2, 1, 0], sizes = [1, 7, 32], strides = [1, 1, 1]} : vector<6x9x32xf32> to vector<1x7x32xf32>
    %34 = vector.shape_cast %33 : vector<1x7x32xf32> to vector<7x32xf32>
    %35 = vector.extract_strided_slice %3 {offsets = [2, 2, 0], sizes = [1, 7, 32], strides = [1, 1, 1]} : vector<6x9x32xf32> to vector<1x7x32xf32>
    %36 = vector.shape_cast %35 : vector<1x7x32xf32> to vector<7x32xf32>
    %37 = vector.extract_strided_slice %3 {offsets = [3, 0, 0], sizes = [1, 7, 32], strides = [1, 1, 1]} : vector<6x9x32xf32> to vector<1x7x32xf32>
    %38 = vector.shape_cast %37 : vector<1x7x32xf32> to vector<7x32xf32>
    %39 = vector.extract_strided_slice %6 {offsets = [3, 0, 0], sizes = [1, 7, 32], strides = [1, 1, 1]} : vector<6x9x32xf32> to vector<1x7x32xf32>
    %40 = vector.shape_cast %39 : vector<1x7x32xf32> to vector<7x32xf32>
    %41 = vector.extract_strided_slice %3 {offsets = [3, 1, 0], sizes = [1, 7, 32], strides = [1, 1, 1]} : vector<6x9x32xf32> to vector<1x7x32xf32>
    %42 = vector.shape_cast %41 : vector<1x7x32xf32> to vector<7x32xf32>
    %43 = vector.extract_strided_slice %6 {offsets = [3, 1, 0], sizes = [1, 7, 32], strides = [1, 1, 1]} : vector<6x9x32xf32> to vector<1x7x32xf32>
    %44 = vector.shape_cast %43 : vector<1x7x32xf32> to vector<7x32xf32>
    %45 = vector.extract_strided_slice %3 {offsets = [3, 2, 0], sizes = [1, 7, 32], strides = [1, 1, 1]} : vector<6x9x32xf32> to vector<1x7x32xf32>
    %46 = vector.shape_cast %45 : vector<1x7x32xf32> to vector<7x32xf32>
    %47 = vector.extract_strided_slice %3 {offsets = [4, 0, 0], sizes = [1, 7, 32], strides = [1, 1, 1]} : vector<6x9x32xf32> to vector<1x7x32xf32>
    %48 = vector.shape_cast %47 : vector<1x7x32xf32> to vector<7x32xf32>
    %49 = vector.extract_strided_slice %6 {offsets = [4, 0, 0], sizes = [1, 7, 32], strides = [1, 1, 1]} : vector<6x9x32xf32> to vector<1x7x32xf32>
    %50 = vector.shape_cast %49 : vector<1x7x32xf32> to vector<7x32xf32>
    %51 = vector.extract_strided_slice %3 {offsets = [4, 1, 0], sizes = [1, 7, 32], strides = [1, 1, 1]} : vector<6x9x32xf32> to vector<1x7x32xf32>
    %52 = vector.shape_cast %51 : vector<1x7x32xf32> to vector<7x32xf32>
    %53 = vector.extract_strided_slice %6 {offsets = [4, 1, 0], sizes = [1, 7, 32], strides = [1, 1, 1]} : vector<6x9x32xf32> to vector<1x7x32xf32>
    %54 = vector.shape_cast %53 : vector<1x7x32xf32> to vector<7x32xf32>
    %55 = vector.extract_strided_slice %3 {offsets = [4, 2, 0], sizes = [1, 7, 32], strides = [1, 1, 1]} : vector<6x9x32xf32> to vector<1x7x32xf32>
    %56 = vector.shape_cast %55 : vector<1x7x32xf32> to vector<7x32xf32>
    %57 = tpu.concatenate %8, %10, %12, %14, %16, %18, %20, %22, %24, %26, %28, %30, %32, %34, %36, %38 in 1 : vector<7x32xf32>, vector<7x32xf32>, vector<7x32xf32>, vector<7x32xf32>, vector<7x32xf32>, vector<7x32xf32>, vector<7x32xf32>, vector<7x32xf32>, vector<7x32xf32>, vector<7x32xf32>, vector<7x32xf32>, vector<7x32xf32>, vector<7x32xf32>, vector<7x32xf32>, vector<7x32xf32>, vector<7x32xf32> -> vector<7x512xf32>
    %58 = tpu.concatenate %40, %42, %44, %46, %48, %50, %52, %54, %56 in 1 : vector<7x32xf32>, vector<7x32xf32>, vector<7x32xf32>, vector<7x32xf32>, vector<7x32xf32>, vector<7x32xf32>, vector<7x32xf32>, vector<7x32xf32>, vector<7x32xf32> -> vector<7x288xf32>
    %59 = tpu.concatenate %57, %58 in 1 : vector<7x512xf32>, vector<7x288xf32> -> vector<7x800xf32>
    %c0_5 = arith.constant 0 : index
    %c0_6 = arith.constant 0 : index
    %60 = vector.load %arg4[%c0_5, %c0_6] : memref<800x64xf32, #tpu.memory_space<vmem>>, vector<800x64xf32>
    %cst = arith.constant dense<0.000000e+00> : vector<7x64xf32>
    %61 = tpu.matmul %59, %60, %cst {dimension_numbers = #tpu.dot_dimension_numbers<[1], [0], [0], [1], [0, 0, 1, 1], [], []>} : vector<7x800xf32>, vector<800x64xf32>, vector<7x64xf32> -> vector<7x64xf32>
    %62 = vector.extract_strided_slice %6 {offsets = [0, 0, 0], sizes = [1, 7, 32], strides = [1, 1, 1]} : vector<6x9x32xf32> to vector<1x7x32xf32>
    %63 = vector.shape_cast %62 : vector<1x7x32xf32> to vector<7x32xf32>
    %64 = vector.extract_strided_slice %3 {offsets = [0, 1, 0], sizes = [1, 7, 32], strides = [1, 1, 1]} : vector<6x9x32xf32> to vector<1x7x32xf32>
    %65 = vector.shape_cast %64 : vector<1x7x32xf32> to vector<7x32xf32>
    %66 = vector.extract_strided_slice %6 {offsets = [0, 1, 0], sizes = [1, 7, 32], strides = [1, 1, 1]} : vector<6x9x32xf32> to vector<1x7x32xf32>
    %67 = vector.shape_cast %66 : vector<1x7x32xf32> to vector<7x32xf32>
    %68 = vector.extract_strided_slice %3 {offsets = [0, 2, 0], sizes = [1, 7, 32], strides = [1, 1, 1]} : vector<6x9x32xf32> to vector<1x7x32xf32>
    %69 = vector.shape_cast %68 : vector<1x7x32xf32> to vector<7x32xf32>
    %70 = vector.extract_strided_slice %6 {offsets = [0, 2, 0], sizes = [1, 7, 32], strides = [1, 1, 1]} : vector<6x9x32xf32> to vector<1x7x32xf32>
    %71 = vector.shape_cast %70 : vector<1x7x32xf32> to vector<7x32xf32>
    %72 = vector.extract_strided_slice %6 {offsets = [1, 0, 0], sizes = [1, 7, 32], strides = [1, 1, 1]} : vector<6x9x32xf32> to vector<1x7x32xf32>
    %73 = vector.shape_cast %72 : vector<1x7x32xf32> to vector<7x32xf32>
    %74 = vector.extract_strided_slice %3 {offsets = [1, 1, 0], sizes = [1, 7, 32], strides = [1, 1, 1]} : vector<6x9x32xf32> to vector<1x7x32xf32>
    %75 = vector.shape_cast %74 : vector<1x7x32xf32> to vector<7x32xf32>
    %76 = vector.extract_strided_slice %6 {offsets = [1, 1, 0], sizes = [1, 7, 32], strides = [1, 1, 1]} : vector<6x9x32xf32> to vector<1x7x32xf32>
    %77 = vector.shape_cast %76 : vector<1x7x32xf32> to vector<7x32xf32>
    %78 = vector.extract_strided_slice %3 {offsets = [1, 2, 0], sizes = [1, 7, 32], strides = [1, 1, 1]} : vector<6x9x32xf32> to vector<1x7x32xf32>
    %79 = vector.shape_cast %78 : vector<1x7x32xf32> to vector<7x32xf32>
    %80 = vector.extract_strided_slice %6 {offsets = [1, 2, 0], sizes = [1, 7, 32], strides = [1, 1, 1]} : vector<6x9x32xf32> to vector<1x7x32xf32>
    %81 = vector.shape_cast %80 : vector<1x7x32xf32> to vector<7x32xf32>
    %82 = vector.extract_strided_slice %6 {offsets = [2, 0, 0], sizes = [1, 7, 32], strides = [1, 1, 1]} : vector<6x9x32xf32> to vector<1x7x32xf32>
    %83 = vector.shape_cast %82 : vector<1x7x32xf32> to vector<7x32xf32>
    %84 = vector.extract_strided_slice %3 {offsets = [2, 1, 0], sizes = [1, 7, 32], strides = [1, 1, 1]} : vector<6x9x32xf32> to vector<1x7x32xf32>
    %85 = vector.shape_cast %84 : vector<1x7x32xf32> to vector<7x32xf32>
    %86 = vector.extract_strided_slice %6 {offsets = [2, 1, 0], sizes = [1, 7, 32], strides = [1, 1, 1]} : vector<6x9x32xf32> to vector<1x7x32xf32>
    %87 = vector.shape_cast %86 : vector<1x7x32xf32> to vector<7x32xf32>
    %88 = vector.extract_strided_slice %3 {offsets = [2, 2, 0], sizes = [1, 7, 32], strides = [1, 1, 1]} : vector<6x9x32xf32> to vector<1x7x32xf32>
    %89 = vector.shape_cast %88 : vector<1x7x32xf32> to vector<7x32xf32>
    %90 = vector.extract_strided_slice %6 {offsets = [2, 2, 0], sizes = [1, 7, 32], strides = [1, 1, 1]} : vector<6x9x32xf32> to vector<1x7x32xf32>
    %91 = vector.shape_cast %90 : vector<1x7x32xf32> to vector<7x32xf32>
    %92 = vector.extract_strided_slice %6 {offsets = [3, 0, 0], sizes = [1, 7, 32], strides = [1, 1, 1]} : vector<6x9x32xf32> to vector<1x7x32xf32>
    %93 = vector.shape_cast %92 : vector<1x7x32xf32> to vector<7x32xf32>
    %94 = vector.extract_strided_slice %3 {offsets = [3, 1, 0], sizes = [1, 7, 32], strides = [1, 1, 1]} : vector<6x9x32xf32> to vector<1x7x32xf32>
    %95 = vector.shape_cast %94 : vector<1x7x32xf32> to vector<7x32xf32>
    %96 = vector.extract_strided_slice %6 {offsets = [3, 1, 0], sizes = [1, 7, 32], strides = [1, 1, 1]} : vector<6x9x32xf32> to vector<1x7x32xf32>
    %97 = vector.shape_cast %96 : vector<1x7x32xf32> to vector<7x32xf32>
    %98 = vector.extract_strided_slice %3 {offsets = [3, 2, 0], sizes = [1, 7, 32], strides = [1, 1, 1]} : vector<6x9x32xf32> to vector<1x7x32xf32>
    %99 = vector.shape_cast %98 : vector<1x7x32xf32> to vector<7x32xf32>
    %100 = vector.extract_strided_slice %6 {offsets = [3, 2, 0], sizes = [1, 7, 32], strides = [1, 1, 1]} : vector<6x9x32xf32> to vector<1x7x32xf32>
    %101 = vector.shape_cast %100 : vector<1x7x32xf32> to vector<7x32xf32>
    %102 = vector.extract_strided_slice %6 {offsets = [4, 0, 0], sizes = [1, 7, 32], strides = [1, 1, 1]} : vector<6x9x32xf32> to vector<1x7x32xf32>
    %103 = vector.shape_cast %102 : vector<1x7x32xf32> to vector<7x32xf32>
    %104 = vector.extract_strided_slice %3 {offsets = [4, 1, 0], sizes = [1, 7, 32], strides = [1, 1, 1]} : vector<6x9x32xf32> to vector<1x7x32xf32>
    %105 = vector.shape_cast %104 : vector<1x7x32xf32> to vector<7x32xf32>
    %106 = vector.extract_strided_slice %6 {offsets = [4, 1, 0], sizes = [1, 7, 32], strides = [1, 1, 1]} : vector<6x9x32xf32> to vector<1x7x32xf32>
    %107 = vector.shape_cast %106 : vector<1x7x32xf32> to vector<7x32xf32>
    %108 = vector.extract_strided_slice %3 {offsets = [4, 2, 0], sizes = [1, 7, 32], strides = [1, 1, 1]} : vector<6x9x32xf32> to vector<1x7x32xf32>
    %109 = vector.shape_cast %108 : vector<1x7x32xf32> to vector<7x32xf32>
    %110 = vector.extract_strided_slice %6 {offsets = [4, 2, 0], sizes = [1, 7, 32], strides = [1, 1, 1]} : vector<6x9x32xf32> to vector<1x7x32xf32>
    %111 = vector.shape_cast %110 : vector<1x7x32xf32> to vector<7x32xf32>
    %112 = tpu.concatenate %63, %65, %67, %69, %71, %73, %75, %77, %79, %81, %83, %85, %87, %89, %91, %93 in 1 : vector<7x32xf32>, vector<7x32xf32>, vector<7x32xf32>, vector<7x32xf32>, vector<7x32xf32>, vector<7x32xf32>, vector<7x32xf32>, vector<7x32xf32>, vector<7x32xf32>, vector<7x32xf32>, vector<7x32xf32>, vector<7x32xf32>, vector<7x32xf32>, vector<7x32xf32>, vector<7x32xf32>, vector<7x32xf32> -> vector<7x512xf32>
    %113 = tpu.concatenate %95, %97, %99, %101, %103, %105, %107, %109, %111 in 1 : vector<7x32xf32>, vector<7x32xf32>, vector<7x32xf32>, vector<7x32xf32>, vector<7x32xf32>, vector<7x32xf32>, vector<7x32xf32>, vector<7x32xf32>, vector<7x32xf32> -> vector<7x288xf32>
    %114 = tpu.concatenate %112, %113 in 1 : vector<7x512xf32>, vector<7x288xf32> -> vector<7x800xf32>
    %c0_7 = arith.constant 0 : index
    %c0_8 = arith.constant 0 : index
    %115 = vector.load %arg4[%c0_7, %c0_8] : memref<800x64xf32, #tpu.memory_space<vmem>>, vector<800x64xf32>
    %cst_9 = arith.constant dense<0.000000e+00> : vector<7x64xf32>
    %116 = tpu.matmul %114, %115, %cst_9 {dimension_numbers = #tpu.dot_dimension_numbers<[1], [0], [0], [1], [0, 0, 1, 1], [], []>} : vector<7x800xf32>, vector<800x64xf32>, vector<7x64xf32> -> vector<7x64xf32>
    %117 = arith.maximumf %61, %116 : vector<7x64xf32>
    %118 = vector.extract_strided_slice %3 {offsets = [1, 0, 0], sizes = [1, 7, 32], strides = [1, 1, 1]} : vector<6x9x32xf32> to vector<1x7x32xf32>
    %119 = vector.shape_cast %118 : vector<1x7x32xf32> to vector<7x32xf32>
    %120 = vector.extract_strided_slice %6 {offsets = [1, 0, 0], sizes = [1, 7, 32], strides = [1, 1, 1]} : vector<6x9x32xf32> to vector<1x7x32xf32>
    %121 = vector.shape_cast %120 : vector<1x7x32xf32> to vector<7x32xf32>
    %122 = vector.extract_strided_slice %3 {offsets = [1, 1, 0], sizes = [1, 7, 32], strides = [1, 1, 1]} : vector<6x9x32xf32> to vector<1x7x32xf32>
    %123 = vector.shape_cast %122 : vector<1x7x32xf32> to vector<7x32xf32>
    %124 = vector.extract_strided_slice %6 {offsets = [1, 1, 0], sizes = [1, 7, 32], strides = [1, 1, 1]} : vector<6x9x32xf32> to vector<1x7x32xf32>
    %125 = vector.shape_cast %124 : vector<1x7x32xf32> to vector<7x32xf32>
    %126 = vector.extract_strided_slice %3 {offsets = [1, 2, 0], sizes = [1, 7, 32], strides = [1, 1, 1]} : vector<6x9x32xf32> to vector<1x7x32xf32>
    %127 = vector.shape_cast %126 : vector<1x7x32xf32> to vector<7x32xf32>
    %128 = vector.extract_strided_slice %3 {offsets = [2, 0, 0], sizes = [1, 7, 32], strides = [1, 1, 1]} : vector<6x9x32xf32> to vector<1x7x32xf32>
    %129 = vector.shape_cast %128 : vector<1x7x32xf32> to vector<7x32xf32>
    %130 = vector.extract_strided_slice %6 {offsets = [2, 0, 0], sizes = [1, 7, 32], strides = [1, 1, 1]} : vector<6x9x32xf32> to vector<1x7x32xf32>
    %131 = vector.shape_cast %130 : vector<1x7x32xf32> to vector<7x32xf32>
    %132 = vector.extract_strided_slice %3 {offsets = [2, 1, 0], sizes = [1, 7, 32], strides = [1, 1, 1]} : vector<6x9x32xf32> to vector<1x7x32xf32>
    %133 = vector.shape_cast %132 : vector<1x7x32xf32> to vector<7x32xf32>
    %134 = vector.extract_strided_slice %6 {offsets = [2, 1, 0], sizes = [1, 7, 32], strides = [1, 1, 1]} : vector<6x9x32xf32> to vector<1x7x32xf32>
    %135 = vector.shape_cast %134 : vector<1x7x32xf32> to vector<7x32xf32>
    %136 = vector.extract_strided_slice %3 {offsets = [2, 2, 0], sizes = [1, 7, 32], strides = [1, 1, 1]} : vector<6x9x32xf32> to vector<1x7x32xf32>
    %137 = vector.shape_cast %136 : vector<1x7x32xf32> to vector<7x32xf32>
    %138 = vector.extract_strided_slice %3 {offsets = [3, 0, 0], sizes = [1, 7, 32], strides = [1, 1, 1]} : vector<6x9x32xf32> to vector<1x7x32xf32>
    %139 = vector.shape_cast %138 : vector<1x7x32xf32> to vector<7x32xf32>
    %140 = vector.extract_strided_slice %6 {offsets = [3, 0, 0], sizes = [1, 7, 32], strides = [1, 1, 1]} : vector<6x9x32xf32> to vector<1x7x32xf32>
    %141 = vector.shape_cast %140 : vector<1x7x32xf32> to vector<7x32xf32>
    %142 = vector.extract_strided_slice %3 {offsets = [3, 1, 0], sizes = [1, 7, 32], strides = [1, 1, 1]} : vector<6x9x32xf32> to vector<1x7x32xf32>
    %143 = vector.shape_cast %142 : vector<1x7x32xf32> to vector<7x32xf32>
    %144 = vector.extract_strided_slice %6 {offsets = [3, 1, 0], sizes = [1, 7, 32], strides = [1, 1, 1]} : vector<6x9x32xf32> to vector<1x7x32xf32>
    %145 = vector.shape_cast %144 : vector<1x7x32xf32> to vector<7x32xf32>
    %146 = vector.extract_strided_slice %3 {offsets = [3, 2, 0], sizes = [1, 7, 32], strides = [1, 1, 1]} : vector<6x9x32xf32> to vector<1x7x32xf32>
    %147 = vector.shape_cast %146 : vector<1x7x32xf32> to vector<7x32xf32>
    %148 = vector.extract_strided_slice %3 {offsets = [4, 0, 0], sizes = [1, 7, 32], strides = [1, 1, 1]} : vector<6x9x32xf32> to vector<1x7x32xf32>
    %149 = vector.shape_cast %148 : vector<1x7x32xf32> to vector<7x32xf32>
    %150 = vector.extract_strided_slice %6 {offsets = [4, 0, 0], sizes = [1, 7, 32], strides = [1, 1, 1]} : vector<6x9x32xf32> to vector<1x7x32xf32>
    %151 = vector.shape_cast %150 : vector<1x7x32xf32> to vector<7x32xf32>
    %152 = vector.extract_strided_slice %3 {offsets = [4, 1, 0], sizes = [1, 7, 32], strides = [1, 1, 1]} : vector<6x9x32xf32> to vector<1x7x32xf32>
    %153 = vector.shape_cast %152 : vector<1x7x32xf32> to vector<7x32xf32>
    %154 = vector.extract_strided_slice %6 {offsets = [4, 1, 0], sizes = [1, 7, 32], strides = [1, 1, 1]} : vector<6x9x32xf32> to vector<1x7x32xf32>
    %155 = vector.shape_cast %154 : vector<1x7x32xf32> to vector<7x32xf32>
    %156 = vector.extract_strided_slice %3 {offsets = [4, 2, 0], sizes = [1, 7, 32], strides = [1, 1, 1]} : vector<6x9x32xf32> to vector<1x7x32xf32>
    %157 = vector.shape_cast %156 : vector<1x7x32xf32> to vector<7x32xf32>
    %158 = vector.extract_strided_slice %3 {offsets = [5, 0, 0], sizes = [1, 7, 32], strides = [1, 1, 1]} : vector<6x9x32xf32> to vector<1x7x32xf32>
    %159 = vector.shape_cast %158 : vector<1x7x32xf32> to vector<7x32xf32>
    %160 = vector.extract_strided_slice %6 {offsets = [5, 0, 0], sizes = [1, 7, 32], strides = [1, 1, 1]} : vector<6x9x32xf32> to vector<1x7x32xf32>
    %161 = vector.shape_cast %160 : vector<1x7x32xf32> to vector<7x32xf32>
    %162 = vector.extract_strided_slice %3 {offsets = [5, 1, 0], sizes = [1, 7, 32], strides = [1, 1, 1]} : vector<6x9x32xf32> to vector<1x7x32xf32>
    %163 = vector.shape_cast %162 : vector<1x7x32xf32> to vector<7x32xf32>
    %164 = vector.extract_strided_slice %6 {offsets = [5, 1, 0], sizes = [1, 7, 32], strides = [1, 1, 1]} : vector<6x9x32xf32> to vector<1x7x32xf32>
    %165 = vector.shape_cast %164 : vector<1x7x32xf32> to vector<7x32xf32>
    %166 = vector.extract_strided_slice %3 {offsets = [5, 2, 0], sizes = [1, 7, 32], strides = [1, 1, 1]} : vector<6x9x32xf32> to vector<1x7x32xf32>
    %167 = vector.shape_cast %166 : vector<1x7x32xf32> to vector<7x32xf32>
    %168 = tpu.concatenate %119, %121, %123, %125, %127, %129, %131, %133, %135, %137, %139, %141, %143, %145, %147, %149 in 1 : vector<7x32xf32>, vector<7x32xf32>, vector<7x32xf32>, vector<7x32xf32>, vector<7x32xf32>, vector<7x32xf32>, vector<7x32xf32>, vector<7x32xf32>, vector<7x32xf32>, vector<7x32xf32>, vector<7x32xf32>, vector<7x32xf32>, vector<7x32xf32>, vector<7x32xf32>, vector<7x32xf32>, vector<7x32xf32> -> vector<7x512xf32>
    %169 = tpu.concatenate %151, %153, %155, %157, %159, %161, %163, %165, %167 in 1 : vector<7x32xf32>, vector<7x32xf32>, vector<7x32xf32>, vector<7x32xf32>, vector<7x32xf32>, vector<7x32xf32>, vector<7x32xf32>, vector<7x32xf32>, vector<7x32xf32> -> vector<7x288xf32>
    %170 = tpu.concatenate %168, %169 in 1 : vector<7x512xf32>, vector<7x288xf32> -> vector<7x800xf32>
    %c0_10 = arith.constant 0 : index
    %c0_11 = arith.constant 0 : index
    %171 = vector.load %arg4[%c0_10, %c0_11] : memref<800x64xf32, #tpu.memory_space<vmem>>, vector<800x64xf32>
    %cst_12 = arith.constant dense<0.000000e+00> : vector<7x64xf32>
    %172 = tpu.matmul %170, %171, %cst_12 {dimension_numbers = #tpu.dot_dimension_numbers<[1], [0], [0], [1], [0, 0, 1, 1], [], []>} : vector<7x800xf32>, vector<800x64xf32>, vector<7x64xf32> -> vector<7x64xf32>
    %173 = arith.maximumf %117, %172 : vector<7x64xf32>
    %174 = vector.extract_strided_slice %6 {offsets = [1, 0, 0], sizes = [1, 7, 32], strides = [1, 1, 1]} : vector<6x9x32xf32> to vector<1x7x32xf32>
    %175 = vector.shape_cast %174 : vector<1x7x32xf32> to vector<7x32xf32>
    %176 = vector.extract_strided_slice %3 {offsets = [1, 1, 0], sizes = [1, 7, 32], strides = [1, 1, 1]} : vector<6x9x32xf32> to vector<1x7x32xf32>
    %177 = vector.shape_cast %176 : vector<1x7x32xf32> to vector<7x32xf32>
    %178 = vector.extract_strided_slice %6 {offsets = [1, 1, 0], sizes = [1, 7, 32], strides = [1, 1, 1]} : vector<6x9x32xf32> to vector<1x7x32xf32>
    %179 = vector.shape_cast %178 : vector<1x7x32xf32> to vector<7x32xf32>
    %180 = vector.extract_strided_slice %3 {offsets = [1, 2, 0], sizes = [1, 7, 32], strides = [1, 1, 1]} : vector<6x9x32xf32> to vector<1x7x32xf32>
    %181 = vector.shape_cast %180 : vector<1x7x32xf32> to vector<7x32xf32>
    %182 = vector.extract_strided_slice %6 {offsets = [1, 2, 0], sizes = [1, 7, 32], strides = [1, 1, 1]} : vector<6x9x32xf32> to vector<1x7x32xf32>
    %183 = vector.shape_cast %182 : vector<1x7x32xf32> to vector<7x32xf32>
    %184 = vector.extract_strided_slice %6 {offsets = [2, 0, 0], sizes = [1, 7, 32], strides = [1, 1, 1]} : vector<6x9x32xf32> to vector<1x7x32xf32>
    %185 = vector.shape_cast %184 : vector<1x7x32xf32> to vector<7x32xf32>
    %186 = vector.extract_strided_slice %3 {offsets = [2, 1, 0], sizes = [1, 7, 32], strides = [1, 1, 1]} : vector<6x9x32xf32> to vector<1x7x32xf32>
    %187 = vector.shape_cast %186 : vector<1x7x32xf32> to vector<7x32xf32>
    %188 = vector.extract_strided_slice %6 {offsets = [2, 1, 0], sizes = [1, 7, 32], strides = [1, 1, 1]} : vector<6x9x32xf32> to vector<1x7x32xf32>
    %189 = vector.shape_cast %188 : vector<1x7x32xf32> to vector<7x32xf32>
    %190 = vector.extract_strided_slice %3 {offsets = [2, 2, 0], sizes = [1, 7, 32], strides = [1, 1, 1]} : vector<6x9x32xf32> to vector<1x7x32xf32>
    %191 = vector.shape_cast %190 : vector<1x7x32xf32> to vector<7x32xf32>
    %192 = vector.extract_strided_slice %6 {offsets = [2, 2, 0], sizes = [1, 7, 32], strides = [1, 1, 1]} : vector<6x9x32xf32> to vector<1x7x32xf32>
    %193 = vector.shape_cast %192 : vector<1x7x32xf32> to vector<7x32xf32>
    %194 = vector.extract_strided_slice %6 {offsets = [3, 0, 0], sizes = [1, 7, 32], strides = [1, 1, 1]} : vector<6x9x32xf32> to vector<1x7x32xf32>
    %195 = vector.shape_cast %194 : vector<1x7x32xf32> to vector<7x32xf32>
    %196 = vector.extract_strided_slice %3 {offsets = [3, 1, 0], sizes = [1, 7, 32], strides = [1, 1, 1]} : vector<6x9x32xf32> to vector<1x7x32xf32>
    %197 = vector.shape_cast %196 : vector<1x7x32xf32> to vector<7x32xf32>
    %198 = vector.extract_strided_slice %6 {offsets = [3, 1, 0], sizes = [1, 7, 32], strides = [1, 1, 1]} : vector<6x9x32xf32> to vector<1x7x32xf32>
    %199 = vector.shape_cast %198 : vector<1x7x32xf32> to vector<7x32xf32>
    %200 = vector.extract_strided_slice %3 {offsets = [3, 2, 0], sizes = [1, 7, 32], strides = [1, 1, 1]} : vector<6x9x32xf32> to vector<1x7x32xf32>
    %201 = vector.shape_cast %200 : vector<1x7x32xf32> to vector<7x32xf32>
    %202 = vector.extract_strided_slice %6 {offsets = [3, 2, 0], sizes = [1, 7, 32], strides = [1, 1, 1]} : vector<6x9x32xf32> to vector<1x7x32xf32>
    %203 = vector.shape_cast %202 : vector<1x7x32xf32> to vector<7x32xf32>
    %204 = vector.extract_strided_slice %6 {offsets = [4, 0, 0], sizes = [1, 7, 32], strides = [1, 1, 1]} : vector<6x9x32xf32> to vector<1x7x32xf32>
    %205 = vector.shape_cast %204 : vector<1x7x32xf32> to vector<7x32xf32>
    %206 = vector.extract_strided_slice %3 {offsets = [4, 1, 0], sizes = [1, 7, 32], strides = [1, 1, 1]} : vector<6x9x32xf32> to vector<1x7x32xf32>
    %207 = vector.shape_cast %206 : vector<1x7x32xf32> to vector<7x32xf32>
    %208 = vector.extract_strided_slice %6 {offsets = [4, 1, 0], sizes = [1, 7, 32], strides = [1, 1, 1]} : vector<6x9x32xf32> to vector<1x7x32xf32>
    %209 = vector.shape_cast %208 : vector<1x7x32xf32> to vector<7x32xf32>
    %210 = vector.extract_strided_slice %3 {offsets = [4, 2, 0], sizes = [1, 7, 32], strides = [1, 1, 1]} : vector<6x9x32xf32> to vector<1x7x32xf32>
    %211 = vector.shape_cast %210 : vector<1x7x32xf32> to vector<7x32xf32>
    %212 = vector.extract_strided_slice %6 {offsets = [4, 2, 0], sizes = [1, 7, 32], strides = [1, 1, 1]} : vector<6x9x32xf32> to vector<1x7x32xf32>
    %213 = vector.shape_cast %212 : vector<1x7x32xf32> to vector<7x32xf32>
    %214 = vector.extract_strided_slice %6 {offsets = [5, 0, 0], sizes = [1, 7, 32], strides = [1, 1, 1]} : vector<6x9x32xf32> to vector<1x7x32xf32>
    %215 = vector.shape_cast %214 : vector<1x7x32xf32> to vector<7x32xf32>
    %216 = vector.extract_strided_slice %3 {offsets = [5, 1, 0], sizes = [1, 7, 32], strides = [1, 1, 1]} : vector<6x9x32xf32> to vector<1x7x32xf32>
    %217 = vector.shape_cast %216 : vector<1x7x32xf32> to vector<7x32xf32>
    %218 = vector.extract_strided_slice %6 {offsets = [5, 1, 0], sizes = [1, 7, 32], strides = [1, 1, 1]} : vector<6x9x32xf32> to vector<1x7x32xf32>
    %219 = vector.shape_cast %218 : vector<1x7x32xf32> to vector<7x32xf32>
    %220 = vector.extract_strided_slice %3 {offsets = [5, 2, 0], sizes = [1, 7, 32], strides = [1, 1, 1]} : vector<6x9x32xf32> to vector<1x7x32xf32>
    %221 = vector.shape_cast %220 : vector<1x7x32xf32> to vector<7x32xf32>
    %222 = vector.extract_strided_slice %6 {offsets = [5, 2, 0], sizes = [1, 7, 32], strides = [1, 1, 1]} : vector<6x9x32xf32> to vector<1x7x32xf32>
    %223 = vector.shape_cast %222 : vector<1x7x32xf32> to vector<7x32xf32>
    %224 = tpu.concatenate %175, %177, %179, %181, %183, %185, %187, %189, %191, %193, %195, %197, %199, %201, %203, %205 in 1 : vector<7x32xf32>, vector<7x32xf32>, vector<7x32xf32>, vector<7x32xf32>, vector<7x32xf32>, vector<7x32xf32>, vector<7x32xf32>, vector<7x32xf32>, vector<7x32xf32>, vector<7x32xf32>, vector<7x32xf32>, vector<7x32xf32>, vector<7x32xf32>, vector<7x32xf32>, vector<7x32xf32>, vector<7x32xf32> -> vector<7x512xf32>
    %225 = tpu.concatenate %207, %209, %211, %213, %215, %217, %219, %221, %223 in 1 : vector<7x32xf32>, vector<7x32xf32>, vector<7x32xf32>, vector<7x32xf32>, vector<7x32xf32>, vector<7x32xf32>, vector<7x32xf32>, vector<7x32xf32>, vector<7x32xf32> -> vector<7x288xf32>
    %226 = tpu.concatenate %224, %225 in 1 : vector<7x512xf32>, vector<7x288xf32> -> vector<7x800xf32>
    %c0_13 = arith.constant 0 : index
    %c0_14 = arith.constant 0 : index
    %227 = vector.load %arg4[%c0_13, %c0_14] : memref<800x64xf32, #tpu.memory_space<vmem>>, vector<800x64xf32>
    %cst_15 = arith.constant dense<0.000000e+00> : vector<7x64xf32>
    %228 = tpu.matmul %226, %227, %cst_15 {dimension_numbers = #tpu.dot_dimension_numbers<[1], [0], [0], [1], [0, 0, 1, 1], [], []>} : vector<7x800xf32>, vector<800x64xf32>, vector<7x64xf32> -> vector<7x64xf32>
    %229 = arith.maximumf %173, %228 : vector<7x64xf32>
    %c0_16 = arith.constant 0 : index
    %c0_17 = arith.constant 0 : index
    %230 = vector.load %arg5[%c0_16, %c0_17] : memref<1x64xf32, #tpu.memory_space<vmem>>, vector<1x64xf32>
    %231 = vector.broadcast %230 : vector<1x64xf32> to vector<7x64xf32>
    %232 = arith.addf %229, %231 : vector<7x64xf32>
    %cst_18 = arith.constant 0.000000e+00 : f32
    %233 = vector.broadcast %cst_18 : f32 to vector<7x64xf32>
    %234 = arith.maximumf %232, %233 : vector<7x64xf32>
    %c0_19 = arith.constant 0 : index
    %c0_20 = arith.constant 0 : index
    %c0_21 = arith.constant 0 : index
    %c0_22 = arith.constant 0 : index
    %235 = vector.load %arg6[%c0_19, %c0_20, %c0_21, %c0_22] : memref<1x1x7x64xf32, #tpu.memory_space<vmem>>, vector<1x1x7x64xf32>
    %236 = vector.shape_cast %235 : vector<1x1x7x64xf32> to vector<7x64xf32>
    %237 = vector.shape_cast %234 : vector<7x64xf32> to vector<1x1x7x64xf32>
    tpu.vector_store %arg6[%c0_19, %c0_20, %c0_21, %c0_22], %237 {strides = array<i32>} : memref<1x1x7x64xf32, #tpu.memory_space<vmem>>, vector<1x1x7x64xf32>,
    return
  }
  func.func @transform_0(%arg0: i32, %arg1: i32) -> (i32, i32, i32, i32) {
    %c0_i32 = arith.constant 0 : i32
    %c0_i32_0 = arith.constant 0 : i32
    %c0_i32_1 = arith.constant 0 : i32
    %c0_i32_2 = arith.constant 0 : i32
    return %arg0, %c0_i32, %c0_i32_0, %c0_i32_1 : i32, i32, i32, i32
  }
  func.func @transform_1(%arg0: i32, %arg1: i32) -> (i32, i32, i32, i32) {
    %c0_i32 = arith.constant 0 : i32
    %c0_i32_0 = arith.constant 0 : i32
    %c0_i32_1 = arith.constant 0 : i32
    %c0_i32_2 = arith.constant 0 : i32
    return %arg0, %c0_i32, %c0_i32_0, %c0_i32_1 : i32, i32, i32, i32
  }
  func.func @transform_2(%arg0: i32, %arg1: i32) -> (i32, i32) {
    %c0_i32 = arith.constant 0 : i32
    %c0_i32_0 = arith.constant 0 : i32
    %c0_i32_1 = arith.constant 0 : i32
    return %c0_i32, %c0_i32_0 : i32, i32
  }
  func.func @transform_3(%arg0: i32, %arg1: i32) -> (i32, i32) {
    %c0_i32 = arith.constant 0 : i32
    %c0_i32_0 = arith.constant 0 : i32
    %c0_i32_1 = arith.constant 0 : i32
    return %c0_i32, %c0_i32_0 : i32, i32
  }
  func.func @transform_4(%arg0: i32, %arg1: i32) -> (i32, i32, i32, i32) {
    %c0_i32 = arith.constant 0 : i32
    %c0_i32_0 = arith.constant 0 : i32
    %c0_i32_1 = arith.constant 0 : i32
    return %arg0, %arg1, %c0_i32, %c0_i32_0 : i32, i32, i32, i32
  }
}

module attributes {stable_mosaic.version = 11 : i64} {
  func.func @_fc1_relu_fc2_kernel(%arg0: i32, %arg1: memref<2x3136xf32, #tpu.memory_space<vmem>>, %arg2: memref<3136x512xbf16, #tpu.memory_space<vmem>>, %arg3: memref<1x512xf32, #tpu.memory_space<vmem>>, %arg4: memref<512x128xbf16, #tpu.memory_space<vmem>>, %arg5: memref<1x128xf32, #tpu.memory_space<vmem>>, %arg6: memref<2x128xf32, #tpu.memory_space<vmem>>) attributes {dimension_semantics = [#tpu.dimension_semantics<arbitrary>], iteration_bounds = array<i64: 4>, scalar_prefetch = 0 : i64, scratch_operands = 0 : i64, tpu.core_type = #tpu.core_type<tc>, window_params = [{pipeline_mode = #tpu.pipeline_mode<synchronous>, transform_indices = @transform_0, window_bounds = array<i64: 2, 3136>}, {transform_indices = @transform_1, window_bounds = array<i64: 3136, 512>}, {transform_indices = @transform_2, window_bounds = array<i64: 1, 512>}, {transform_indices = @transform_3, window_bounds = array<i64: 512, 128>}, {pipeline_mode = #tpu.pipeline_mode<synchronous>, transform_indices = @transform_4, window_bounds = array<i64: 1, 128>}, {pipeline_mode = #tpu.pipeline_mode<synchronous>, transform_indices = @transform_5, window_bounds = array<i64: 2, 128>}]} {
    %c0_i32 = arith.constant 0 : i32
    %0 = arith.cmpi eq, %arg0, %c0_i32 : i32
    %1 = arith.extui %0 : i1 to i32
    %c0_i32_0 = arith.constant 0 : i32
    %2 = arith.cmpi ne, %1, %c0_i32_0 : i32
    scf.if %2 {
      %cst_15 = arith.constant 0.000000e+00 : f32
      %21 = vector.broadcast %cst_15 : f32 to vector<2x128xf32>
      %c0_16 = arith.constant 0 : index
      %c0_17 = arith.constant 0 : index
      %22 = vector.load %arg6[%c0_16, %c0_17] : memref<2x128xf32, #tpu.memory_space<vmem>>, vector<2x128xf32>
      tpu.vector_store %arg6[%c0_16, %c0_17], %21 {strides = array<i32>} : memref<2x128xf32, #tpu.memory_space<vmem>>, vector<2x128xf32>,
    } else {
    }
    %c0 = arith.constant 0 : index
    %c0_1 = arith.constant 0 : index
    %3 = vector.load %arg1[%c0, %c0_1] : memref<2x3136xf32, #tpu.memory_space<vmem>>, vector<2x3136xf32>
    %4 = arith.truncf %3 : vector<2x3136xf32> to vector<2x3136xbf16>
    %c0_2 = arith.constant 0 : index
    %c0_3 = arith.constant 0 : index
    %5 = vector.load %arg2[%c0_2, %c0_3] : memref<3136x512xbf16, #tpu.memory_space<vmem>>, vector<3136x512xbf16>
    %cst = arith.constant dense<0.000000e+00> : vector<2x512xf32>
    %6 = tpu.matmul %4, %5, %cst {dimension_numbers = #tpu.dot_dimension_numbers<[1], [0], [0], [1], [0, 0, 1, 1], [], []>} : vector<2x3136xbf16>, vector<3136x512xbf16>, vector<2x512xf32> -> vector<2x512xf32>
    %c0_4 = arith.constant 0 : index
    %c0_5 = arith.constant 0 : index
    %7 = vector.load %arg3[%c0_4, %c0_5] : memref<1x512xf32, #tpu.memory_space<vmem>>, vector<1x512xf32>
    %8 = vector.broadcast %7 : vector<1x512xf32> to vector<2x512xf32>
    %9 = arith.addf %6, %8 : vector<2x512xf32>
    %cst_6 = arith.constant 0.000000e+00 : f32
    %10 = vector.broadcast %cst_6 : f32 to vector<2x512xf32>
    %11 = arith.maximumf %9, %10 : vector<2x512xf32>
    %c0_7 = arith.constant 0 : index
    %c0_8 = arith.constant 0 : index
    %12 = vector.load %arg6[%c0_7, %c0_8] : memref<2x128xf32, #tpu.memory_space<vmem>>, vector<2x128xf32>
    %13 = arith.truncf %11 : vector<2x512xf32> to vector<2x512xbf16>
    %c0_9 = arith.constant 0 : index
    %c0_10 = arith.constant 0 : index
    %14 = vector.load %arg4[%c0_9, %c0_10] : memref<512x128xbf16, #tpu.memory_space<vmem>>, vector<512x128xbf16>
    %cst_11 = arith.constant dense<0.000000e+00> : vector<2x128xf32>
    %15 = tpu.matmul %13, %14, %cst_11 {dimension_numbers = #tpu.dot_dimension_numbers<[1], [0], [0], [1], [0, 0, 1, 1], [], []>} : vector<2x512xbf16>, vector<512x128xbf16>, vector<2x128xf32> -> vector<2x128xf32>
    %16 = arith.addf %12, %15 : vector<2x128xf32>
    %c0_12 = arith.constant 0 : index
    %c0_13 = arith.constant 0 : index
    %17 = vector.load %arg6[%c0_12, %c0_13] : memref<2x128xf32, #tpu.memory_space<vmem>>, vector<2x128xf32>
    tpu.vector_store %arg6[%c0_12, %c0_13], %16 {strides = array<i32>} : memref<2x128xf32, #tpu.memory_space<vmem>>, vector<2x128xf32>,
    %c3_i32 = arith.constant 3 : i32
    %18 = arith.cmpi eq, %arg0, %c3_i32 : i32
    %19 = arith.extui %18 : i1 to i32
    %c0_i32_14 = arith.constant 0 : i32
    %20 = arith.cmpi ne, %19, %c0_i32_14 : i32
    scf.if %20 {
      %c0_15 = arith.constant 0 : index
      %c0_16 = arith.constant 0 : index
      %21 = vector.load %arg6[%c0_15, %c0_16] : memref<2x128xf32, #tpu.memory_space<vmem>>, vector<2x128xf32>
      %c0_17 = arith.constant 0 : index
      %c0_18 = arith.constant 0 : index
      %22 = vector.load %arg5[%c0_17, %c0_18] : memref<1x128xf32, #tpu.memory_space<vmem>>, vector<1x128xf32>
      %23 = vector.broadcast %22 : vector<1x128xf32> to vector<2x128xf32>
      %24 = arith.addf %21, %23 : vector<2x128xf32>
      %c0_19 = arith.constant 0 : index
      %c0_20 = arith.constant 0 : index
      %25 = vector.load %arg6[%c0_19, %c0_20] : memref<2x128xf32, #tpu.memory_space<vmem>>, vector<2x128xf32>
      tpu.vector_store %arg6[%c0_19, %c0_20], %24 {strides = array<i32>} : memref<2x128xf32, #tpu.memory_space<vmem>>, vector<2x128xf32>,
    } else {
    }
    return
  }
  func.func @transform_0(%arg0: i32) -> (i32, i32) {
    %c0_i32 = arith.constant 0 : i32
    %c0_i32_0 = arith.constant 0 : i32
    %c0_i32_1 = arith.constant 0 : i32
    return %c0_i32, %c0_i32_0 : i32, i32
  }
  func.func @transform_1(%arg0: i32) -> (i32, i32) {
    %c0_i32 = arith.constant 0 : i32
    %c0_i32_0 = arith.constant 0 : i32
    return %c0_i32, %arg0 : i32, i32
  }
  func.func @transform_2(%arg0: i32) -> (i32, i32) {
    %c0_i32 = arith.constant 0 : i32
    %c0_i32_0 = arith.constant 0 : i32
    return %c0_i32, %arg0 : i32, i32
  }
  func.func @transform_3(%arg0: i32) -> (i32, i32) {
    %c0_i32 = arith.constant 0 : i32
    %c0_i32_0 = arith.constant 0 : i32
    return %arg0, %c0_i32 : i32, i32
  }
  func.func @transform_4(%arg0: i32) -> (i32, i32) {
    %c0_i32 = arith.constant 0 : i32
    %c0_i32_0 = arith.constant 0 : i32
    %c0_i32_1 = arith.constant 0 : i32
    return %c0_i32, %c0_i32_0 : i32, i32
  }
  func.func @transform_5(%arg0: i32) -> (i32, i32) {
    %c0_i32 = arith.constant 0 : i32
    %c0_i32_0 = arith.constant 0 : i32
    %c0_i32_1 = arith.constant 0 : i32
    return %c0_i32, %c0_i32_0 : i32, i32
  }
}

</mosaic_0001>

<llo_original>
// kernel: emnist_forward.3
$region0: #{emnist_forward.3}
  #allocation0 [shape = 'u32[]', space=smem, size = 0x4, offset = 0x4, fixed_abs, tag = 'smem constant byte address 0x4 - core index']
  #allocation1 [shape = 'u32[144,128]{1,0:T(1,128)}', space=vmem, size = 0x12000, scoped, tag = 'internal scratch']
  %s0 = inlined_call_operand.vmem [shape: f32[2,32,16,1], index: 0, kind: input, shape index: {}]
  %s1 = inlined_call_operand.vmem [shape: f32[2,32,16,1], index: 1, kind: input, shape index: {}]
  %s2 = inlined_call_operand.hbm [shape: f32[25,32], index: 2, kind: input, shape index: {}]
  %s3 = inlined_call_operand.hbm [shape: f32[1,32], index: 3, kind: input, shape index: {}]
  %s4 = inlined_call_operand.vmem [shape: f32[2,14,14,32], index: 4, kind: output, shape index: {}]
  %s5 = sld [smem:[#allocation0]]
  $region57: #{emnist_forward.3} parent=0
    _
  %s7 = ssub.s32 1, %s5
  %s8 = scalar_select 0, %s7, %s5
  $region1: #{emnist_forward.3} parent=0
    #allocation2 [shape = 'u8[16384]{0}', space=vmem, size = 0x4000, scoped, tag = 'input window, operand 2, single buffered']
    #allocation3 [shape = 's32[2]{0}', space=sflag, size = 0x8, scoped, tag = 'scoped memory for emnist_forward.3']
    #allocation4 [shape = 'u8[512]{0}', space=vmem, size = 0x400, scoped, tag = 'input window, operand 3, single buffered']
    #allocation5 [shape = 's32[1]{0}', space=sflag, size = 0x4, scoped, tag = 'scoped memory for emnist_forward.3']
    %9 = vsyncpa [#allocation3], 0
    %10 = vsyncpa [#allocation5], 0
    loop: start=0, step=1, limit=30
    $region2: #{emnist_forward.3} parent=1 // loop_pre_header
      _
    $region3: #{emnist_forward.3} parent=1 // loop_header
      %s12 = sphi 0, %s16
      %p13 = scmp.ge.s32.totalorder %s12, 30
      %s19 = sphi 0, %s31
      %s20 = sphi 0, %s27
      %s21 = sphi 0, %s19
      %s22 = sphi 0, %s20
      %s23 = sphi 0, %s21
      %s24 = sphi 0, %s22
      %s34 = sphi 0, %s36
      %s37 = sphi 0, %s34
      %s38 = sphi 0, %s37
      %s54 = sphi 0, %s38
      %s60 = sphi 0, %s62
      %s63 = sphi 0, %s60
      %s64 = sphi 0, %s63
      %s80 = sphi 0, %s64
      %s84 = sphi 0, %s84
      %s86 = sphi 0, %s84
      %s87 = sphi 0, %s86
      %s101 = sphi 0, %s87
      %s105 = sphi 0, %s105
      %s107 = sphi 0, %s105
      %s108 = sphi 0, %s107
      %s122 = sphi 0, %s108
      %s130 = sphi 0, %s132
      %s133 = sphi 0, %s130
      %s134 = sphi 0, %s133
      %s150 = sphi 0, %s134
    $region4: #{emnist_forward.3} parent=1 // loop_header_branch
      %15 = sbr.rel (%p13) target = $region8
    $region5: #{emnist_forward.3} parent=1 // loop_body
      %s17 = ssub.s32 %s12, 1
      %s18 = ssub.s32 %s12, 2
      %s25 = sadd.s32 1, %s20
      %p26 = scmp.ge.s32.totalorder %s25, 14
      %s27 = scalar_select %p26, 0, %s25
      %s28 = sadd.s32 1, %s19
      %s29 = scalar_select %p26, %s28, %s19
      %p30 = scmp.ge.s32.totalorder %s29, 2
      %s31 = scalar_select %p30, 0, %s29
      %s32 = ssub.s32 %s19, %s31
      %p33 = scmp.eq.s32.totalorder %s32, 0
      %s35 = sadd.s32 %s34, 1
      %s36 = scalar_select %p33, %s34, %s35
      %p39 = pneg %p33
      %p40 = scmp.eq.s32.totalorder %s12, 27
      %p41 = por %p39, %p40
      %p42 = scmp.ne.s32.totalorder %s34, %s37
      %p43 = scmp.eq.s32.totalorder %s12, 0
      %p44 = por %p42, %p43
      %p45 = scmp.ne.s32.totalorder %s34, %s37
      %p46 = scmp.eq.s32.totalorder %s17, 27
      %p47 = por %p45, %p46
      %p48 = scmp.ne.s32.totalorder %s37, %s38
      %p49 = scmp.eq.s32.totalorder %s17, 0
      %p50 = por %p48, %p49
      %p51 = scmp.ne.s32.totalorder %s37, %s38
      %p52 = scmp.eq.s32.totalorder %s18, 27
      %p53 = por %p51, %p52
      %p55 = scmp.ne.s32.totalorder %s38, %s54
      %p56 = scmp.eq.s32.totalorder %s18, 0
      %p57 = por %p55, %p56
      %s58 = ssub.s32 %s19, %s31
      %p59 = scmp.eq.s32.totalorder %s58, 0
      %s61 = sadd.s32 %s60, 1
      %s62 = scalar_select %p59, %s60, %s61
      %p65 = pneg %p59
      %p66 = scmp.eq.s32.totalorder %s12, 27
      %p67 = por %p65, %p66
      %p68 = scmp.ne.s32.totalorder %s60, %s63
      %p69 = scmp.eq.s32.totalorder %s12, 0
      %p70 = por %p68, %p69
      %p71 = scmp.ne.s32.totalorder %s60, %s63
      %p72 = scmp.eq.s32.totalorder %s17, 27
      %p73 = por %p71, %p72
      %p74 = scmp.ne.s32.totalorder %s63, %s64
      %p75 = scmp.eq.s32.totalorder %s17, 0
      %p76 = por %p74, %p75
      %p77 = scmp.ne.s32.totalorder %s63, %s64
      %p78 = scmp.eq.s32.totalorder %s18, 27
      %p79 = por %p77, %p78
      %p81 = scmp.ne.s32.totalorder %s64, %s80
      %p82 = scmp.eq.s32.totalorder %s18, 0
      %p83 = por %p81, %p82
      %s85 = sadd.s32 %s84, 1
      %p88 = scmp.eq.s32.totalorder %s12, 27
      %p89 = scmp.ne.s32.totalorder %s84, %s86
      %p90 = scmp.eq.s32.totalorder %s12, 0
      %p91 = por %p89, %p90
      %p92 = scmp.ne.s32.totalorder %s84, %s86
      %p93 = scmp.eq.s32.totalorder %s17, 27
      %p94 = por %p92, %p93
      %p95 = scmp.ne.s32.totalorder %s86, %s87
      %p96 = scmp.eq.s32.totalorder %s17, 0
      %p97 = por %p95, %p96
      %p98 = scmp.ne.s32.totalorder %s86, %s87
      %p99 = scmp.eq.s32.totalorder %s18, 27
      %p100 = por %p98, %p99
      %p102 = scmp.ne.s32.totalorder %s87, %s101
      %p103 = scmp.eq.s32.totalorder %s18, 0
      %p104 = por %p102, %p103
      %s106 = sadd.s32 %s105, 1
      %p109 = scmp.eq.s32.totalorder %s12, 27
      %p110 = scmp.ne.s32.totalorder %s105, %s107
      %p111 = scmp.eq.s32.totalorder %s12, 0
      %p112 = por %p110, %p111
      %p113 = scmp.ne.s32.totalorder %s105, %s107
      %p114 = scmp.eq.s32.totalorder %s17, 27
      %p115 = por %p113, %p114
      %p116 = scmp.ne.s32.totalorder %s107, %s108
      %p117 = scmp.eq.s32.totalorder %s17, 0
      %p118 = por %p116, %p117
      %p119 = scmp.ne.s32.totalorder %s107, %s108
      %p120 = scmp.eq.s32.totalorder %s18, 27
      %p121 = por %p119, %p120
      %p123 = scmp.ne.s32.totalorder %s108, %s122
      %p124 = scmp.eq.s32.totalorder %s18, 0
      %p125 = por %p123, %p124
      %s126 = ssub.s32 %s19, %s31
      %s127 = ssub.s32 %s20, %s27
      %s128 = sor.u32 %s126, %s127
      %p129 = scmp.eq.s32.totalorder %s128, 0
      %s131 = sadd.s32 %s130, 1
      %s132 = scalar_select %p129, %s130, %s131
      %p135 = pneg %p129
      %p136 = scmp.eq.s32.totalorder %s12, 27
      %p137 = por %p135, %p136
      %p138 = scmp.ne.s32.totalorder %s130, %s133
      %p139 = scmp.eq.s32.totalorder %s12, 0
      %p140 = por %p138, %p139
      %p141 = scmp.ne.s32.totalorder %s130, %s133
      %p142 = scmp.eq.s32.totalorder %s17, 27
      %p143 = por %p141, %p142
      %p144 = scmp.ne.s32.totalorder %s133, %s134
      %p145 = scmp.eq.s32.totalorder %s17, 0
      %p146 = por %p144, %p145
      %p147 = scmp.ne.s32.totalorder %s133, %s134
      %p148 = scmp.eq.s32.totalorder %s18, 27
      %p149 = por %p147, %p148
      %p151 = scmp.ne.s32.totalorder %s134, %s150
      %p152 = scmp.eq.s32.totalorder %s18, 0
      %p153 = por %p151, %p152
      %p154 = scmp.le.s32.totalorder 1, %s12
      %p155 = scmp.lt.s32.totalorder %s12, 29
      %p156 = pnand %p154, %p155
      %p157 = pneg %p156
      // Predicated region
      $region9: #{emnist_forward.3} parent=5 // pred_check
        _
      $region10: #{emnist_forward.3} parent=5 // pred_check_branch
        %159 = sbr.rel (%p156) target = $region12
      $region11: #{emnist_forward.3} parent=5 // pred_region
        %s160 = ssub.s32 %s12, 1
        // Predicated region
        $region13: #{emnist_forward.3} parent=11 // pred_check
          %p161 = pneg %p97
        $region14: #{emnist_forward.3} parent=11 // pred_check_branch
          %163 = sbr.rel (%p161) target = $region16
        $region15: #{emnist_forward.3} parent=11 // pred_region
          %s165 = ssub.s32 512, 512
          %166 = vsyncadd [#allocation3], %s165
          %s167 = sshll.u32 [#allocation2], 4
          %s168 = int_to_ptr.vmem [resolvable:$true] %s167
          %173 = dma.hbm_to_vmem [thread:$0]  %s2, 512, %s168, [#allocation3], 128, 128, 8
        $region16: #{emnist_forward.3} parent=11 // pred_fallthru
          _
        // Predicated region
        $region17: #{emnist_forward.3} parent=11 // pred_check
          %p174 = pneg %p118
        $region18: #{emnist_forward.3} parent=11 // pred_check_branch
          %176 = sbr.rel (%p174) target = $region20
        $region19: #{emnist_forward.3} parent=11 // pred_region
          %s178 = ssub.s32 16, 16
          %179 = vsyncadd [#allocation5], %s178
          %s181 = sshll.u32 [#allocation4], 4
          %s182 = int_to_ptr.vmem [resolvable:$true] %s181
          %184 = dma.hbm_to_vmem [thread:$0]  %s3, 16, %s182, [#allocation5]
        $region20: #{emnist_forward.3} parent=11 // pred_fallthru
          _
      $region12: #{emnist_forward.3} parent=5 // pred_fallthru
        _
      %p185 = scmp.lt.s32.totalorder %s12, 28
      // Predicated region
      $region21: #{emnist_forward.3} parent=5 // pred_check
        %p186 = pneg %p185
      $region22: #{emnist_forward.3} parent=5 // pred_check_branch
        %188 = sbr.rel (%p186) target = $region24
      $region23: #{emnist_forward.3} parent=5 // pred_region
        // Predicated region
        $region25: #{emnist_forward.3} parent=23 // pred_check
          %p189 = pneg %p44
        $region26: #{emnist_forward.3} parent=23 // pred_check_branch
          %191 = sbr.rel (%p189) target = $region28
        $region27: #{emnist_forward.3} parent=23 // pred_region
          %p192 = scmp.lt.s32.totalorder %s19, 1
          %s193 = scalar_select %p192, %s19, 1
          %s194 = smul.addr %s193, 64
          %s195 = smul.addr %s194, 8
          %s196 = scalar_lea.vmem %s0, %s195
        $region28: #{emnist_forward.3} parent=23 // pred_fallthru
          _
        // Predicated region
        $region29: #{emnist_forward.3} parent=23 // pred_check
          %p197 = pneg %p70
        $region30: #{emnist_forward.3} parent=23 // pred_check_branch
          %199 = sbr.rel (%p197) target = $region32
        $region31: #{emnist_forward.3} parent=23 // pred_region
          %p200 = scmp.lt.s32.totalorder %s19, 1
          %s201 = scalar_select %p200, %s19, 1
          %s202 = smul.addr %s201, 64
          %s203 = smul.addr %s202, 8
          %s204 = scalar_lea.vmem %s1, %s203
        $region32: #{emnist_forward.3} parent=23 // pred_fallthru
          _
      $region24: #{emnist_forward.3} parent=5 // pred_fallthru
        _
      %p205 = scmp.le.s32.totalorder 1, %s12
      %p206 = scmp.lt.s32.totalorder %s12, 29
      %p207 = pnand %p205, %p206
      %p208 = pneg %p207
      // Predicated region
      $region33: #{emnist_forward.3} parent=5 // pred_check
        _
      $region34: #{emnist_forward.3} parent=5 // pred_check_branch
        %210 = sbr.rel (%p207) target = $region36
      $region35: #{emnist_forward.3} parent=5 // pred_region
        %s211 = ssub.s32 %s12, 1
        // Predicated region
        $region37: #{emnist_forward.3} parent=35 // pred_check
          %p212 = pneg %p97
        $region38: #{emnist_forward.3} parent=35 // pred_check_branch
          %214 = sbr.rel (%p212) target = $region40
        $region39: #{emnist_forward.3} parent=35 // pred_region
          %215 = dma.done [#allocation3], 512
        $region40: #{emnist_forward.3} parent=35 // pred_fallthru
          _
        // Predicated region
        $region41: #{emnist_forward.3} parent=35 // pred_check
          %p216 = pneg %p118
        $region42: #{emnist_forward.3} parent=35 // pred_check_branch
          %218 = sbr.rel (%p216) target = $region44
        $region43: #{emnist_forward.3} parent=35 // pred_region
          %219 = dma.done [#allocation5], 16
        $region44: #{emnist_forward.3} parent=35 // pred_fallthru
          _
        %p220 = scmp.lt.s32.totalorder %s21, 1
        %s221 = scalar_select %p220, %s21, 1
        %s222 = smul.addr %s221, 64
        %s223 = smul.addr %s222, 8
        %s224 = scalar_lea.vmem %s0, %s223
        %p225 = pneg %p50
        %p226 = pneg %p47
        %p227 = scmp.lt.s32.totalorder %s21, 1
        %s228 = scalar_select %p227, %s21, 1
        %s229 = smul.addr %s228, 64
        %s230 = smul.addr %s229, 8
        %s231 = scalar_lea.vmem %s1, %s230
        %p232 = pneg %p76
        %p233 = pneg %p73
        %p234 = pneg %p97
        %p235 = pneg %p94
        %p236 = pneg %p118
        %p237 = pneg %p115
        %p238 = pneg %p146
        %p239 = pneg %p143
        %p240 = scmp.lt.s32.totalorder %s21, 1
        %s241 = scalar_select %p240, %s21, 1
        %p242 = scmp.lt.s32.totalorder %s22, 13
        %s243 = scalar_select %p242, %s22, 13
        %s244 = smul.addr %s243, 2
        %s245 = smul.addr %s241, 28
        %s246 = sadd.s32 %s244, %s245
        %s247 = smul.addr %s246, 8
        %s248 = scalar_lea.vmem %s4, %s247
        %p249 = scmp.lt.s32.totalorder %s21, 1
        %s250 = scalar_select %p249, %s21, 1
        %s251 = smul.addr %s250, 64
        %s252 = smul.addr %s251, 8
        %s253 = scalar_lea.vmem %s0, %s252
        %p254 = scmp.lt.s32.totalorder %s21, 1
        %s255 = scalar_select %p254, %s21, 1
        %s256 = smul.addr %s255, 64
        %s257 = smul.addr %s256, 8
        %s258 = scalar_lea.vmem %s1, %s257
        %p259 = scmp.lt.s32.totalorder %s21, 1
        %s260 = scalar_select %p259, %s21, 1
        %p261 = scmp.lt.s32.totalorder %s22, 13
        %s262 = scalar_select %p261, %s22, 13
        %s263 = smul.addr %s262, 2
        %s264 = smul.addr %s260, 28
        %s265 = sadd.s32 %s263, %s264
        %s266 = smul.addr %s265, 8
        %s267 = scalar_lea.vmem %s4, %s266
        %s268 = smul.u32 %s22, 2
        %s269 = smul.u32 %s268, 16
        %s270 = scalar_lea.vmem %s253, %s269
        %v271 = vld [vmem:[%s270] sm:$0xff]
        %v272 = vld [vmem:[%s270 + $0x8] sm:$0xff]
        %v273 = vld [vmem:[%s270 + $0x10] sm:$0xff]
        %v274 = vld [vmem:[%s270 + $0x18] sm:$0xff]
        %v275 = vld [vmem:[%s270 + $0x20] sm:$0xff]
        %v276 = vld [vmem:[%s270 + $0x28] sm:$0xff]
        %v277 = vld [vmem:[%s270 + $0x30] sm:$0xff]
        %v278 = vld [vmem:[%s270 + $0x38] sm:$0xff]
        %v279 = vld [vmem:[%s270 + $0x40] sm:$0xff]
        %v280 = vld [vmem:[%s270 + $0x48] sm:$0xff]
        %v281 = vld [vmem:[%s270 + $0x50] sm:$0xff]
        %v282 = vld [vmem:[%s270 + $0x58] sm:$0xff]
        %s283 = scalar_lea.vmem %s258, %s269
        %v284 = vld [vmem:[%s283] sm:$0xff]
        %v285 = vld [vmem:[%s283 + $0x8] sm:$0xff]
        %v286 = vld [vmem:[%s283 + $0x10] sm:$0xff]
        %v287 = vld [vmem:[%s283 + $0x18] sm:$0xff]
        %v288 = vld [vmem:[%s283 + $0x20] sm:$0xff]
        %v289 = vld [vmem:[%s283 + $0x28] sm:$0xff]
        %v290 = vld [vmem:[%s283 + $0x30] sm:$0xff]
        %v291 = vld [vmem:[%s283 + $0x38] sm:$0xff]
        %v292 = vld [vmem:[%s283 + $0x40] sm:$0xff]
        %v293 = vld [vmem:[%s283 + $0x48] sm:$0xff]
        %v294 = vld [vmem:[%s283 + $0x50] sm:$0xff]
        %v295 = vld [vmem:[%s283 + $0x58] sm:$0xff]
        %v296 = vld [vmem:[#allocation2] sm:$0x1]
        %298 = vset.pattern.permute.xlu0 0
        %299 = vperm.xlu0 %298, %v271
        %v300 = vpop.permute.xlu0 %299
        %303 = vset.pattern.permute.xlu0 0
        %304 = vperm.xlu0 %303, %v272
        %v305 = vpop.permute.xlu0 %304
        %v307 = vlaneseq
        %v308 = vshrl.u32 %v307, 7
        %v309 = vsub.s32 0, %v308
        %v310 = vrot.slane %v296, %v309
        %v311 = vmul.f32 %v300, %v310
        %v312 = vmul.f32 %v305, %v310
        %v313 = vld [vmem:[#allocation2 + $0x1] sm:$0x1]
        %315 = vset.pattern.permute.xlu0 0
        %316 = vperm.xlu0 %315, %v284
        %v317 = vpop.permute.xlu0 %316
        %320 = vset.pattern.permute.xlu0 0
        %321 = vperm.xlu0 %320, %v285
        %v322 = vpop.permute.xlu0 %321
        %v324 = vlaneseq
        %v325 = vshrl.u32 %v324, 7
        %v326 = vsub.s32 0, %v325
        %v327 = vrot.slane %v313, %v326
        %v328 = vmul.f32 %v317, %v327
        %v329 = vmul.f32 %v322, %v327
        %v330 = vadd.f32 %v311, %v328
        %v331 = vadd.f32 %v312, %v329
        %v332 = vld [vmem:[#allocation2 + $0x2] sm:$0x1]
        %v333 = vlaneseq
        %v334 = vshrl.u32 %v333, 7
        %v335 = vsub.s32 0, %v334
        %v336 = vrot.slane %v332, %v335
        %v337 = vmul.f32 %v300, %v336
        %v338 = vmul.f32 %v305, %v336
        %vm341 = vcmask 1046528
        %v342 = vrot.slane %v337, 1
        %v343 = vrot.slane %v338, 1
        %v344 = vsel %vm341, %v342, %v343
        %v347 = vadd.f32 %v330, %v344
        %v348 = vadd.f32 %v331, %v343
        %v349 = vld [vmem:[#allocation2 + $0x3] sm:$0x1]
        %v350 = vlaneseq
        %v351 = vshrl.u32 %v350, 7
        %v352 = vsub.s32 0, %v351
        %v353 = vrot.slane %v349, %v352
        %v354 = vmul.f32 %v317, %v353
        %v355 = vmul.f32 %v322, %v353
        %v358 = vrot.slane %v354, 1
        %v359 = vrot.slane %v355, 1
        %v360 = vsel %vm341, %v358, %v359
        %v363 = vadd.f32 %v347, %v360
        %v364 = vadd.f32 %v348, %v359
        %v365 = vld [vmem:[#allocation2 + $0x4] sm:$0x1]
        %v366 = vlaneseq
        %v367 = vshrl.u32 %v366, 7
        %v368 = vsub.s32 0, %v367
        %v369 = vrot.slane %v365, %v368
        %v370 = vmul.f32 %v300, %v369
        %v371 = vmul.f32 %v305, %v369
        %vm374 = vcmask 1045504
        %v375 = vrot.slane %v370, 2
        %v376 = vrot.slane %v371, 2
        %v377 = vsel %vm374, %v375, %v376
        %v380 = vadd.f32 %v363, %v377
        %v381 = vadd.f32 %v364, %v376
        %v382 = vld [vmem:[#allocation2 + $0x5] sm:$0x1]
        %384 = vset.pattern.permute.xlu0 0
        %385 = vperm.xlu0 %384, %v273
        %v386 = vpop.permute.xlu0 %385
        %389 = vset.pattern.permute.xlu0 0
        %390 = vperm.xlu0 %389, %v274
        %v391 = vpop.permute.xlu0 %390
        %v393 = vlaneseq
        %v394 = vshrl.u32 %v393, 7
        %v395 = vsub.s32 0, %v394
        %v396 = vrot.slane %v382, %v395
        %v397 = vmul.f32 %v386, %v396
        %v398 = vmul.f32 %v391, %v396
        %v399 = vadd.f32 %v380, %v397
        %v400 = vadd.f32 %v381, %v398
        %v401 = vld [vmem:[#allocation2 + $0x6] sm:$0x1]
        %403 = vset.pattern.permute.xlu0 0
        %404 = vperm.xlu0 %403, %v286
        %v405 = vpop.permute.xlu0 %404
        %408 = vset.pattern.permute.xlu0 0
        %409 = vperm.xlu0 %408, %v287
        %v410 = vpop.permute.xlu0 %409
        %v412 = vlaneseq
        %v413 = vshrl.u32 %v412, 7
        %v414 = vsub.s32 0, %v413
        %v415 = vrot.slane %v401, %v414
        %v416 = vmul.f32 %v405, %v415
        %v417 = vmul.f32 %v410, %v415
        %v418 = vadd.f32 %v399, %v416
        %v419 = vadd.f32 %v400, %v417
        %v420 = vld [vmem:[#allocation2 + $0x7] sm:$0x1]
        %v421 = vlaneseq
        %v422 = vshrl.u32 %v421, 7
        %v423 = vsub.s32 0, %v422
        %v424 = vrot.slane %v420, %v423
        %v425 = vmul.f32 %v386, %v424
        %v426 = vmul.f32 %v391, %v424
        %v429 = vrot.slane %v425, 1
        %v430 = vrot.slane %v426, 1
        %v431 = vsel %vm341, %v429, %v430
        %v434 = vadd.f32 %v418, %v431
        %v435 = vadd.f32 %v419, %v430
        %v436 = vld [vmem:[#allocation2 + $0x8] sm:$0x1]
        %v437 = vlaneseq
        %v438 = vshrl.u32 %v437, 7
        %v439 = vsub.s32 0, %v438
        %v440 = vrot.slane %v436, %v439
        %v441 = vmul.f32 %v405, %v440
        %v442 = vmul.f32 %v410, %v440
        %v445 = vrot.slane %v441, 1
        %v446 = vrot.slane %v442, 1
        %v447 = vsel %vm341, %v445, %v446
        %v450 = vadd.f32 %v434, %v447
        %v451 = vadd.f32 %v435, %v446
        %v452 = vld [vmem:[#allocation2 + $0x9] sm:$0x1]
        %v453 = vlaneseq
        %v454 = vshrl.u32 %v453, 7
        %v455 = vsub.s32 0, %v454
        %v456 = vrot.slane %v452, %v455
        %v457 = vmul.f32 %v386, %v456
        %v458 = vmul.f32 %v391, %v456
        %v461 = vrot.slane %v457, 2
        %v462 = vrot.slane %v458, 2
        %v463 = vsel %vm374, %v461, %v462
        %v466 = vadd.f32 %v450, %v463
        %v467 = vadd.f32 %v451, %v462
        %v468 = vld [vmem:[#allocation2 + $0xa] sm:$0x1]
        %470 = vset.pattern.permute.xlu0 0
        %471 = vperm.xlu0 %470, %v275
        %v472 = vpop.permute.xlu0 %471
        %475 = vset.pattern.permute.xlu0 0
        %476 = vperm.xlu0 %475, %v276
        %v477 = vpop.permute.xlu0 %476
        %v479 = vlaneseq
        %v480 = vshrl.u32 %v479, 7
        %v481 = vsub.s32 0, %v480
        %v482 = vrot.slane %v468, %v481
        %v483 = vmul.f32 %v472, %v482
        %v484 = vmul.f32 %v477, %v482
        %v485 = vadd.f32 %v466, %v483
        %v486 = vadd.f32 %v467, %v484
        %v487 = vld [vmem:[#allocation2 + $0xb] sm:$0x1]
        %489 = vset.pattern.permute.xlu0 0
        %490 = vperm.xlu0 %489, %v288
        %v491 = vpop.permute.xlu0 %490
        %494 = vset.pattern.permute.xlu0 0
        %495 = vperm.xlu0 %494, %v289
        %v496 = vpop.permute.xlu0 %495
        %v498 = vlaneseq
        %v499 = vshrl.u32 %v498, 7
        %v500 = vsub.s32 0, %v499
        %v501 = vrot.slane %v487, %v500
        %v502 = vmul.f32 %v491, %v501
        %v503 = vmul.f32 %v496, %v501
        %v504 = vadd.f32 %v485, %v502
        %v505 = vadd.f32 %v486, %v503
        %v506 = vld [vmem:[#allocation2 + $0xc] sm:$0x1]
        %v507 = vlaneseq
        %v508 = vshrl.u32 %v507, 7
        %v509 = vsub.s32 0, %v508
        %v510 = vrot.slane %v506, %v509
        %v511 = vmul.f32 %v472, %v510
        %v512 = vmul.f32 %v477, %v510
        %v515 = vrot.slane %v511, 1
        %v516 = vrot.slane %v512, 1
        %v517 = vsel %vm341, %v515, %v516
        %v520 = vadd.f32 %v504, %v517
        %v521 = vadd.f32 %v505, %v516
        %v522 = vld [vmem:[#allocation2 + $0xd] sm:$0x1]
        %v523 = vlaneseq
        %v524 = vshrl.u32 %v523, 7
        %v525 = vsub.s32 0, %v524
        %v526 = vrot.slane %v522, %v525
        %v527 = vmul.f32 %v491, %v526
        %v528 = vmul.f32 %v496, %v526
        %v531 = vrot.slane %v527, 1
        %v532 = vrot.slane %v528, 1
        %v533 = vsel %vm341, %v531, %v532
        %v536 = vadd.f32 %v520, %v533
        %v537 = vadd.f32 %v521, %v532
        %v538 = vld [vmem:[#allocation2 + $0xe] sm:$0x1]
        %v539 = vlaneseq
        %v540 = vshrl.u32 %v539, 7
        %v541 = vsub.s32 0, %v540
        %v542 = vrot.slane %v538, %v541
        %v543 = vmul.f32 %v472, %v542
        %v544 = vmul.f32 %v477, %v542
        %v547 = vrot.slane %v543, 2
        %v548 = vrot.slane %v544, 2
        %v549 = vsel %vm374, %v547, %v548
        %v552 = vadd.f32 %v536, %v549
        %v553 = vadd.f32 %v537, %v548
        %v554 = vld [vmem:[#allocation2 + $0xf] sm:$0x1]
        %556 = vset.pattern.permute.xlu0 0
        %557 = vperm.xlu0 %556, %v277
        %v558 = vpop.permute.xlu0 %557
        %561 = vset.pattern.permute.xlu0 0
        %562 = vperm.xlu0 %561, %v278
        %v563 = vpop.permute.xlu0 %562
        %v565 = vlaneseq
        %v566 = vshrl.u32 %v565, 7
        %v567 = vsub.s32 0, %v566
        %v568 = vrot.slane %v554, %v567
        %v569 = vmul.f32 %v558, %v568
        %v570 = vmul.f32 %v563, %v568
        %v571 = vadd.f32 %v552, %v569
        %v572 = vadd.f32 %v553, %v570
        %v573 = vld [vmem:[#allocation2 + $0x10] sm:$0x1]
        %575 = vset.pattern.permute.xlu0 0
        %576 = vperm.xlu0 %575, %v290
        %v577 = vpop.permute.xlu0 %576
        %580 = vset.pattern.permute.xlu0 0
        %581 = vperm.xlu0 %580, %v291
        %v582 = vpop.permute.xlu0 %581
        %v584 = vlaneseq
        %v585 = vshrl.u32 %v584, 7
        %v586 = vsub.s32 0, %v585
        %v587 = vrot.slane %v573, %v586
        %v588 = vmul.f32 %v577, %v587
        %v589 = vmul.f32 %v582, %v587
        %v590 = vadd.f32 %v571, %v588
        %v591 = vadd.f32 %v572, %v589
        %v592 = vld [vmem:[#allocation2 + $0x11] sm:$0x1]
        %v593 = vlaneseq
        %v594 = vshrl.u32 %v593, 7
        %v595 = vsub.s32 0, %v594
        %v596 = vrot.slane %v592, %v595
        %v597 = vmul.f32 %v558, %v596
        %v598 = vmul.f32 %v563, %v596
        %v601 = vrot.slane %v597, 1
        %v602 = vrot.slane %v598, 1
        %v603 = vsel %vm341, %v601, %v602
        %v606 = vadd.f32 %v590, %v603
        %v607 = vadd.f32 %v591, %v602
        %v608 = vld [vmem:[#allocation2 + $0x12] sm:$0x1]
        %v609 = vlaneseq
        %v610 = vshrl.u32 %v609, 7
        %v611 = vsub.s32 0, %v610
        %v612 = vrot.slane %v608, %v611
        %v613 = vmul.f32 %v577, %v612
        %v614 = vmul.f32 %v582, %v612
        %v617 = vrot.slane %v613, 1
        %v618 = vrot.slane %v614, 1
        %v619 = vsel %vm341, %v617, %v618
        %v622 = vadd.f32 %v606, %v619
        %v623 = vadd.f32 %v607, %v618
        %v624 = vld [vmem:[#allocation2 + $0x13] sm:$0x1]
        %v625 = vlaneseq
        %v626 = vshrl.u32 %v625, 7
        %v627 = vsub.s32 0, %v626
        %v628 = vrot.slane %v624, %v627
        %v629 = vmul.f32 %v558, %v628
        %v630 = vmul.f32 %v563, %v628
        %v633 = vrot.slane %v629, 2
        %v634 = vrot.slane %v630, 2
        %v635 = vsel %vm374, %v633, %v634
        %v638 = vadd.f32 %v622, %v635
        %v639 = vadd.f32 %v623, %v634
        %v640 = vld [vmem:[#allocation2 + $0x14] sm:$0x1]
        %642 = vset.pattern.permute.xlu0 0
        %643 = vperm.xlu0 %642, %v279
        %v644 = vpop.permute.xlu0 %643
        %647 = vset.pattern.permute.xlu0 0
        %648 = vperm.xlu0 %647, %v280
        %v649 = vpop.permute.xlu0 %648
        %v651 = vlaneseq
        %v652 = vshrl.u32 %v651, 7
        %v653 = vsub.s32 0, %v652
        %v654 = vrot.slane %v640, %v653
        %v655 = vmul.f32 %v644, %v654
        %v656 = vmul.f32 %v649, %v654
        %v657 = vadd.f32 %v638, %v655
        %v658 = vadd.f32 %v639, %v656
        %v659 = vld [vmem:[#allocation2 + $0x15] sm:$0x1]
        %661 = vset.pattern.permute.xlu0 0
        %662 = vperm.xlu0 %661, %v292
        %v663 = vpop.permute.xlu0 %662
        %666 = vset.pattern.permute.xlu0 0
        %667 = vperm.xlu0 %666, %v293
        %v668 = vpop.permute.xlu0 %667
        %v670 = vlaneseq
        %v671 = vshrl.u32 %v670, 7
        %v672 = vsub.s32 0, %v671
        %v673 = vrot.slane %v659, %v672
        %v674 = vmul.f32 %v663, %v673
        %v675 = vmul.f32 %v668, %v673
        %v676 = vadd.f32 %v657, %v674
        %v677 = vadd.f32 %v658, %v675
        %v678 = vld [vmem:[#allocation2 + $0x16] sm:$0x1]
        %v679 = vlaneseq
        %v680 = vshrl.u32 %v679, 7
        %v681 = vsub.s32 0, %v680
        %v682 = vrot.slane %v678, %v681
        %v683 = vmul.f32 %v644, %v682
        %v684 = vmul.f32 %v649, %v682
        %v687 = vrot.slane %v683, 1
        %v688 = vrot.slane %v684, 1
        %v689 = vsel %vm341, %v687, %v688
        %v692 = vadd.f32 %v676, %v689
        %v693 = vadd.f32 %v677, %v688
        %v694 = vld [vmem:[#allocation2 + $0x17] sm:$0x1]
        %v695 = vlaneseq
        %v696 = vshrl.u32 %v695, 7
        %v697 = vsub.s32 0, %v696
        %v698 = vrot.slane %v694, %v697
        %v699 = vmul.f32 %v663, %v698
        %v700 = vmul.f32 %v668, %v698
        %v703 = vrot.slane %v699, 1
        %v704 = vrot.slane %v700, 1
        %v705 = vsel %vm341, %v703, %v704
        %v708 = vadd.f32 %v692, %v705
        %v709 = vadd.f32 %v693, %v704
        %v710 = vld [vmem:[#allocation2 + $0x18] sm:$0x1]
        %v711 = vlaneseq
        %v712 = vshrl.u32 %v711, 7
        %v713 = vsub.s32 0, %v712
        %v714 = vrot.slane %v710, %v713
        %v715 = vmul.f32 %v644, %v714
        %v716 = vmul.f32 %v649, %v714
        %v719 = vrot.slane %v715, 2
        %v720 = vrot.slane %v716, 2
        %v721 = vsel %vm374, %v719, %v720
        %v724 = vadd.f32 %v708, %v721
        %v725 = vadd.f32 %v709, %v720
        %v726 = vmul.f32 %v317, %v310
        %v727 = vmul.f32 %v322, %v310
        %v728 = vmul.f32 %v300, %v327
        %v729 = vmul.f32 %v305, %v327
        %v732 = vrot.slane %v728, 1
        %v733 = vrot.slane %v729, 1
        %v734 = vsel %vm341, %v732, %v733
        %v737 = vadd.f32 %v726, %v734
        %v738 = vadd.f32 %v727, %v733
        %v739 = vmul.f32 %v317, %v336
        %v740 = vmul.f32 %v322, %v336
        %v743 = vrot.slane %v739, 1
        %v744 = vrot.slane %v740, 1
        %v745 = vsel %vm341, %v743, %v744
        %v748 = vadd.f32 %v737, %v745
        %v749 = vadd.f32 %v738, %v744
        %v750 = vmul.f32 %v300, %v353
        %v751 = vmul.f32 %v305, %v353
        %v754 = vrot.slane %v750, 2
        %v755 = vrot.slane %v751, 2
        %v756 = vsel %vm374, %v754, %v755
        %v759 = vadd.f32 %v748, %v756
        %v760 = vadd.f32 %v749, %v755
        %v761 = vmul.f32 %v317, %v369
        %v762 = vmul.f32 %v322, %v369
        %v765 = vrot.slane %v761, 2
        %v766 = vrot.slane %v762, 2
        %v767 = vsel %vm374, %v765, %v766
        %v770 = vadd.f32 %v759, %v767
        %v771 = vadd.f32 %v760, %v766
        %v772 = vmul.f32 %v405, %v396
        %v773 = vmul.f32 %v410, %v396
        %v774 = vadd.f32 %v770, %v772
        %v775 = vadd.f32 %v771, %v773
        %v776 = vmul.f32 %v386, %v415
        %v777 = vmul.f32 %v391, %v415
        %v780 = vrot.slane %v776, 1
        %v781 = vrot.slane %v777, 1
        %v782 = vsel %vm341, %v780, %v781
        %v785 = vadd.f32 %v774, %v782
        %v786 = vadd.f32 %v775, %v781
        %v787 = vmul.f32 %v405, %v424
        %v788 = vmul.f32 %v410, %v424
        %v791 = vrot.slane %v787, 1
        %v792 = vrot.slane %v788, 1
        %v793 = vsel %vm341, %v791, %v792
        %v796 = vadd.f32 %v785, %v793
        %v797 = vadd.f32 %v786, %v792
        %v798 = vmul.f32 %v386, %v440
        %v799 = vmul.f32 %v391, %v440
        %v802 = vrot.slane %v798, 2
        %v803 = vrot.slane %v799, 2
        %v804 = vsel %vm374, %v802, %v803
        %v807 = vadd.f32 %v796, %v804
        %v808 = vadd.f32 %v797, %v803
        %v809 = vmul.f32 %v405, %v456
        %v810 = vmul.f32 %v410, %v456
        %v813 = vrot.slane %v809, 2
        %v814 = vrot.slane %v810, 2
        %v815 = vsel %vm374, %v813, %v814
        %v818 = vadd.f32 %v807, %v815
        %v819 = vadd.f32 %v808, %v814
        %v820 = vmul.f32 %v491, %v482
        %v821 = vmul.f32 %v496, %v482
        %v822 = vadd.f32 %v818, %v820
        %v823 = vadd.f32 %v819, %v821
        %v824 = vmul.f32 %v472, %v501
        %v825 = vmul.f32 %v477, %v501
        %v828 = vrot.slane %v824, 1
        %v829 = vrot.slane %v825, 1
        %v830 = vsel %vm341, %v828, %v829
        %v833 = vadd.f32 %v822, %v830
        %v834 = vadd.f32 %v823, %v829
        %v835 = vmul.f32 %v491, %v510
        %v836 = vmul.f32 %v496, %v510
        %v839 = vrot.slane %v835, 1
        %v840 = vrot.slane %v836, 1
        %v841 = vsel %vm341, %v839, %v840
        %v844 = vadd.f32 %v833, %v841
        %v845 = vadd.f32 %v834, %v840
        %v846 = vmul.f32 %v472, %v526
        %v847 = vmul.f32 %v477, %v526
        %v850 = vrot.slane %v846, 2
        %v851 = vrot.slane %v847, 2
        %v852 = vsel %vm374, %v850, %v851
        %v855 = vadd.f32 %v844, %v852
        %v856 = vadd.f32 %v845, %v851
        %v857 = vmul.f32 %v491, %v542
        %v858 = vmul.f32 %v496, %v542
        %v861 = vrot.slane %v857, 2
        %v862 = vrot.slane %v858, 2
        %v863 = vsel %vm374, %v861, %v862
        %v866 = vadd.f32 %v855, %v863
        %v867 = vadd.f32 %v856, %v862
        %v868 = vmul.f32 %v577, %v568
        %v869 = vmul.f32 %v582, %v568
        %v870 = vadd.f32 %v866, %v868
        %v871 = vadd.f32 %v867, %v869
        %v872 = vmul.f32 %v558, %v587
        %v873 = vmul.f32 %v563, %v587
        %v876 = vrot.slane %v872, 1
        %v877 = vrot.slane %v873, 1
        %v878 = vsel %vm341, %v876, %v877
        %v881 = vadd.f32 %v870, %v878
        %v882 = vadd.f32 %v871, %v877
        %v883 = vmul.f32 %v577, %v596
        %v884 = vmul.f32 %v582, %v596
        %v887 = vrot.slane %v883, 1
        %v888 = vrot.slane %v884, 1
        %v889 = vsel %vm341, %v887, %v888
        %v892 = vadd.f32 %v881, %v889
        %v893 = vadd.f32 %v882, %v888
        %v894 = vmul.f32 %v558, %v612
        %v895 = vmul.f32 %v563, %v612
        %v898 = vrot.slane %v894, 2
        %v899 = vrot.slane %v895, 2
        %v900 = vsel %vm374, %v898, %v899
        %v903 = vadd.f32 %v892, %v900
        %v904 = vadd.f32 %v893, %v899
        %v905 = vmul.f32 %v577, %v628
        %v906 = vmul.f32 %v582, %v628
        %v909 = vrot.slane %v905, 2
        %v910 = vrot.slane %v906, 2
        %v911 = vsel %vm374, %v909, %v910
        %v914 = vadd.f32 %v903, %v911
        %v915 = vadd.f32 %v904, %v910
        %v916 = vmul.f32 %v663, %v654
        %v917 = vmul.f32 %v668, %v654
        %v918 = vadd.f32 %v914, %v916
        %v919 = vadd.f32 %v915, %v917
        %v920 = vmul.f32 %v644, %v673
        %v921 = vmul.f32 %v649, %v673
        %v924 = vrot.slane %v920, 1
        %v925 = vrot.slane %v921, 1
        %v926 = vsel %vm341, %v924, %v925
        %v929 = vadd.f32 %v918, %v926
        %v930 = vadd.f32 %v919, %v925
        %v931 = vmul.f32 %v663, %v682
        %v932 = vmul.f32 %v668, %v682
        %v935 = vrot.slane %v931, 1
        %v936 = vrot.slane %v932, 1
        %v937 = vsel %vm341, %v935, %v936
        %v940 = vadd.f32 %v929, %v937
        %v941 = vadd.f32 %v930, %v936
        %v942 = vmul.f32 %v644, %v698
        %v943 = vmul.f32 %v649, %v698
        %v946 = vrot.slane %v942, 2
        %v947 = vrot.slane %v943, 2
        %v948 = vsel %vm374, %v946, %v947
        %v951 = vadd.f32 %v940, %v948
        %v952 = vadd.f32 %v941, %v947
        %v953 = vmul.f32 %v663, %v714
        %v954 = vmul.f32 %v668, %v714
        %v957 = vrot.slane %v953, 2
        %v958 = vrot.slane %v954, 2
        %v959 = vsel %vm374, %v957, %v958
        %v962 = vadd.f32 %v951, %v959
        %v963 = vadd.f32 %v952, %v958
        %v964 = vmax.f32 %v724, %v962
        %v965 = vmax.f32 %v725, %v963
        %v966 = vmul.f32 %v386, %v310
        %v967 = vmul.f32 %v391, %v310
        %v968 = vmul.f32 %v405, %v327
        %v969 = vmul.f32 %v410, %v327
        %v970 = vadd.f32 %v966, %v968
        %v971 = vadd.f32 %v967, %v969
        %v972 = vmul.f32 %v386, %v336
        %v973 = vmul.f32 %v391, %v336
        %v976 = vrot.slane %v972, 1
        %v977 = vrot.slane %v973, 1
        %v978 = vsel %vm341, %v976, %v977
        %v981 = vadd.f32 %v970, %v978
        %v982 = vadd.f32 %v971, %v977
        %v983 = vmul.f32 %v405, %v353
        %v984 = vmul.f32 %v410, %v353
        %v987 = vrot.slane %v983, 1
        %v988 = vrot.slane %v984, 1
        %v989 = vsel %vm341, %v987, %v988
        %v992 = vadd.f32 %v981, %v989
        %v993 = vadd.f32 %v982, %v988
        %v994 = vmul.f32 %v386, %v369
        %v995 = vmul.f32 %v391, %v369
        %v998 = vrot.slane %v994, 2
        %v999 = vrot.slane %v995, 2
        %v1000 = vsel %vm374, %v998, %v999
        %v1003 = vadd.f32 %v992, %v1000
        %v1004 = vadd.f32 %v993, %v999
        %v1005 = vmul.f32 %v472, %v396
        %v1006 = vmul.f32 %v477, %v396
        %v1007 = vadd.f32 %v1003, %v1005
        %v1008 = vadd.f32 %v1004, %v1006
        %v1009 = vmul.f32 %v491, %v415
        %v1010 = vmul.f32 %v496, %v415
        %v1011 = vadd.f32 %v1007, %v1009
        %v1012 = vadd.f32 %v1008, %v1010
        %v1013 = vmul.f32 %v472, %v424
        %v1014 = vmul.f32 %v477, %v424
        %v1017 = vrot.slane %v1013, 1
        %v1018 = vrot.slane %v1014, 1
        %v1019 = vsel %vm341, %v1017, %v1018
        %v1022 = vadd.f32 %v1011, %v1019
        %v1023 = vadd.f32 %v1012, %v1018
        %v1024 = vmul.f32 %v491, %v440
        %v1025 = vmul.f32 %v496, %v440
        %v1028 = vrot.slane %v1024, 1
        %v1029 = vrot.slane %v1025, 1
        %v1030 = vsel %vm341, %v1028, %v1029
        %v1033 = vadd.f32 %v1022, %v1030
        %v1034 = vadd.f32 %v1023, %v1029
        %v1035 = vmul.f32 %v472, %v456
        %v1036 = vmul.f32 %v477, %v456
        %v1039 = vrot.slane %v1035, 2
        %v1040 = vrot.slane %v1036, 2
        %v1041 = vsel %vm374, %v1039, %v1040
        %v1044 = vadd.f32 %v1033, %v1041
        %v1045 = vadd.f32 %v1034, %v1040
        %v1046 = vmul.f32 %v558, %v482
        %v1047 = vmul.f32 %v563, %v482
        %v1048 = vadd.f32 %v1044, %v1046
        %v1049 = vadd.f32 %v1045, %v1047
        %v1050 = vmul.f32 %v577, %v501
        %v1051 = vmul.f32 %v582, %v501
        %v1052 = vadd.f32 %v1048, %v1050
        %v1053 = vadd.f32 %v1049, %v1051
        %v1054 = vmul.f32 %v558, %v510
        %v1055 = vmul.f32 %v563, %v510
        %v1058 = vrot.slane %v1054, 1
        %v1059 = vrot.slane %v1055, 1
        %v1060 = vsel %vm341, %v1058, %v1059
        %v1063 = vadd.f32 %v1052, %v1060
        %v1064 = vadd.f32 %v1053, %v1059
        %v1065 = vmul.f32 %v577, %v526
        %v1066 = vmul.f32 %v582, %v526
        %v1069 = vrot.slane %v1065, 1
        %v1070 = vrot.slane %v1066, 1
        %v1071 = vsel %vm341, %v1069, %v1070
        %v1074 = vadd.f32 %v1063, %v1071
        %v1075 = vadd.f32 %v1064, %v1070
        %v1076 = vmul.f32 %v558, %v542
        %v1077 = vmul.f32 %v563, %v542
        %v1080 = vrot.slane %v1076, 2
        %v1081 = vrot.slane %v1077, 2
        %v1082 = vsel %vm374, %v1080, %v1081
        %v1085 = vadd.f32 %v1074, %v1082
        %v1086 = vadd.f32 %v1075, %v1081
        %v1087 = vmul.f32 %v644, %v568
        %v1088 = vmul.f32 %v649, %v568
        %v1089 = vadd.f32 %v1085, %v1087
        %v1090 = vadd.f32 %v1086, %v1088
        %v1091 = vmul.f32 %v663, %v587
        %v1092 = vmul.f32 %v668, %v587
        %v1093 = vadd.f32 %v1089, %v1091
        %v1094 = vadd.f32 %v1090, %v1092
        %v1095 = vmul.f32 %v644, %v596
        %v1096 = vmul.f32 %v649, %v596
        %v1099 = vrot.slane %v1095, 1
        %v1100 = vrot.slane %v1096, 1
        %v1101 = vsel %vm341, %v1099, %v1100
        %v1104 = vadd.f32 %v1093, %v1101
        %v1105 = vadd.f32 %v1094, %v1100
        %v1106 = vmul.f32 %v663, %v612
        %v1107 = vmul.f32 %v668, %v612
        %v1110 = vrot.slane %v1106, 1
        %v1111 = vrot.slane %v1107, 1
        %v1112 = vsel %vm341, %v1110, %v1111
        %v1115 = vadd.f32 %v1104, %v1112
        %v1116 = vadd.f32 %v1105, %v1111
        %v1117 = vmul.f32 %v644, %v628
        %v1118 = vmul.f32 %v649, %v628
        %v1121 = vrot.slane %v1117, 2
        %v1122 = vrot.slane %v1118, 2
        %v1123 = vsel %vm374, %v1121, %v1122
        %v1126 = vadd.f32 %v1115, %v1123
        %v1127 = vadd.f32 %v1116, %v1122
        %1129 = vset.pattern.permute.xlu0 0
        %1130 = vperm.xlu0 %1129, %v281
        %v1131 = vpop.permute.xlu0 %1130
        %1134 = vset.pattern.permute.xlu0 0
        %1135 = vperm.xlu0 %1134, %v282
        %v1136 = vpop.permute.xlu0 %1135
        %v1138 = vmul.f32 %v1131, %v654
        %v1139 = vmul.f32 %v1136, %v654
        %v1140 = vadd.f32 %v1126, %v1138
        %v1141 = vadd.f32 %v1127, %v1139
        %1143 = vset.pattern.permute.xlu0 0
        %1144 = vperm.xlu0 %1143, %v294
        %v1145 = vpop.permute.xlu0 %1144
        %1148 = vset.pattern.permute.xlu0 0
        %1149 = vperm.xlu0 %1148, %v295
        %v1150 = vpop.permute.xlu0 %1149
        %v1152 = vmul.f32 %v1145, %v673
        %v1153 = vmul.f32 %v1150, %v673
        %v1154 = vadd.f32 %v1140, %v1152
        %v1155 = vadd.f32 %v1141, %v1153
        %v1156 = vmul.f32 %v1131, %v682
        %v1157 = vmul.f32 %v1136, %v682
        %v1160 = vrot.slane %v1156, 1
        %v1161 = vrot.slane %v1157, 1
        %v1162 = vsel %vm341, %v1160, %v1161
        %v1165 = vadd.f32 %v1154, %v1162
        %v1166 = vadd.f32 %v1155, %v1161
        %v1167 = vmul.f32 %v1145, %v698
        %v1168 = vmul.f32 %v1150, %v698
        %v1171 = vrot.slane %v1167, 1
        %v1172 = vrot.slane %v1168, 1
        %v1173 = vsel %vm341, %v1171, %v1172
        %v1176 = vadd.f32 %v1165, %v1173
        %v1177 = vadd.f32 %v1166, %v1172
        %v1178 = vmul.f32 %v1131, %v714
        %v1179 = vmul.f32 %v1136, %v714
        %v1182 = vrot.slane %v1178, 2
        %v1183 = vrot.slane %v1179, 2
        %v1184 = vsel %vm374, %v1182, %v1183
        %v1187 = vadd.f32 %v1176, %v1184
        %v1188 = vadd.f32 %v1177, %v1183
        %v1189 = vmax.f32 %v964, %v1187
        %v1190 = vmax.f32 %v965, %v1188
        %v1191 = vmul.f32 %v405, %v310
        %v1192 = vmul.f32 %v410, %v310
        %v1193 = vmul.f32 %v386, %v327
        %v1194 = vmul.f32 %v391, %v327
        %v1197 = vrot.slane %v1193, 1
        %v1198 = vrot.slane %v1194, 1
        %v1199 = vsel %vm341, %v1197, %v1198
        %v1202 = vadd.f32 %v1191, %v1199
        %v1203 = vadd.f32 %v1192, %v1198
        %v1204 = vmul.f32 %v405, %v336
        %v1205 = vmul.f32 %v410, %v336
        %v1208 = vrot.slane %v1204, 1
        %v1209 = vrot.slane %v1205, 1
        %v1210 = vsel %vm341, %v1208, %v1209
        %v1213 = vadd.f32 %v1202, %v1210
        %v1214 = vadd.f32 %v1203, %v1209
        %v1215 = vmul.f32 %v386, %v353
        %v1216 = vmul.f32 %v391, %v353
        %v1219 = vrot.slane %v1215, 2
        %v1220 = vrot.slane %v1216, 2
        %v1221 = vsel %vm374, %v1219, %v1220
        %v1224 = vadd.f32 %v1213, %v1221
        %v1225 = vadd.f32 %v1214, %v1220
        %v1226 = vmul.f32 %v405, %v369
        %v1227 = vmul.f32 %v410, %v369
        %v1230 = vrot.slane %v1226, 2
        %v1231 = vrot.slane %v1227, 2
        %v1232 = vsel %vm374, %v1230, %v1231
        %v1235 = vadd.f32 %v1224, %v1232
        %v1236 = vadd.f32 %v1225, %v1231
        %v1237 = vmul.f32 %v491, %v396
        %v1238 = vmul.f32 %v496, %v396
        %v1239 = vadd.f32 %v1235, %v1237
        %v1240 = vadd.f32 %v1236, %v1238
        %v1241 = vmul.f32 %v472, %v415
        %v1242 = vmul.f32 %v477, %v415
        %v1245 = vrot.slane %v1241, 1
        %v1246 = vrot.slane %v1242, 1
        %v1247 = vsel %vm341, %v1245, %v1246
        %v1250 = vadd.f32 %v1239, %v1247
        %v1251 = vadd.f32 %v1240, %v1246
        %v1252 = vmul.f32 %v491, %v424
        %v1253 = vmul.f32 %v496, %v424
        %v1256 = vrot.slane %v1252, 1
        %v1257 = vrot.slane %v1253, 1
        %v1258 = vsel %vm341, %v1256, %v1257
        %v1261 = vadd.f32 %v1250, %v1258
        %v1262 = vadd.f32 %v1251, %v1257
        %v1263 = vmul.f32 %v472, %v440
        %v1264 = vmul.f32 %v477, %v440
        %v1267 = vrot.slane %v1263, 2
        %v1268 = vrot.slane %v1264, 2
        %v1269 = vsel %vm374, %v1267, %v1268
        %v1272 = vadd.f32 %v1261, %v1269
        %v1273 = vadd.f32 %v1262, %v1268
        %v1274 = vmul.f32 %v491, %v456
        %v1275 = vmul.f32 %v496, %v456
        %v1278 = vrot.slane %v1274, 2
        %v1279 = vrot.slane %v1275, 2
        %v1280 = vsel %vm374, %v1278, %v1279
        %v1283 = vadd.f32 %v1272, %v1280
        %v1284 = vadd.f32 %v1273, %v1279
        %v1285 = vmul.f32 %v577, %v482
        %v1286 = vmul.f32 %v582, %v482
        %v1287 = vadd.f32 %v1283, %v1285
        %v1288 = vadd.f32 %v1284, %v1286
        %v1289 = vmul.f32 %v558, %v501
        %v1290 = vmul.f32 %v563, %v501
        %v1293 = vrot.slane %v1289, 1
        %v1294 = vrot.slane %v1290, 1
        %v1295 = vsel %vm341, %v1293, %v1294
        %v1298 = vadd.f32 %v1287, %v1295
        %v1299 = vadd.f32 %v1288, %v1294
        %v1300 = vmul.f32 %v577, %v510
        %v1301 = vmul.f32 %v582, %v510
        %v1304 = vrot.slane %v1300, 1
        %v1305 = vrot.slane %v1301, 1
        %v1306 = vsel %vm341, %v1304, %v1305
        %v1309 = vadd.f32 %v1298, %v1306
        %v1310 = vadd.f32 %v1299, %v1305
        %v1311 = vmul.f32 %v558, %v526
        %v1312 = vmul.f32 %v563, %v526
        %v1315 = vrot.slane %v1311, 2
        %v1316 = vrot.slane %v1312, 2
        %v1317 = vsel %vm374, %v1315, %v1316
        %v1320 = vadd.f32 %v1309, %v1317
        %v1321 = vadd.f32 %v1310, %v1316
        %v1322 = vmul.f32 %v577, %v542
        %v1323 = vmul.f32 %v582, %v542
        %v1326 = vrot.slane %v1322, 2
        %v1327 = vrot.slane %v1323, 2
        %v1328 = vsel %vm374, %v1326, %v1327
        %v1331 = vadd.f32 %v1320, %v1328
        %v1332 = vadd.f32 %v1321, %v1327
        %v1333 = vmul.f32 %v663, %v568
        %v1334 = vmul.f32 %v668, %v568
        %v1335 = vadd.f32 %v1331, %v1333
        %v1336 = vadd.f32 %v1332, %v1334
        %v1337 = vmul.f32 %v644, %v587
        %v1338 = vmul.f32 %v649, %v587
        %v1341 = vrot.slane %v1337, 1
        %v1342 = vrot.slane %v1338, 1
        %v1343 = vsel %vm341, %v1341, %v1342
        %v1346 = vadd.f32 %v1335, %v1343
        %v1347 = vadd.f32 %v1336, %v1342
        %v1348 = vmul.f32 %v663, %v596
        %v1349 = vmul.f32 %v668, %v596
        %v1352 = vrot.slane %v1348, 1
        %v1353 = vrot.slane %v1349, 1
        %v1354 = vsel %vm341, %v1352, %v1353
        %v1357 = vadd.f32 %v1346, %v1354
        %v1358 = vadd.f32 %v1347, %v1353
        %v1359 = vmul.f32 %v644, %v612
        %v1360 = vmul.f32 %v649, %v612
        %v1363 = vrot.slane %v1359, 2
        %v1364 = vrot.slane %v1360, 2
        %v1365 = vsel %vm374, %v1363, %v1364
        %v1368 = vadd.f32 %v1357, %v1365
        %v1369 = vadd.f32 %v1358, %v1364
        %v1370 = vmul.f32 %v663, %v628
        %v1371 = vmul.f32 %v668, %v628
        %v1374 = vrot.slane %v1370, 2
        %v1375 = vrot.slane %v1371, 2
        %v1376 = vsel %vm374, %v1374, %v1375
        %v1379 = vadd.f32 %v1368, %v1376
        %v1380 = vadd.f32 %v1369, %v1375
        %v1381 = vmul.f32 %v1145, %v654
        %v1382 = vmul.f32 %v1150, %v654
        %v1383 = vadd.f32 %v1379, %v1381
        %v1384 = vadd.f32 %v1380, %v1382
        %v1385 = vmul.f32 %v1131, %v673
        %v1386 = vmul.f32 %v1136, %v673
        %v1389 = vrot.slane %v1385, 1
        %v1390 = vrot.slane %v1386, 1
        %v1391 = vsel %vm341, %v1389, %v1390
        %v1394 = vadd.f32 %v1383, %v1391
        %v1395 = vadd.f32 %v1384, %v1390
        %v1396 = vmul.f32 %v1145, %v682
        %v1397 = vmul.f32 %v1150, %v682
        %v1400 = vrot.slane %v1396, 1
        %v1401 = vrot.slane %v1397, 1
        %v1402 = vsel %vm341, %v1400, %v1401
        %v1405 = vadd.f32 %v1394, %v1402
        %v1406 = vadd.f32 %v1395, %v1401
        %v1407 = vmul.f32 %v1131, %v698
        %v1408 = vmul.f32 %v1136, %v698
        %v1411 = vrot.slane %v1407, 2
        %v1412 = vrot.slane %v1408, 2
        %v1413 = vsel %vm374, %v1411, %v1412
        %v1416 = vadd.f32 %v1405, %v1413
        %v1417 = vadd.f32 %v1406, %v1412
        %v1418 = vmul.f32 %v1145, %v714
        %v1419 = vmul.f32 %v1150, %v714
        %v1422 = vrot.slane %v1418, 2
        %v1423 = vrot.slane %v1419, 2
        %v1424 = vsel %vm374, %v1422, %v1423
        %v1427 = vadd.f32 %v1416, %v1424
        %v1428 = vadd.f32 %v1417, %v1423
        %v1429 = vmax.f32 %v1189, %v1427
        %v1430 = vmax.f32 %v1190, %v1428
        %v1431 = vld [vmem:[#allocation4] sm:$0x1]
        %v1433 = vlaneseq
        %v1434 = vshrl.u32 %v1433, 7
        %v1435 = vsub.s32 0, %v1434
        %v1436 = vrot.slane %v1431, %v1435
        %v1438 = vadd.f32 %v1429, %v1436
        %v1439 = vadd.f32 %v1430, %v1436
        %v1440 = vmax.f32 %v1438, 0.0
        %v1441 = vmax.f32 %v1439, 0.0
        %vm1442 = vcmask 261120
        %1443 = vst.msk [vmem:[%s267] sm:$0xff] %vm1442, %v1440
        %vm1444 = vcmask 259072
        %1445 = vst.msk [vmem:[%s267 + $0x8] sm:$0x3f] %vm1444, %v1441
        %p1446 = scmp.lt.s32.totalorder %s21, 1
        %s1447 = scalar_select %p1446, %s21, 1
        %p1448 = scmp.lt.s32.totalorder %s22, 13
        %s1449 = scalar_select %p1448, %s22, 13
        %s1450 = smul.addr %s1449, 2
        %s1451 = smul.addr %s1447, 28
        %s1452 = sadd.s32 %s1450, %s1451
        %s1453 = smul.addr %s1452, 8
        %s1454 = scalar_lea.vmem %s4, %s1453
        // Predicated region
        $region45: #{emnist_forward.3} parent=35 // pred_check
          %p1455 = pneg %p143
        $region46: #{emnist_forward.3} parent=35 // pred_check_branch
          %1457 = sbr.rel (%p1455) target = $region48
        $region47: #{emnist_forward.3} parent=35 // pred_region
          _
        $region48: #{emnist_forward.3} parent=35 // pred_fallthru
          _
      $region36: #{emnist_forward.3} parent=5 // pred_fallthru
        _
      %p1458 = scmp.le.s32.totalorder 2, %s12
      // Predicated region
      $region49: #{emnist_forward.3} parent=5 // pred_check
        %p1459 = pneg %p1458
      $region50: #{emnist_forward.3} parent=5 // pred_check_branch
        %1461 = sbr.rel (%p1459) target = $region52
      $region51: #{emnist_forward.3} parent=5 // pred_region
        %s1462 = ssub.s32 %s12, 2
        // Predicated region
        $region53: #{emnist_forward.3} parent=51 // pred_check
          %p1463 = pneg %p149
        $region54: #{emnist_forward.3} parent=51 // pred_check_branch
          %1465 = sbr.rel (%p1463) target = $region56
        $region55: #{emnist_forward.3} parent=51 // pred_region
          %p1466 = scmp.lt.s32.totalorder %s23, 1
          %s1467 = scalar_select %p1466, %s23, 1
          %p1468 = scmp.lt.s32.totalorder %s24, 13
          %s1469 = scalar_select %p1468, %s24, 13
          %s1470 = smul.addr %s1469, 2
          %s1471 = smul.addr %s1467, 28
          %s1472 = sadd.s32 %s1470, %s1471
          %s1473 = smul.addr %s1472, 8
          %s1474 = scalar_lea.vmem %s4, %s1473
        $region56: #{emnist_forward.3} parent=51 // pred_fallthru
          _
      $region52: #{emnist_forward.3} parent=5 // pred_fallthru
        _
    $region6: #{emnist_forward.3} parent=1 // loop_footer
      %s16 = sadd.s32 1, %s12
    $region7: #{emnist_forward.3} parent=1 // loop_footer_branch
      %11 = sbr.rel target = $region3
    $region8: #{emnist_forward.3} parent=1 // loop_exit
      _
    %1475 = vsyncpa [#allocation3], 1
    %s1476 = scalar_lea.sflag [#allocation3], 1
    %1477 = vsyncpa %s1476, 1
    %1478 = vsyncpa [#allocation5], 1

// kernel: emnist_forward.4
$region0: #{emnist_forward.4}
  #allocation0 [shape = 'u32[]', space=smem, size = 0x4, offset = 0x4, fixed_abs, tag = 'smem constant byte address 0x4 - core index']
  #allocation1 [shape = 'u32[144,128]{1,0:T(1,128)}', space=vmem, size = 0x12000, scoped, tag = 'internal scratch']
  %s0 = inlined_call_operand.vmem [shape: f32[2,18,9,32], index: 0, kind: input, shape index: {}]
  %s1 = inlined_call_operand.vmem [shape: f32[2,18,9,32], index: 1, kind: input, shape index: {}]
  %s2 = inlined_call_operand.vmem [shape: f32[800,64], index: 2, kind: input, shape index: {}]
  %s3 = inlined_call_operand.hbm [shape: f32[1,64], index: 3, kind: input, shape index: {}]
  %s4 = inlined_call_operand.vmem [shape: f32[2,7,7,64], index: 4, kind: output, shape index: {}]
  %s5 = sld [smem:[#allocation0]]
  $region53: #{emnist_forward.4} parent=0
    _
  %s7 = ssub.s32 1, %s5
  %s8 = scalar_select 0, %s7, %s5
  $region1: #{emnist_forward.4} parent=0
    #allocation2 [shape = 'u8[512]{0}', space=vmem, size = 0x400, scoped, tag = 'input window, operand 3, single buffered']
    #allocation3 [shape = 's32[2]{0}', space=sflag, size = 0x8, scoped, tag = 'scoped memory for emnist_forward.4']
    %9 = vsyncpa [#allocation3], 0
    loop: start=0, step=1, limit=16
    $region2: #{emnist_forward.4} parent=1 // loop_pre_header
      _
    $region3: #{emnist_forward.4} parent=1 // loop_header
      %s11 = sphi 0, %s15
      %p12 = scmp.ge.s32.totalorder %s11, 16
      %s18 = sphi 0, %s30
      %s19 = sphi 0, %s26
      %s20 = sphi 0, %s18
      %s21 = sphi 0, %s19
      %s22 = sphi 0, %s20
      %s23 = sphi 0, %s21
      %s33 = sphi 0, %s35
      %s36 = sphi 0, %s33
      %s37 = sphi 0, %s36
      %s53 = sphi 0, %s37
      %s59 = sphi 0, %s61
      %s62 = sphi 0, %s59
      %s63 = sphi 0, %s62
      %s79 = sphi 0, %s63
      %s83 = sphi 0, %s83
      %s85 = sphi 0, %s83
      %s86 = sphi 0, %s85
      %s100 = sphi 0, %s86
      %s104 = sphi 0, %s104
      %s106 = sphi 0, %s104
      %s107 = sphi 0, %s106
      %s121 = sphi 0, %s107
      %s129 = sphi 0, %s131
      %s132 = sphi 0, %s129
      %s133 = sphi 0, %s132
      %s149 = sphi 0, %s133
    $region4: #{emnist_forward.4} parent=1 // loop_header_branch
      %14 = sbr.rel (%p12) target = $region8
    $region5: #{emnist_forward.4} parent=1 // loop_body
      %s16 = ssub.s32 %s11, 1
      %s17 = ssub.s32 %s11, 2
      %s24 = sadd.s32 1, %s19
      %p25 = scmp.ge.s32.totalorder %s24, 7
      %s26 = scalar_select %p25, 0, %s24
      %s27 = sadd.s32 1, %s18
      %s28 = scalar_select %p25, %s27, %s18
      %p29 = scmp.ge.s32.totalorder %s28, 2
      %s30 = scalar_select %p29, 0, %s28
      %s31 = ssub.s32 %s18, %s30
      %p32 = scmp.eq.s32.totalorder %s31, 0
      %s34 = sadd.s32 %s33, 1
      %s35 = scalar_select %p32, %s33, %s34
      %p38 = pneg %p32
      %p39 = scmp.eq.s32.totalorder %s11, 13
      %p40 = por %p38, %p39
      %p41 = scmp.ne.s32.totalorder %s33, %s36
      %p42 = scmp.eq.s32.totalorder %s11, 0
      %p43 = por %p41, %p42
      %p44 = scmp.ne.s32.totalorder %s33, %s36
      %p45 = scmp.eq.s32.totalorder %s16, 13
      %p46 = por %p44, %p45
      %p47 = scmp.ne.s32.totalorder %s36, %s37
      %p48 = scmp.eq.s32.totalorder %s16, 0
      %p49 = por %p47, %p48
      %p50 = scmp.ne.s32.totalorder %s36, %s37
      %p51 = scmp.eq.s32.totalorder %s17, 13
      %p52 = por %p50, %p51
      %p54 = scmp.ne.s32.totalorder %s37, %s53
      %p55 = scmp.eq.s32.totalorder %s17, 0
      %p56 = por %p54, %p55
      %s57 = ssub.s32 %s18, %s30
      %p58 = scmp.eq.s32.totalorder %s57, 0
      %s60 = sadd.s32 %s59, 1
      %s61 = scalar_select %p58, %s59, %s60
      %p64 = pneg %p58
      %p65 = scmp.eq.s32.totalorder %s11, 13
      %p66 = por %p64, %p65
      %p67 = scmp.ne.s32.totalorder %s59, %s62
      %p68 = scmp.eq.s32.totalorder %s11, 0
      %p69 = por %p67, %p68
      %p70 = scmp.ne.s32.totalorder %s59, %s62
      %p71 = scmp.eq.s32.totalorder %s16, 13
      %p72 = por %p70, %p71
      %p73 = scmp.ne.s32.totalorder %s62, %s63
      %p74 = scmp.eq.s32.totalorder %s16, 0
      %p75 = por %p73, %p74
      %p76 = scmp.ne.s32.totalorder %s62, %s63
      %p77 = scmp.eq.s32.totalorder %s17, 13
      %p78 = por %p76, %p77
      %p80 = scmp.ne.s32.totalorder %s63, %s79
      %p81 = scmp.eq.s32.totalorder %s17, 0
      %p82 = por %p80, %p81
      %s84 = sadd.s32 %s83, 1
      %p87 = scmp.eq.s32.totalorder %s11, 13
      %p88 = scmp.ne.s32.totalorder %s83, %s85
      %p89 = scmp.eq.s32.totalorder %s11, 0
      %p90 = por %p88, %p89
      %p91 = scmp.ne.s32.totalorder %s83, %s85
      %p92 = scmp.eq.s32.totalorder %s16, 13
      %p93 = por %p91, %p92
      %p94 = scmp.ne.s32.totalorder %s85, %s86
      %p95 = scmp.eq.s32.totalorder %s16, 0
      %p96 = por %p94, %p95
      %p97 = scmp.ne.s32.totalorder %s85, %s86
      %p98 = scmp.eq.s32.totalorder %s17, 13
      %p99 = por %p97, %p98
      %p101 = scmp.ne.s32.totalorder %s86, %s100
      %p102 = scmp.eq.s32.totalorder %s17, 0
      %p103 = por %p101, %p102
      %s105 = sadd.s32 %s104, 1
      %p108 = scmp.eq.s32.totalorder %s11, 13
      %p109 = scmp.ne.s32.totalorder %s104, %s106
      %p110 = scmp.eq.s32.totalorder %s11, 0
      %p111 = por %p109, %p110
      %p112 = scmp.ne.s32.totalorder %s104, %s106
      %p113 = scmp.eq.s32.totalorder %s16, 13
      %p114 = por %p112, %p113
      %p115 = scmp.ne.s32.totalorder %s106, %s107
      %p116 = scmp.eq.s32.totalorder %s16, 0
      %p117 = por %p115, %p116
      %p118 = scmp.ne.s32.totalorder %s106, %s107
      %p119 = scmp.eq.s32.totalorder %s17, 13
      %p120 = por %p118, %p119
      %p122 = scmp.ne.s32.totalorder %s107, %s121
      %p123 = scmp.eq.s32.totalorder %s17, 0
      %p124 = por %p122, %p123
      %s125 = ssub.s32 %s18, %s30
      %s126 = ssub.s32 %s19, %s26
      %s127 = sor.u32 %s125, %s126
      %p128 = scmp.eq.s32.totalorder %s127, 0
      %s130 = sadd.s32 %s129, 1
      %s131 = scalar_select %p128, %s129, %s130
      %p134 = pneg %p128
      %p135 = scmp.eq.s32.totalorder %s11, 13
      %p136 = por %p134, %p135
      %p137 = scmp.ne.s32.totalorder %s129, %s132
      %p138 = scmp.eq.s32.totalorder %s11, 0
      %p139 = por %p137, %p138
      %p140 = scmp.ne.s32.totalorder %s129, %s132
      %p141 = scmp.eq.s32.totalorder %s16, 13
      %p142 = por %p140, %p141
      %p143 = scmp.ne.s32.totalorder %s132, %s133
      %p144 = scmp.eq.s32.totalorder %s16, 0
      %p145 = por %p143, %p144
      %p146 = scmp.ne.s32.totalorder %s132, %s133
      %p147 = scmp.eq.s32.totalorder %s17, 13
      %p148 = por %p146, %p147
      %p150 = scmp.ne.s32.totalorder %s133, %s149
      %p151 = scmp.eq.s32.totalorder %s17, 0
      %p152 = por %p150, %p151
      %p153 = scmp.le.s32.totalorder 1, %s11
      %p154 = scmp.lt.s32.totalorder %s11, 15
      %p155 = pnand %p153, %p154
      %p156 = pneg %p155
      // Predicated region
      $region9: #{emnist_forward.4} parent=5 // pred_check
        _
      $region10: #{emnist_forward.4} parent=5 // pred_check_branch
        %158 = sbr.rel (%p155) target = $region12
      $region11: #{emnist_forward.4} parent=5 // pred_region
        %s159 = ssub.s32 %s11, 1
        // Predicated region
        $region13: #{emnist_forward.4} parent=11 // pred_check
          %p160 = pneg %p96
        $region14: #{emnist_forward.4} parent=11 // pred_check_branch
          %162 = sbr.rel (%p160) target = $region16
        $region15: #{emnist_forward.4} parent=11 // pred_region
          _
        $region16: #{emnist_forward.4} parent=11 // pred_fallthru
          _
        // Predicated region
        $region17: #{emnist_forward.4} parent=11 // pred_check
          %p163 = pneg %p117
        $region18: #{emnist_forward.4} parent=11 // pred_check_branch
          %165 = sbr.rel (%p163) target = $region20
        $region19: #{emnist_forward.4} parent=11 // pred_region
          %s167 = ssub.s32 16, 16
          %168 = vsyncadd [#allocation3], %s167
          %s170 = sshll.u32 [#allocation2], 4
          %s171 = int_to_ptr.vmem [resolvable:$true] %s170
          %173 = dma.hbm_to_vmem [thread:$0]  %s3, 16, %s171, [#allocation3]
        $region20: #{emnist_forward.4} parent=11 // pred_fallthru
          _
      $region12: #{emnist_forward.4} parent=5 // pred_fallthru
        _
      %p174 = scmp.lt.s32.totalorder %s11, 14
      // Predicated region
      $region21: #{emnist_forward.4} parent=5 // pred_check
        %p175 = pneg %p174
      $region22: #{emnist_forward.4} parent=5 // pred_check_branch
        %177 = sbr.rel (%p175) target = $region24
      $region23: #{emnist_forward.4} parent=5 // pred_region
        // Predicated region
        $region25: #{emnist_forward.4} parent=23 // pred_check
          %p178 = pneg %p43
        $region26: #{emnist_forward.4} parent=23 // pred_check_branch
          %180 = sbr.rel (%p178) target = $region28
        $region27: #{emnist_forward.4} parent=23 // pred_region
          %p181 = scmp.lt.s32.totalorder %s18, 1
          %s182 = scalar_select %p181, %s18, 1
          %s183 = smul.addr %s182, 36
          %s184 = smul.addr %s183, 8
          %s185 = scalar_lea.vmem %s0, %s184
        $region28: #{emnist_forward.4} parent=23 // pred_fallthru
          _
        // Predicated region
        $region29: #{emnist_forward.4} parent=23 // pred_check
          %p186 = pneg %p69
        $region30: #{emnist_forward.4} parent=23 // pred_check_branch
          %188 = sbr.rel (%p186) target = $region32
        $region31: #{emnist_forward.4} parent=23 // pred_region
          %p189 = scmp.lt.s32.totalorder %s18, 1
          %s190 = scalar_select %p189, %s18, 1
          %s191 = smul.addr %s190, 36
          %s192 = smul.addr %s191, 8
          %s193 = scalar_lea.vmem %s1, %s192
        $region32: #{emnist_forward.4} parent=23 // pred_fallthru
          _
      $region24: #{emnist_forward.4} parent=5 // pred_fallthru
        _
      %p194 = scmp.le.s32.totalorder 1, %s11
      %p195 = scmp.lt.s32.totalorder %s11, 15
      %p196 = pnand %p194, %p195
      %p197 = pneg %p196
      // Predicated region
      $region33: #{emnist_forward.4} parent=5 // pred_check
        _
      $region34: #{emnist_forward.4} parent=5 // pred_check_branch
        %199 = sbr.rel (%p196) target = $region36
      $region35: #{emnist_forward.4} parent=5 // pred_region
        %s200 = ssub.s32 %s11, 1
        // Predicated region
        $region37: #{emnist_forward.4} parent=35 // pred_check
          %p201 = pneg %p117
        $region38: #{emnist_forward.4} parent=35 // pred_check_branch
          %203 = sbr.rel (%p201) target = $region40
        $region39: #{emnist_forward.4} parent=35 // pred_region
          %204 = dma.done [#allocation3], 16
        $region40: #{emnist_forward.4} parent=35 // pred_fallthru
          _
        %p205 = scmp.lt.s32.totalorder %s20, 1
        %s206 = scalar_select %p205, %s20, 1
        %s207 = smul.addr %s206, 36
        %s208 = smul.addr %s207, 8
        %s209 = scalar_lea.vmem %s0, %s208
        %p210 = pneg %p49
        %p211 = pneg %p46
        %p212 = scmp.lt.s32.totalorder %s20, 1
        %s213 = scalar_select %p212, %s20, 1
        %s214 = smul.addr %s213, 36
        %s215 = smul.addr %s214, 8
        %s216 = scalar_lea.vmem %s1, %s215
        %p217 = pneg %p75
        %p218 = pneg %p72
        %p219 = pneg %p96
        %p220 = pneg %p93
        %p221 = pneg %p117
        %p222 = pneg %p114
        %p223 = pneg %p145
        %p224 = pneg %p142
        %p225 = scmp.lt.s32.totalorder %s20, 1
        %s226 = scalar_select %p225, %s20, 1
        %p227 = scmp.lt.s32.totalorder %s21, 6
        %s228 = scalar_select %p227, %s21, 6
        %s229 = smul.addr %s226, 7
        %s230 = sadd.s32 %s228, %s229
        %s231 = smul.addr %s230, 8
        %s232 = scalar_lea.vmem %s4, %s231
        %p233 = scmp.lt.s32.totalorder %s20, 1
        %s234 = scalar_select %p233, %s20, 1
        %s235 = smul.addr %s234, 36
        %s236 = smul.addr %s235, 8
        %s237 = scalar_lea.vmem %s0, %s236
        %p238 = scmp.lt.s32.totalorder %s20, 1
        %s239 = scalar_select %p238, %s20, 1
        %s240 = smul.addr %s239, 36
        %s241 = smul.addr %s240, 8
        %s242 = scalar_lea.vmem %s1, %s241
        %p243 = scmp.lt.s32.totalorder %s20, 1
        %s244 = scalar_select %p243, %s20, 1
        %p245 = scmp.lt.s32.totalorder %s21, 6
        %s246 = scalar_select %p245, %s21, 6
        %s247 = smul.addr %s244, 7
        %s248 = sadd.s32 %s246, %s247
        %s249 = smul.addr %s248, 8
        %s250 = scalar_lea.vmem %s4, %s249
        %s251 = smul.u32 %s21, 2
        %s252 = smul.u32 %s251, 16
        %s253 = scalar_lea.vmem %s237, %s252
        %v254 = vld [vmem:[%s253] sm:$0xff]
        %v255 = vld [vmem:[%s253 + $0x8] sm:$0x1]
        %v256 = vld [vmem:[%s253 + $0x10] sm:$0xff]
        %v257 = vld [vmem:[%s253 + $0x18] sm:$0x1]
        %v258 = vld [vmem:[%s253 + $0x20] sm:$0xff]
        %v259 = vld [vmem:[%s253 + $0x28] sm:$0x1]
        %v260 = vld [vmem:[%s253 + $0x30] sm:$0xff]
        %v261 = vld [vmem:[%s253 + $0x38] sm:$0x1]
        %v262 = vld [vmem:[%s253 + $0x40] sm:$0xff]
        %v263 = vld [vmem:[%s253 + $0x48] sm:$0x1]
        %v264 = vld [vmem:[%s253 + $0x50] sm:$0xff]
        %v265 = vld [vmem:[%s253 + $0x58] sm:$0x1]
        %s266 = scalar_lea.vmem %s242, %s252
        %v267 = vld [vmem:[%s266] sm:$0xff]
        %v268 = vld [vmem:[%s266 + $0x8] sm:$0x1]
        %v269 = vld [vmem:[%s266 + $0x10] sm:$0xff]
        %v270 = vld [vmem:[%s266 + $0x18] sm:$0x1]
        %v271 = vld [vmem:[%s266 + $0x20] sm:$0xff]
        %v272 = vld [vmem:[%s266 + $0x28] sm:$0x1]
        %v273 = vld [vmem:[%s266 + $0x30] sm:$0xff]
        %v274 = vld [vmem:[%s266 + $0x38] sm:$0x1]
        %v275 = vld [vmem:[%s266 + $0x40] sm:$0xff]
        %v276 = vld [vmem:[%s266 + $0x48] sm:$0x1]
        %v277 = vld [vmem:[%s266 + $0x50] sm:$0xff]
        %v278 = vld [vmem:[%s266 + $0x58] sm:$0x1]
        %280 = vrot.lane.b32.xlu0 %v267, 32
        %v281 = vpop.permute.xlu0 %280
        %v284 = vrot.slane %v254, 1
        %285 = vrot.lane.b32.xlu0 %v284, 64
        %v286 = vpop.permute.xlu0 %285
        %v288 = vrot.slane %v267, 1
        %289 = vrot.lane.b32.xlu0 %v288, 96
        %v290 = vpop.permute.xlu0 %289
        %vm293 = vcmask 1045504
        %v294 = vrot.slane %v254, 2
        %v295 = vrot.slane %v255, 2
        %v296 = vsel %vm293, %v294, %v295
        %299 = vrot.lane.b32.xlu0 %v256, 32
        %v300 = vpop.permute.xlu0 %299
        %303 = vrot.lane.b32.xlu0 %v269, 64
        %v304 = vpop.permute.xlu0 %303
        %v306 = vrot.slane %v256, 1
        %307 = vrot.lane.b32.xlu0 %v306, 96
        %v308 = vpop.permute.xlu0 %307
        %v310 = vrot.slane %v269, 1
        %v313 = vrot.slane %v256, 2
        %v314 = vrot.slane %v257, 2
        %v315 = vsel %vm293, %v313, %v314
        %316 = vrot.lane.b32.xlu0 %v315, 32
        %v317 = vpop.permute.xlu0 %316
        %320 = vrot.lane.b32.xlu0 %v258, 64
        %v321 = vpop.permute.xlu0 %320
        %324 = vrot.lane.b32.xlu0 %v271, 96
        %v325 = vpop.permute.xlu0 %324
        %v327 = vrot.slane %v258, 1
        %v329 = vrot.slane %v271, 1
        %330 = vrot.lane.b32.xlu0 %v329, 32
        %v331 = vpop.permute.xlu0 %330
        %v334 = vrot.slane %v258, 2
        %v335 = vrot.slane %v259, 2
        %v336 = vsel %vm293, %v334, %v335
        %337 = vrot.lane.b32.xlu0 %v336, 64
        %v338 = vpop.permute.xlu0 %337
        %341 = vrot.lane.b32.xlu0 %v260, 96
        %v342 = vpop.permute.xlu0 %341
        %vm344 = vcmask 261120
        %v345 = vsel %vm344, %v254, %v281
        %vm346 = vcmask 523264
        %v347 = vsel %vm346, %v345, %v286
        %vm348 = vcmask 785408
        %v349 = vsel %vm348, %v347, %v290
        %v350 = vsel %vm344, %v296, %v300
        %v351 = vsel %vm346, %v350, %v304
        %v352 = vsel %vm348, %v351, %v308
        %v353 = vsel %vm344, %v310, %v317
        %v354 = vsel %vm346, %v353, %v321
        %v355 = vsel %vm348, %v354, %v325
        %v356 = vsel %vm344, %v327, %v331
        %v357 = vsel %vm346, %v356, %v338
        %v358 = vsel %vm348, %v357, %v342
        %v359 = vrot.slane %v260, 1
        %360 = vrot.lane.b32.xlu0 %v359, 32
        %v361 = vpop.permute.xlu0 %360
        %v364 = vrot.slane %v273, 1
        %365 = vrot.lane.b32.xlu0 %v364, 64
        %v366 = vpop.permute.xlu0 %365
        %v369 = vrot.slane %v260, 2
        %v370 = vrot.slane %v261, 2
        %v371 = vsel %vm293, %v369, %v370
        %372 = vrot.lane.b32.xlu0 %v371, 96
        %v373 = vpop.permute.xlu0 %372
        %376 = vrot.lane.b32.xlu0 %v275, 32
        %v377 = vpop.permute.xlu0 %376
        %v380 = vrot.slane %v262, 1
        %381 = vrot.lane.b32.xlu0 %v380, 64
        %v382 = vpop.permute.xlu0 %381
        %v384 = vrot.slane %v275, 1
        %385 = vrot.lane.b32.xlu0 %v384, 96
        %v386 = vpop.permute.xlu0 %385
        %v389 = vrot.slane %v262, 2
        %v390 = vrot.slane %v263, 2
        %v391 = vsel %vm293, %v389, %v390
        %v392 = vsel %vm344, %v273, %v361
        %v393 = vsel %vm346, %v392, %v366
        %v394 = vsel %vm348, %v393, %v373
        %v395 = vsel %vm344, %v262, %v377
        %v396 = vsel %vm346, %v395, %v382
        %v397 = vsel %vm348, %v396, %v386
        %v398 = vld [vmem:[%s2] sm:$0xff]
        %v399 = vld [vmem:[%s2 + $0x8] sm:$0xff]
        %v400 = vld [vmem:[%s2 + $0x10] sm:$0xff]
        %v401 = vld [vmem:[%s2 + $0x18] sm:$0xff]
        %v402 = vld [vmem:[%s2 + $0x20] sm:$0xff]
        %v403 = vld [vmem:[%s2 + $0x28] sm:$0xff]
        %v404 = vld [vmem:[%s2 + $0x30] sm:$0xff]
        %v405 = vld [vmem:[%s2 + $0x38] sm:$0xff]
        %v406 = vld [vmem:[%s2 + $0x40] sm:$0xff]
        %v407 = vld [vmem:[%s2 + $0x48] sm:$0xff]
        %v408 = vld [vmem:[%s2 + $0x50] sm:$0xff]
        %v409 = vld [vmem:[%s2 + $0x58] sm:$0xff]
        %v410 = vld [vmem:[%s2 + $0x60] sm:$0xff]
        %v411 = vld [vmem:[%s2 + $0x68] sm:$0xff]
        %v412 = vld [vmem:[%s2 + $0x70] sm:$0xff]
        %v413 = vld [vmem:[%s2 + $0x78] sm:$0xff]
        %v414 = vld [vmem:[%s2 + $0x80] sm:$0xff]
        %v415 = vld [vmem:[%s2 + $0x88] sm:$0xff]
        %v416 = vld [vmem:[%s2 + $0x90] sm:$0xff]
        %v417 = vld [vmem:[%s2 + $0x98] sm:$0xff]
        %v418 = vld [vmem:[%s2 + $0xa0] sm:$0xff]
        %v419 = vld [vmem:[%s2 + $0xa8] sm:$0xff]
        %v420 = vld [vmem:[%s2 + $0xb0] sm:$0xff]
        %v421 = vld [vmem:[%s2 + $0xb8] sm:$0xff]
        %v422 = vld [vmem:[%s2 + $0xc0] sm:$0xff]
        %v423 = vld [vmem:[%s2 + $0xc8] sm:$0xff]
        %v424 = vld [vmem:[%s2 + $0xd0] sm:$0xff]
        %v425 = vld [vmem:[%s2 + $0xd8] sm:$0xff]
        %v426 = vld [vmem:[%s2 + $0xe0] sm:$0xff]
        %v427 = vld [vmem:[%s2 + $0xe8] sm:$0xff]
        %v428 = vld [vmem:[%s2 + $0xf0] sm:$0xff]
        %v429 = vld [vmem:[%s2 + $0xf8] sm:$0xff]
        %v430 = vld [vmem:[%s2 + $0x100] sm:$0xff]
        %v431 = vld [vmem:[%s2 + $0x108] sm:$0xff]
        %v432 = vld [vmem:[%s2 + $0x110] sm:$0xff]
        %v433 = vld [vmem:[%s2 + $0x118] sm:$0xff]
        %v434 = vld [vmem:[%s2 + $0x120] sm:$0xff]
        %v435 = vld [vmem:[%s2 + $0x128] sm:$0xff]
        %v436 = vld [vmem:[%s2 + $0x130] sm:$0xff]
        %v437 = vld [vmem:[%s2 + $0x138] sm:$0xff]
        %v438 = vld [vmem:[%s2 + $0x140] sm:$0xff]
        %v439 = vld [vmem:[%s2 + $0x148] sm:$0xff]
        %v440 = vld [vmem:[%s2 + $0x150] sm:$0xff]
        %v441 = vld [vmem:[%s2 + $0x158] sm:$0xff]
        %v442 = vld [vmem:[%s2 + $0x160] sm:$0xff]
        %v443 = vld [vmem:[%s2 + $0x168] sm:$0xff]
        %v444 = vld [vmem:[%s2 + $0x170] sm:$0xff]
        %v445 = vld [vmem:[%s2 + $0x178] sm:$0xff]
        %v446 = vld [vmem:[%s2 + $0x180] sm:$0xff]
        %v447 = vld [vmem:[%s2 + $0x188] sm:$0xff]
        %v448 = vld [vmem:[%s2 + $0x190] sm:$0xff]
        %v449 = vld [vmem:[%s2 + $0x198] sm:$0xff]
        %v450 = vld [vmem:[%s2 + $0x1a0] sm:$0xff]
        %v451 = vld [vmem:[%s2 + $0x1a8] sm:$0xff]
        %v452 = vld [vmem:[%s2 + $0x1b0] sm:$0xff]
        %v453 = vld [vmem:[%s2 + $0x1b8] sm:$0xff]
        %v454 = vld [vmem:[%s2 + $0x1c0] sm:$0xff]
        %v455 = vld [vmem:[%s2 + $0x1c8] sm:$0xff]
        %v456 = vld [vmem:[%s2 + $0x1d0] sm:$0xff]
        %v457 = vld [vmem:[%s2 + $0x1d8] sm:$0xff]
        %v458 = vld [vmem:[%s2 + $0x1e0] sm:$0xff]
        %v459 = vld [vmem:[%s2 + $0x1e8] sm:$0xff]
        %v460 = vld [vmem:[%s2 + $0x1f0] sm:$0xff]
        %v461 = vld [vmem:[%s2 + $0x1f8] sm:$0xff]
        %v462 = vld [vmem:[%s2 + $0x200] sm:$0xff]
        %v463 = vld [vmem:[%s2 + $0x208] sm:$0xff]
        %v464 = vld [vmem:[%s2 + $0x210] sm:$0xff]
        %v465 = vld [vmem:[%s2 + $0x218] sm:$0xff]
        %v466 = vld [vmem:[%s2 + $0x220] sm:$0xff]
        %v467 = vld [vmem:[%s2 + $0x228] sm:$0xff]
        %v468 = vld [vmem:[%s2 + $0x230] sm:$0xff]
        %v469 = vld [vmem:[%s2 + $0x238] sm:$0xff]
        %v470 = vld [vmem:[%s2 + $0x240] sm:$0xff]
        %v471 = vld [vmem:[%s2 + $0x248] sm:$0xff]
        %v472 = vld [vmem:[%s2 + $0x250] sm:$0xff]
        %v473 = vld [vmem:[%s2 + $0x258] sm:$0xff]
        %v474 = vld [vmem:[%s2 + $0x260] sm:$0xff]
        %v475 = vld [vmem:[%s2 + $0x268] sm:$0xff]
        %v476 = vld [vmem:[%s2 + $0x270] sm:$0xff]
        %v477 = vld [vmem:[%s2 + $0x278] sm:$0xff]
        %v478 = vld [vmem:[%s2 + $0x280] sm:$0xff]
        %v479 = vld [vmem:[%s2 + $0x288] sm:$0xff]
        %v480 = vld [vmem:[%s2 + $0x290] sm:$0xff]
        %v481 = vld [vmem:[%s2 + $0x298] sm:$0xff]
        %v482 = vld [vmem:[%s2 + $0x2a0] sm:$0xff]
        %v483 = vld [vmem:[%s2 + $0x2a8] sm:$0xff]
        %v484 = vld [vmem:[%s2 + $0x2b0] sm:$0xff]
        %v485 = vld [vmem:[%s2 + $0x2b8] sm:$0xff]
        %v486 = vld [vmem:[%s2 + $0x2c0] sm:$0xff]
        %v487 = vld [vmem:[%s2 + $0x2c8] sm:$0xff]
        %v488 = vld [vmem:[%s2 + $0x2d0] sm:$0xff]
        %v489 = vld [vmem:[%s2 + $0x2d8] sm:$0xff]
        %v490 = vld [vmem:[%s2 + $0x2e0] sm:$0xff]
        %v491 = vld [vmem:[%s2 + $0x2e8] sm:$0xff]
        %v492 = vld [vmem:[%s2 + $0x2f0] sm:$0xff]
        %v493 = vld [vmem:[%s2 + $0x2f8] sm:$0xff]
        %v494 = vld [vmem:[%s2 + $0x300] sm:$0xff]
        %v495 = vld [vmem:[%s2 + $0x308] sm:$0xff]
        %v496 = vld [vmem:[%s2 + $0x310] sm:$0xff]
        %v497 = vld [vmem:[%s2 + $0x318] sm:$0xff]
        %v498 = vsel %vm344, %v391, 0
        %500 = vmatprep.subr.mxu0 0.0
        %501 = vmatpush1.msra.mxu0 %v398
        %502 = vmatprep.subr.mxu0 0.0
        %503 = vmatpush1.msra.mxu0 %v399
        %504 = vmatprep.subr.mxu0 0.0
        %505 = vmatpush1.msra.mxu0 %v400
        %506 = vmatprep.subr.mxu0 0.0
        %507 = vmatpush1.msra.mxu0 %v401
        %508 = vmatprep.subr.mxu0 0.0
        %509 = vmatpush1.msra.mxu0 %v402
        %510 = vmatprep.subr.mxu0 0.0
        %511 = vmatpush1.msra.mxu0 %v403
        %512 = vmatprep.subr.mxu0 0.0
        %513 = vmatpush1.msra.mxu0 %v404
        %514 = vmatprep.subr.mxu0 0.0
        %515 = vmatpush1.msra.mxu0 %v405
        %516 = vmatprep.subr.mxu0 0.0
        %517 = vmatpush1.msra.mxu0 %v406
        %518 = vmatprep.subr.mxu0 0.0
        %519 = vmatpush1.msra.mxu0 %v407
        %520 = vmatprep.subr.mxu0 0.0
        %521 = vmatpush1.msra.mxu0 %v408
        %522 = vmatprep.subr.mxu0 0.0
        %523 = vmatpush1.msra.mxu0 %v409
        %524 = vmatprep.subr.mxu0 0.0
        %525 = vmatpush1.msra.mxu0 %v410
        %526 = vmatprep.subr.mxu0 0.0
        %527 = vmatpush1.msra.mxu0 %v411
        %528 = vmatprep.subr.mxu0 0.0
        %529 = vmatpush1.msra.mxu0 %v412
        %530 = vmatprep.subr.mxu0 0.0
        %531 = vmatpush1.msra.mxu0 %v413
        %532 = vmatprep.subr.mxu0 0.0
        %533 = vmatpush1.msra.mxu0 %v414
        %534 = vmatprep.subr.mxu0 0.0
        %535 = vmatpush1.msra.mxu0 %v415
        %536 = vmatprep.subr.mxu0 0.0
        %537 = vmatpush1.msra.mxu0 %v416
        %538 = vmatprep.subr.mxu0 0.0
        %539 = vmatpush1.msra.mxu0 %v417
        %540 = vmatprep.subr.mxu0 0.0
        %541 = vmatpush1.msra.mxu0 %v418
        %542 = vmatprep.subr.mxu0 0.0
        %543 = vmatpush1.msra.mxu0 %v419
        %544 = vmatprep.subr.mxu0 0.0
        %545 = vmatpush1.msra.mxu0 %v420
        %546 = vmatprep.subr.mxu0 0.0
        %547 = vmatpush1.msra.mxu0 %v421
        %548 = vmatprep.subr.mxu0 0.0
        %549 = vmatpush1.msra.mxu0 %v422
        %550 = vmatprep.subr.mxu0 0.0
        %551 = vmatpush1.msra.mxu0 %v423
        %552 = vmatprep.subr.mxu0 0.0
        %553 = vmatpush1.msra.mxu0 %v424
        %554 = vmatprep.subr.mxu0 0.0
        %555 = vmatpush1.msra.mxu0 %v425
        %556 = vmatprep.subr.mxu0 0.0
        %557 = vmatpush1.msra.mxu0 %v426
        %558 = vmatprep.subr.mxu0 0.0
        %559 = vmatpush1.msra.mxu0 %v427
        %560 = vmatprep.subr.mxu0 0.0
        %561 = vmatpush1.msra.mxu0 %v428
        %562 = vmatprep.subr.mxu0 0.0
        %563 = vmatpush1.msra.mxu0 %v429
        %564 = vmatprep.mubr.f32.mxu0 %v352
        %565 = vmatmul.mubr.f32.gmra.mrb[0].mxu0 %v349
        %v566 = vpop.f32.mrb[0].mxu0
        %v567 = vadd.f32 0.0, %v566
        %v568 = vpop.f32.mrb[0].mxu0
        %569 = vdwg.mxu0
        %570 = vmatprep.subr.mxu0 0.0
        %571 = vmatpush1.msra.mxu0 %v430
        %572 = vmatprep.subr.mxu0 0.0
        %573 = vmatpush1.msra.mxu0 %v431
        %574 = vmatprep.subr.mxu0 0.0
        %575 = vmatpush1.msra.mxu0 %v432
        %576 = vmatprep.subr.mxu0 0.0
        %577 = vmatpush1.msra.mxu0 %v433
        %578 = vmatprep.subr.mxu0 0.0
        %579 = vmatpush1.msra.mxu0 %v434
        %580 = vmatprep.subr.mxu0 0.0
        %581 = vmatpush1.msra.mxu0 %v435
        %582 = vmatprep.subr.mxu0 0.0
        %583 = vmatpush1.msra.mxu0 %v436
        %584 = vmatprep.subr.mxu0 0.0
        %585 = vmatpush1.msra.mxu0 %v437
        %586 = vmatprep.subr.mxu0 0.0
        %587 = vmatpush1.msra.mxu0 %v438
        %588 = vmatprep.subr.mxu0 0.0
        %589 = vmatpush1.msra.mxu0 %v439
        %590 = vmatprep.subr.mxu0 0.0
        %591 = vmatpush1.msra.mxu0 %v440
        %592 = vmatprep.subr.mxu0 0.0
        %593 = vmatpush1.msra.mxu0 %v441
        %594 = vmatprep.subr.mxu0 0.0
        %595 = vmatpush1.msra.mxu0 %v442
        %596 = vmatprep.subr.mxu0 0.0
        %597 = vmatpush1.msra.mxu0 %v443
        %598 = vmatprep.subr.mxu0 0.0
        %599 = vmatpush1.msra.mxu0 %v444
        %600 = vmatprep.subr.mxu0 0.0
        %601 = vmatpush1.msra.mxu0 %v445
        %602 = vmatprep.subr.mxu0 0.0
        %603 = vmatpush1.msra.mxu0 %v446
        %604 = vmatprep.subr.mxu0 0.0
        %605 = vmatpush1.msra.mxu0 %v447
        %606 = vmatprep.subr.mxu0 0.0
        %607 = vmatpush1.msra.mxu0 %v448
        %608 = vmatprep.subr.mxu0 0.0
        %609 = vmatpush1.msra.mxu0 %v449
        %610 = vmatprep.subr.mxu0 0.0
        %611 = vmatpush1.msra.mxu0 %v450
        %612 = vmatprep.subr.mxu0 0.0
        %613 = vmatpush1.msra.mxu0 %v451
        %614 = vmatprep.subr.mxu0 0.0
        %615 = vmatpush1.msra.mxu0 %v452
        %616 = vmatprep.subr.mxu0 0.0
        %617 = vmatpush1.msra.mxu0 %v453
        %618 = vmatprep.subr.mxu0 0.0
        %619 = vmatpush1.msra.mxu0 %v454
        %620 = vmatprep.subr.mxu0 0.0
        %621 = vmatpush1.msra.mxu0 %v455
        %622 = vmatprep.subr.mxu0 0.0
        %623 = vmatpush1.msra.mxu0 %v456
        %624 = vmatprep.subr.mxu0 0.0
        %625 = vmatpush1.msra.mxu0 %v457
        %626 = vmatprep.subr.mxu0 0.0
        %627 = vmatpush1.msra.mxu0 %v458
        %628 = vmatprep.subr.mxu0 0.0
        %629 = vmatpush1.msra.mxu0 %v459
        %630 = vmatprep.subr.mxu0 0.0
        %631 = vmatpush1.msra.mxu0 %v460
        %632 = vmatprep.subr.mxu0 0.0
        %633 = vmatpush1.msra.mxu0 %v461
        %634 = vmatprep.mubr.f32.mxu0 %v358
        %635 = vmatmul.mubr.f32.gmra.mrb[0].mxu0 %v355
        %v636 = vpop.f32.mrb[0].mxu0
        %v637 = vadd.f32 %v567, %v636
        %v638 = vpop.f32.mrb[0].mxu0
        %639 = vdwg.mxu0
        %640 = vmatprep.subr.mxu0 0.0
        %641 = vmatpush1.msra.mxu0 %v462
        %642 = vmatprep.subr.mxu0 0.0
        %643 = vmatpush1.msra.mxu0 %v463
        %644 = vmatprep.subr.mxu0 0.0
        %645 = vmatpush1.msra.mxu0 %v464
        %646 = vmatprep.subr.mxu0 0.0
        %647 = vmatpush1.msra.mxu0 %v465
        %648 = vmatprep.subr.mxu0 0.0
        %649 = vmatpush1.msra.mxu0 %v466
        %650 = vmatprep.subr.mxu0 0.0
        %651 = vmatpush1.msra.mxu0 %v467
        %652 = vmatprep.subr.mxu0 0.0
        %653 = vmatpush1.msra.mxu0 %v468
        %654 = vmatprep.subr.mxu0 0.0
        %655 = vmatpush1.msra.mxu0 %v469
        %656 = vmatprep.subr.mxu0 0.0
        %657 = vmatpush1.msra.mxu0 %v470
        %658 = vmatprep.subr.mxu0 0.0
        %659 = vmatpush1.msra.mxu0 %v471
        %660 = vmatprep.subr.mxu0 0.0
        %661 = vmatpush1.msra.mxu0 %v472
        %662 = vmatprep.subr.mxu0 0.0
        %663 = vmatpush1.msra.mxu0 %v473
        %664 = vmatprep.subr.mxu0 0.0
        %665 = vmatpush1.msra.mxu0 %v474
        %666 = vmatprep.subr.mxu0 0.0
        %667 = vmatpush1.msra.mxu0 %v475
        %668 = vmatprep.subr.mxu0 0.0
        %669 = vmatpush1.msra.mxu0 %v476
        %670 = vmatprep.subr.mxu0 0.0
        %671 = vmatpush1.msra.mxu0 %v477
        %672 = vmatprep.subr.mxu0 0.0
        %673 = vmatpush1.msra.mxu0 %v478
        %674 = vmatprep.subr.mxu0 0.0
        %675 = vmatpush1.msra.mxu0 %v479
        %676 = vmatprep.subr.mxu0 0.0
        %677 = vmatpush1.msra.mxu0 %v480
        %678 = vmatprep.subr.mxu0 0.0
        %679 = vmatpush1.msra.mxu0 %v481
        %680 = vmatprep.subr.mxu0 0.0
        %681 = vmatpush1.msra.mxu0 %v482
        %682 = vmatprep.subr.mxu0 0.0
        %683 = vmatpush1.msra.mxu0 %v483
        %684 = vmatprep.subr.mxu0 0.0
        %685 = vmatpush1.msra.mxu0 %v484
        %686 = vmatprep.subr.mxu0 0.0
        %687 = vmatpush1.msra.mxu0 %v485
        %688 = vmatprep.subr.mxu0 0.0
        %689 = vmatpush1.msra.mxu0 %v486
        %690 = vmatprep.subr.mxu0 0.0
        %691 = vmatpush1.msra.mxu0 %v487
        %692 = vmatprep.subr.mxu0 0.0
        %693 = vmatpush1.msra.mxu0 %v488
        %694 = vmatprep.subr.mxu0 0.0
        %695 = vmatpush1.msra.mxu0 %v489
        %696 = vmatprep.subr.mxu0 0.0
        %697 = vmatpush1.msra.mxu0 %v490
        %698 = vmatprep.subr.mxu0 0.0
        %699 = vmatpush1.msra.mxu0 %v491
        %700 = vmatprep.subr.mxu0 0.0
        %701 = vmatpush1.msra.mxu0 %v492
        %702 = vmatprep.subr.mxu0 0.0
        %703 = vmatpush1.msra.mxu0 %v493
        %704 = vmatprep.mubr.f32.mxu0 %v397
        %705 = vmatmul.mubr.f32.gmra.mrb[0].mxu0 %v394
        %v706 = vpop.f32.mrb[0].mxu0
        %v707 = vadd.f32 %v637, %v706
        %v708 = vpop.f32.mrb[0].mxu0
        %709 = vdwg.mxu0
        %710 = vmatprep.subr.mxu0 0.0
        %711 = vmatpush1.msra.mxu0 %v494
        %712 = vmatprep.subr.mxu0 0.0
        %713 = vmatpush1.msra.mxu0 %v495
        %714 = vmatprep.subr.mxu0 0.0
        %715 = vmatpush1.msra.mxu0 %v496
        %716 = vmatprep.subr.mxu0 0.0
        %717 = vmatpush1.msra.mxu0 %v497
        %718 = vmatprep.subr.mxu0 0.0
        %719 = vmatpush1.msra.mxu0 0.0
        %720 = vmatprep.subr.mxu0 0.0
        %721 = vmatpush1.msra.mxu0 0.0
        %722 = vmatprep.subr.mxu0 0.0
        %723 = vmatpush1.msra.mxu0 0.0
        %724 = vmatprep.subr.mxu0 0.0
        %725 = vmatpush1.msra.mxu0 0.0
        %726 = vmatprep.subr.mxu0 0.0
        %727 = vmatpush1.msra.mxu0 0.0
        %728 = vmatprep.subr.mxu0 0.0
        %729 = vmatpush1.msra.mxu0 0.0
        %730 = vmatprep.subr.mxu0 0.0
        %731 = vmatpush1.msra.mxu0 0.0
        %732 = vmatprep.subr.mxu0 0.0
        %733 = vmatpush1.msra.mxu0 0.0
        %734 = vmatprep.subr.mxu0 0.0
        %735 = vmatpush1.msra.mxu0 0.0
        %736 = vmatprep.subr.mxu0 0.0
        %737 = vmatpush1.msra.mxu0 0.0
        %738 = vmatprep.subr.mxu0 0.0
        %739 = vmatpush1.msra.mxu0 0.0
        %740 = vmatprep.subr.mxu0 0.0
        %741 = vmatpush1.msra.mxu0 0.0
        %742 = vmatprep.subr.mxu0 0.0
        %743 = vmatpush1.msra.mxu0 0.0
        %744 = vmatprep.subr.mxu0 0.0
        %745 = vmatpush1.msra.mxu0 0.0
        %746 = vmatprep.subr.mxu0 0.0
        %747 = vmatpush1.msra.mxu0 0.0
        %748 = vmatprep.subr.mxu0 0.0
        %749 = vmatpush1.msra.mxu0 0.0
        %750 = vmatprep.subr.mxu0 0.0
        %751 = vmatpush1.msra.mxu0 0.0
        %752 = vmatprep.subr.mxu0 0.0
        %753 = vmatpush1.msra.mxu0 0.0
        %754 = vmatprep.subr.mxu0 0.0
        %755 = vmatpush1.msra.mxu0 0.0
        %756 = vmatprep.subr.mxu0 0.0
        %757 = vmatpush1.msra.mxu0 0.0
        %758 = vmatprep.subr.mxu0 0.0
        %759 = vmatpush1.msra.mxu0 0.0
        %760 = vmatprep.subr.mxu0 0.0
        %761 = vmatpush1.msra.mxu0 0.0
        %762 = vmatprep.subr.mxu0 0.0
        %763 = vmatpush1.msra.mxu0 0.0
        %764 = vmatprep.subr.mxu0 0.0
        %765 = vmatpush1.msra.mxu0 0.0
        %766 = vmatprep.subr.mxu0 0.0
        %767 = vmatpush1.msra.mxu0 0.0
        %768 = vmatprep.subr.mxu0 0.0
        %769 = vmatpush1.msra.mxu0 0.0
        %770 = vmatprep.subr.mxu0 0.0
        %771 = vmatpush1.msra.mxu0 0.0
        %772 = vmatprep.subr.mxu0 0.0
        %773 = vmatpush1.msra.mxu0 0.0
        %774 = vmatprep.mubr.f32.mxu0 0.0
        %775 = vmatmul.mubr.f32.gmra.mrb[0].mxu0 %v498
        %v776 = vpop.f32.mrb[0].mxu0
        %v777 = vadd.f32 %v707, %v776
        %v778 = vpop.f32.mrb[0].mxu0
        %779 = vdwg.mxu0
        %780 = vrot.lane.b32.xlu0 %v284, 32
        %v781 = vpop.permute.xlu0 %780
        %783 = vrot.lane.b32.xlu0 %v288, 64
        %v784 = vpop.permute.xlu0 %783
        %786 = vrot.lane.b32.xlu0 %v296, 96
        %v787 = vpop.permute.xlu0 %786
        %v790 = vrot.slane %v267, 2
        %v791 = vrot.slane %v268, 2
        %v792 = vsel %vm293, %v790, %v791
        %794 = vrot.lane.b32.xlu0 %v269, 32
        %v795 = vpop.permute.xlu0 %794
        %797 = vrot.lane.b32.xlu0 %v306, 64
        %v798 = vpop.permute.xlu0 %797
        %800 = vrot.lane.b32.xlu0 %v310, 96
        %v801 = vpop.permute.xlu0 %800
        %v805 = vrot.slane %v269, 2
        %v806 = vrot.slane %v270, 2
        %v807 = vsel %vm293, %v805, %v806
        %808 = vrot.lane.b32.xlu0 %v807, 32
        %v809 = vpop.permute.xlu0 %808
        %811 = vrot.lane.b32.xlu0 %v271, 64
        %v812 = vpop.permute.xlu0 %811
        %814 = vrot.lane.b32.xlu0 %v327, 96
        %v815 = vpop.permute.xlu0 %814
        %818 = vrot.lane.b32.xlu0 %v336, 32
        %v819 = vpop.permute.xlu0 %818
        %v822 = vrot.slane %v271, 2
        %v823 = vrot.slane %v272, 2
        %v824 = vsel %vm293, %v822, %v823
        %825 = vrot.lane.b32.xlu0 %v824, 64
        %v826 = vpop.permute.xlu0 %825
        %828 = vrot.lane.b32.xlu0 %v273, 96
        %v829 = vpop.permute.xlu0 %828
        %v831 = vsel %vm344, %v267, %v781
        %v832 = vsel %vm346, %v831, %v784
        %v833 = vsel %vm348, %v832, %v787
        %v834 = vsel %vm344, %v792, %v795
        %v835 = vsel %vm346, %v834, %v798
        %v836 = vsel %vm348, %v835, %v801
        %v837 = vsel %vm344, %v315, %v809
        %v838 = vsel %vm346, %v837, %v812
        %v839 = vsel %vm348, %v838, %v815
        %v840 = vsel %vm344, %v329, %v819
        %v841 = vsel %vm346, %v840, %v826
        %v842 = vsel %vm348, %v841, %v829
        %843 = vrot.lane.b32.xlu0 %v273, 32
        %v844 = vpop.permute.xlu0 %843
        %vm846 = vcmask 1046528
        %v847 = vrot.slane %v261, 1
        %v848 = vsel %vm846, %v359, %v847
        %849 = vrot.lane.b32.xlu0 %v848, 64
        %v850 = vpop.permute.xlu0 %849
        %v853 = vrot.slane %v274, 1
        %v854 = vsel %vm846, %v364, %v853
        %855 = vrot.lane.b32.xlu0 %v854, 96
        %v856 = vpop.permute.xlu0 %855
        %v858 = vrot.slane %v275, 7
        %860 = vrot.lane.b32.xlu0 %v262, 32
        %v861 = vpop.permute.xlu0 %860
        %863 = vrot.lane.b32.xlu0 %v275, 64
        %v864 = vpop.permute.xlu0 %863
        %v866 = vrot.slane %v263, 1
        %v867 = vsel %vm846, %v380, %v866
        %868 = vrot.lane.b32.xlu0 %v867, 96
        %v869 = vpop.permute.xlu0 %868
        %v872 = vrot.slane %v276, 1
        %v873 = vsel %vm846, %v384, %v872
        %v874 = vsel %vm344, %v260, %v844
        %v875 = vsel %vm346, %v874, %v850
        %v876 = vsel %vm348, %v875, %v856
        %v877 = vsel %vm344, %v858, %v861
        %v878 = vsel %vm346, %v877, %v864
        %v879 = vsel %vm348, %v878, %v869
        %v882 = vrot.slane %v876, 1
        %v883 = vrot.slane %v879, 1
        %v884 = vrot.slane %v873, 1
        %v887 = vsel %vm344, %v884, 0
        %889 = vmatprep.subr.mxu0 0.0
        %890 = vmatpush1.msra.mxu0 %v398
        %891 = vmatprep.subr.mxu0 0.0
        %892 = vmatpush1.msra.mxu0 %v399
        %893 = vmatprep.subr.mxu0 0.0
        %894 = vmatpush1.msra.mxu0 %v400
        %895 = vmatprep.subr.mxu0 0.0
        %896 = vmatpush1.msra.mxu0 %v401
        %897 = vmatprep.subr.mxu0 0.0
        %898 = vmatpush1.msra.mxu0 %v402
        %899 = vmatprep.subr.mxu0 0.0
        %900 = vmatpush1.msra.mxu0 %v403
        %901 = vmatprep.subr.mxu0 0.0
        %902 = vmatpush1.msra.mxu0 %v404
        %903 = vmatprep.subr.mxu0 0.0
        %904 = vmatpush1.msra.mxu0 %v405
        %905 = vmatprep.subr.mxu0 0.0
        %906 = vmatpush1.msra.mxu0 %v406
        %907 = vmatprep.subr.mxu0 0.0
        %908 = vmatpush1.msra.mxu0 %v407
        %909 = vmatprep.subr.mxu0 0.0
        %910 = vmatpush1.msra.mxu0 %v408
        %911 = vmatprep.subr.mxu0 0.0
        %912 = vmatpush1.msra.mxu0 %v409
        %913 = vmatprep.subr.mxu0 0.0
        %914 = vmatpush1.msra.mxu0 %v410
        %915 = vmatprep.subr.mxu0 0.0
        %916 = vmatpush1.msra.mxu0 %v411
        %917 = vmatprep.subr.mxu0 0.0
        %918 = vmatpush1.msra.mxu0 %v412
        %919 = vmatprep.subr.mxu0 0.0
        %920 = vmatpush1.msra.mxu0 %v413
        %921 = vmatprep.subr.mxu0 0.0
        %922 = vmatpush1.msra.mxu0 %v414
        %923 = vmatprep.subr.mxu0 0.0
        %924 = vmatpush1.msra.mxu0 %v415
        %925 = vmatprep.subr.mxu0 0.0
        %926 = vmatpush1.msra.mxu0 %v416
        %927 = vmatprep.subr.mxu0 0.0
        %928 = vmatpush1.msra.mxu0 %v417
        %929 = vmatprep.subr.mxu0 0.0
        %930 = vmatpush1.msra.mxu0 %v418
        %931 = vmatprep.subr.mxu0 0.0
        %932 = vmatpush1.msra.mxu0 %v419
        %933 = vmatprep.subr.mxu0 0.0
        %934 = vmatpush1.msra.mxu0 %v420
        %935 = vmatprep.subr.mxu0 0.0
        %936 = vmatpush1.msra.mxu0 %v421
        %937 = vmatprep.subr.mxu0 0.0
        %938 = vmatpush1.msra.mxu0 %v422
        %939 = vmatprep.subr.mxu0 0.0
        %940 = vmatpush1.msra.mxu0 %v423
        %941 = vmatprep.subr.mxu0 0.0
        %942 = vmatpush1.msra.mxu0 %v424
        %943 = vmatprep.subr.mxu0 0.0
        %944 = vmatpush1.msra.mxu0 %v425
        %945 = vmatprep.subr.mxu0 0.0
        %946 = vmatpush1.msra.mxu0 %v426
        %947 = vmatprep.subr.mxu0 0.0
        %948 = vmatpush1.msra.mxu0 %v427
        %949 = vmatprep.subr.mxu0 0.0
        %950 = vmatpush1.msra.mxu0 %v428
        %951 = vmatprep.subr.mxu0 0.0
        %952 = vmatpush1.msra.mxu0 %v429
        %953 = vmatprep.mubr.f32.mxu0 %v836
        %954 = vmatmul.mubr.f32.gmra.mrb[0].mxu0 %v833
        %v955 = vpop.f32.mrb[0].mxu0
        %v956 = vadd.f32 0.0, %v955
        %v957 = vpop.f32.mrb[0].mxu0
        %958 = vdwg.mxu0
        %959 = vmatprep.subr.mxu0 0.0
        %960 = vmatpush1.msra.mxu0 %v430
        %961 = vmatprep.subr.mxu0 0.0
        %962 = vmatpush1.msra.mxu0 %v431
        %963 = vmatprep.subr.mxu0 0.0
        %964 = vmatpush1.msra.mxu0 %v432
        %965 = vmatprep.subr.mxu0 0.0
        %966 = vmatpush1.msra.mxu0 %v433
        %967 = vmatprep.subr.mxu0 0.0
        %968 = vmatpush1.msra.mxu0 %v434
        %969 = vmatprep.subr.mxu0 0.0
        %970 = vmatpush1.msra.mxu0 %v435
        %971 = vmatprep.subr.mxu0 0.0
        %972 = vmatpush1.msra.mxu0 %v436
        %973 = vmatprep.subr.mxu0 0.0
        %974 = vmatpush1.msra.mxu0 %v437
        %975 = vmatprep.subr.mxu0 0.0
        %976 = vmatpush1.msra.mxu0 %v438
        %977 = vmatprep.subr.mxu0 0.0
        %978 = vmatpush1.msra.mxu0 %v439
        %979 = vmatprep.subr.mxu0 0.0
        %980 = vmatpush1.msra.mxu0 %v440
        %981 = vmatprep.subr.mxu0 0.0
        %982 = vmatpush1.msra.mxu0 %v441
        %983 = vmatprep.subr.mxu0 0.0
        %984 = vmatpush1.msra.mxu0 %v442
        %985 = vmatprep.subr.mxu0 0.0
        %986 = vmatpush1.msra.mxu0 %v443
        %987 = vmatprep.subr.mxu0 0.0
        %988 = vmatpush1.msra.mxu0 %v444
        %989 = vmatprep.subr.mxu0 0.0
        %990 = vmatpush1.msra.mxu0 %v445
        %991 = vmatprep.subr.mxu0 0.0
        %992 = vmatpush1.msra.mxu0 %v446
        %993 = vmatprep.subr.mxu0 0.0
        %994 = vmatpush1.msra.mxu0 %v447
        %995 = vmatprep.subr.mxu0 0.0
        %996 = vmatpush1.msra.mxu0 %v448
        %997 = vmatprep.subr.mxu0 0.0
        %998 = vmatpush1.msra.mxu0 %v449
        %999 = vmatprep.subr.mxu0 0.0
        %1000 = vmatpush1.msra.mxu0 %v450
        %1001 = vmatprep.subr.mxu0 0.0
        %1002 = vmatpush1.msra.mxu0 %v451
        %1003 = vmatprep.subr.mxu0 0.0
        %1004 = vmatpush1.msra.mxu0 %v452
        %1005 = vmatprep.subr.mxu0 0.0
        %1006 = vmatpush1.msra.mxu0 %v453
        %1007 = vmatprep.subr.mxu0 0.0
        %1008 = vmatpush1.msra.mxu0 %v454
        %1009 = vmatprep.subr.mxu0 0.0
        %1010 = vmatpush1.msra.mxu0 %v455
        %1011 = vmatprep.subr.mxu0 0.0
        %1012 = vmatpush1.msra.mxu0 %v456
        %1013 = vmatprep.subr.mxu0 0.0
        %1014 = vmatpush1.msra.mxu0 %v457
        %1015 = vmatprep.subr.mxu0 0.0
        %1016 = vmatpush1.msra.mxu0 %v458
        %1017 = vmatprep.subr.mxu0 0.0
        %1018 = vmatpush1.msra.mxu0 %v459
        %1019 = vmatprep.subr.mxu0 0.0
        %1020 = vmatpush1.msra.mxu0 %v460
        %1021 = vmatprep.subr.mxu0 0.0
        %1022 = vmatpush1.msra.mxu0 %v461
        %1023 = vmatprep.mubr.f32.mxu0 %v842
        %1024 = vmatmul.mubr.f32.gmra.mrb[0].mxu0 %v839
        %v1025 = vpop.f32.mrb[0].mxu0
        %v1026 = vadd.f32 %v956, %v1025
        %v1027 = vpop.f32.mrb[0].mxu0
        %1028 = vdwg.mxu0
        %1029 = vmatprep.subr.mxu0 0.0
        %1030 = vmatpush1.msra.mxu0 %v462
        %1031 = vmatprep.subr.mxu0 0.0
        %1032 = vmatpush1.msra.mxu0 %v463
        %1033 = vmatprep.subr.mxu0 0.0
        %1034 = vmatpush1.msra.mxu0 %v464
        %1035 = vmatprep.subr.mxu0 0.0
        %1036 = vmatpush1.msra.mxu0 %v465
        %1037 = vmatprep.subr.mxu0 0.0
        %1038 = vmatpush1.msra.mxu0 %v466
        %1039 = vmatprep.subr.mxu0 0.0
        %1040 = vmatpush1.msra.mxu0 %v467
        %1041 = vmatprep.subr.mxu0 0.0
        %1042 = vmatpush1.msra.mxu0 %v468
        %1043 = vmatprep.subr.mxu0 0.0
        %1044 = vmatpush1.msra.mxu0 %v469
        %1045 = vmatprep.subr.mxu0 0.0
        %1046 = vmatpush1.msra.mxu0 %v470
        %1047 = vmatprep.subr.mxu0 0.0
        %1048 = vmatpush1.msra.mxu0 %v471
        %1049 = vmatprep.subr.mxu0 0.0
        %1050 = vmatpush1.msra.mxu0 %v472
        %1051 = vmatprep.subr.mxu0 0.0
        %1052 = vmatpush1.msra.mxu0 %v473
        %1053 = vmatprep.subr.mxu0 0.0
        %1054 = vmatpush1.msra.mxu0 %v474
        %1055 = vmatprep.subr.mxu0 0.0
        %1056 = vmatpush1.msra.mxu0 %v475
        %1057 = vmatprep.subr.mxu0 0.0
        %1058 = vmatpush1.msra.mxu0 %v476
        %1059 = vmatprep.subr.mxu0 0.0
        %1060 = vmatpush1.msra.mxu0 %v477
        %1061 = vmatprep.subr.mxu0 0.0
        %1062 = vmatpush1.msra.mxu0 %v478
        %1063 = vmatprep.subr.mxu0 0.0
        %1064 = vmatpush1.msra.mxu0 %v479
        %1065 = vmatprep.subr.mxu0 0.0
        %1066 = vmatpush1.msra.mxu0 %v480
        %1067 = vmatprep.subr.mxu0 0.0
        %1068 = vmatpush1.msra.mxu0 %v481
        %1069 = vmatprep.subr.mxu0 0.0
        %1070 = vmatpush1.msra.mxu0 %v482
        %1071 = vmatprep.subr.mxu0 0.0
        %1072 = vmatpush1.msra.mxu0 %v483
        %1073 = vmatprep.subr.mxu0 0.0
        %1074 = vmatpush1.msra.mxu0 %v484
        %1075 = vmatprep.subr.mxu0 0.0
        %1076 = vmatpush1.msra.mxu0 %v485
        %1077 = vmatprep.subr.mxu0 0.0
        %1078 = vmatpush1.msra.mxu0 %v486
        %1079 = vmatprep.subr.mxu0 0.0
        %1080 = vmatpush1.msra.mxu0 %v487
        %1081 = vmatprep.subr.mxu0 0.0
        %1082 = vmatpush1.msra.mxu0 %v488
        %1083 = vmatprep.subr.mxu0 0.0
        %1084 = vmatpush1.msra.mxu0 %v489
        %1085 = vmatprep.subr.mxu0 0.0
        %1086 = vmatpush1.msra.mxu0 %v490
        %1087 = vmatprep.subr.mxu0 0.0
        %1088 = vmatpush1.msra.mxu0 %v491
        %1089 = vmatprep.subr.mxu0 0.0
        %1090 = vmatpush1.msra.mxu0 %v492
        %1091 = vmatprep.subr.mxu0 0.0
        %1092 = vmatpush1.msra.mxu0 %v493
        %1093 = vmatprep.mubr.f32.mxu0 %v883
        %1094 = vmatmul.mubr.f32.gmra.mrb[0].mxu0 %v882
        %v1095 = vpop.f32.mrb[0].mxu0
        %v1096 = vadd.f32 %v1026, %v1095
        %v1097 = vpop.f32.mrb[0].mxu0
        %1098 = vdwg.mxu0
        %1099 = vmatprep.subr.mxu0 0.0
        %1100 = vmatpush1.msra.mxu0 %v494
        %1101 = vmatprep.subr.mxu0 0.0
        %1102 = vmatpush1.msra.mxu0 %v495
        %1103 = vmatprep.subr.mxu0 0.0
        %1104 = vmatpush1.msra.mxu0 %v496
        %1105 = vmatprep.subr.mxu0 0.0
        %1106 = vmatpush1.msra.mxu0 %v497
        %1107 = vmatprep.subr.mxu0 0.0
        %1108 = vmatpush1.msra.mxu0 0.0
        %1109 = vmatprep.subr.mxu0 0.0
        %1110 = vmatpush1.msra.mxu0 0.0
        %1111 = vmatprep.subr.mxu0 0.0
        %1112 = vmatpush1.msra.mxu0 0.0
        %1113 = vmatprep.subr.mxu0 0.0
        %1114 = vmatpush1.msra.mxu0 0.0
        %1115 = vmatprep.subr.mxu0 0.0
        %1116 = vmatpush1.msra.mxu0 0.0
        %1117 = vmatprep.subr.mxu0 0.0
        %1118 = vmatpush1.msra.mxu0 0.0
        %1119 = vmatprep.subr.mxu0 0.0
        %1120 = vmatpush1.msra.mxu0 0.0
        %1121 = vmatprep.subr.mxu0 0.0
        %1122 = vmatpush1.msra.mxu0 0.0
        %1123 = vmatprep.subr.mxu0 0.0
        %1124 = vmatpush1.msra.mxu0 0.0
        %1125 = vmatprep.subr.mxu0 0.0
        %1126 = vmatpush1.msra.mxu0 0.0
        %1127 = vmatprep.subr.mxu0 0.0
        %1128 = vmatpush1.msra.mxu0 0.0
        %1129 = vmatprep.subr.mxu0 0.0
        %1130 = vmatpush1.msra.mxu0 0.0
        %1131 = vmatprep.subr.mxu0 0.0
        %1132 = vmatpush1.msra.mxu0 0.0
        %1133 = vmatprep.subr.mxu0 0.0
        %1134 = vmatpush1.msra.mxu0 0.0
        %1135 = vmatprep.subr.mxu0 0.0
        %1136 = vmatpush1.msra.mxu0 0.0
        %1137 = vmatprep.subr.mxu0 0.0
        %1138 = vmatpush1.msra.mxu0 0.0
        %1139 = vmatprep.subr.mxu0 0.0
        %1140 = vmatpush1.msra.mxu0 0.0
        %1141 = vmatprep.subr.mxu0 0.0
        %1142 = vmatpush1.msra.mxu0 0.0
        %1143 = vmatprep.subr.mxu0 0.0
        %1144 = vmatpush1.msra.mxu0 0.0
        %1145 = vmatprep.subr.mxu0 0.0
        %1146 = vmatpush1.msra.mxu0 0.0
        %1147 = vmatprep.subr.mxu0 0.0
        %1148 = vmatpush1.msra.mxu0 0.0
        %1149 = vmatprep.subr.mxu0 0.0
        %1150 = vmatpush1.msra.mxu0 0.0
        %1151 = vmatprep.subr.mxu0 0.0
        %1152 = vmatpush1.msra.mxu0 0.0
        %1153 = vmatprep.subr.mxu0 0.0
        %1154 = vmatpush1.msra.mxu0 0.0
        %1155 = vmatprep.subr.mxu0 0.0
        %1156 = vmatpush1.msra.mxu0 0.0
        %1157 = vmatprep.subr.mxu0 0.0
        %1158 = vmatpush1.msra.mxu0 0.0
        %1159 = vmatprep.subr.mxu0 0.0
        %1160 = vmatpush1.msra.mxu0 0.0
        %1161 = vmatprep.subr.mxu0 0.0
        %1162 = vmatpush1.msra.mxu0 0.0
        %1163 = vmatprep.mubr.f32.mxu0 0.0
        %1164 = vmatmul.mubr.f32.gmra.mrb[0].mxu0 %v887
        %v1165 = vpop.f32.mrb[0].mxu0
        %v1166 = vadd.f32 %v1096, %v1165
        %v1167 = vpop.f32.mrb[0].mxu0
        %1168 = vdwg.mxu0
        %v1169 = vmax.f32 %v777, %v1166
        %1170 = vrot.lane.b32.xlu0 %v258, 32
        %v1171 = vpop.permute.xlu0 %1170
        %1173 = vrot.lane.b32.xlu0 %v260, 64
        %v1174 = vpop.permute.xlu0 %1173
        %1177 = vrot.lane.b32.xlu0 %v364, 32
        %v1178 = vpop.permute.xlu0 %1177
        %1180 = vrot.lane.b32.xlu0 %v371, 64
        %v1181 = vpop.permute.xlu0 %1180
        %1183 = vrot.lane.b32.xlu0 %v262, 96
        %v1184 = vpop.permute.xlu0 %1183
        %v1186 = vsel %vm344, %v256, %v795
        %v1187 = vsel %vm346, %v1186, %v798
        %v1188 = vsel %vm348, %v1187, %v801
        %v1189 = vsel %vm344, %v315, %v1171
        %v1190 = vsel %vm346, %v1189, %v812
        %v1191 = vsel %vm348, %v1190, %v815
        %v1192 = vsel %vm346, %v840, %v1174
        %v1193 = vsel %vm348, %v1192, %v829
        %v1194 = vsel %vm344, %v359, %v1178
        %v1195 = vsel %vm346, %v1194, %v1181
        %v1196 = vsel %vm348, %v1195, %v1184
        %1197 = vrot.lane.b32.xlu0 %v380, 32
        %v1198 = vpop.permute.xlu0 %1197
        %1200 = vrot.lane.b32.xlu0 %v384, 64
        %v1201 = vpop.permute.xlu0 %1200
        %1203 = vrot.lane.b32.xlu0 %v391, 96
        %v1204 = vpop.permute.xlu0 %1203
        %1207 = vrot.lane.b32.xlu0 %v277, 32
        %v1208 = vpop.permute.xlu0 %1207
        %v1211 = vrot.slane %v264, 1
        %1212 = vrot.lane.b32.xlu0 %v1211, 64
        %v1213 = vpop.permute.xlu0 %1212
        %v1215 = vrot.slane %v277, 1
        %1216 = vrot.lane.b32.xlu0 %v1215, 96
        %v1217 = vpop.permute.xlu0 %1216
        %v1220 = vrot.slane %v264, 2
        %v1221 = vrot.slane %v265, 2
        %v1222 = vsel %vm293, %v1220, %v1221
        %v1223 = vsel %vm344, %v275, %v1198
        %v1224 = vsel %vm346, %v1223, %v1201
        %v1225 = vsel %vm348, %v1224, %v1204
        %v1226 = vsel %vm344, %v264, %v1208
        %v1227 = vsel %vm346, %v1226, %v1213
        %v1228 = vsel %vm348, %v1227, %v1217
        %v1229 = vsel %vm344, %v1222, 0
        %1231 = vmatprep.subr.mxu0 0.0
        %1232 = vmatpush1.msra.mxu0 %v398
        %1233 = vmatprep.subr.mxu0 0.0
        %1234 = vmatpush1.msra.mxu0 %v399
        %1235 = vmatprep.subr.mxu0 0.0
        %1236 = vmatpush1.msra.mxu0 %v400
        %1237 = vmatprep.subr.mxu0 0.0
        %1238 = vmatpush1.msra.mxu0 %v401
        %1239 = vmatprep.subr.mxu0 0.0
        %1240 = vmatpush1.msra.mxu0 %v402
        %1241 = vmatprep.subr.mxu0 0.0
        %1242 = vmatpush1.msra.mxu0 %v403
        %1243 = vmatprep.subr.mxu0 0.0
        %1244 = vmatpush1.msra.mxu0 %v404
        %1245 = vmatprep.subr.mxu0 0.0
        %1246 = vmatpush1.msra.mxu0 %v405
        %1247 = vmatprep.subr.mxu0 0.0
        %1248 = vmatpush1.msra.mxu0 %v406
        %1249 = vmatprep.subr.mxu0 0.0
        %1250 = vmatpush1.msra.mxu0 %v407
        %1251 = vmatprep.subr.mxu0 0.0
        %1252 = vmatpush1.msra.mxu0 %v408
        %1253 = vmatprep.subr.mxu0 0.0
        %1254 = vmatpush1.msra.mxu0 %v409
        %1255 = vmatprep.subr.mxu0 0.0
        %1256 = vmatpush1.msra.mxu0 %v410
        %1257 = vmatprep.subr.mxu0 0.0
        %1258 = vmatpush1.msra.mxu0 %v411
        %1259 = vmatprep.subr.mxu0 0.0
        %1260 = vmatpush1.msra.mxu0 %v412
        %1261 = vmatprep.subr.mxu0 0.0
        %1262 = vmatpush1.msra.mxu0 %v413
        %1263 = vmatprep.subr.mxu0 0.0
        %1264 = vmatpush1.msra.mxu0 %v414
        %1265 = vmatprep.subr.mxu0 0.0
        %1266 = vmatpush1.msra.mxu0 %v415
        %1267 = vmatprep.subr.mxu0 0.0
        %1268 = vmatpush1.msra.mxu0 %v416
        %1269 = vmatprep.subr.mxu0 0.0
        %1270 = vmatpush1.msra.mxu0 %v417
        %1271 = vmatprep.subr.mxu0 0.0
        %1272 = vmatpush1.msra.mxu0 %v418
        %1273 = vmatprep.subr.mxu0 0.0
        %1274 = vmatpush1.msra.mxu0 %v419
        %1275 = vmatprep.subr.mxu0 0.0
        %1276 = vmatpush1.msra.mxu0 %v420
        %1277 = vmatprep.subr.mxu0 0.0
        %1278 = vmatpush1.msra.mxu0 %v421
        %1279 = vmatprep.subr.mxu0 0.0
        %1280 = vmatpush1.msra.mxu0 %v422
        %1281 = vmatprep.subr.mxu0 0.0
        %1282 = vmatpush1.msra.mxu0 %v423
        %1283 = vmatprep.subr.mxu0 0.0
        %1284 = vmatpush1.msra.mxu0 %v424
        %1285 = vmatprep.subr.mxu0 0.0
        %1286 = vmatpush1.msra.mxu0 %v425
        %1287 = vmatprep.subr.mxu0 0.0
        %1288 = vmatpush1.msra.mxu0 %v426
        %1289 = vmatprep.subr.mxu0 0.0
        %1290 = vmatpush1.msra.mxu0 %v427
        %1291 = vmatprep.subr.mxu0 0.0
        %1292 = vmatpush1.msra.mxu0 %v428
        %1293 = vmatprep.subr.mxu0 0.0
        %1294 = vmatpush1.msra.mxu0 %v429
        %1295 = vmatprep.mubr.f32.mxu0 %v1191
        %1296 = vmatmul.mubr.f32.gmra.mrb[0].mxu0 %v1188
        %v1297 = vpop.f32.mrb[0].mxu0
        %v1298 = vadd.f32 0.0, %v1297
        %v1299 = vpop.f32.mrb[0].mxu0
        %1300 = vdwg.mxu0
        %1301 = vmatprep.subr.mxu0 0.0
        %1302 = vmatpush1.msra.mxu0 %v430
        %1303 = vmatprep.subr.mxu0 0.0
        %1304 = vmatpush1.msra.mxu0 %v431
        %1305 = vmatprep.subr.mxu0 0.0
        %1306 = vmatpush1.msra.mxu0 %v432
        %1307 = vmatprep.subr.mxu0 0.0
        %1308 = vmatpush1.msra.mxu0 %v433
        %1309 = vmatprep.subr.mxu0 0.0
        %1310 = vmatpush1.msra.mxu0 %v434
        %1311 = vmatprep.subr.mxu0 0.0
        %1312 = vmatpush1.msra.mxu0 %v435
        %1313 = vmatprep.subr.mxu0 0.0
        %1314 = vmatpush1.msra.mxu0 %v436
        %1315 = vmatprep.subr.mxu0 0.0
        %1316 = vmatpush1.msra.mxu0 %v437
        %1317 = vmatprep.subr.mxu0 0.0
        %1318 = vmatpush1.msra.mxu0 %v438
        %1319 = vmatprep.subr.mxu0 0.0
        %1320 = vmatpush1.msra.mxu0 %v439
        %1321 = vmatprep.subr.mxu0 0.0
        %1322 = vmatpush1.msra.mxu0 %v440
        %1323 = vmatprep.subr.mxu0 0.0
        %1324 = vmatpush1.msra.mxu0 %v441
        %1325 = vmatprep.subr.mxu0 0.0
        %1326 = vmatpush1.msra.mxu0 %v442
        %1327 = vmatprep.subr.mxu0 0.0
        %1328 = vmatpush1.msra.mxu0 %v443
        %1329 = vmatprep.subr.mxu0 0.0
        %1330 = vmatpush1.msra.mxu0 %v444
        %1331 = vmatprep.subr.mxu0 0.0
        %1332 = vmatpush1.msra.mxu0 %v445
        %1333 = vmatprep.subr.mxu0 0.0
        %1334 = vmatpush1.msra.mxu0 %v446
        %1335 = vmatprep.subr.mxu0 0.0
        %1336 = vmatpush1.msra.mxu0 %v447
        %1337 = vmatprep.subr.mxu0 0.0
        %1338 = vmatpush1.msra.mxu0 %v448
        %1339 = vmatprep.subr.mxu0 0.0
        %1340 = vmatpush1.msra.mxu0 %v449
        %1341 = vmatprep.subr.mxu0 0.0
        %1342 = vmatpush1.msra.mxu0 %v450
        %1343 = vmatprep.subr.mxu0 0.0
        %1344 = vmatpush1.msra.mxu0 %v451
        %1345 = vmatprep.subr.mxu0 0.0
        %1346 = vmatpush1.msra.mxu0 %v452
        %1347 = vmatprep.subr.mxu0 0.0
        %1348 = vmatpush1.msra.mxu0 %v453
        %1349 = vmatprep.subr.mxu0 0.0
        %1350 = vmatpush1.msra.mxu0 %v454
        %1351 = vmatprep.subr.mxu0 0.0
        %1352 = vmatpush1.msra.mxu0 %v455
        %1353 = vmatprep.subr.mxu0 0.0
        %1354 = vmatpush1.msra.mxu0 %v456
        %1355 = vmatprep.subr.mxu0 0.0
        %1356 = vmatpush1.msra.mxu0 %v457
        %1357 = vmatprep.subr.mxu0 0.0
        %1358 = vmatpush1.msra.mxu0 %v458
        %1359 = vmatprep.subr.mxu0 0.0
        %1360 = vmatpush1.msra.mxu0 %v459
        %1361 = vmatprep.subr.mxu0 0.0
        %1362 = vmatpush1.msra.mxu0 %v460
        %1363 = vmatprep.subr.mxu0 0.0
        %1364 = vmatpush1.msra.mxu0 %v461
        %1365 = vmatprep.mubr.f32.mxu0 %v1196
        %1366 = vmatmul.mubr.f32.gmra.mrb[0].mxu0 %v1193
        %v1367 = vpop.f32.mrb[0].mxu0
        %v1368 = vadd.f32 %v1298, %v1367
        %v1369 = vpop.f32.mrb[0].mxu0
        %1370 = vdwg.mxu0
        %1371 = vmatprep.subr.mxu0 0.0
        %1372 = vmatpush1.msra.mxu0 %v462
        %1373 = vmatprep.subr.mxu0 0.0
        %1374 = vmatpush1.msra.mxu0 %v463
        %1375 = vmatprep.subr.mxu0 0.0
        %1376 = vmatpush1.msra.mxu0 %v464
        %1377 = vmatprep.subr.mxu0 0.0
        %1378 = vmatpush1.msra.mxu0 %v465
        %1379 = vmatprep.subr.mxu0 0.0
        %1380 = vmatpush1.msra.mxu0 %v466
        %1381 = vmatprep.subr.mxu0 0.0
        %1382 = vmatpush1.msra.mxu0 %v467
        %1383 = vmatprep.subr.mxu0 0.0
        %1384 = vmatpush1.msra.mxu0 %v468
        %1385 = vmatprep.subr.mxu0 0.0
        %1386 = vmatpush1.msra.mxu0 %v469
        %1387 = vmatprep.subr.mxu0 0.0
        %1388 = vmatpush1.msra.mxu0 %v470
        %1389 = vmatprep.subr.mxu0 0.0
        %1390 = vmatpush1.msra.mxu0 %v471
        %1391 = vmatprep.subr.mxu0 0.0
        %1392 = vmatpush1.msra.mxu0 %v472
        %1393 = vmatprep.subr.mxu0 0.0
        %1394 = vmatpush1.msra.mxu0 %v473
        %1395 = vmatprep.subr.mxu0 0.0
        %1396 = vmatpush1.msra.mxu0 %v474
        %1397 = vmatprep.subr.mxu0 0.0
        %1398 = vmatpush1.msra.mxu0 %v475
        %1399 = vmatprep.subr.mxu0 0.0
        %1400 = vmatpush1.msra.mxu0 %v476
        %1401 = vmatprep.subr.mxu0 0.0
        %1402 = vmatpush1.msra.mxu0 %v477
        %1403 = vmatprep.subr.mxu0 0.0
        %1404 = vmatpush1.msra.mxu0 %v478
        %1405 = vmatprep.subr.mxu0 0.0
        %1406 = vmatpush1.msra.mxu0 %v479
        %1407 = vmatprep.subr.mxu0 0.0
        %1408 = vmatpush1.msra.mxu0 %v480
        %1409 = vmatprep.subr.mxu0 0.0
        %1410 = vmatpush1.msra.mxu0 %v481
        %1411 = vmatprep.subr.mxu0 0.0
        %1412 = vmatpush1.msra.mxu0 %v482
        %1413 = vmatprep.subr.mxu0 0.0
        %1414 = vmatpush1.msra.mxu0 %v483
        %1415 = vmatprep.subr.mxu0 0.0
        %1416 = vmatpush1.msra.mxu0 %v484
        %1417 = vmatprep.subr.mxu0 0.0
        %1418 = vmatpush1.msra.mxu0 %v485
        %1419 = vmatprep.subr.mxu0 0.0
        %1420 = vmatpush1.msra.mxu0 %v486
        %1421 = vmatprep.subr.mxu0 0.0
        %1422 = vmatpush1.msra.mxu0 %v487
        %1423 = vmatprep.subr.mxu0 0.0
        %1424 = vmatpush1.msra.mxu0 %v488
        %1425 = vmatprep.subr.mxu0 0.0
        %1426 = vmatpush1.msra.mxu0 %v489
        %1427 = vmatprep.subr.mxu0 0.0
        %1428 = vmatpush1.msra.mxu0 %v490
        %1429 = vmatprep.subr.mxu0 0.0
        %1430 = vmatpush1.msra.mxu0 %v491
        %1431 = vmatprep.subr.mxu0 0.0
        %1432 = vmatpush1.msra.mxu0 %v492
        %1433 = vmatprep.subr.mxu0 0.0
        %1434 = vmatpush1.msra.mxu0 %v493
        %1435 = vmatprep.mubr.f32.mxu0 %v1228
        %1436 = vmatmul.mubr.f32.gmra.mrb[0].mxu0 %v1225
        %v1437 = vpop.f32.mrb[0].mxu0
        %v1438 = vadd.f32 %v1368, %v1437
        %v1439 = vpop.f32.mrb[0].mxu0
        %1440 = vdwg.mxu0
        %1441 = vmatprep.subr.mxu0 0.0
        %1442 = vmatpush1.msra.mxu0 %v494
        %1443 = vmatprep.subr.mxu0 0.0
        %1444 = vmatpush1.msra.mxu0 %v495
        %1445 = vmatprep.subr.mxu0 0.0
        %1446 = vmatpush1.msra.mxu0 %v496
        %1447 = vmatprep.subr.mxu0 0.0
        %1448 = vmatpush1.msra.mxu0 %v497
        %1449 = vmatprep.subr.mxu0 0.0
        %1450 = vmatpush1.msra.mxu0 0.0
        %1451 = vmatprep.subr.mxu0 0.0
        %1452 = vmatpush1.msra.mxu0 0.0
        %1453 = vmatprep.subr.mxu0 0.0
        %1454 = vmatpush1.msra.mxu0 0.0
        %1455 = vmatprep.subr.mxu0 0.0
        %1456 = vmatpush1.msra.mxu0 0.0
        %1457 = vmatprep.subr.mxu0 0.0
        %1458 = vmatpush1.msra.mxu0 0.0
        %1459 = vmatprep.subr.mxu0 0.0
        %1460 = vmatpush1.msra.mxu0 0.0
        %1461 = vmatprep.subr.mxu0 0.0
        %1462 = vmatpush1.msra.mxu0 0.0
        %1463 = vmatprep.subr.mxu0 0.0
        %1464 = vmatpush1.msra.mxu0 0.0
        %1465 = vmatprep.subr.mxu0 0.0
        %1466 = vmatpush1.msra.mxu0 0.0
        %1467 = vmatprep.subr.mxu0 0.0
        %1468 = vmatpush1.msra.mxu0 0.0
        %1469 = vmatprep.subr.mxu0 0.0
        %1470 = vmatpush1.msra.mxu0 0.0
        %1471 = vmatprep.subr.mxu0 0.0
        %1472 = vmatpush1.msra.mxu0 0.0
        %1473 = vmatprep.subr.mxu0 0.0
        %1474 = vmatpush1.msra.mxu0 0.0
        %1475 = vmatprep.subr.mxu0 0.0
        %1476 = vmatpush1.msra.mxu0 0.0
        %1477 = vmatprep.subr.mxu0 0.0
        %1478 = vmatpush1.msra.mxu0 0.0
        %1479 = vmatprep.subr.mxu0 0.0
        %1480 = vmatpush1.msra.mxu0 0.0
        %1481 = vmatprep.subr.mxu0 0.0
        %1482 = vmatpush1.msra.mxu0 0.0
        %1483 = vmatprep.subr.mxu0 0.0
        %1484 = vmatpush1.msra.mxu0 0.0
        %1485 = vmatprep.subr.mxu0 0.0
        %1486 = vmatpush1.msra.mxu0 0.0
        %1487 = vmatprep.subr.mxu0 0.0
        %1488 = vmatpush1.msra.mxu0 0.0
        %1489 = vmatprep.subr.mxu0 0.0
        %1490 = vmatpush1.msra.mxu0 0.0
        %1491 = vmatprep.subr.mxu0 0.0
        %1492 = vmatpush1.msra.mxu0 0.0
        %1493 = vmatprep.subr.mxu0 0.0
        %1494 = vmatpush1.msra.mxu0 0.0
        %1495 = vmatprep.subr.mxu0 0.0
        %1496 = vmatpush1.msra.mxu0 0.0
        %1497 = vmatprep.subr.mxu0 0.0
        %1498 = vmatpush1.msra.mxu0 0.0
        %1499 = vmatprep.subr.mxu0 0.0
        %1500 = vmatpush1.msra.mxu0 0.0
        %1501 = vmatprep.subr.mxu0 0.0
        %1502 = vmatpush1.msra.mxu0 0.0
        %1503 = vmatprep.subr.mxu0 0.0
        %1504 = vmatpush1.msra.mxu0 0.0
        %1505 = vmatprep.mubr.f32.mxu0 0.0
        %1506 = vmatmul.mubr.f32.gmra.mrb[0].mxu0 %v1229
        %v1507 = vpop.f32.mrb[0].mxu0
        %v1508 = vadd.f32 %v1438, %v1507
        %v1509 = vpop.f32.mrb[0].mxu0
        %1510 = vdwg.mxu0
        %v1511 = vmax.f32 %v1169, %v1508
        %1512 = vrot.lane.b32.xlu0 %v306, 32
        %v1513 = vpop.permute.xlu0 %1512
        %1515 = vrot.lane.b32.xlu0 %v310, 64
        %v1516 = vpop.permute.xlu0 %1515
        %1518 = vrot.lane.b32.xlu0 %v315, 96
        %v1519 = vpop.permute.xlu0 %1518
        %1522 = vrot.lane.b32.xlu0 %v271, 32
        %v1523 = vpop.permute.xlu0 %1522
        %1525 = vrot.lane.b32.xlu0 %v327, 64
        %v1526 = vpop.permute.xlu0 %1525
        %1528 = vrot.lane.b32.xlu0 %v329, 96
        %v1529 = vpop.permute.xlu0 %1528
        %1532 = vrot.lane.b32.xlu0 %v824, 32
        %v1533 = vpop.permute.xlu0 %1532
        %1535 = vrot.lane.b32.xlu0 %v273, 64
        %v1536 = vpop.permute.xlu0 %1535
        %1538 = vrot.lane.b32.xlu0 %v359, 96
        %v1539 = vpop.permute.xlu0 %1538
        %1542 = vrot.lane.b32.xlu0 %v371, 32
        %v1543 = vpop.permute.xlu0 %1542
        %v1545 = vrot.slane %v273, 2
        %v1546 = vrot.slane %v274, 2
        %v1547 = vsel %vm293, %v1545, %v1546
        %1548 = vrot.lane.b32.xlu0 %v1547, 64
        %v1549 = vpop.permute.xlu0 %1548
        %1551 = vrot.lane.b32.xlu0 %v275, 96
        %v1552 = vpop.permute.xlu0 %1551
        %v1554 = vsel %vm344, %v269, %v1513
        %v1555 = vsel %vm346, %v1554, %v1516
        %v1556 = vsel %vm348, %v1555, %v1519
        %v1557 = vsel %vm344, %v807, %v1523
        %v1558 = vsel %vm346, %v1557, %v1526
        %v1559 = vsel %vm348, %v1558, %v1529
        %v1560 = vsel %vm344, %v336, %v1533
        %v1561 = vsel %vm346, %v1560, %v1536
        %v1562 = vsel %vm348, %v1561, %v1539
        %v1563 = vsel %vm344, %v364, %v1543
        %v1564 = vsel %vm346, %v1563, %v1549
        %v1565 = vsel %vm348, %v1564, %v1552
        %1566 = vrot.lane.b32.xlu0 %v867, 64
        %v1567 = vpop.permute.xlu0 %1566
        %1569 = vrot.lane.b32.xlu0 %v873, 96
        %v1570 = vpop.permute.xlu0 %1569
        %v1572 = vrot.slane %v277, 7
        %1574 = vrot.lane.b32.xlu0 %v264, 32
        %v1575 = vpop.permute.xlu0 %1574
        %1577 = vrot.lane.b32.xlu0 %v277, 64
        %v1578 = vpop.permute.xlu0 %1577
        %v1580 = vrot.slane %v265, 1
        %v1581 = vsel %vm846, %v1211, %v1580
        %1582 = vrot.lane.b32.xlu0 %v1581, 96
        %v1583 = vpop.permute.xlu0 %1582
        %v1586 = vrot.slane %v278, 1
        %v1587 = vsel %vm846, %v1215, %v1586
        %v1588 = vsel %vm346, %v395, %v1567
        %v1589 = vsel %vm348, %v1588, %v1570
        %v1590 = vsel %vm344, %v1572, %v1575
        %v1591 = vsel %vm346, %v1590, %v1578
        %v1592 = vsel %vm348, %v1591, %v1583
        %v1595 = vrot.slane %v1589, 1
        %v1596 = vrot.slane %v1592, 1
        %v1597 = vrot.slane %v1587, 1
        %v1600 = vsel %vm344, %v1597, 0
        %1602 = vmatprep.subr.mxu0 0.0
        %1603 = vmatpush1.msra.mxu0 %v398
        %1604 = vmatprep.subr.mxu0 0.0
        %1605 = vmatpush1.msra.mxu0 %v399
        %1606 = vmatprep.subr.mxu0 0.0
        %1607 = vmatpush1.msra.mxu0 %v400
        %1608 = vmatprep.subr.mxu0 0.0
        %1609 = vmatpush1.msra.mxu0 %v401
        %1610 = vmatprep.subr.mxu0 0.0
        %1611 = vmatpush1.msra.mxu0 %v402
        %1612 = vmatprep.subr.mxu0 0.0
        %1613 = vmatpush1.msra.mxu0 %v403
        %1614 = vmatprep.subr.mxu0 0.0
        %1615 = vmatpush1.msra.mxu0 %v404
        %1616 = vmatprep.subr.mxu0 0.0
        %1617 = vmatpush1.msra.mxu0 %v405
        %1618 = vmatprep.subr.mxu0 0.0
        %1619 = vmatpush1.msra.mxu0 %v406
        %1620 = vmatprep.subr.mxu0 0.0
        %1621 = vmatpush1.msra.mxu0 %v407
        %1622 = vmatprep.subr.mxu0 0.0
        %1623 = vmatpush1.msra.mxu0 %v408
        %1624 = vmatprep.subr.mxu0 0.0
        %1625 = vmatpush1.msra.mxu0 %v409
        %1626 = vmatprep.subr.mxu0 0.0
        %1627 = vmatpush1.msra.mxu0 %v410
        %1628 = vmatprep.subr.mxu0 0.0
        %1629 = vmatpush1.msra.mxu0 %v411
        %1630 = vmatprep.subr.mxu0 0.0
        %1631 = vmatpush1.msra.mxu0 %v412
        %1632 = vmatprep.subr.mxu0 0.0
        %1633 = vmatpush1.msra.mxu0 %v413
        %1634 = vmatprep.subr.mxu0 0.0
        %1635 = vmatpush1.msra.mxu0 %v414
        %1636 = vmatprep.subr.mxu0 0.0
        %1637 = vmatpush1.msra.mxu0 %v415
        %1638 = vmatprep.subr.mxu0 0.0
        %1639 = vmatpush1.msra.mxu0 %v416
        %1640 = vmatprep.subr.mxu0 0.0
        %1641 = vmatpush1.msra.mxu0 %v417
        %1642 = vmatprep.subr.mxu0 0.0
        %1643 = vmatpush1.msra.mxu0 %v418
        %1644 = vmatprep.subr.mxu0 0.0
        %1645 = vmatpush1.msra.mxu0 %v419
        %1646 = vmatprep.subr.mxu0 0.0
        %1647 = vmatpush1.msra.mxu0 %v420
        %1648 = vmatprep.subr.mxu0 0.0
        %1649 = vmatpush1.msra.mxu0 %v421
        %1650 = vmatprep.subr.mxu0 0.0
        %1651 = vmatpush1.msra.mxu0 %v422
        %1652 = vmatprep.subr.mxu0 0.0
        %1653 = vmatpush1.msra.mxu0 %v423
        %1654 = vmatprep.subr.mxu0 0.0
        %1655 = vmatpush1.msra.mxu0 %v424
        %1656 = vmatprep.subr.mxu0 0.0
        %1657 = vmatpush1.msra.mxu0 %v425
        %1658 = vmatprep.subr.mxu0 0.0
        %1659 = vmatpush1.msra.mxu0 %v426
        %1660 = vmatprep.subr.mxu0 0.0
        %1661 = vmatpush1.msra.mxu0 %v427
        %1662 = vmatprep.subr.mxu0 0.0
        %1663 = vmatpush1.msra.mxu0 %v428
        %1664 = vmatprep.subr.mxu0 0.0
        %1665 = vmatpush1.msra.mxu0 %v429
        %1666 = vmatprep.mubr.f32.mxu0 %v1559
        %1667 = vmatmul.mubr.f32.gmra.mrb[0].mxu0 %v1556
        %v1668 = vpop.f32.mrb[0].mxu0
        %v1669 = vadd.f32 0.0, %v1668
        %v1670 = vpop.f32.mrb[0].mxu0
        %1671 = vdwg.mxu0
        %1672 = vmatprep.subr.mxu0 0.0
        %1673 = vmatpush1.msra.mxu0 %v430
        %1674 = vmatprep.subr.mxu0 0.0
        %1675 = vmatpush1.msra.mxu0 %v431
        %1676 = vmatprep.subr.mxu0 0.0
        %1677 = vmatpush1.msra.mxu0 %v432
        %1678 = vmatprep.subr.mxu0 0.0
        %1679 = vmatpush1.msra.mxu0 %v433
        %1680 = vmatprep.subr.mxu0 0.0
        %1681 = vmatpush1.msra.mxu0 %v434
        %1682 = vmatprep.subr.mxu0 0.0
        %1683 = vmatpush1.msra.mxu0 %v435
        %1684 = vmatprep.subr.mxu0 0.0
        %1685 = vmatpush1.msra.mxu0 %v436
        %1686 = vmatprep.subr.mxu0 0.0
        %1687 = vmatpush1.msra.mxu0 %v437
        %1688 = vmatprep.subr.mxu0 0.0
        %1689 = vmatpush1.msra.mxu0 %v438
        %1690 = vmatprep.subr.mxu0 0.0
        %1691 = vmatpush1.msra.mxu0 %v439
        %1692 = vmatprep.subr.mxu0 0.0
        %1693 = vmatpush1.msra.mxu0 %v440
        %1694 = vmatprep.subr.mxu0 0.0
        %1695 = vmatpush1.msra.mxu0 %v441
        %1696 = vmatprep.subr.mxu0 0.0
        %1697 = vmatpush1.msra.mxu0 %v442
        %1698 = vmatprep.subr.mxu0 0.0
        %1699 = vmatpush1.msra.mxu0 %v443
        %1700 = vmatprep.subr.mxu0 0.0
        %1701 = vmatpush1.msra.mxu0 %v444
        %1702 = vmatprep.subr.mxu0 0.0
        %1703 = vmatpush1.msra.mxu0 %v445
        %1704 = vmatprep.subr.mxu0 0.0
        %1705 = vmatpush1.msra.mxu0 %v446
        %1706 = vmatprep.subr.mxu0 0.0
        %1707 = vmatpush1.msra.mxu0 %v447
        %1708 = vmatprep.subr.mxu0 0.0
        %1709 = vmatpush1.msra.mxu0 %v448
        %1710 = vmatprep.subr.mxu0 0.0
        %1711 = vmatpush1.msra.mxu0 %v449
        %1712 = vmatprep.subr.mxu0 0.0
        %1713 = vmatpush1.msra.mxu0 %v450
        %1714 = vmatprep.subr.mxu0 0.0
        %1715 = vmatpush1.msra.mxu0 %v451
        %1716 = vmatprep.subr.mxu0 0.0
        %1717 = vmatpush1.msra.mxu0 %v452
        %1718 = vmatprep.subr.mxu0 0.0
        %1719 = vmatpush1.msra.mxu0 %v453
        %1720 = vmatprep.subr.mxu0 0.0
        %1721 = vmatpush1.msra.mxu0 %v454
        %1722 = vmatprep.subr.mxu0 0.0
        %1723 = vmatpush1.msra.mxu0 %v455
        %1724 = vmatprep.subr.mxu0 0.0
        %1725 = vmatpush1.msra.mxu0 %v456
        %1726 = vmatprep.subr.mxu0 0.0
        %1727 = vmatpush1.msra.mxu0 %v457
        %1728 = vmatprep.subr.mxu0 0.0
        %1729 = vmatpush1.msra.mxu0 %v458
        %1730 = vmatprep.subr.mxu0 0.0
        %1731 = vmatpush1.msra.mxu0 %v459
        %1732 = vmatprep.subr.mxu0 0.0
        %1733 = vmatpush1.msra.mxu0 %v460
        %1734 = vmatprep.subr.mxu0 0.0
        %1735 = vmatpush1.msra.mxu0 %v461
        %1736 = vmatprep.mubr.f32.mxu0 %v1565
        %1737 = vmatmul.mubr.f32.gmra.mrb[0].mxu0 %v1562
        %v1738 = vpop.f32.mrb[0].mxu0
        %v1739 = vadd.f32 %v1669, %v1738
        %v1740 = vpop.f32.mrb[0].mxu0
        %1741 = vdwg.mxu0
        %1742 = vmatprep.subr.mxu0 0.0
        %1743 = vmatpush1.msra.mxu0 %v462
        %1744 = vmatprep.subr.mxu0 0.0
        %1745 = vmatpush1.msra.mxu0 %v463
        %1746 = vmatprep.subr.mxu0 0.0
        %1747 = vmatpush1.msra.mxu0 %v464
        %1748 = vmatprep.subr.mxu0 0.0
        %1749 = vmatpush1.msra.mxu0 %v465
        %1750 = vmatprep.subr.mxu0 0.0
        %1751 = vmatpush1.msra.mxu0 %v466
        %1752 = vmatprep.subr.mxu0 0.0
        %1753 = vmatpush1.msra.mxu0 %v467
        %1754 = vmatprep.subr.mxu0 0.0
        %1755 = vmatpush1.msra.mxu0 %v468
        %1756 = vmatprep.subr.mxu0 0.0
        %1757 = vmatpush1.msra.mxu0 %v469
        %1758 = vmatprep.subr.mxu0 0.0
        %1759 = vmatpush1.msra.mxu0 %v470
        %1760 = vmatprep.subr.mxu0 0.0
        %1761 = vmatpush1.msra.mxu0 %v471
        %1762 = vmatprep.subr.mxu0 0.0
        %1763 = vmatpush1.msra.mxu0 %v472
        %1764 = vmatprep.subr.mxu0 0.0
        %1765 = vmatpush1.msra.mxu0 %v473
        %1766 = vmatprep.subr.mxu0 0.0
        %1767 = vmatpush1.msra.mxu0 %v474
        %1768 = vmatprep.subr.mxu0 0.0
        %1769 = vmatpush1.msra.mxu0 %v475
        %1770 = vmatprep.subr.mxu0 0.0
        %1771 = vmatpush1.msra.mxu0 %v476
        %1772 = vmatprep.subr.mxu0 0.0
        %1773 = vmatpush1.msra.mxu0 %v477
        %1774 = vmatprep.subr.mxu0 0.0
        %1775 = vmatpush1.msra.mxu0 %v478
        %1776 = vmatprep.subr.mxu0 0.0
        %1777 = vmatpush1.msra.mxu0 %v479
        %1778 = vmatprep.subr.mxu0 0.0
        %1779 = vmatpush1.msra.mxu0 %v480
        %1780 = vmatprep.subr.mxu0 0.0
        %1781 = vmatpush1.msra.mxu0 %v481
        %1782 = vmatprep.subr.mxu0 0.0
        %1783 = vmatpush1.msra.mxu0 %v482
        %1784 = vmatprep.subr.mxu0 0.0
        %1785 = vmatpush1.msra.mxu0 %v483
        %1786 = vmatprep.subr.mxu0 0.0
        %1787 = vmatpush1.msra.mxu0 %v484
        %1788 = vmatprep.subr.mxu0 0.0
        %1789 = vmatpush1.msra.mxu0 %v485
        %1790 = vmatprep.subr.mxu0 0.0
        %1791 = vmatpush1.msra.mxu0 %v486
        %1792 = vmatprep.subr.mxu0 0.0
        %1793 = vmatpush1.msra.mxu0 %v487
        %1794 = vmatprep.subr.mxu0 0.0
        %1795 = vmatpush1.msra.mxu0 %v488
        %1796 = vmatprep.subr.mxu0 0.0
        %1797 = vmatpush1.msra.mxu0 %v489
        %1798 = vmatprep.subr.mxu0 0.0
        %1799 = vmatpush1.msra.mxu0 %v490
        %1800 = vmatprep.subr.mxu0 0.0
        %1801 = vmatpush1.msra.mxu0 %v491
        %1802 = vmatprep.subr.mxu0 0.0
        %1803 = vmatpush1.msra.mxu0 %v492
        %1804 = vmatprep.subr.mxu0 0.0
        %1805 = vmatpush1.msra.mxu0 %v493
        %1806 = vmatprep.mubr.f32.mxu0 %v1596
        %1807 = vmatmul.mubr.f32.gmra.mrb[0].mxu0 %v1595
        %v1808 = vpop.f32.mrb[0].mxu0
        %v1809 = vadd.f32 %v1739, %v1808
        %v1810 = vpop.f32.mrb[0].mxu0
        %1811 = vdwg.mxu0
        %1812 = vmatprep.subr.mxu0 0.0
        %1813 = vmatpush1.msra.mxu0 %v494
        %1814 = vmatprep.subr.mxu0 0.0
        %1815 = vmatpush1.msra.mxu0 %v495
        %1816 = vmatprep.subr.mxu0 0.0
        %1817 = vmatpush1.msra.mxu0 %v496
        %1818 = vmatprep.subr.mxu0 0.0
        %1819 = vmatpush1.msra.mxu0 %v497
        %1820 = vmatprep.subr.mxu0 0.0
        %1821 = vmatpush1.msra.mxu0 0.0
        %1822 = vmatprep.subr.mxu0 0.0
        %1823 = vmatpush1.msra.mxu0 0.0
        %1824 = vmatprep.subr.mxu0 0.0
        %1825 = vmatpush1.msra.mxu0 0.0
        %1826 = vmatprep.subr.mxu0 0.0
        %1827 = vmatpush1.msra.mxu0 0.0
        %1828 = vmatprep.subr.mxu0 0.0
        %1829 = vmatpush1.msra.mxu0 0.0
        %1830 = vmatprep.subr.mxu0 0.0
        %1831 = vmatpush1.msra.mxu0 0.0
        %1832 = vmatprep.subr.mxu0 0.0
        %1833 = vmatpush1.msra.mxu0 0.0
        %1834 = vmatprep.subr.mxu0 0.0
        %1835 = vmatpush1.msra.mxu0 0.0
        %1836 = vmatprep.subr.mxu0 0.0
        %1837 = vmatpush1.msra.mxu0 0.0
        %1838 = vmatprep.subr.mxu0 0.0
        %1839 = vmatpush1.msra.mxu0 0.0
        %1840 = vmatprep.subr.mxu0 0.0
        %1841 = vmatpush1.msra.mxu0 0.0
        %1842 = vmatprep.subr.mxu0 0.0
        %1843 = vmatpush1.msra.mxu0 0.0
        %1844 = vmatprep.subr.mxu0 0.0
        %1845 = vmatpush1.msra.mxu0 0.0
        %1846 = vmatprep.subr.mxu0 0.0
        %1847 = vmatpush1.msra.mxu0 0.0
        %1848 = vmatprep.subr.mxu0 0.0
        %1849 = vmatpush1.msra.mxu0 0.0
        %1850 = vmatprep.subr.mxu0 0.0
        %1851 = vmatpush1.msra.mxu0 0.0
        %1852 = vmatprep.subr.mxu0 0.0
        %1853 = vmatpush1.msra.mxu0 0.0
        %1854 = vmatprep.subr.mxu0 0.0
        %1855 = vmatpush1.msra.mxu0 0.0
        %1856 = vmatprep.subr.mxu0 0.0
        %1857 = vmatpush1.msra.mxu0 0.0
        %1858 = vmatprep.subr.mxu0 0.0
        %1859 = vmatpush1.msra.mxu0 0.0
        %1860 = vmatprep.subr.mxu0 0.0
        %1861 = vmatpush1.msra.mxu0 0.0
        %1862 = vmatprep.subr.mxu0 0.0
        %1863 = vmatpush1.msra.mxu0 0.0
        %1864 = vmatprep.subr.mxu0 0.0
        %1865 = vmatpush1.msra.mxu0 0.0
        %1866 = vmatprep.subr.mxu0 0.0
        %1867 = vmatpush1.msra.mxu0 0.0
        %1868 = vmatprep.subr.mxu0 0.0
        %1869 = vmatpush1.msra.mxu0 0.0
        %1870 = vmatprep.subr.mxu0 0.0
        %1871 = vmatpush1.msra.mxu0 0.0
        %1872 = vmatprep.subr.mxu0 0.0
        %1873 = vmatpush1.msra.mxu0 0.0
        %1874 = vmatprep.subr.mxu0 0.0
        %1875 = vmatpush1.msra.mxu0 0.0
        %1876 = vmatprep.mubr.f32.mxu0 0.0
        %1877 = vmatmul.mubr.f32.gmra.mrb[0].mxu0 %v1600
        %v1878 = vpop.f32.mrb[0].mxu0
        %v1879 = vadd.f32 %v1809, %v1878
        %v1880 = vpop.f32.mrb[0].mxu0
        %1881 = vdwg.mxu0
        %v1882 = vmax.f32 %v1511, %v1879
        %v1883 = vld [vmem:[#allocation2] sm:$0x1]
        %v1885 = vlaneseq
        %v1886 = vshrl.u32 %v1885, 7
        %v1887 = vsub.s32 0, %v1886
        %v1888 = vrot.slane %v1883, %v1887
        %v1890 = vadd.f32 %v1882, %v1888
        %v1891 = vmax.f32 %v1890, 0.0
        %vm1892 = vcmask 522240
        %1893 = vst.msk [vmem:[%s250] sm:$0x7f] %vm1892, %v1891
        %p1894 = scmp.lt.s32.totalorder %s20, 1
        %s1895 = scalar_select %p1894, %s20, 1
        %p1896 = scmp.lt.s32.totalorder %s21, 6
        %s1897 = scalar_select %p1896, %s21, 6
        %s1898 = smul.addr %s1895, 7
        %s1899 = sadd.s32 %s1897, %s1898
        %s1900 = smul.addr %s1899, 8
        %s1901 = scalar_lea.vmem %s4, %s1900
        // Predicated region
        $region41: #{emnist_forward.4} parent=35 // pred_check
          %p1902 = pneg %p142
        $region42: #{emnist_forward.4} parent=35 // pred_check_branch
          %1904 = sbr.rel (%p1902) target = $region44
        $region43: #{emnist_forward.4} parent=35 // pred_region
          _
        $region44: #{emnist_forward.4} parent=35 // pred_fallthru
          _
      $region36: #{emnist_forward.4} parent=5 // pred_fallthru
        _
      %p1905 = scmp.le.s32.totalorder 2, %s11
      // Predicated region
      $region45: #{emnist_forward.4} parent=5 // pred_check
        %p1906 = pneg %p1905
      $region46: #{emnist_forward.4} parent=5 // pred_check_branch
        %1908 = sbr.rel (%p1906) target = $region48
      $region47: #{emnist_forward.4} parent=5 // pred_region
        %s1909 = ssub.s32 %s11, 2
        // Predicated region
        $region49: #{emnist_forward.4} parent=47 // pred_check
          %p1910 = pneg %p148
        $region50: #{emnist_forward.4} parent=47 // pred_check_branch
          %1912 = sbr.rel (%p1910) target = $region52
        $region51: #{emnist_forward.4} parent=47 // pred_region
          %p1913 = scmp.lt.s32.totalorder %s22, 1
          %s1914 = scalar_select %p1913, %s22, 1
          %p1915 = scmp.lt.s32.totalorder %s23, 6
          %s1916 = scalar_select %p1915, %s23, 6
          %s1917 = smul.addr %s1914, 7
          %s1918 = sadd.s32 %s1916, %s1917
          %s1919 = smul.addr %s1918, 8
          %s1920 = scalar_lea.vmem %s4, %s1919
        $region52: #{emnist_forward.4} parent=47 // pred_fallthru
          _
      $region48: #{emnist_forward.4} parent=5 // pred_fallthru
        _
    $region6: #{emnist_forward.4} parent=1 // loop_footer
      %s15 = sadd.s32 1, %s11
    $region7: #{emnist_forward.4} parent=1 // loop_footer_branch
      %10 = sbr.rel target = $region3
    $region8: #{emnist_forward.4} parent=1 // loop_exit
      _
    %1921 = vsyncpa [#allocation3], 1
    %s1922 = scalar_lea.sflag [#allocation3], 1
    %1923 = vsyncpa %s1922, 1

// kernel: emnist_forward.5
$region0: #{emnist_forward.5}
  #allocation0 [shape = 'u32[]', space=smem, size = 0x4, offset = 0x4, fixed_abs, tag = 'smem constant byte address 0x4 - core index']
  #allocation1 [shape = 'u32[144,128]{1,0:T(1,128)}', space=vmem, size = 0x12000, scoped, tag = 'internal scratch']
  %s0 = inlined_call_operand.vmem [shape: f32[2,3136], index: 0, kind: input, shape index: {}]
  %s1 = inlined_call_operand.hbm [shape: bf16[3136,2048], index: 1, kind: input, shape index: {}]
  %s2 = inlined_call_operand.hbm [shape: f32[1,2048], index: 2, kind: input, shape index: {}]
  %s3 = inlined_call_operand.hbm [shape: bf16[2048,128], index: 3, kind: input, shape index: {}]
  %s4 = inlined_call_operand.hbm [shape: f32[1,128], index: 4, kind: input, shape index: {}]
  %s5 = inlined_call_operand.hbm [shape: f32[2,128], index: 5, kind: output, shape index: {}]
  %s6 = sld [smem:[#allocation0]]
  $region77: #{emnist_forward.5} parent=0
    _
  %s8 = ssub.s32 1, %s6
  %s9 = scalar_select 0, %s8, %s6
  $region1: #{emnist_forward.5} parent=0
    #allocation2 [shape = 'u8[6422528]{0}', space=vmem, size = 0x620000, scoped, tag = 'input window, operand 1']
    #allocation3 [shape = 's32[2]{0}', space=sflag, size = 0x8, scoped, tag = 'scoped memory for emnist_forward.5']
    #allocation4 [shape = 's32[2]{0}', space=sflag, size = 0x8, scoped, tag = 'scoped memory for emnist_forward.5']
    #allocation5 [shape = 'u8[4096]{0}', space=vmem, size = 0x1000, scoped, tag = 'input window, operand 2']
    #allocation6 [shape = 's32[2]{0}', space=sflag, size = 0x8, scoped, tag = 'scoped memory for emnist_forward.5']
    #allocation7 [shape = 'u8[262144]{0}', space=vmem, size = 0x40000, scoped, tag = 'input window, operand 3']
    #allocation8 [shape = 'u8[512]{0}', space=vmem, size = 0x400, scoped, tag = 'input window, operand 4, single buffered']
    #allocation9 [shape = 's32[1]{0}', space=sflag, size = 0x4, scoped, tag = 'scoped memory for emnist_forward.5']
    #allocation10 [shape = 'u8[1024]{0}', space=vmem, size = 0x400, scoped, tag = 'output window, operand 0, single buffered']
    %10 = vsyncpa [#allocation3], 0
    %s11 = scalar_lea.sflag [#allocation3], 1
    %12 = vsyncpa %s11, 0
    %13 = vsyncpa [#allocation6], 0
    %s14 = scalar_lea.sflag [#allocation6], 1
    %15 = vsyncpa %s14, 0
    %16 = vsyncpa [#allocation9], 0
    %17 = vsyncpa [#allocation4], 0
    loop: start=0, step=1, limit=6
    $region2: #{emnist_forward.5} parent=1 // loop_pre_header
      _
    $region3: #{emnist_forward.5} parent=1 // loop_header
      %s19 = sphi 0, %s23
      %p20 = scmp.ge.s32.totalorder %s19, 6
      %s27 = sphi 0, %s27
      %s29 = sphi 0, %s27
      %s30 = sphi 0, %s29
      %s44 = sphi 0, %s30
      %s50 = sphi 0, %s52
      %s53 = sphi 0, %s50
      %s54 = sphi 0, %s53
      %s70 = sphi 0, %s54
      %s76 = sphi 0, %s78
      %s79 = sphi 0, %s76
      %s80 = sphi 0, %s79
      %s96 = sphi 0, %s80
      %s102 = sphi 0, %s104
      %s105 = sphi 0, %s102
      %s106 = sphi 0, %s105
      %s122 = sphi 0, %s106
      %s126 = sphi 0, %s126
      %s128 = sphi 0, %s126
      %s129 = sphi 0, %s128
      %s143 = sphi 0, %s129
      %s147 = sphi 0, %s147
      %s149 = sphi 0, %s147
      %s150 = sphi 0, %s149
      %s164 = sphi 0, %s150
    $region4: #{emnist_forward.5} parent=1 // loop_header_branch
      %22 = sbr.rel (%p20) target = $region8
    $region5: #{emnist_forward.5} parent=1 // loop_body
      %s24 = ssub.s32 %s19, 1
      %s25 = ssub.s32 %s19, 2
      %s26 = sadd.s32 %s19, 1
      %s28 = sadd.s32 %s27, 1
      %p31 = scmp.eq.s32.totalorder %s19, 3
      %p32 = scmp.ne.s32.totalorder %s27, %s29
      %p33 = scmp.eq.s32.totalorder %s19, 0
      %p34 = por %p32, %p33
      %p35 = scmp.ne.s32.totalorder %s27, %s29
      %p36 = scmp.eq.s32.totalorder %s24, 3
      %p37 = por %p35, %p36
      %p38 = scmp.ne.s32.totalorder %s29, %s30
      %p39 = scmp.eq.s32.totalorder %s24, 0
      %p40 = por %p38, %p39
      %p41 = scmp.ne.s32.totalorder %s29, %s30
      %p42 = scmp.eq.s32.totalorder %s25, 3
      %p43 = por %p41, %p42
      %p45 = scmp.ne.s32.totalorder %s30, %s44
      %p46 = scmp.eq.s32.totalorder %s25, 0
      %p47 = por %p45, %p46
      %s48 = ssub.s32 %s19, %s26
      %p49 = scmp.eq.s32.totalorder %s48, 0
      %s51 = sadd.s32 %s50, 1
      %s52 = scalar_select %p49, %s50, %s51
      %p55 = pneg %p49
      %p56 = scmp.eq.s32.totalorder %s19, 3
      %p57 = por %p55, %p56
      %p58 = scmp.ne.s32.totalorder %s50, %s53
      %p59 = scmp.eq.s32.totalorder %s19, 0
      %p60 = por %p58, %p59
      %p61 = scmp.ne.s32.totalorder %s50, %s53
      %p62 = scmp.eq.s32.totalorder %s24, 3
      %p63 = por %p61, %p62
      %p64 = scmp.ne.s32.totalorder %s53, %s54
      %p65 = scmp.eq.s32.totalorder %s24, 0
      %p66 = por %p64, %p65
      %p67 = scmp.ne.s32.totalorder %s53, %s54
      %p68 = scmp.eq.s32.totalorder %s25, 3
      %p69 = por %p67, %p68
      %p71 = scmp.ne.s32.totalorder %s54, %s70
      %p72 = scmp.eq.s32.totalorder %s25, 0
      %p73 = por %p71, %p72
      %s74 = ssub.s32 %s19, %s26
      %p75 = scmp.eq.s32.totalorder %s74, 0
      %s77 = sadd.s32 %s76, 1
      %s78 = scalar_select %p75, %s76, %s77
      %p81 = pneg %p75
      %p82 = scmp.eq.s32.totalorder %s19, 3
      %p83 = por %p81, %p82
      %p84 = scmp.ne.s32.totalorder %s76, %s79
      %p85 = scmp.eq.s32.totalorder %s19, 0
      %p86 = por %p84, %p85
      %p87 = scmp.ne.s32.totalorder %s76, %s79
      %p88 = scmp.eq.s32.totalorder %s24, 3
      %p89 = por %p87, %p88
      %p90 = scmp.ne.s32.totalorder %s79, %s80
      %p91 = scmp.eq.s32.totalorder %s24, 0
      %p92 = por %p90, %p91
      %p93 = scmp.ne.s32.totalorder %s79, %s80
      %p94 = scmp.eq.s32.totalorder %s25, 3
      %p95 = por %p93, %p94
      %p97 = scmp.ne.s32.totalorder %s80, %s96
      %p98 = scmp.eq.s32.totalorder %s25, 0
      %p99 = por %p97, %p98
      %s100 = ssub.s32 %s19, %s26
      %p101 = scmp.eq.s32.totalorder %s100, 0
      %s103 = sadd.s32 %s102, 1
      %s104 = scalar_select %p101, %s102, %s103
      %p107 = pneg %p101
      %p108 = scmp.eq.s32.totalorder %s19, 3
      %p109 = por %p107, %p108
      %p110 = scmp.ne.s32.totalorder %s102, %s105
      %p111 = scmp.eq.s32.totalorder %s19, 0
      %p112 = por %p110, %p111
      %p113 = scmp.ne.s32.totalorder %s102, %s105
      %p114 = scmp.eq.s32.totalorder %s24, 3
      %p115 = por %p113, %p114
      %p116 = scmp.ne.s32.totalorder %s105, %s106
      %p117 = scmp.eq.s32.totalorder %s24, 0
      %p118 = por %p116, %p117
      %p119 = scmp.ne.s32.totalorder %s105, %s106
      %p120 = scmp.eq.s32.totalorder %s25, 3
      %p121 = por %p119, %p120
      %p123 = scmp.ne.s32.totalorder %s106, %s122
      %p124 = scmp.eq.s32.totalorder %s25, 0
      %p125 = por %p123, %p124
      %s127 = sadd.s32 %s126, 1
      %p130 = scmp.eq.s32.totalorder %s19, 3
      %p131 = scmp.ne.s32.totalorder %s126, %s128
      %p132 = scmp.eq.s32.totalorder %s19, 0
      %p133 = por %p131, %p132
      %p134 = scmp.ne.s32.totalorder %s126, %s128
      %p135 = scmp.eq.s32.totalorder %s24, 3
      %p136 = por %p134, %p135
      %p137 = scmp.ne.s32.totalorder %s128, %s129
      %p138 = scmp.eq.s32.totalorder %s24, 0
      %p139 = por %p137, %p138
      %p140 = scmp.ne.s32.totalorder %s128, %s129
      %p141 = scmp.eq.s32.totalorder %s25, 3
      %p142 = por %p140, %p141
      %p144 = scmp.ne.s32.totalorder %s129, %s143
      %p145 = scmp.eq.s32.totalorder %s25, 0
      %p146 = por %p144, %p145
      %s148 = sadd.s32 %s147, 1
      %p151 = scmp.eq.s32.totalorder %s19, 3
      %p152 = scmp.ne.s32.totalorder %s147, %s149
      %p153 = scmp.eq.s32.totalorder %s19, 0
      %p154 = por %p152, %p153
      %p155 = scmp.ne.s32.totalorder %s147, %s149
      %p156 = scmp.eq.s32.totalorder %s24, 3
      %p157 = por %p155, %p156
      %p158 = scmp.ne.s32.totalorder %s149, %s150
      %p159 = scmp.eq.s32.totalorder %s24, 0
      %p160 = por %p158, %p159
      %p161 = scmp.ne.s32.totalorder %s149, %s150
      %p162 = scmp.eq.s32.totalorder %s25, 3
      %p163 = por %p161, %p162
      %p165 = scmp.ne.s32.totalorder %s150, %s164
      %p166 = scmp.eq.s32.totalorder %s25, 0
      %p167 = por %p165, %p166
      %p168 = scmp.le.s32.totalorder 1, %s19
      %p169 = scmp.lt.s32.totalorder %s19, 5
      %p170 = pnand %p168, %p169
      %p171 = pneg %p170
      // Predicated region
      $region9: #{emnist_forward.5} parent=5 // pred_check
        _
      $region10: #{emnist_forward.5} parent=5 // pred_check_branch
        %173 = sbr.rel (%p170) target = $region12
      $region11: #{emnist_forward.5} parent=5 // pred_region
        %s174 = ssub.s32 %s19, 1
        // Predicated region
        $region13: #{emnist_forward.5} parent=11 // pred_check
          %p175 = pneg %p40
        $region14: #{emnist_forward.5} parent=11 // pred_check_branch
          %177 = sbr.rel (%p175) target = $region16
        $region15: #{emnist_forward.5} parent=11 // pred_region
          _
        $region16: #{emnist_forward.5} parent=11 // pred_fallthru
          _
        // Predicated region
        $region17: #{emnist_forward.5} parent=11 // pred_check
          %p178 = pneg %p139
        $region18: #{emnist_forward.5} parent=11 // pred_check_branch
          %180 = sbr.rel (%p178) target = $region20
        $region19: #{emnist_forward.5} parent=11 // pred_region
          %s182 = ssub.s32 16, 16
          %183 = vsyncadd [#allocation9], %s182
          %s185 = sshll.u32 [#allocation8], 4
          %s186 = int_to_ptr.vmem [resolvable:$true] %s185
          %188 = dma.hbm_to_vmem [thread:$0]  %s4, 16, %s186, [#allocation9]
        $region20: #{emnist_forward.5} parent=11 // pred_fallthru
          _
      $region12: #{emnist_forward.5} parent=5 // pred_fallthru
        _
      %p189 = scmp.lt.s32.totalorder %s19, 4
      // Predicated region
      $region21: #{emnist_forward.5} parent=5 // pred_check
        %p190 = pneg %p189
      $region22: #{emnist_forward.5} parent=5 // pred_check_branch
        %192 = sbr.rel (%p190) target = $region24
      $region23: #{emnist_forward.5} parent=5 // pred_region
        // Predicated region
        $region25: #{emnist_forward.5} parent=23 // pred_check
          %p193 = pneg %p60
        $region26: #{emnist_forward.5} parent=23 // pred_check_branch
          %195 = sbr.rel (%p193) target = $region28
        $region27: #{emnist_forward.5} parent=23 // pred_region
          %s196 = sand.u32 %s50, 1
          %s197 = scalar_lea.sflag [#allocation3], %s196
          %s198 = sand.u32 %s50, 1
          %s199 = smul.addr %s198, 6272
          %s200 = scalar_lea.vmem [#allocation2], %s199
          %s201 = smul.u32 4, %s19
          %s203 = ssub.s32 100352, 100352
          %204 = vsyncadd %s197, %s203
          %s205 = smul.addr %s201, 64
          %s206 = scalar_lea.hbm %s1, %s205
          %s207 = sshll.u32 %s200, 4
          %s208 = int_to_ptr.vmem [resolvable:$true] %s207
          %213 = dma.hbm_to_vmem [thread:$0]  %s206, 100352, %s208, %s197, 1024, 256, 16
        $region28: #{emnist_forward.5} parent=23 // pred_fallthru
          _
        // Predicated region
        $region29: #{emnist_forward.5} parent=23 // pred_check
          %p214 = pneg %p86
        $region30: #{emnist_forward.5} parent=23 // pred_check_branch
          %216 = sbr.rel (%p214) target = $region32
        $region31: #{emnist_forward.5} parent=23 // pred_region
          %s217 = sand.u32 %s19, 1
          %s218 = scalar_lea.sflag [#allocation6], %s217
          %s219 = sand.u32 %s76, 1
          %s220 = smul.addr %s219, 4
          %s221 = scalar_lea.vmem [#allocation5], %s220
          %s222 = smul.u32 4, %s19
          %s224 = ssub.s32 64, 64
          %225 = vsyncadd %s218, %s224
          %s226 = smul.addr %s222, 16
          %s227 = scalar_lea.hbm %s2, %s226
          %s229 = sshll.u32 %s221, 4
          %s230 = int_to_ptr.vmem [resolvable:$true] %s229
          %232 = dma.hbm_to_vmem [thread:$0]  %s227, 64, %s230, %s218
        $region32: #{emnist_forward.5} parent=23 // pred_fallthru
          _
        // Predicated region
        $region33: #{emnist_forward.5} parent=23 // pred_check
          %p233 = pneg %p112
        $region34: #{emnist_forward.5} parent=23 // pred_check_branch
          %235 = sbr.rel (%p233) target = $region36
        $region35: #{emnist_forward.5} parent=23 // pred_region
          %s236 = sand.u32 %s19, 1
          %s237 = scalar_lea.sflag [#allocation6], %s236
          %s238 = sand.u32 %s102, 1
          %s239 = smul.addr %s238, 256
          %s240 = scalar_lea.vmem [#allocation7], %s239
          %s241 = smul.u32 64, %s19
          %s243 = ssub.s32 4096, 4096
          %244 = vsyncadd %s237, %s243
          %s245 = smul.addr %s241, 64
          %s246 = scalar_lea.hbm %s3, %s245
          %s247 = sshll.u32 %s240, 4
          %s248 = int_to_ptr.vmem [resolvable:$true] %s247
          %253 = dma.hbm_to_vmem [thread:$0]  %s246, 4096, %s248, %s237, 64, 64, 4
        $region36: #{emnist_forward.5} parent=23 // pred_fallthru
          _
      $region24: #{emnist_forward.5} parent=5 // pred_fallthru
        _
      %p254 = scmp.le.s32.totalorder 1, %s19
      %p255 = scmp.lt.s32.totalorder %s19, 5
      %p256 = pnand %p254, %p255
      %p257 = pneg %p256
      // Predicated region
      $region37: #{emnist_forward.5} parent=5 // pred_check
        _
      $region38: #{emnist_forward.5} parent=5 // pred_check_branch
        %259 = sbr.rel (%p256) target = $region40
      $region39: #{emnist_forward.5} parent=5 // pred_region
        %s260 = ssub.s32 %s19, 1
        %s261 = sand.u32 %s53, 1
        %s262 = scalar_lea.sflag [#allocation3], %s261
        %s263 = sand.u32 %s53, 1
        %s264 = smul.addr %s263, 6272
        %s265 = scalar_lea.vmem [#allocation2], %s264
        // Predicated region
        $region41: #{emnist_forward.5} parent=39 // pred_check
          %p266 = pneg %p66
        $region42: #{emnist_forward.5} parent=39 // pred_check_branch
          %268 = sbr.rel (%p266) target = $region44
        $region43: #{emnist_forward.5} parent=39 // pred_region
          %269 = dma.done %s262, 100352
        $region44: #{emnist_forward.5} parent=39 // pred_fallthru
          _
        %s270 = sand.u32 %s24, 1
        %s271 = scalar_lea.sflag [#allocation6], %s270
        %s272 = sand.u32 %s79, 1
        %s273 = smul.addr %s272, 4
        %s274 = scalar_lea.vmem [#allocation5], %s273
        // Predicated region
        $region45: #{emnist_forward.5} parent=39 // pred_check
          %p275 = pneg %p92
        $region46: #{emnist_forward.5} parent=39 // pred_check_branch
          %277 = sbr.rel (%p275) target = $region48
        $region47: #{emnist_forward.5} parent=39 // pred_region
          %278 = dma.done %s271, 64
        $region48: #{emnist_forward.5} parent=39 // pred_fallthru
          _
        %s279 = sand.u32 %s24, 1
        %s280 = scalar_lea.sflag [#allocation6], %s279
        %s281 = sand.u32 %s105, 1
        %s282 = smul.addr %s281, 256
        %s283 = scalar_lea.vmem [#allocation7], %s282
        // Predicated region
        $region49: #{emnist_forward.5} parent=39 // pred_check
          %p284 = pneg %p118
        $region50: #{emnist_forward.5} parent=39 // pred_check_branch
          %286 = sbr.rel (%p284) target = $region52
        $region51: #{emnist_forward.5} parent=39 // pred_region
          %287 = dma.done %s280, 4096
        $region52: #{emnist_forward.5} parent=39 // pred_fallthru
          _
        // Predicated region
        $region53: #{emnist_forward.5} parent=39 // pred_check
          %p288 = pneg %p139
        $region54: #{emnist_forward.5} parent=39 // pred_check_branch
          %290 = sbr.rel (%p288) target = $region56
        $region55: #{emnist_forward.5} parent=39 // pred_region
          %291 = dma.done [#allocation9], 16
        $region56: #{emnist_forward.5} parent=39 // pred_fallthru
          _
        %p292 = pneg %p40
        %p293 = pneg %p37
        %s294 = sand.u32 %s53, 1
        %s295 = scalar_lea.sflag [#allocation3], %s294
        %s296 = sand.u32 %s53, 1
        %s297 = smul.addr %s296, 6272
        %s298 = scalar_lea.vmem [#allocation2], %s297
        %p299 = pneg %p66
        %p300 = pneg %p63
        %s301 = sand.u32 %s24, 1
        %s302 = scalar_lea.sflag [#allocation6], %s301
        %s303 = sand.u32 %s79, 1
        %s304 = smul.addr %s303, 4
        %s305 = scalar_lea.vmem [#allocation5], %s304
        %p306 = pneg %p92
        %p307 = pneg %p89
        %s308 = sand.u32 %s24, 1
        %s309 = scalar_lea.sflag [#allocation6], %s308
        %s310 = sand.u32 %s105, 1
        %s311 = smul.addr %s310, 256
        %s312 = scalar_lea.vmem [#allocation7], %s311
        %p313 = pneg %p118
        %p314 = pneg %p115
        %p315 = pneg %p139
        %p316 = pneg %p136
        %p317 = pneg %p160
        %p318 = pneg %p157
        %s319 = smul.u32 4, %s24
        %s320 = smul.u32 4, %s24
        %s321 = smul.u32 64, %s24
        %p323 = scmp.eq.s32.totalorder %s24, 0
        // Predicated region
        $region57: #{emnist_forward.5} parent=39 // pred_check
          %p324 = pneg %p323
        $region58: #{emnist_forward.5} parent=39 // pred_check_branch
          %326 = sbr.rel (%p324) target = $region60
        $region59: #{emnist_forward.5} parent=39 // pred_region
          %327 = vst [vmem:[#allocation10] sm:$0x3] 0.0
        $region60: #{emnist_forward.5} parent=39 // pred_fallthru
          _
        %v328 = vld [vmem:[%s0] sm:$0xff]
        %v329 = vld [vmem:[%s0 + $0x8] sm:$0xff]
        %v330 = vld [vmem:[%s0 + $0x10] sm:$0xff]
        %v331 = vld [vmem:[%s0 + $0x18] sm:$0xff]
        %v332 = vld [vmem:[%s0 + $0x20] sm:$0xff]
        %v333 = vld [vmem:[%s0 + $0x28] sm:$0xff]
        %v334 = vld [vmem:[%s0 + $0x30] sm:$0x3]
        %v342 = vcombine.high %v328, %v328
        %v344 = vunpack.c.l.s4 1983009808
        %v345 = vunpack.c.0.s8 %v344
        %v346 = vlaneseq
        %v347 = vshrl.u32 %v346, 7
        %v348 = vsub.s32 %v345, %v347
        %v349 = vrot.slane %v328, %v348
        %v351 = vunpack.c.l.s4 1983009808
        %v352 = vunpack.c.0.s8 %v351
        %v353 = vlaneseq
        %v354 = vshrl.u32 %v353, 7
        %v355 = vsub.s32 %v352, %v354
        %v356 = vrot.slane %v342, %v355
        %v357 = vcombine.high %v349, %v349
        %v358 = vcombine.high %v356, %v356
        %v359 = vcombine.high %v329, %v329
        %v361 = vunpack.c.l.s4 1983009808
        %v362 = vunpack.c.0.s8 %v361
        %v363 = vlaneseq
        %v364 = vshrl.u32 %v363, 7
        %v365 = vsub.s32 %v362, %v364
        %v366 = vrot.slane %v329, %v365
        %v368 = vunpack.c.l.s4 1983009808
        %v369 = vunpack.c.0.s8 %v368
        %v370 = vlaneseq
        %v371 = vshrl.u32 %v370, 7
        %v372 = vsub.s32 %v369, %v371
        %v373 = vrot.slane %v359, %v372
        %v374 = vcombine.high %v366, %v366
        %v375 = vcombine.high %v373, %v373
        %v376 = vcombine.high %v330, %v330
        %v378 = vunpack.c.l.s4 1983009808
        %v379 = vunpack.c.0.s8 %v378
        %v380 = vlaneseq
        %v381 = vshrl.u32 %v380, 7
        %v382 = vsub.s32 %v379, %v381
        %v383 = vrot.slane %v330, %v382
        %v385 = vunpack.c.l.s4 1983009808
        %v386 = vunpack.c.0.s8 %v385
        %v387 = vlaneseq
        %v388 = vshrl.u32 %v387, 7
        %v389 = vsub.s32 %v386, %v388
        %v390 = vrot.slane %v376, %v389
        %v391 = vcombine.high %v383, %v383
        %v392 = vcombine.high %v390, %v390
        %v393 = vcombine.high %v331, %v331
        %v395 = vunpack.c.l.s4 1983009808
        %v396 = vunpack.c.0.s8 %v395
        %v397 = vlaneseq
        %v398 = vshrl.u32 %v397, 7
        %v399 = vsub.s32 %v396, %v398
        %v400 = vrot.slane %v331, %v399
        %v402 = vunpack.c.l.s4 1983009808
        %v403 = vunpack.c.0.s8 %v402
        %v404 = vlaneseq
        %v405 = vshrl.u32 %v404, 7
        %v406 = vsub.s32 %v403, %v405
        %v407 = vrot.slane %v393, %v406
        %v408 = vcombine.high %v400, %v400
        %v409 = vcombine.high %v407, %v407
        %v410 = vcombine.high %v332, %v332
        %v412 = vunpack.c.l.s4 1983009808
        %v413 = vunpack.c.0.s8 %v412
        %v414 = vlaneseq
        %v415 = vshrl.u32 %v414, 7
        %v416 = vsub.s32 %v413, %v415
        %v417 = vrot.slane %v332, %v416
        %v419 = vunpack.c.l.s4 1983009808
        %v420 = vunpack.c.0.s8 %v419
        %v421 = vlaneseq
        %v422 = vshrl.u32 %v421, 7
        %v423 = vsub.s32 %v420, %v422
        %v424 = vrot.slane %v410, %v423
        %v425 = vcombine.high %v417, %v417
        %v426 = vcombine.high %v424, %v424
        %v427 = vcombine.high %v333, %v333
        %v429 = vunpack.c.l.s4 1983009808
        %v430 = vunpack.c.0.s8 %v429
        %v431 = vlaneseq
        %v432 = vshrl.u32 %v431, 7
        %v433 = vsub.s32 %v430, %v432
        %v434 = vrot.slane %v333, %v433
        %v436 = vunpack.c.l.s4 1983009808
        %v437 = vunpack.c.0.s8 %v436
        %v438 = vlaneseq
        %v439 = vshrl.u32 %v438, 7
        %v440 = vsub.s32 %v437, %v439
        %v441 = vrot.slane %v427, %v440
        %v442 = vcombine.high %v434, %v434
        %v443 = vcombine.high %v441, %v441
        %v445 = vunpack.c.l.s4 1983009808
        %v446 = vunpack.c.0.s8 %v445
        %v447 = vlaneseq
        %v448 = vshrl.u32 %v447, 7
        %v449 = vsub.s32 %v446, %v448
        %v450 = vrot.slane %v334, %v449
        %v476 = vpack.c.bf16 %v349, %v349
        %v477 = vpack.c.bf16 %v357, %v357
        %v478 = vpack.c.bf16 %v356, %v356
        %v479 = vpack.c.bf16 %v358, %v358
        %v480 = vpack.c.bf16 %v366, %v366
        %v481 = vpack.c.bf16 %v374, %v374
        %v482 = vpack.c.bf16 %v373, %v373
        %v483 = vpack.c.bf16 %v375, %v375
        %v484 = vpack.c.bf16 %v383, %v383
        %v485 = vpack.c.bf16 %v391, %v391
        %v486 = vpack.c.bf16 %v390, %v390
        %v487 = vpack.c.bf16 %v392, %v392
        %v488 = vpack.c.bf16 %v400, %v400
        %v489 = vpack.c.bf16 %v408, %v408
        %v490 = vpack.c.bf16 %v407, %v407
        %v491 = vpack.c.bf16 %v409, %v409
        %v492 = vpack.c.bf16 %v417, %v417
        %v493 = vpack.c.bf16 %v425, %v425
        %v494 = vpack.c.bf16 %v424, %v424
        %v495 = vpack.c.bf16 %v426, %v426
        %v496 = vpack.c.bf16 %v434, %v434
        %v497 = vpack.c.bf16 %v442, %v442
        %v498 = vpack.c.bf16 %v441, %v441
        %v499 = vpack.c.bf16 %v443, %v443
        %v500 = vpack.c.bf16 %v450, %v450
        %v501 = vld [vmem:[%s265] sm:$0xff]
        %v502 = vld [vmem:[%s265 + $0x8] sm:$0xff]
        %v503 = vld [vmem:[%s265 + $0x10] sm:$0xff]
        %v504 = vld [vmem:[%s265 + $0x18] sm:$0xff]
        %v505 = vld [vmem:[%s265 + $0x20] sm:$0xff]
        %v506 = vld [vmem:[%s265 + $0x28] sm:$0xff]
        %v507 = vld [vmem:[%s265 + $0x30] sm:$0xff]
        %v508 = vld [vmem:[%s265 + $0x38] sm:$0xff]
        %v509 = vld [vmem:[%s265 + $0x40] sm:$0xff]
        %v510 = vld [vmem:[%s265 + $0x48] sm:$0xff]
        %v511 = vld [vmem:[%s265 + $0x50] sm:$0xff]
        %v512 = vld [vmem:[%s265 + $0x58] sm:$0xff]
        %v513 = vld [vmem:[%s265 + $0x60] sm:$0xff]
        %v514 = vld [vmem:[%s265 + $0x68] sm:$0xff]
        %v515 = vld [vmem:[%s265 + $0x70] sm:$0xff]
        %v516 = vld [vmem:[%s265 + $0x78] sm:$0xff]
        %v517 = vld [vmem:[%s265 + $0x80] sm:$0xff]
        %v518 = vld [vmem:[%s265 + $0x88] sm:$0xff]
        %v519 = vld [vmem:[%s265 + $0x90] sm:$0xff]
        %v520 = vld [vmem:[%s265 + $0x98] sm:$0xff]
        %v521 = vld [vmem:[%s265 + $0xa0] sm:$0xff]
        %v522 = vld [vmem:[%s265 + $0xa8] sm:$0xff]
        %v523 = vld [vmem:[%s265 + $0xb0] sm:$0xff]
        %v524 = vld [vmem:[%s265 + $0xb8] sm:$0xff]
        %v525 = vld [vmem:[%s265 + $0xc0] sm:$0xff]
        %v526 = vld [vmem:[%s265 + $0xc8] sm:$0xff]
        %v527 = vld [vmem:[%s265 + $0xd0] sm:$0xff]
        %v528 = vld [vmem:[%s265 + $0xd8] sm:$0xff]
        %v529 = vld [vmem:[%s265 + $0xe0] sm:$0xff]
        %v530 = vld [vmem:[%s265 + $0xe8] sm:$0xff]
        %v531 = vld [vmem:[%s265 + $0xf0] sm:$0xff]
        %v532 = vld [vmem:[%s265 + $0xf8] sm:$0xff]
        %v533 = vld [vmem:[%s265 + $0x100] sm:$0xff]
        %v534 = vld [vmem:[%s265 + $0x108] sm:$0xff]
        %v535 = vld [vmem:[%s265 + $0x110] sm:$0xff]
        %v536 = vld [vmem:[%s265 + $0x118] sm:$0xff]
        %v537 = vld [vmem:[%s265 + $0x120] sm:$0xff]
        %v538 = vld [vmem:[%s265 + $0x128] sm:$0xff]
        %v539 = vld [vmem:[%s265 + $0x130] sm:$0xff]
        %v540 = vld [vmem:[%s265 + $0x138] sm:$0xff]
        %v541 = vld [vmem:[%s265 + $0x140] sm:$0xff]
        %v542 = vld [vmem:[%s265 + $0x148] sm:$0xff]
        %v543 = vld [vmem:[%s265 + $0x150] sm:$0xff]
        %v544 = vld [vmem:[%s265 + $0x158] sm:$0xff]
        %v545 = vld [vmem:[%s265 + $0x160] sm:$0xff]
        %v546 = vld [vmem:[%s265 + $0x168] sm:$0xff]
        %v547 = vld [vmem:[%s265 + $0x170] sm:$0xff]
        %v548 = vld [vmem:[%s265 + $0x178] sm:$0xff]
        %v549 = vld [vmem:[%s265 + $0x180] sm:$0xff]
        %v550 = vld [vmem:[%s265 + $0x188] sm:$0xff]
        %v551 = vld [vmem:[%s265 + $0x190] sm:$0xff]
        %v552 = vld [vmem:[%s265 + $0x198] sm:$0xff]
        %v553 = vld [vmem:[%s265 + $0x1a0] sm:$0xff]
        %v554 = vld [vmem:[%s265 + $0x1a8] sm:$0xff]
        %v555 = vld [vmem:[%s265 + $0x1b0] sm:$0xff]
        %v556 = vld [vmem:[%s265 + $0x1b8] sm:$0xff]
        %v557 = vld [vmem:[%s265 + $0x1c0] sm:$0xff]
        %v558 = vld [vmem:[%s265 + $0x1c8] sm:$0xff]
        %v559 = vld [vmem:[%s265 + $0x1d0] sm:$0xff]
        %v560 = vld [vmem:[%s265 + $0x1d8] sm:$0xff]
        %v561 = vld [vmem:[%s265 + $0x1e0] sm:$0xff]
        %v562 = vld [vmem:[%s265 + $0x1e8] sm:$0xff]
        %v563 = vld [vmem:[%s265 + $0x1f0] sm:$0xff]
        %v564 = vld [vmem:[%s265 + $0x1f8] sm:$0xff]
        %v565 = vld [vmem:[%s265 + $0x200] sm:$0xff]
        %v566 = vld [vmem:[%s265 + $0x208] sm:$0xff]
        %v567 = vld [vmem:[%s265 + $0x210] sm:$0xff]
        %v568 = vld [vmem:[%s265 + $0x218] sm:$0xff]
        %v569 = vld [vmem:[%s265 + $0x220] sm:$0xff]
        %v570 = vld [vmem:[%s265 + $0x228] sm:$0xff]
        %v571 = vld [vmem:[%s265 + $0x230] sm:$0xff]
        %v572 = vld [vmem:[%s265 + $0x238] sm:$0xff]
        %v573 = vld [vmem:[%s265 + $0x240] sm:$0xff]
        %v574 = vld [vmem:[%s265 + $0x248] sm:$0xff]
        %v575 = vld [vmem:[%s265 + $0x250] sm:$0xff]
        %v576 = vld [vmem:[%s265 + $0x258] sm:$0xff]
        %v577 = vld [vmem:[%s265 + $0x260] sm:$0xff]
        %v578 = vld [vmem:[%s265 + $0x268] sm:$0xff]
        %v579 = vld [vmem:[%s265 + $0x270] sm:$0xff]
        %v580 = vld [vmem:[%s265 + $0x278] sm:$0xff]
        %v581 = vld [vmem:[%s265 + $0x280] sm:$0xff]
        %v582 = vld [vmem:[%s265 + $0x288] sm:$0xff]
        %v583 = vld [vmem:[%s265 + $0x290] sm:$0xff]
        %v584 = vld [vmem:[%s265 + $0x298] sm:$0xff]
        %v585 = vld [vmem:[%s265 + $0x2a0] sm:$0xff]
        %v586 = vld [vmem:[%s265 + $0x2a8] sm:$0xff]
        %v587 = vld [vmem:[%s265 + $0x2b0] sm:$0xff]
        %v588 = vld [vmem:[%s265 + $0x2b8] sm:$0xff]
        %v589 = vld [vmem:[%s265 + $0x2c0] sm:$0xff]
        %v590 = vld [vmem:[%s265 + $0x2c8] sm:$0xff]
        %v591 = vld [vmem:[%s265 + $0x2d0] sm:$0xff]
        %v592 = vld [vmem:[%s265 + $0x2d8] sm:$0xff]
        %v593 = vld [vmem:[%s265 + $0x2e0] sm:$0xff]
        %v594 = vld [vmem:[%s265 + $0x2e8] sm:$0xff]
        %v595 = vld [vmem:[%s265 + $0x2f0] sm:$0xff]
        %v596 = vld [vmem:[%s265 + $0x2f8] sm:$0xff]
        %v597 = vld [vmem:[%s265 + $0x300] sm:$0xff]
        %v598 = vld [vmem:[%s265 + $0x308] sm:$0xff]
        %v599 = vld [vmem:[%s265 + $0x310] sm:$0xff]
        %v600 = vld [vmem:[%s265 + $0x318] sm:$0xff]
        %v601 = vld [vmem:[%s265 + $0x320] sm:$0xff]
        %v602 = vld [vmem:[%s265 + $0x328] sm:$0xff]
        %v603 = vld [vmem:[%s265 + $0x330] sm:$0xff]
        %v604 = vld [vmem:[%s265 + $0x338] sm:$0xff]
        %v605 = vld [vmem:[%s265 + $0x340] sm:$0xff]
        %v606 = vld [vmem:[%s265 + $0x348] sm:$0xff]
        %v607 = vld [vmem:[%s265 + $0x350] sm:$0xff]
        %v608 = vld [vmem:[%s265 + $0x358] sm:$0xff]
        %v609 = vld [vmem:[%s265 + $0x360] sm:$0xff]
        %v610 = vld [vmem:[%s265 + $0x368] sm:$0xff]
        %v611 = vld [vmem:[%s265 + $0x370] sm:$0xff]
        %v612 = vld [vmem:[%s265 + $0x378] sm:$0xff]
        %v613 = vld [vmem:[%s265 + $0x380] sm:$0xff]
        %v614 = vld [vmem:[%s265 + $0x388] sm:$0xff]
        %v615 = vld [vmem:[%s265 + $0x390] sm:$0xff]
        %v616 = vld [vmem:[%s265 + $0x398] sm:$0xff]
        %v617 = vld [vmem:[%s265 + $0x3a0] sm:$0xff]
        %v618 = vld [vmem:[%s265 + $0x3a8] sm:$0xff]
        %v619 = vld [vmem:[%s265 + $0x3b0] sm:$0xff]
        %v620 = vld [vmem:[%s265 + $0x3b8] sm:$0xff]
        %v621 = vld [vmem:[%s265 + $0x3c0] sm:$0xff]
        %v622 = vld [vmem:[%s265 + $0x3c8] sm:$0xff]
        %v623 = vld [vmem:[%s265 + $0x3d0] sm:$0xff]
        %v624 = vld [vmem:[%s265 + $0x3d8] sm:$0xff]
        %v625 = vld [vmem:[%s265 + $0x3e0] sm:$0xff]
        %v626 = vld [vmem:[%s265 + $0x3e8] sm:$0xff]
        %v627 = vld [vmem:[%s265 + $0x3f0] sm:$0xff]
        %v628 = vld [vmem:[%s265 + $0x3f8] sm:$0xff]
        %v629 = vld [vmem:[%s265 + $0x400] sm:$0xff]
        %v630 = vld [vmem:[%s265 + $0x408] sm:$0xff]
        %v631 = vld [vmem:[%s265 + $0x410] sm:$0xff]
        %v632 = vld [vmem:[%s265 + $0x418] sm:$0xff]
        %v633 = vld [vmem:[%s265 + $0x420] sm:$0xff]
        %v634 = vld [vmem:[%s265 + $0x428] sm:$0xff]
        %v635 = vld [vmem:[%s265 + $0x430] sm:$0xff]
        %v636 = vld [vmem:[%s265 + $0x438] sm:$0xff]
        %v637 = vld [vmem:[%s265 + $0x440] sm:$0xff]
        %v638 = vld [vmem:[%s265 + $0x448] sm:$0xff]
        %v639 = vld [vmem:[%s265 + $0x450] sm:$0xff]
        %v640 = vld [vmem:[%s265 + $0x458] sm:$0xff]
        %v641 = vld [vmem:[%s265 + $0x460] sm:$0xff]
        %v642 = vld [vmem:[%s265 + $0x468] sm:$0xff]
        %v643 = vld [vmem:[%s265 + $0x470] sm:$0xff]
        %v644 = vld [vmem:[%s265 + $0x478] sm:$0xff]
        %v645 = vld [vmem:[%s265 + $0x480] sm:$0xff]
        %v646 = vld [vmem:[%s265 + $0x488] sm:$0xff]
        %v647 = vld [vmem:[%s265 + $0x490] sm:$0xff]
        %v648 = vld [vmem:[%s265 + $0x498] sm:$0xff]
        %v649 = vld [vmem:[%s265 + $0x4a0] sm:$0xff]
        %v650 = vld [vmem:[%s265 + $0x4a8] sm:$0xff]
        %v651 = vld [vmem:[%s265 + $0x4b0] sm:$0xff]
        %v652 = vld [vmem:[%s265 + $0x4b8] sm:$0xff]
        %v653 = vld [vmem:[%s265 + $0x4c0] sm:$0xff]
        %v654 = vld [vmem:[%s265 + $0x4c8] sm:$0xff]
        %v655 = vld [vmem:[%s265 + $0x4d0] sm:$0xff]
        %v656 = vld [vmem:[%s265 + $0x4d8] sm:$0xff]
        %v657 = vld [vmem:[%s265 + $0x4e0] sm:$0xff]
        %v658 = vld [vmem:[%s265 + $0x4e8] sm:$0xff]
        %v659 = vld [vmem:[%s265 + $0x4f0] sm:$0xff]
        %v660 = vld [vmem:[%s265 + $0x4f8] sm:$0xff]
        %v661 = vld [vmem:[%s265 + $0x500] sm:$0xff]
        %v662 = vld [vmem:[%s265 + $0x508] sm:$0xff]
        %v663 = vld [vmem:[%s265 + $0x510] sm:$0xff]
        %v664 = vld [vmem:[%s265 + $0x518] sm:$0xff]
        %v665 = vld [vmem:[%s265 + $0x520] sm:$0xff]
        %v666 = vld [vmem:[%s265 + $0x528] sm:$0xff]
        %v667 = vld [vmem:[%s265 + $0x530] sm:$0xff]
        %v668 = vld [vmem:[%s265 + $0x538] sm:$0xff]
        %v669 = vld [vmem:[%s265 + $0x540] sm:$0xff]
        %v670 = vld [vmem:[%s265 + $0x548] sm:$0xff]
        %v671 = vld [vmem:[%s265 + $0x550] sm:$0xff]
        %v672 = vld [vmem:[%s265 + $0x558] sm:$0xff]
        %v673 = vld [vmem:[%s265 + $0x560] sm:$0xff]
        %v674 = vld [vmem:[%s265 + $0x568] sm:$0xff]
        %v675 = vld [vmem:[%s265 + $0x570] sm:$0xff]
        %v676 = vld [vmem:[%s265 + $0x578] sm:$0xff]
        %v677 = vld [vmem:[%s265 + $0x580] sm:$0xff]
        %v678 = vld [vmem:[%s265 + $0x588] sm:$0xff]
        %v679 = vld [vmem:[%s265 + $0x590] sm:$0xff]
        %v680 = vld [vmem:[%s265 + $0x598] sm:$0xff]
        %v681 = vld [vmem:[%s265 + $0x5a0] sm:$0xff]
        %v682 = vld [vmem:[%s265 + $0x5a8] sm:$0xff]
        %v683 = vld [vmem:[%s265 + $0x5b0] sm:$0xff]
        %v684 = vld [vmem:[%s265 + $0x5b8] sm:$0xff]
        %v685 = vld [vmem:[%s265 + $0x5c0] sm:$0xff]
        %v686 = vld [vmem:[%s265 + $0x5c8] sm:$0xff]
        %v687 = vld [vmem:[%s265 + $0x5d0] sm:$0xff]
        %v688 = vld [vmem:[%s265 + $0x5d8] sm:$0xff]
        %v689 = vld [vmem:[%s265 + $0x5e0] sm:$0xff]
        %v690 = vld [vmem:[%s265 + $0x5e8] sm:$0xff]
        %v691 = vld [vmem:[%s265 + $0x5f0] sm:$0xff]
        %v692 = vld [vmem:[%s265 + $0x5f8] sm:$0xff]
        %v693 = vld [vmem:[%s265 + $0x600] sm:$0xff]
        %v694 = vld [vmem:[%s265 + $0x608] sm:$0xff]
        %v695 = vld [vmem:[%s265 + $0x610] sm:$0xff]
        %v696 = vld [vmem:[%s265 + $0x618] sm:$0xff]
        %v697 = vld [vmem:[%s265 + $0x620] sm:$0xff]
        %v698 = vld [vmem:[%s265 + $0x628] sm:$0xff]
        %v699 = vld [vmem:[%s265 + $0x630] sm:$0xff]
        %v700 = vld [vmem:[%s265 + $0x638] sm:$0xff]
        %v701 = vld [vmem:[%s265 + $0x640] sm:$0xff]
        %v702 = vld [vmem:[%s265 + $0x648] sm:$0xff]
        %v703 = vld [vmem:[%s265 + $0x650] sm:$0xff]
        %v704 = vld [vmem:[%s265 + $0x658] sm:$0xff]
        %v705 = vld [vmem:[%s265 + $0x660] sm:$0xff]
        %v706 = vld [vmem:[%s265 + $0x668] sm:$0xff]
        %v707 = vld [vmem:[%s265 + $0x670] sm:$0xff]
        %v708 = vld [vmem:[%s265 + $0x678] sm:$0xff]
        %v709 = vld [vmem:[%s265 + $0x680] sm:$0xff]
        %v710 = vld [vmem:[%s265 + $0x688] sm:$0xff]
        %v711 = vld [vmem:[%s265 + $0x690] sm:$0xff]
        %v712 = vld [vmem:[%s265 + $0x698] sm:$0xff]
        %v713 = vld [vmem:[%s265 + $0x6a0] sm:$0xff]
        %v714 = vld [vmem:[%s265 + $0x6a8] sm:$0xff]
        %v715 = vld [vmem:[%s265 + $0x6b0] sm:$0xff]
        %v716 = vld [vmem:[%s265 + $0x6b8] sm:$0xff]
        %v717 = vld [vmem:[%s265 + $0x6c0] sm:$0xff]
        %v718 = vld [vmem:[%s265 + $0x6c8] sm:$0xff]
        %v719 = vld [vmem:[%s265 + $0x6d0] sm:$0xff]
        %v720 = vld [vmem:[%s265 + $0x6d8] sm:$0xff]
        %v721 = vld [vmem:[%s265 + $0x6e0] sm:$0xff]
        %v722 = vld [vmem:[%s265 + $0x6e8] sm:$0xff]
        %v723 = vld [vmem:[%s265 + $0x6f0] sm:$0xff]
        %v724 = vld [vmem:[%s265 + $0x6f8] sm:$0xff]
        %v725 = vld [vmem:[%s265 + $0x700] sm:$0xff]
        %v726 = vld [vmem:[%s265 + $0x708] sm:$0xff]
        %v727 = vld [vmem:[%s265 + $0x710] sm:$0xff]
        %v728 = vld [vmem:[%s265 + $0x718] sm:$0xff]
        %v729 = vld [vmem:[%s265 + $0x720] sm:$0xff]
        %v730 = vld [vmem:[%s265 + $0x728] sm:$0xff]
        %v731 = vld [vmem:[%s265 + $0x730] sm:$0xff]
        %v732 = vld [vmem:[%s265 + $0x738] sm:$0xff]
        %v733 = vld [vmem:[%s265 + $0x740] sm:$0xff]
        %v734 = vld [vmem:[%s265 + $0x748] sm:$0xff]
        %v735 = vld [vmem:[%s265 + $0x750] sm:$0xff]
        %v736 = vld [vmem:[%s265 + $0x758] sm:$0xff]
        %v737 = vld [vmem:[%s265 + $0x760] sm:$0xff]
        %v738 = vld [vmem:[%s265 + $0x768] sm:$0xff]
        %v739 = vld [vmem:[%s265 + $0x770] sm:$0xff]
        %v740 = vld [vmem:[%s265 + $0x778] sm:$0xff]
        %v741 = vld [vmem:[%s265 + $0x780] sm:$0xff]
        %v742 = vld [vmem:[%s265 + $0x788] sm:$0xff]
        %v743 = vld [vmem:[%s265 + $0x790] sm:$0xff]
        %v744 = vld [vmem:[%s265 + $0x798] sm:$0xff]
        %v745 = vld [vmem:[%s265 + $0x7a0] sm:$0xff]
        %v746 = vld [vmem:[%s265 + $0x7a8] sm:$0xff]
        %v747 = vld [vmem:[%s265 + $0x7b0] sm:$0xff]
        %v748 = vld [vmem:[%s265 + $0x7b8] sm:$0xff]
        %v749 = vld [vmem:[%s265 + $0x7c0] sm:$0xff]
        %v750 = vld [vmem:[%s265 + $0x7c8] sm:$0xff]
        %v751 = vld [vmem:[%s265 + $0x7d0] sm:$0xff]
        %v752 = vld [vmem:[%s265 + $0x7d8] sm:$0xff]
        %v753 = vld [vmem:[%s265 + $0x7e0] sm:$0xff]
        %v754 = vld [vmem:[%s265 + $0x7e8] sm:$0xff]
        %v755 = vld [vmem:[%s265 + $0x7f0] sm:$0xff]
        %v756 = vld [vmem:[%s265 + $0x7f8] sm:$0xff]
        %v757 = vld [vmem:[%s265 + $0x800] sm:$0xff]
        %v758 = vld [vmem:[%s265 + $0x808] sm:$0xff]
        %v759 = vld [vmem:[%s265 + $0x810] sm:$0xff]
        %v760 = vld [vmem:[%s265 + $0x818] sm:$0xff]
        %v761 = vld [vmem:[%s265 + $0x820] sm:$0xff]
        %v762 = vld [vmem:[%s265 + $0x828] sm:$0xff]
        %v763 = vld [vmem:[%s265 + $0x830] sm:$0xff]
        %v764 = vld [vmem:[%s265 + $0x838] sm:$0xff]
        %v765 = vld [vmem:[%s265 + $0x840] sm:$0xff]
        %v766 = vld [vmem:[%s265 + $0x848] sm:$0xff]
        %v767 = vld [vmem:[%s265 + $0x850] sm:$0xff]
        %v768 = vld [vmem:[%s265 + $0x858] sm:$0xff]
        %v769 = vld [vmem:[%s265 + $0x860] sm:$0xff]
        %v770 = vld [vmem:[%s265 + $0x868] sm:$0xff]
        %v771 = vld [vmem:[%s265 + $0x870] sm:$0xff]
        %v772 = vld [vmem:[%s265 + $0x878] sm:$0xff]
        %v773 = vld [vmem:[%s265 + $0x880] sm:$0xff]
        %v774 = vld [vmem:[%s265 + $0x888] sm:$0xff]
        %v775 = vld [vmem:[%s265 + $0x890] sm:$0xff]
        %v776 = vld [vmem:[%s265 + $0x898] sm:$0xff]
        %v777 = vld [vmem:[%s265 + $0x8a0] sm:$0xff]
        %v778 = vld [vmem:[%s265 + $0x8a8] sm:$0xff]
        %v779 = vld [vmem:[%s265 + $0x8b0] sm:$0xff]
        %v780 = vld [vmem:[%s265 + $0x8b8] sm:$0xff]
        %v781 = vld [vmem:[%s265 + $0x8c0] sm:$0xff]
        %v782 = vld [vmem:[%s265 + $0x8c8] sm:$0xff]
        %v783 = vld [vmem:[%s265 + $0x8d0] sm:$0xff]
        %v784 = vld [vmem:[%s265 + $0x8d8] sm:$0xff]
        %v785 = vld [vmem:[%s265 + $0x8e0] sm:$0xff]
        %v786 = vld [vmem:[%s265 + $0x8e8] sm:$0xff]
        %v787 = vld [vmem:[%s265 + $0x8f0] sm:$0xff]
        %v788 = vld [vmem:[%s265 + $0x8f8] sm:$0xff]
        %v789 = vld [vmem:[%s265 + $0x900] sm:$0xff]
        %v790 = vld [vmem:[%s265 + $0x908] sm:$0xff]
        %v791 = vld [vmem:[%s265 + $0x910] sm:$0xff]
        %v792 = vld [vmem:[%s265 + $0x918] sm:$0xff]
        %v793 = vld [vmem:[%s265 + $0x920] sm:$0xff]
        %v794 = vld [vmem:[%s265 + $0x928] sm:$0xff]
        %v795 = vld [vmem:[%s265 + $0x930] sm:$0xff]
        %v796 = vld [vmem:[%s265 + $0x938] sm:$0xff]
        %v797 = vld [vmem:[%s265 + $0x940] sm:$0xff]
        %v798 = vld [vmem:[%s265 + $0x948] sm:$0xff]
        %v799 = vld [vmem:[%s265 + $0x950] sm:$0xff]
        %v800 = vld [vmem:[%s265 + $0x958] sm:$0xff]
        %v801 = vld [vmem:[%s265 + $0x960] sm:$0xff]
        %v802 = vld [vmem:[%s265 + $0x968] sm:$0xff]
        %v803 = vld [vmem:[%s265 + $0x970] sm:$0xff]
        %v804 = vld [vmem:[%s265 + $0x978] sm:$0xff]
        %v805 = vld [vmem:[%s265 + $0x980] sm:$0xff]
        %v806 = vld [vmem:[%s265 + $0x988] sm:$0xff]
        %v807 = vld [vmem:[%s265 + $0x990] sm:$0xff]
        %v808 = vld [vmem:[%s265 + $0x998] sm:$0xff]
        %v809 = vld [vmem:[%s265 + $0x9a0] sm:$0xff]
        %v810 = vld [vmem:[%s265 + $0x9a8] sm:$0xff]
        %v811 = vld [vmem:[%s265 + $0x9b0] sm:$0xff]
        %v812 = vld [vmem:[%s265 + $0x9b8] sm:$0xff]
        %v813 = vld [vmem:[%s265 + $0x9c0] sm:$0xff]
        %v814 = vld [vmem:[%s265 + $0x9c8] sm:$0xff]
        %v815 = vld [vmem:[%s265 + $0x9d0] sm:$0xff]
        %v816 = vld [vmem:[%s265 + $0x9d8] sm:$0xff]
        %v817 = vld [vmem:[%s265 + $0x9e0] sm:$0xff]
        %v818 = vld [vmem:[%s265 + $0x9e8] sm:$0xff]
        %v819 = vld [vmem:[%s265 + $0x9f0] sm:$0xff]
        %v820 = vld [vmem:[%s265 + $0x9f8] sm:$0xff]
        %v821 = vld [vmem:[%s265 + $0xa00] sm:$0xff]
        %v822 = vld [vmem:[%s265 + $0xa08] sm:$0xff]
        %v823 = vld [vmem:[%s265 + $0xa10] sm:$0xff]
        %v824 = vld [vmem:[%s265 + $0xa18] sm:$0xff]
        %v825 = vld [vmem:[%s265 + $0xa20] sm:$0xff]
        %v826 = vld [vmem:[%s265 + $0xa28] sm:$0xff]
        %v827 = vld [vmem:[%s265 + $0xa30] sm:$0xff]
        %v828 = vld [vmem:[%s265 + $0xa38] sm:$0xff]
        %v829 = vld [vmem:[%s265 + $0xa40] sm:$0xff]
        %v830 = vld [vmem:[%s265 + $0xa48] sm:$0xff]
        %v831 = vld [vmem:[%s265 + $0xa50] sm:$0xff]
        %v832 = vld [vmem:[%s265 + $0xa58] sm:$0xff]
        %v833 = vld [vmem:[%s265 + $0xa60] sm:$0xff]
        %v834 = vld [vmem:[%s265 + $0xa68] sm:$0xff]
        %v835 = vld [vmem:[%s265 + $0xa70] sm:$0xff]
        %v836 = vld [vmem:[%s265 + $0xa78] sm:$0xff]
        %v837 = vld [vmem:[%s265 + $0xa80] sm:$0xff]
        %v838 = vld [vmem:[%s265 + $0xa88] sm:$0xff]
        %v839 = vld [vmem:[%s265 + $0xa90] sm:$0xff]
        %v840 = vld [vmem:[%s265 + $0xa98] sm:$0xff]
        %v841 = vld [vmem:[%s265 + $0xaa0] sm:$0xff]
        %v842 = vld [vmem:[%s265 + $0xaa8] sm:$0xff]
        %v843 = vld [vmem:[%s265 + $0xab0] sm:$0xff]
        %v844 = vld [vmem:[%s265 + $0xab8] sm:$0xff]
        %v845 = vld [vmem:[%s265 + $0xac0] sm:$0xff]
        %v846 = vld [vmem:[%s265 + $0xac8] sm:$0xff]
        %v847 = vld [vmem:[%s265 + $0xad0] sm:$0xff]
        %v848 = vld [vmem:[%s265 + $0xad8] sm:$0xff]
        %v849 = vld [vmem:[%s265 + $0xae0] sm:$0xff]
        %v850 = vld [vmem:[%s265 + $0xae8] sm:$0xff]
        %v851 = vld [vmem:[%s265 + $0xaf0] sm:$0xff]
        %v852 = vld [vmem:[%s265 + $0xaf8] sm:$0xff]
        %v853 = vld [vmem:[%s265 + $0xb00] sm:$0xff]
        %v854 = vld [vmem:[%s265 + $0xb08] sm:$0xff]
        %v855 = vld [vmem:[%s265 + $0xb10] sm:$0xff]
        %v856 = vld [vmem:[%s265 + $0xb18] sm:$0xff]
        %v857 = vld [vmem:[%s265 + $0xb20] sm:$0xff]
        %v858 = vld [vmem:[%s265 + $0xb28] sm:$0xff]
        %v859 = vld [vmem:[%s265 + $0xb30] sm:$0xff]
        %v860 = vld [vmem:[%s265 + $0xb38] sm:$0xff]
        %v861 = vld [vmem:[%s265 + $0xb40] sm:$0xff]
        %v862 = vld [vmem:[%s265 + $0xb48] sm:$0xff]
        %v863 = vld [vmem:[%s265 + $0xb50] sm:$0xff]
        %v864 = vld [vmem:[%s265 + $0xb58] sm:$0xff]
        %v865 = vld [vmem:[%s265 + $0xb60] sm:$0xff]
        %v866 = vld [vmem:[%s265 + $0xb68] sm:$0xff]
        %v867 = vld [vmem:[%s265 + $0xb70] sm:$0xff]
        %v868 = vld [vmem:[%s265 + $0xb78] sm:$0xff]
        %v869 = vld [vmem:[%s265 + $0xb80] sm:$0xff]
        %v870 = vld [vmem:[%s265 + $0xb88] sm:$0xff]
        %v871 = vld [vmem:[%s265 + $0xb90] sm:$0xff]
        %v872 = vld [vmem:[%s265 + $0xb98] sm:$0xff]
        %v873 = vld [vmem:[%s265 + $0xba0] sm:$0xff]
        %v874 = vld [vmem:[%s265 + $0xba8] sm:$0xff]
        %v875 = vld [vmem:[%s265 + $0xbb0] sm:$0xff]
        %v876 = vld [vmem:[%s265 + $0xbb8] sm:$0xff]
        %v877 = vld [vmem:[%s265 + $0xbc0] sm:$0xff]
        %v878 = vld [vmem:[%s265 + $0xbc8] sm:$0xff]
        %v879 = vld [vmem:[%s265 + $0xbd0] sm:$0xff]
        %v880 = vld [vmem:[%s265 + $0xbd8] sm:$0xff]
        %v881 = vld [vmem:[%s265 + $0xbe0] sm:$0xff]
        %v882 = vld [vmem:[%s265 + $0xbe8] sm:$0xff]
        %v883 = vld [vmem:[%s265 + $0xbf0] sm:$0xff]
        %v884 = vld [vmem:[%s265 + $0xbf8] sm:$0xff]
        %v885 = vld [vmem:[%s265 + $0xc00] sm:$0xff]
        %v886 = vld [vmem:[%s265 + $0xc08] sm:$0xff]
        %v887 = vld [vmem:[%s265 + $0xc10] sm:$0xff]
        %v888 = vld [vmem:[%s265 + $0xc18] sm:$0xff]
        %v889 = vld [vmem:[%s265 + $0xc20] sm:$0xff]
        %v890 = vld [vmem:[%s265 + $0xc28] sm:$0xff]
        %v891 = vld [vmem:[%s265 + $0xc30] sm:$0xff]
        %v892 = vld [vmem:[%s265 + $0xc38] sm:$0xff]
        %v893 = vld [vmem:[%s265 + $0xc40] sm:$0xff]
        %v894 = vld [vmem:[%s265 + $0xc48] sm:$0xff]
        %v895 = vld [vmem:[%s265 + $0xc50] sm:$0xff]
        %v896 = vld [vmem:[%s265 + $0xc58] sm:$0xff]
        %v897 = vld [vmem:[%s265 + $0xc60] sm:$0xff]
        %v898 = vld [vmem:[%s265 + $0xc68] sm:$0xff]
        %v899 = vld [vmem:[%s265 + $0xc70] sm:$0xff]
        %v900 = vld [vmem:[%s265 + $0xc78] sm:$0xff]
        %v901 = vld [vmem:[%s265 + $0xc80] sm:$0xff]
        %v902 = vld [vmem:[%s265 + $0xc88] sm:$0xff]
        %v903 = vld [vmem:[%s265 + $0xc90] sm:$0xff]
        %v904 = vld [vmem:[%s265 + $0xc98] sm:$0xff]
        %v905 = vld [vmem:[%s265 + $0xca0] sm:$0xff]
        %v906 = vld [vmem:[%s265 + $0xca8] sm:$0xff]
        %v907 = vld [vmem:[%s265 + $0xcb0] sm:$0xff]
        %v908 = vld [vmem:[%s265 + $0xcb8] sm:$0xff]
        %v909 = vld [vmem:[%s265 + $0xcc0] sm:$0xff]
        %v910 = vld [vmem:[%s265 + $0xcc8] sm:$0xff]
        %v911 = vld [vmem:[%s265 + $0xcd0] sm:$0xff]
        %v912 = vld [vmem:[%s265 + $0xcd8] sm:$0xff]
        %v913 = vld [vmem:[%s265 + $0xce0] sm:$0xff]
        %v914 = vld [vmem:[%s265 + $0xce8] sm:$0xff]
        %v915 = vld [vmem:[%s265 + $0xcf0] sm:$0xff]
        %v916 = vld [vmem:[%s265 + $0xcf8] sm:$0xff]
        %v917 = vld [vmem:[%s265 + $0xd00] sm:$0xff]
        %v918 = vld [vmem:[%s265 + $0xd08] sm:$0xff]
        %v919 = vld [vmem:[%s265 + $0xd10] sm:$0xff]
        %v920 = vld [vmem:[%s265 + $0xd18] sm:$0xff]
        %v921 = vld [vmem:[%s265 + $0xd20] sm:$0xff]
        %v922 = vld [vmem:[%s265 + $0xd28] sm:$0xff]
        %v923 = vld [vmem:[%s265 + $0xd30] sm:$0xff]
        %v924 = vld [vmem:[%s265 + $0xd38] sm:$0xff]
        %v925 = vld [vmem:[%s265 + $0xd40] sm:$0xff]
        %v926 = vld [vmem:[%s265 + $0xd48] sm:$0xff]
        %v927 = vld [vmem:[%s265 + $0xd50] sm:$0xff]
        %v928 = vld [vmem:[%s265 + $0xd58] sm:$0xff]
        %v929 = vld [vmem:[%s265 + $0xd60] sm:$0xff]
        %v930 = vld [vmem:[%s265 + $0xd68] sm:$0xff]
        %v931 = vld [vmem:[%s265 + $0xd70] sm:$0xff]
        %v932 = vld [vmem:[%s265 + $0xd78] sm:$0xff]
        %v933 = vld [vmem:[%s265 + $0xd80] sm:$0xff]
        %v934 = vld [vmem:[%s265 + $0xd88] sm:$0xff]
        %v935 = vld [vmem:[%s265 + $0xd90] sm:$0xff]
        %v936 = vld [vmem:[%s265 + $0xd98] sm:$0xff]
        %v937 = vld [vmem:[%s265 + $0xda0] sm:$0xff]
        %v938 = vld [vmem:[%s265 + $0xda8] sm:$0xff]
        %v939 = vld [vmem:[%s265 + $0xdb0] sm:$0xff]
        %v940 = vld [vmem:[%s265 + $0xdb8] sm:$0xff]
        %v941 = vld [vmem:[%s265 + $0xdc0] sm:$0xff]
        %v942 = vld [vmem:[%s265 + $0xdc8] sm:$0xff]
        %v943 = vld [vmem:[%s265 + $0xdd0] sm:$0xff]
        %v944 = vld [vmem:[%s265 + $0xdd8] sm:$0xff]
        %v945 = vld [vmem:[%s265 + $0xde0] sm:$0xff]
        %v946 = vld [vmem:[%s265 + $0xde8] sm:$0xff]
        %v947 = vld [vmem:[%s265 + $0xdf0] sm:$0xff]
        %v948 = vld [vmem:[%s265 + $0xdf8] sm:$0xff]
        %v949 = vld [vmem:[%s265 + $0xe00] sm:$0xff]
        %v950 = vld [vmem:[%s265 + $0xe08] sm:$0xff]
        %v951 = vld [vmem:[%s265 + $0xe10] sm:$0xff]
        %v952 = vld [vmem:[%s265 + $0xe18] sm:$0xff]
        %v953 = vld [vmem:[%s265 + $0xe20] sm:$0xff]
        %v954 = vld [vmem:[%s265 + $0xe28] sm:$0xff]
        %v955 = vld [vmem:[%s265 + $0xe30] sm:$0xff]
        %v956 = vld [vmem:[%s265 + $0xe38] sm:$0xff]
        %v957 = vld [vmem:[%s265 + $0xe40] sm:$0xff]
        %v958 = vld [vmem:[%s265 + $0xe48] sm:$0xff]
        %v959 = vld [vmem:[%s265 + $0xe50] sm:$0xff]
        %v960 = vld [vmem:[%s265 + $0xe58] sm:$0xff]
        %v961 = vld [vmem:[%s265 + $0xe60] sm:$0xff]
        %v962 = vld [vmem:[%s265 + $0xe68] sm:$0xff]
        %v963 = vld [vmem:[%s265 + $0xe70] sm:$0xff]
        %v964 = vld [vmem:[%s265 + $0xe78] sm:$0xff]
        %v965 = vld [vmem:[%s265 + $0xe80] sm:$0xff]
        %v966 = vld [vmem:[%s265 + $0xe88] sm:$0xff]
        %v967 = vld [vmem:[%s265 + $0xe90] sm:$0xff]
        %v968 = vld [vmem:[%s265 + $0xe98] sm:$0xff]
        %v969 = vld [vmem:[%s265 + $0xea0] sm:$0xff]
        %v970 = vld [vmem:[%s265 + $0xea8] sm:$0xff]
        %v971 = vld [vmem:[%s265 + $0xeb0] sm:$0xff]
        %v972 = vld [vmem:[%s265 + $0xeb8] sm:$0xff]
        %v973 = vld [vmem:[%s265 + $0xec0] sm:$0xff]
        %v974 = vld [vmem:[%s265 + $0xec8] sm:$0xff]
        %v975 = vld [vmem:[%s265 + $0xed0] sm:$0xff]
        %v976 = vld [vmem:[%s265 + $0xed8] sm:$0xff]
        %v977 = vld [vmem:[%s265 + $0xee0] sm:$0xff]
        %v978 = vld [vmem:[%s265 + $0xee8] sm:$0xff]
        %v979 = vld [vmem:[%s265 + $0xef0] sm:$0xff]
        %v980 = vld [vmem:[%s265 + $0xef8] sm:$0xff]
        %v981 = vld [vmem:[%s265 + $0xf00] sm:$0xff]
        %v982 = vld [vmem:[%s265 + $0xf08] sm:$0xff]
        %v983 = vld [vmem:[%s265 + $0xf10] sm:$0xff]
        %v984 = vld [vmem:[%s265 + $0xf18] sm:$0xff]
        %v985 = vld [vmem:[%s265 + $0xf20] sm:$0xff]
        %v986 = vld [vmem:[%s265 + $0xf28] sm:$0xff]
        %v987 = vld [vmem:[%s265 + $0xf30] sm:$0xff]
        %v988 = vld [vmem:[%s265 + $0xf38] sm:$0xff]
        %v989 = vld [vmem:[%s265 + $0xf40] sm:$0xff]
        %v990 = vld [vmem:[%s265 + $0xf48] sm:$0xff]
        %v991 = vld [vmem:[%s265 + $0xf50] sm:$0xff]
        %v992 = vld [vmem:[%s265 + $0xf58] sm:$0xff]
        %v993 = vld [vmem:[%s265 + $0xf60] sm:$0xff]
        %v994 = vld [vmem:[%s265 + $0xf68] sm:$0xff]
        %v995 = vld [vmem:[%s265 + $0xf70] sm:$0xff]
        %v996 = vld [vmem:[%s265 + $0xf78] sm:$0xff]
        %v997 = vld [vmem:[%s265 + $0xf80] sm:$0xff]
        %v998 = vld [vmem:[%s265 + $0xf88] sm:$0xff]
        %v999 = vld [vmem:[%s265 + $0xf90] sm:$0xff]
        %v1000 = vld [vmem:[%s265 + $0xf98] sm:$0xff]
        %v1001 = vld [vmem:[%s265 + $0xfa0] sm:$0xff]
        %v1002 = vld [vmem:[%s265 + $0xfa8] sm:$0xff]
        %v1003 = vld [vmem:[%s265 + $0xfb0] sm:$0xff]
        %v1004 = vld [vmem:[%s265 + $0xfb8] sm:$0xff]
        %v1005 = vld [vmem:[%s265 + $0xfc0] sm:$0xff]
        %v1006 = vld [vmem:[%s265 + $0xfc8] sm:$0xff]
        %v1007 = vld [vmem:[%s265 + $0xfd0] sm:$0xff]
        %v1008 = vld [vmem:[%s265 + $0xfd8] sm:$0xff]
        %v1009 = vld [vmem:[%s265 + $0xfe0] sm:$0xff]
        %v1010 = vld [vmem:[%s265 + $0xfe8] sm:$0xff]
        %v1011 = vld [vmem:[%s265 + $0xff0] sm:$0xff]
        %v1012 = vld [vmem:[%s265 + $0xff8] sm:$0xff]
        %v1013 = vld [vmem:[%s265 + $0x1000] sm:$0xff]
        %v1014 = vld [vmem:[%s265 + $0x1008] sm:$0xff]
        %v1015 = vld [vmem:[%s265 + $0x1010] sm:$0xff]
        %v1016 = vld [vmem:[%s265 + $0x1018] sm:$0xff]
        %v1017 = vld [vmem:[%s265 + $0x1020] sm:$0xff]
        %v1018 = vld [vmem:[%s265 + $0x1028] sm:$0xff]
        %v1019 = vld [vmem:[%s265 + $0x1030] sm:$0xff]
        %v1020 = vld [vmem:[%s265 + $0x1038] sm:$0xff]
        %v1021 = vld [vmem:[%s265 + $0x1040] sm:$0xff]
        %v1022 = vld [vmem:[%s265 + $0x1048] sm:$0xff]
        %v1023 = vld [vmem:[%s265 + $0x1050] sm:$0xff]
        %v1024 = vld [vmem:[%s265 + $0x1058] sm:$0xff]
        %v1025 = vld [vmem:[%s265 + $0x1060] sm:$0xff]
        %v1026 = vld [vmem:[%s265 + $0x1068] sm:$0xff]
        %v1027 = vld [vmem:[%s265 + $0x1070] sm:$0xff]
        %v1028 = vld [vmem:[%s265 + $0x1078] sm:$0xff]
        %v1029 = vld [vmem:[%s265 + $0x1080] sm:$0xff]
        %v1030 = vld [vmem:[%s265 + $0x1088] sm:$0xff]
        %v1031 = vld [vmem:[%s265 + $0x1090] sm:$0xff]
        %v1032 = vld [vmem:[%s265 + $0x1098] sm:$0xff]
        %v1033 = vld [vmem:[%s265 + $0x10a0] sm:$0xff]
        %v1034 = vld [vmem:[%s265 + $0x10a8] sm:$0xff]
        %v1035 = vld [vmem:[%s265 + $0x10b0] sm:$0xff]
        %v1036 = vld [vmem:[%s265 + $0x10b8] sm:$0xff]
        %v1037 = vld [vmem:[%s265 + $0x10c0] sm:$0xff]
        %v1038 = vld [vmem:[%s265 + $0x10c8] sm:$0xff]
        %v1039 = vld [vmem:[%s265 + $0x10d0] sm:$0xff]
        %v1040 = vld [vmem:[%s265 + $0x10d8] sm:$0xff]
        %v1041 = vld [vmem:[%s265 + $0x10e0] sm:$0xff]
        %v1042 = vld [vmem:[%s265 + $0x10e8] sm:$0xff]
        %v1043 = vld [vmem:[%s265 + $0x10f0] sm:$0xff]
        %v1044 = vld [vmem:[%s265 + $0x10f8] sm:$0xff]
        %v1045 = vld [vmem:[%s265 + $0x1100] sm:$0xff]
        %v1046 = vld [vmem:[%s265 + $0x1108] sm:$0xff]
        %v1047 = vld [vmem:[%s265 + $0x1110] sm:$0xff]
        %v1048 = vld [vmem:[%s265 + $0x1118] sm:$0xff]
        %v1049 = vld [vmem:[%s265 + $0x1120] sm:$0xff]
        %v1050 = vld [vmem:[%s265 + $0x1128] sm:$0xff]
        %v1051 = vld [vmem:[%s265 + $0x1130] sm:$0xff]
        %v1052 = vld [vmem:[%s265 + $0x1138] sm:$0xff]
        %v1053 = vld [vmem:[%s265 + $0x1140] sm:$0xff]
        %v1054 = vld [vmem:[%s265 + $0x1148] sm:$0xff]
        %v1055 = vld [vmem:[%s265 + $0x1150] sm:$0xff]
        %v1056 = vld [vmem:[%s265 + $0x1158] sm:$0xff]
        %v1057 = vld [vmem:[%s265 + $0x1160] sm:$0xff]
        %v1058 = vld [vmem:[%s265 + $0x1168] sm:$0xff]
        %v1059 = vld [vmem:[%s265 + $0x1170] sm:$0xff]
        %v1060 = vld [vmem:[%s265 + $0x1178] sm:$0xff]
        %v1061 = vld [vmem:[%s265 + $0x1180] sm:$0xff]
        %v1062 = vld [vmem:[%s265 + $0x1188] sm:$0xff]
        %v1063 = vld [vmem:[%s265 + $0x1190] sm:$0xff]
        %v1064 = vld [vmem:[%s265 + $0x1198] sm:$0xff]
        %v1065 = vld [vmem:[%s265 + $0x11a0] sm:$0xff]
        %v1066 = vld [vmem:[%s265 + $0x11a8] sm:$0xff]
        %v1067 = vld [vmem:[%s265 + $0x11b0] sm:$0xff]
        %v1068 = vld [vmem:[%s265 + $0x11b8] sm:$0xff]
        %v1069 = vld [vmem:[%s265 + $0x11c0] sm:$0xff]
        %v1070 = vld [vmem:[%s265 + $0x11c8] sm:$0xff]
        %v1071 = vld [vmem:[%s265 + $0x11d0] sm:$0xff]
        %v1072 = vld [vmem:[%s265 + $0x11d8] sm:$0xff]
        %v1073 = vld [vmem:[%s265 + $0x11e0] sm:$0xff]
        %v1074 = vld [vmem:[%s265 + $0x11e8] sm:$0xff]
        %v1075 = vld [vmem:[%s265 + $0x11f0] sm:$0xff]
        %v1076 = vld [vmem:[%s265 + $0x11f8] sm:$0xff]
        %v1077 = vld [vmem:[%s265 + $0x1200] sm:$0xff]
        %v1078 = vld [vmem:[%s265 + $0x1208] sm:$0xff]
        %v1079 = vld [vmem:[%s265 + $0x1210] sm:$0xff]
        %v1080 = vld [vmem:[%s265 + $0x1218] sm:$0xff]
        %v1081 = vld [vmem:[%s265 + $0x1220] sm:$0xff]
        %v1082 = vld [vmem:[%s265 + $0x1228] sm:$0xff]
        %v1083 = vld [vmem:[%s265 + $0x1230] sm:$0xff]
        %v1084 = vld [vmem:[%s265 + $0x1238] sm:$0xff]
        %v1085 = vld [vmem:[%s265 + $0x1240] sm:$0xff]
        %v1086 = vld [vmem:[%s265 + $0x1248] sm:$0xff]
        %v1087 = vld [vmem:[%s265 + $0x1250] sm:$0xff]
        %v1088 = vld [vmem:[%s265 + $0x1258] sm:$0xff]
        %v1089 = vld [vmem:[%s265 + $0x1260] sm:$0xff]
        %v1090 = vld [vmem:[%s265 + $0x1268] sm:$0xff]
        %v1091 = vld [vmem:[%s265 + $0x1270] sm:$0xff]
        %v1092 = vld [vmem:[%s265 + $0x1278] sm:$0xff]
        %v1093 = vld [vmem:[%s265 + $0x1280] sm:$0xff]
        %v1094 = vld [vmem:[%s265 + $0x1288] sm:$0xff]
        %v1095 = vld [vmem:[%s265 + $0x1290] sm:$0xff]
        %v1096 = vld [vmem:[%s265 + $0x1298] sm:$0xff]
        %v1097 = vld [vmem:[%s265 + $0x12a0] sm:$0xff]
        %v1098 = vld [vmem:[%s265 + $0x12a8] sm:$0xff]
        %v1099 = vld [vmem:[%s265 + $0x12b0] sm:$0xff]
        %v1100 = vld [vmem:[%s265 + $0x12b8] sm:$0xff]
        %v1101 = vld [vmem:[%s265 + $0x12c0] sm:$0xff]
        %v1102 = vld [vmem:[%s265 + $0x12c8] sm:$0xff]
        %v1103 = vld [vmem:[%s265 + $0x12d0] sm:$0xff]
        %v1104 = vld [vmem:[%s265 + $0x12d8] sm:$0xff]
        %v1105 = vld [vmem:[%s265 + $0x12e0] sm:$0xff]
        %v1106 = vld [vmem:[%s265 + $0x12e8] sm:$0xff]
        %v1107 = vld [vmem:[%s265 + $0x12f0] sm:$0xff]
        %v1108 = vld [vmem:[%s265 + $0x12f8] sm:$0xff]
        %v1109 = vld [vmem:[%s265 + $0x1300] sm:$0xff]
        %v1110 = vld [vmem:[%s265 + $0x1308] sm:$0xff]
        %v1111 = vld [vmem:[%s265 + $0x1310] sm:$0xff]
        %v1112 = vld [vmem:[%s265 + $0x1318] sm:$0xff]
        %v1113 = vld [vmem:[%s265 + $0x1320] sm:$0xff]
        %v1114 = vld [vmem:[%s265 + $0x1328] sm:$0xff]
        %v1115 = vld [vmem:[%s265 + $0x1330] sm:$0xff]
        %v1116 = vld [vmem:[%s265 + $0x1338] sm:$0xff]
        %v1117 = vld [vmem:[%s265 + $0x1340] sm:$0xff]
        %v1118 = vld [vmem:[%s265 + $0x1348] sm:$0xff]
        %v1119 = vld [vmem:[%s265 + $0x1350] sm:$0xff]
        %v1120 = vld [vmem:[%s265 + $0x1358] sm:$0xff]
        %v1121 = vld [vmem:[%s265 + $0x1360] sm:$0xff]
        %v1122 = vld [vmem:[%s265 + $0x1368] sm:$0xff]
        %v1123 = vld [vmem:[%s265 + $0x1370] sm:$0xff]
        %v1124 = vld [vmem:[%s265 + $0x1378] sm:$0xff]
        %v1125 = vld [vmem:[%s265 + $0x1380] sm:$0xff]
        %v1126 = vld [vmem:[%s265 + $0x1388] sm:$0xff]
        %v1127 = vld [vmem:[%s265 + $0x1390] sm:$0xff]
        %v1128 = vld [vmem:[%s265 + $0x1398] sm:$0xff]
        %v1129 = vld [vmem:[%s265 + $0x13a0] sm:$0xff]
        %v1130 = vld [vmem:[%s265 + $0x13a8] sm:$0xff]
        %v1131 = vld [vmem:[%s265 + $0x13b0] sm:$0xff]
        %v1132 = vld [vmem:[%s265 + $0x13b8] sm:$0xff]
        %v1133 = vld [vmem:[%s265 + $0x13c0] sm:$0xff]
        %v1134 = vld [vmem:[%s265 + $0x13c8] sm:$0xff]
        %v1135 = vld [vmem:[%s265 + $0x13d0] sm:$0xff]
        %v1136 = vld [vmem:[%s265 + $0x13d8] sm:$0xff]
        %v1137 = vld [vmem:[%s265 + $0x13e0] sm:$0xff]
        %v1138 = vld [vmem:[%s265 + $0x13e8] sm:$0xff]
        %v1139 = vld [vmem:[%s265 + $0x13f0] sm:$0xff]
        %v1140 = vld [vmem:[%s265 + $0x13f8] sm:$0xff]
        %v1141 = vld [vmem:[%s265 + $0x1400] sm:$0xff]
        %v1142 = vld [vmem:[%s265 + $0x1408] sm:$0xff]
        %v1143 = vld [vmem:[%s265 + $0x1410] sm:$0xff]
        %v1144 = vld [vmem:[%s265 + $0x1418] sm:$0xff]
        %v1145 = vld [vmem:[%s265 + $0x1420] sm:$0xff]
        %v1146 = vld [vmem:[%s265 + $0x1428] sm:$0xff]
        %v1147 = vld [vmem:[%s265 + $0x1430] sm:$0xff]
        %v1148 = vld [vmem:[%s265 + $0x1438] sm:$0xff]
        %v1149 = vld [vmem:[%s265 + $0x1440] sm:$0xff]
        %v1150 = vld [vmem:[%s265 + $0x1448] sm:$0xff]
        %v1151 = vld [vmem:[%s265 + $0x1450] sm:$0xff]
        %v1152 = vld [vmem:[%s265 + $0x1458] sm:$0xff]
        %v1153 = vld [vmem:[%s265 + $0x1460] sm:$0xff]
        %v1154 = vld [vmem:[%s265 + $0x1468] sm:$0xff]
        %v1155 = vld [vmem:[%s265 + $0x1470] sm:$0xff]
        %v1156 = vld [vmem:[%s265 + $0x1478] sm:$0xff]
        %v1157 = vld [vmem:[%s265 + $0x1480] sm:$0xff]
        %v1158 = vld [vmem:[%s265 + $0x1488] sm:$0xff]
        %v1159 = vld [vmem:[%s265 + $0x1490] sm:$0xff]
        %v1160 = vld [vmem:[%s265 + $0x1498] sm:$0xff]
        %v1161 = vld [vmem:[%s265 + $0x14a0] sm:$0xff]
        %v1162 = vld [vmem:[%s265 + $0x14a8] sm:$0xff]
        %v1163 = vld [vmem:[%s265 + $0x14b0] sm:$0xff]
        %v1164 = vld [vmem:[%s265 + $0x14b8] sm:$0xff]
        %v1165 = vld [vmem:[%s265 + $0x14c0] sm:$0xff]
        %v1166 = vld [vmem:[%s265 + $0x14c8] sm:$0xff]
        %v1167 = vld [vmem:[%s265 + $0x14d0] sm:$0xff]
        %v1168 = vld [vmem:[%s265 + $0x14d8] sm:$0xff]
        %v1169 = vld [vmem:[%s265 + $0x14e0] sm:$0xff]
        %v1170 = vld [vmem:[%s265 + $0x14e8] sm:$0xff]
        %v1171 = vld [vmem:[%s265 + $0x14f0] sm:$0xff]
        %v1172 = vld [vmem:[%s265 + $0x14f8] sm:$0xff]
        %v1173 = vld [vmem:[%s265 + $0x1500] sm:$0xff]
        %v1174 = vld [vmem:[%s265 + $0x1508] sm:$0xff]
        %v1175 = vld [vmem:[%s265 + $0x1510] sm:$0xff]
        %v1176 = vld [vmem:[%s265 + $0x1518] sm:$0xff]
        %v1177 = vld [vmem:[%s265 + $0x1520] sm:$0xff]
        %v1178 = vld [vmem:[%s265 + $0x1528] sm:$0xff]
        %v1179 = vld [vmem:[%s265 + $0x1530] sm:$0xff]
        %v1180 = vld [vmem:[%s265 + $0x1538] sm:$0xff]
        %v1181 = vld [vmem:[%s265 + $0x1540] sm:$0xff]
        %v1182 = vld [vmem:[%s265 + $0x1548] sm:$0xff]
        %v1183 = vld [vmem:[%s265 + $0x1550] sm:$0xff]
        %v1184 = vld [vmem:[%s265 + $0x1558] sm:$0xff]
        %v1185 = vld [vmem:[%s265 + $0x1560] sm:$0xff]
        %v1186 = vld [vmem:[%s265 + $0x1568] sm:$0xff]
        %v1187 = vld [vmem:[%s265 + $0x1570] sm:$0xff]
        %v1188 = vld [vmem:[%s265 + $0x1578] sm:$0xff]
        %v1189 = vld [vmem:[%s265 + $0x1580] sm:$0xff]
        %v1190 = vld [vmem:[%s265 + $0x1588] sm:$0xff]
        %v1191 = vld [vmem:[%s265 + $0x1590] sm:$0xff]
        %v1192 = vld [vmem:[%s265 + $0x1598] sm:$0xff]
        %v1193 = vld [vmem:[%s265 + $0x15a0] sm:$0xff]
        %v1194 = vld [vmem:[%s265 + $0x15a8] sm:$0xff]
        %v1195 = vld [vmem:[%s265 + $0x15b0] sm:$0xff]
        %v1196 = vld [vmem:[%s265 + $0x15b8] sm:$0xff]
        %v1197 = vld [vmem:[%s265 + $0x15c0] sm:$0xff]
        %v1198 = vld [vmem:[%s265 + $0x15c8] sm:$0xff]
        %v1199 = vld [vmem:[%s265 + $0x15d0] sm:$0xff]
        %v1200 = vld [vmem:[%s265 + $0x15d8] sm:$0xff]
        %v1201 = vld [vmem:[%s265 + $0x15e0] sm:$0xff]
        %v1202 = vld [vmem:[%s265 + $0x15e8] sm:$0xff]
        %v1203 = vld [vmem:[%s265 + $0x15f0] sm:$0xff]
        %v1204 = vld [vmem:[%s265 + $0x15f8] sm:$0xff]
        %v1205 = vld [vmem:[%s265 + $0x1600] sm:$0xff]
        %v1206 = vld [vmem:[%s265 + $0x1608] sm:$0xff]
        %v1207 = vld [vmem:[%s265 + $0x1610] sm:$0xff]
        %v1208 = vld [vmem:[%s265 + $0x1618] sm:$0xff]
        %v1209 = vld [vmem:[%s265 + $0x1620] sm:$0xff]
        %v1210 = vld [vmem:[%s265 + $0x1628] sm:$0xff]
        %v1211 = vld [vmem:[%s265 + $0x1630] sm:$0xff]
        %v1212 = vld [vmem:[%s265 + $0x1638] sm:$0xff]
        %v1213 = vld [vmem:[%s265 + $0x1640] sm:$0xff]
        %v1214 = vld [vmem:[%s265 + $0x1648] sm:$0xff]
        %v1215 = vld [vmem:[%s265 + $0x1650] sm:$0xff]
        %v1216 = vld [vmem:[%s265 + $0x1658] sm:$0xff]
        %v1217 = vld [vmem:[%s265 + $0x1660] sm:$0xff]
        %v1218 = vld [vmem:[%s265 + $0x1668] sm:$0xff]
        %v1219 = vld [vmem:[%s265 + $0x1670] sm:$0xff]
        %v1220 = vld [vmem:[%s265 + $0x1678] sm:$0xff]
        %v1221 = vld [vmem:[%s265 + $0x1680] sm:$0xff]
        %v1222 = vld [vmem:[%s265 + $0x1688] sm:$0xff]
        %v1223 = vld [vmem:[%s265 + $0x1690] sm:$0xff]
        %v1224 = vld [vmem:[%s265 + $0x1698] sm:$0xff]
        %v1225 = vld [vmem:[%s265 + $0x16a0] sm:$0xff]
        %v1226 = vld [vmem:[%s265 + $0x16a8] sm:$0xff]
        %v1227 = vld [vmem:[%s265 + $0x16b0] sm:$0xff]
        %v1228 = vld [vmem:[%s265 + $0x16b8] sm:$0xff]
        %v1229 = vld [vmem:[%s265 + $0x16c0] sm:$0xff]
        %v1230 = vld [vmem:[%s265 + $0x16c8] sm:$0xff]
        %v1231 = vld [vmem:[%s265 + $0x16d0] sm:$0xff]
        %v1232 = vld [vmem:[%s265 + $0x16d8] sm:$0xff]
        %v1233 = vld [vmem:[%s265 + $0x16e0] sm:$0xff]
        %v1234 = vld [vmem:[%s265 + $0x16e8] sm:$0xff]
        %v1235 = vld [vmem:[%s265 + $0x16f0] sm:$0xff]
        %v1236 = vld [vmem:[%s265 + $0x16f8] sm:$0xff]
        %v1237 = vld [vmem:[%s265 + $0x1700] sm:$0xff]
        %v1238 = vld [vmem:[%s265 + $0x1708] sm:$0xff]
        %v1239 = vld [vmem:[%s265 + $0x1710] sm:$0xff]
        %v1240 = vld [vmem:[%s265 + $0x1718] sm:$0xff]
        %v1241 = vld [vmem:[%s265 + $0x1720] sm:$0xff]
        %v1242 = vld [vmem:[%s265 + $0x1728] sm:$0xff]
        %v1243 = vld [vmem:[%s265 + $0x1730] sm:$0xff]
        %v1244 = vld [vmem:[%s265 + $0x1738] sm:$0xff]
        %v1245 = vld [vmem:[%s265 + $0x1740] sm:$0xff]
        %v1246 = vld [vmem:[%s265 + $0x1748] sm:$0xff]
        %v1247 = vld [vmem:[%s265 + $0x1750] sm:$0xff]
        %v1248 = vld [vmem:[%s265 + $0x1758] sm:$0xff]
        %v1249 = vld [vmem:[%s265 + $0x1760] sm:$0xff]
        %v1250 = vld [vmem:[%s265 + $0x1768] sm:$0xff]
        %v1251 = vld [vmem:[%s265 + $0x1770] sm:$0xff]
        %v1252 = vld [vmem:[%s265 + $0x1778] sm:$0xff]
        %v1253 = vld [vmem:[%s265 + $0x1780] sm:$0xff]
        %v1254 = vld [vmem:[%s265 + $0x1788] sm:$0xff]
        %v1255 = vld [vmem:[%s265 + $0x1790] sm:$0xff]
        %v1256 = vld [vmem:[%s265 + $0x1798] sm:$0xff]
        %v1257 = vld [vmem:[%s265 + $0x17a0] sm:$0xff]
        %v1258 = vld [vmem:[%s265 + $0x17a8] sm:$0xff]
        %v1259 = vld [vmem:[%s265 + $0x17b0] sm:$0xff]
        %v1260 = vld [vmem:[%s265 + $0x17b8] sm:$0xff]
        %v1261 = vld [vmem:[%s265 + $0x17c0] sm:$0xff]
        %v1262 = vld [vmem:[%s265 + $0x17c8] sm:$0xff]
        %v1263 = vld [vmem:[%s265 + $0x17d0] sm:$0xff]
        %v1264 = vld [vmem:[%s265 + $0x17d8] sm:$0xff]
        %v1265 = vld [vmem:[%s265 + $0x17e0] sm:$0xff]
        %v1266 = vld [vmem:[%s265 + $0x17e8] sm:$0xff]
        %v1267 = vld [vmem:[%s265 + $0x17f0] sm:$0xff]
        %v1268 = vld [vmem:[%s265 + $0x17f8] sm:$0xff]
        %v1269 = vld [vmem:[%s265 + $0x1800] sm:$0xff]
        %v1270 = vld [vmem:[%s265 + $0x1808] sm:$0xff]
        %v1271 = vld [vmem:[%s265 + $0x1810] sm:$0xff]
        %v1272 = vld [vmem:[%s265 + $0x1818] sm:$0xff]
        %v1273 = vld [vmem:[%s265 + $0x1820] sm:$0xff]
        %v1274 = vld [vmem:[%s265 + $0x1828] sm:$0xff]
        %v1275 = vld [vmem:[%s265 + $0x1830] sm:$0xff]
        %v1276 = vld [vmem:[%s265 + $0x1838] sm:$0xff]
        %v1277 = vld [vmem:[%s265 + $0x1840] sm:$0xff]
        %v1278 = vld [vmem:[%s265 + $0x1848] sm:$0xff]
        %v1279 = vld [vmem:[%s265 + $0x1850] sm:$0xff]
        %v1280 = vld [vmem:[%s265 + $0x1858] sm:$0xff]
        %v1281 = vld [vmem:[%s265 + $0x1860] sm:$0xff]
        %v1282 = vld [vmem:[%s265 + $0x1868] sm:$0xff]
        %v1283 = vld [vmem:[%s265 + $0x1870] sm:$0xff]
        %v1284 = vld [vmem:[%s265 + $0x1878] sm:$0xff]
        %v1285 = vld [vmem:[%s274] sm:$0xf]
        %v1287 = vlaneseq
        %v1288 = vshrl.u32 %v1287, 7
        %v1289 = vsub.s32 0, %v1288
        %v1290 = vrot.slane %v1285, %v1289
        %v1291 = vlaneseq
        %v1292 = vshrl.u32 %v1291, 7
        %v1293 = vsub.s32 1, %v1292
        %v1294 = vrot.slane %v1285, %v1293
        %v1295 = vlaneseq
        %v1296 = vshrl.u32 %v1295, 7
        %v1297 = vsub.s32 2, %v1296
        %v1298 = vrot.slane %v1285, %v1297
        %v1299 = vlaneseq
        %v1300 = vshrl.u32 %v1299, 7
        %v1301 = vsub.s32 3, %v1300
        %v1302 = vrot.slane %v1285, %v1301
        %v2091 = vunpack.c.l.b16 %v501
        %v2092 = vunpack.c.h.b16 %v501
        %v2093 = vunpack.c.l.b16 %v502
        %v2094 = vunpack.c.h.b16 %v502
        %v2095 = vunpack.c.l.b16 %v503
        %v2096 = vunpack.c.h.b16 %v503
        %v2097 = vunpack.c.l.b16 %v504
        %v2098 = vunpack.c.h.b16 %v504
        %v2099 = vunpack.c.l.b16 %v505
        %v2100 = vunpack.c.h.b16 %v505
        %v2101 = vunpack.c.l.b16 %v506
        %v2102 = vunpack.c.h.b16 %v506
        %v2103 = vunpack.c.l.b16 %v507
        %v2104 = vunpack.c.h.b16 %v507
        %v2105 = vunpack.c.l.b16 %v508
        %v2106 = vunpack.c.h.b16 %v508
        %v2107 = vunpack.c.l.b16 %v509
        %v2108 = vunpack.c.h.b16 %v509
        %v2109 = vunpack.c.l.b16 %v510
        %v2110 = vunpack.c.h.b16 %v510
        %v2111 = vunpack.c.l.b16 %v511
        %v2112 = vunpack.c.h.b16 %v511
        %v2113 = vunpack.c.l.b16 %v512
        %v2114 = vunpack.c.h.b16 %v512
        %v2115 = vunpack.c.l.b16 %v513
        %v2116 = vunpack.c.h.b16 %v513
        %v2117 = vunpack.c.l.b16 %v514
        %v2118 = vunpack.c.h.b16 %v514
        %v2119 = vunpack.c.l.b16 %v515
        %v2120 = vunpack.c.h.b16 %v515
        %v2121 = vunpack.c.l.b16 %v516
        %v2122 = vunpack.c.h.b16 %v516
        %v2123 = vunpack.c.l.b16 %v517
        %v2124 = vunpack.c.h.b16 %v517
        %v2125 = vunpack.c.l.b16 %v518
        %v2126 = vunpack.c.h.b16 %v518
        %v2127 = vunpack.c.l.b16 %v519
        %v2128 = vunpack.c.h.b16 %v519
        %v2129 = vunpack.c.l.b16 %v520
        %v2130 = vunpack.c.h.b16 %v520
        %v2131 = vunpack.c.l.b16 %v521
        %v2132 = vunpack.c.h.b16 %v521
        %v2133 = vunpack.c.l.b16 %v522
        %v2134 = vunpack.c.h.b16 %v522
        %v2135 = vunpack.c.l.b16 %v523
        %v2136 = vunpack.c.h.b16 %v523
        %v2137 = vunpack.c.l.b16 %v524
        %v2138 = vunpack.c.h.b16 %v524
        %v2139 = vunpack.c.l.b16 %v525
        %v2140 = vunpack.c.h.b16 %v525
        %v2141 = vunpack.c.l.b16 %v526
        %v2142 = vunpack.c.h.b16 %v526
        %v2143 = vunpack.c.l.b16 %v527
        %v2144 = vunpack.c.h.b16 %v527
        %v2145 = vunpack.c.l.b16 %v528
        %v2146 = vunpack.c.h.b16 %v528
        %v2147 = vunpack.c.l.b16 %v529
        %v2148 = vunpack.c.h.b16 %v529
        %v2149 = vunpack.c.l.b16 %v530
        %v2150 = vunpack.c.h.b16 %v530
        %v2151 = vunpack.c.l.b16 %v531
        %v2152 = vunpack.c.h.b16 %v531
        %v2153 = vunpack.c.l.b16 %v532
        %v2154 = vunpack.c.h.b16 %v532
        %v2155 = vunpack.c.l.b16 %v533
        %v2156 = vunpack.c.h.b16 %v533
        %v2157 = vunpack.c.l.b16 %v534
        %v2158 = vunpack.c.h.b16 %v534
        %v2159 = vunpack.c.l.b16 %v535
        %v2160 = vunpack.c.h.b16 %v535
        %v2161 = vunpack.c.l.b16 %v536
        %v2162 = vunpack.c.h.b16 %v536
        %v2163 = vunpack.c.l.b16 %v537
        %v2164 = vunpack.c.h.b16 %v537
        %v2165 = vunpack.c.l.b16 %v538
        %v2166 = vunpack.c.h.b16 %v538
        %v2167 = vunpack.c.l.b16 %v539
        %v2168 = vunpack.c.h.b16 %v539
        %v2169 = vunpack.c.l.b16 %v540
        %v2170 = vunpack.c.h.b16 %v540
        %v2171 = vunpack.c.l.b16 %v541
        %v2172 = vunpack.c.h.b16 %v541
        %v2173 = vunpack.c.l.b16 %v542
        %v2174 = vunpack.c.h.b16 %v542
        %v2175 = vunpack.c.l.b16 %v543
        %v2176 = vunpack.c.h.b16 %v543
        %v2177 = vunpack.c.l.b16 %v544
        %v2178 = vunpack.c.h.b16 %v544
        %v2179 = vunpack.c.l.b16 %v545
        %v2180 = vunpack.c.h.b16 %v545
        %v2181 = vunpack.c.l.b16 %v546
        %v2182 = vunpack.c.h.b16 %v546
        %v2183 = vunpack.c.l.b16 %v547
        %v2184 = vunpack.c.h.b16 %v547
        %v2185 = vunpack.c.l.b16 %v548
        %v2186 = vunpack.c.h.b16 %v548
        %v2187 = vunpack.c.l.b16 %v549
        %v2188 = vunpack.c.h.b16 %v549
        %v2189 = vunpack.c.l.b16 %v550
        %v2190 = vunpack.c.h.b16 %v550
        %v2191 = vunpack.c.l.b16 %v551
        %v2192 = vunpack.c.h.b16 %v551
        %v2193 = vunpack.c.l.b16 %v552
        %v2194 = vunpack.c.h.b16 %v552
        %v2195 = vunpack.c.l.b16 %v553
        %v2196 = vunpack.c.h.b16 %v553
        %v2197 = vunpack.c.l.b16 %v554
        %v2198 = vunpack.c.h.b16 %v554
        %v2199 = vunpack.c.l.b16 %v555
        %v2200 = vunpack.c.h.b16 %v555
        %v2201 = vunpack.c.l.b16 %v556
        %v2202 = vunpack.c.h.b16 %v556
        %v2203 = vunpack.c.l.b16 %v557
        %v2204 = vunpack.c.h.b16 %v557
        %v2205 = vunpack.c.l.b16 %v558
        %v2206 = vunpack.c.h.b16 %v558
        %v2207 = vunpack.c.l.b16 %v559
        %v2208 = vunpack.c.h.b16 %v559
        %v2209 = vunpack.c.l.b16 %v560
        %v2210 = vunpack.c.h.b16 %v560
        %v2211 = vunpack.c.l.b16 %v561
        %v2212 = vunpack.c.h.b16 %v561
        %v2213 = vunpack.c.l.b16 %v562
        %v2214 = vunpack.c.h.b16 %v562
        %v2215 = vunpack.c.l.b16 %v563
        %v2216 = vunpack.c.h.b16 %v563
        %v2217 = vunpack.c.l.b16 %v564
        %v2218 = vunpack.c.h.b16 %v564
        %v2219 = vunpack.c.l.b16 %v565
        %v2220 = vunpack.c.h.b16 %v565
        %v2221 = vunpack.c.l.b16 %v566
        %v2222 = vunpack.c.h.b16 %v566
        %v2223 = vunpack.c.l.b16 %v567
        %v2224 = vunpack.c.h.b16 %v567
        %v2225 = vunpack.c.l.b16 %v568
        %v2226 = vunpack.c.h.b16 %v568
        %v2227 = vunpack.c.l.b16 %v569
        %v2228 = vunpack.c.h.b16 %v569
        %v2229 = vunpack.c.l.b16 %v570
        %v2230 = vunpack.c.h.b16 %v570
        %v2231 = vunpack.c.l.b16 %v571
        %v2232 = vunpack.c.h.b16 %v571
        %v2233 = vunpack.c.l.b16 %v572
        %v2234 = vunpack.c.h.b16 %v572
        %v2235 = vunpack.c.l.b16 %v573
        %v2236 = vunpack.c.h.b16 %v573
        %v2237 = vunpack.c.l.b16 %v574
        %v2238 = vunpack.c.h.b16 %v574
        %v2239 = vunpack.c.l.b16 %v575
        %v2240 = vunpack.c.h.b16 %v575
        %v2241 = vunpack.c.l.b16 %v576
        %v2242 = vunpack.c.h.b16 %v576
        %v2243 = vunpack.c.l.b16 %v577
        %v2244 = vunpack.c.h.b16 %v577
        %v2245 = vunpack.c.l.b16 %v578
        %v2246 = vunpack.c.h.b16 %v578
        %v2247 = vunpack.c.l.b16 %v579
        %v2248 = vunpack.c.h.b16 %v579
        %v2249 = vunpack.c.l.b16 %v580
        %v2250 = vunpack.c.h.b16 %v580
        %v2251 = vunpack.c.l.b16 %v581
        %v2252 = vunpack.c.h.b16 %v581
        %v2253 = vunpack.c.l.b16 %v582
        %v2254 = vunpack.c.h.b16 %v582
        %v2255 = vunpack.c.l.b16 %v583
        %v2256 = vunpack.c.h.b16 %v583
        %v2257 = vunpack.c.l.b16 %v584
        %v2258 = vunpack.c.h.b16 %v584
        %v2259 = vunpack.c.l.b16 %v585
        %v2260 = vunpack.c.h.b16 %v585
        %v2261 = vunpack.c.l.b16 %v586
        %v2262 = vunpack.c.h.b16 %v586
        %v2263 = vunpack.c.l.b16 %v587
        %v2264 = vunpack.c.h.b16 %v587
        %v2265 = vunpack.c.l.b16 %v588
        %v2266 = vunpack.c.h.b16 %v588
        %v2267 = vunpack.c.l.b16 %v589
        %v2268 = vunpack.c.h.b16 %v589
        %v2269 = vunpack.c.l.b16 %v590
        %v2270 = vunpack.c.h.b16 %v590
        %v2271 = vunpack.c.l.b16 %v591
        %v2272 = vunpack.c.h.b16 %v591
        %v2273 = vunpack.c.l.b16 %v592
        %v2274 = vunpack.c.h.b16 %v592
        %v2275 = vunpack.c.l.b16 %v593
        %v2276 = vunpack.c.h.b16 %v593
        %v2277 = vunpack.c.l.b16 %v594
        %v2278 = vunpack.c.h.b16 %v594
        %v2279 = vunpack.c.l.b16 %v595
        %v2280 = vunpack.c.h.b16 %v595
        %v2281 = vunpack.c.l.b16 %v596
        %v2282 = vunpack.c.h.b16 %v596
        %v2283 = vunpack.c.l.b16 %v597
        %v2284 = vunpack.c.h.b16 %v597
        %v2285 = vunpack.c.l.b16 %v598
        %v2286 = vunpack.c.h.b16 %v598
        %v2287 = vunpack.c.l.b16 %v599
        %v2288 = vunpack.c.h.b16 %v599
        %v2289 = vunpack.c.l.b16 %v600
        %v2290 = vunpack.c.h.b16 %v600
        %v2291 = vunpack.c.l.b16 %v601
        %v2292 = vunpack.c.h.b16 %v601
        %v2293 = vunpack.c.l.b16 %v602
        %v2294 = vunpack.c.h.b16 %v602
        %v2295 = vunpack.c.l.b16 %v603
        %v2296 = vunpack.c.h.b16 %v603
        %v2297 = vunpack.c.l.b16 %v604
        %v2298 = vunpack.c.h.b16 %v604
        %v2299 = vunpack.c.l.b16 %v605
        %v2300 = vunpack.c.h.b16 %v605
        %v2301 = vunpack.c.l.b16 %v606
        %v2302 = vunpack.c.h.b16 %v606
        %v2303 = vunpack.c.l.b16 %v607
        %v2304 = vunpack.c.h.b16 %v607
        %v2305 = vunpack.c.l.b16 %v608
        %v2306 = vunpack.c.h.b16 %v608
        %v2307 = vunpack.c.l.b16 %v609
        %v2308 = vunpack.c.h.b16 %v609
        %v2309 = vunpack.c.l.b16 %v610
        %v2310 = vunpack.c.h.b16 %v610
        %v2311 = vunpack.c.l.b16 %v611
        %v2312 = vunpack.c.h.b16 %v611
        %v2313 = vunpack.c.l.b16 %v612
        %v2314 = vunpack.c.h.b16 %v612
        %v2315 = vunpack.c.l.b16 %v613
        %v2316 = vunpack.c.h.b16 %v613
        %v2317 = vunpack.c.l.b16 %v614
        %v2318 = vunpack.c.h.b16 %v614
        %v2319 = vunpack.c.l.b16 %v615
        %v2320 = vunpack.c.h.b16 %v615
        %v2321 = vunpack.c.l.b16 %v616
        %v2322 = vunpack.c.h.b16 %v616
        %v2323 = vunpack.c.l.b16 %v617
        %v2324 = vunpack.c.h.b16 %v617
        %v2325 = vunpack.c.l.b16 %v618
        %v2326 = vunpack.c.h.b16 %v618
        %v2327 = vunpack.c.l.b16 %v619
        %v2328 = vunpack.c.h.b16 %v619
        %v2329 = vunpack.c.l.b16 %v620
        %v2330 = vunpack.c.h.b16 %v620
        %v2331 = vunpack.c.l.b16 %v621
        %v2332 = vunpack.c.h.b16 %v621
        %v2333 = vunpack.c.l.b16 %v622
        %v2334 = vunpack.c.h.b16 %v622
        %v2335 = vunpack.c.l.b16 %v623
        %v2336 = vunpack.c.h.b16 %v623
        %v2337 = vunpack.c.l.b16 %v624
        %v2338 = vunpack.c.h.b16 %v624
        %v2339 = vunpack.c.l.b16 %v625
        %v2340 = vunpack.c.h.b16 %v625
        %v2341 = vunpack.c.l.b16 %v626
        %v2342 = vunpack.c.h.b16 %v626
        %v2343 = vunpack.c.l.b16 %v627
        %v2344 = vunpack.c.h.b16 %v627
        %v2345 = vunpack.c.l.b16 %v628
        %v2346 = vunpack.c.h.b16 %v628
        %v2347 = vunpack.c.l.b16 %v629
        %v2348 = vunpack.c.h.b16 %v629
        %v2349 = vunpack.c.l.b16 %v630
        %v2350 = vunpack.c.h.b16 %v630
        %v2351 = vunpack.c.l.b16 %v631
        %v2352 = vunpack.c.h.b16 %v631
        %v2353 = vunpack.c.l.b16 %v632
        %v2354 = vunpack.c.h.b16 %v632
        %v2355 = vunpack.c.l.b16 %v633
        %v2356 = vunpack.c.h.b16 %v633
        %v2357 = vunpack.c.l.b16 %v634
        %v2358 = vunpack.c.h.b16 %v634
        %v2359 = vunpack.c.l.b16 %v635
        %v2360 = vunpack.c.h.b16 %v635
        %v2361 = vunpack.c.l.b16 %v636
        %v2362 = vunpack.c.h.b16 %v636
        %v2363 = vunpack.c.l.b16 %v637
        %v2364 = vunpack.c.h.b16 %v637
        %v2365 = vunpack.c.l.b16 %v638
        %v2366 = vunpack.c.h.b16 %v638
        %v2367 = vunpack.c.l.b16 %v639
        %v2368 = vunpack.c.h.b16 %v639
        %v2369 = vunpack.c.l.b16 %v640
        %v2370 = vunpack.c.h.b16 %v640
        %v2371 = vunpack.c.l.b16 %v641
        %v2372 = vunpack.c.h.b16 %v641
        %v2373 = vunpack.c.l.b16 %v642
        %v2374 = vunpack.c.h.b16 %v642
        %v2375 = vunpack.c.l.b16 %v643
        %v2376 = vunpack.c.h.b16 %v643
        %v2377 = vunpack.c.l.b16 %v644
        %v2378 = vunpack.c.h.b16 %v644
        %v2379 = vunpack.c.l.b16 %v645
        %v2380 = vunpack.c.h.b16 %v645
        %v2381 = vunpack.c.l.b16 %v646
        %v2382 = vunpack.c.h.b16 %v646
        %v2383 = vunpack.c.l.b16 %v647
        %v2384 = vunpack.c.h.b16 %v647
        %v2385 = vunpack.c.l.b16 %v648
        %v2386 = vunpack.c.h.b16 %v648
        %v2387 = vunpack.c.l.b16 %v649
        %v2388 = vunpack.c.h.b16 %v649
        %v2389 = vunpack.c.l.b16 %v650
        %v2390 = vunpack.c.h.b16 %v650
        %v2391 = vunpack.c.l.b16 %v651
        %v2392 = vunpack.c.h.b16 %v651
        %v2393 = vunpack.c.l.b16 %v652
        %v2394 = vunpack.c.h.b16 %v652
        %v2395 = vunpack.c.l.b16 %v653
        %v2396 = vunpack.c.h.b16 %v653
        %v2397 = vunpack.c.l.b16 %v654
        %v2398 = vunpack.c.h.b16 %v654
        %v2399 = vunpack.c.l.b16 %v655
        %v2400 = vunpack.c.h.b16 %v655
        %v2401 = vunpack.c.l.b16 %v656
        %v2402 = vunpack.c.h.b16 %v656
        %v2403 = vunpack.c.l.b16 %v657
        %v2404 = vunpack.c.h.b16 %v657
        %v2405 = vunpack.c.l.b16 %v658
        %v2406 = vunpack.c.h.b16 %v658
        %v2407 = vunpack.c.l.b16 %v659
        %v2408 = vunpack.c.h.b16 %v659
        %v2409 = vunpack.c.l.b16 %v660
        %v2410 = vunpack.c.h.b16 %v660
        %v2411 = vunpack.c.l.b16 %v661
        %v2412 = vunpack.c.h.b16 %v661
        %v2413 = vunpack.c.l.b16 %v662
        %v2414 = vunpack.c.h.b16 %v662
        %v2415 = vunpack.c.l.b16 %v663
        %v2416 = vunpack.c.h.b16 %v663
        %v2417 = vunpack.c.l.b16 %v664
        %v2418 = vunpack.c.h.b16 %v664
        %v2419 = vunpack.c.l.b16 %v665
        %v2420 = vunpack.c.h.b16 %v665
        %v2421 = vunpack.c.l.b16 %v666
        %v2422 = vunpack.c.h.b16 %v666
        %v2423 = vunpack.c.l.b16 %v667
        %v2424 = vunpack.c.h.b16 %v667
        %v2425 = vunpack.c.l.b16 %v668
        %v2426 = vunpack.c.h.b16 %v668
        %v2427 = vunpack.c.l.b16 %v669
        %v2428 = vunpack.c.h.b16 %v669
        %v2429 = vunpack.c.l.b16 %v670
        %v2430 = vunpack.c.h.b16 %v670
        %v2431 = vunpack.c.l.b16 %v671
        %v2432 = vunpack.c.h.b16 %v671
        %v2433 = vunpack.c.l.b16 %v672
        %v2434 = vunpack.c.h.b16 %v672
        %v2435 = vunpack.c.l.b16 %v673
        %v2436 = vunpack.c.h.b16 %v673
        %v2437 = vunpack.c.l.b16 %v674
        %v2438 = vunpack.c.h.b16 %v674
        %v2439 = vunpack.c.l.b16 %v675
        %v2440 = vunpack.c.h.b16 %v675
        %v2441 = vunpack.c.l.b16 %v676
        %v2442 = vunpack.c.h.b16 %v676
        %v2443 = vunpack.c.l.b16 %v677
        %v2444 = vunpack.c.h.b16 %v677
        %v2445 = vunpack.c.l.b16 %v678
        %v2446 = vunpack.c.h.b16 %v678
        %v2447 = vunpack.c.l.b16 %v679
        %v2448 = vunpack.c.h.b16 %v679
        %v2449 = vunpack.c.l.b16 %v680
        %v2450 = vunpack.c.h.b16 %v680
        %v2451 = vunpack.c.l.b16 %v681
        %v2452 = vunpack.c.h.b16 %v681
        %v2453 = vunpack.c.l.b16 %v682
        %v2454 = vunpack.c.h.b16 %v682
        %v2455 = vunpack.c.l.b16 %v683
        %v2456 = vunpack.c.h.b16 %v683
        %v2457 = vunpack.c.l.b16 %v684
        %v2458 = vunpack.c.h.b16 %v684
        %v2459 = vunpack.c.l.b16 %v685
        %v2460 = vunpack.c.h.b16 %v685
        %v2461 = vunpack.c.l.b16 %v686
        %v2462 = vunpack.c.h.b16 %v686
        %v2463 = vunpack.c.l.b16 %v687
        %v2464 = vunpack.c.h.b16 %v687
        %v2465 = vunpack.c.l.b16 %v688
        %v2466 = vunpack.c.h.b16 %v688
        %v2467 = vunpack.c.l.b16 %v689
        %v2468 = vunpack.c.h.b16 %v689
        %v2469 = vunpack.c.l.b16 %v690
        %v2470 = vunpack.c.h.b16 %v690
        %v2471 = vunpack.c.l.b16 %v691
        %v2472 = vunpack.c.h.b16 %v691
        %v2473 = vunpack.c.l.b16 %v692
        %v2474 = vunpack.c.h.b16 %v692
        %v2475 = vunpack.c.l.b16 %v693
        %v2476 = vunpack.c.h.b16 %v693
        %v2477 = vunpack.c.l.b16 %v694
        %v2478 = vunpack.c.h.b16 %v694
        %v2479 = vunpack.c.l.b16 %v695
        %v2480 = vunpack.c.h.b16 %v695
        %v2481 = vunpack.c.l.b16 %v696
        %v2482 = vunpack.c.h.b16 %v696
        %v2483 = vunpack.c.l.b16 %v697
        %v2484 = vunpack.c.h.b16 %v697
        %v2485 = vunpack.c.l.b16 %v698
        %v2486 = vunpack.c.h.b16 %v698
        %v2487 = vunpack.c.l.b16 %v699
        %v2488 = vunpack.c.h.b16 %v699
        %v2489 = vunpack.c.l.b16 %v700
        %v2490 = vunpack.c.h.b16 %v700
        %v2491 = vunpack.c.l.b16 %v701
        %v2492 = vunpack.c.h.b16 %v701
        %v2493 = vunpack.c.l.b16 %v702
        %v2494 = vunpack.c.h.b16 %v702
        %v2495 = vunpack.c.l.b16 %v703
        %v2496 = vunpack.c.h.b16 %v703
        %v2497 = vunpack.c.l.b16 %v704
        %v2498 = vunpack.c.h.b16 %v704
        %v2499 = vunpack.c.l.b16 %v705
        %v2500 = vunpack.c.h.b16 %v705
        %v2501 = vunpack.c.l.b16 %v706
        %v2502 = vunpack.c.h.b16 %v706
        %v2503 = vunpack.c.l.b16 %v707
        %v2504 = vunpack.c.h.b16 %v707
        %v2505 = vunpack.c.l.b16 %v708
        %v2506 = vunpack.c.h.b16 %v708
        %v2507 = vunpack.c.l.b16 %v709
        %v2508 = vunpack.c.h.b16 %v709
        %v2509 = vunpack.c.l.b16 %v710
        %v2510 = vunpack.c.h.b16 %v710
        %v2511 = vunpack.c.l.b16 %v711
        %v2512 = vunpack.c.h.b16 %v711
        %v2513 = vunpack.c.l.b16 %v712
        %v2514 = vunpack.c.h.b16 %v712
        %v2515 = vunpack.c.l.b16 %v713
        %v2516 = vunpack.c.h.b16 %v713
        %v2517 = vunpack.c.l.b16 %v714
        %v2518 = vunpack.c.h.b16 %v714
        %v2519 = vunpack.c.l.b16 %v715
        %v2520 = vunpack.c.h.b16 %v715
        %v2521 = vunpack.c.l.b16 %v716
        %v2522 = vunpack.c.h.b16 %v716
        %v2523 = vunpack.c.l.b16 %v717
        %v2524 = vunpack.c.h.b16 %v717
        %v2525 = vunpack.c.l.b16 %v718
        %v2526 = vunpack.c.h.b16 %v718
        %v2527 = vunpack.c.l.b16 %v719
        %v2528 = vunpack.c.h.b16 %v719
        %v2529 = vunpack.c.l.b16 %v720
        %v2530 = vunpack.c.h.b16 %v720
        %v2531 = vunpack.c.l.b16 %v721
        %v2532 = vunpack.c.h.b16 %v721
        %v2533 = vunpack.c.l.b16 %v722
        %v2534 = vunpack.c.h.b16 %v722
        %v2535 = vunpack.c.l.b16 %v723
        %v2536 = vunpack.c.h.b16 %v723
        %v2537 = vunpack.c.l.b16 %v724
        %v2538 = vunpack.c.h.b16 %v724
        %v2539 = vunpack.c.l.b16 %v725
        %v2540 = vunpack.c.h.b16 %v725
        %v2541 = vunpack.c.l.b16 %v726
        %v2542 = vunpack.c.h.b16 %v726
        %v2543 = vunpack.c.l.b16 %v727
        %v2544 = vunpack.c.h.b16 %v727
        %v2545 = vunpack.c.l.b16 %v728
        %v2546 = vunpack.c.h.b16 %v728
        %v2547 = vunpack.c.l.b16 %v729
        %v2548 = vunpack.c.h.b16 %v729
        %v2549 = vunpack.c.l.b16 %v730
        %v2550 = vunpack.c.h.b16 %v730
        %v2551 = vunpack.c.l.b16 %v731
        %v2552 = vunpack.c.h.b16 %v731
        %v2553 = vunpack.c.l.b16 %v732
        %v2554 = vunpack.c.h.b16 %v732
        %v2555 = vunpack.c.l.b16 %v733
        %v2556 = vunpack.c.h.b16 %v733
        %v2557 = vunpack.c.l.b16 %v734
        %v2558 = vunpack.c.h.b16 %v734
        %v2559 = vunpack.c.l.b16 %v735
        %v2560 = vunpack.c.h.b16 %v735
        %v2561 = vunpack.c.l.b16 %v736
        %v2562 = vunpack.c.h.b16 %v736
        %v2563 = vunpack.c.l.b16 %v737
        %v2564 = vunpack.c.h.b16 %v737
        %v2565 = vunpack.c.l.b16 %v738
        %v2566 = vunpack.c.h.b16 %v738
        %v2567 = vunpack.c.l.b16 %v739
        %v2568 = vunpack.c.h.b16 %v739
        %v2569 = vunpack.c.l.b16 %v740
        %v2570 = vunpack.c.h.b16 %v740
        %v2571 = vunpack.c.l.b16 %v741
        %v2572 = vunpack.c.h.b16 %v741
        %v2573 = vunpack.c.l.b16 %v742
        %v2574 = vunpack.c.h.b16 %v742
        %v2575 = vunpack.c.l.b16 %v743
        %v2576 = vunpack.c.h.b16 %v743
        %v2577 = vunpack.c.l.b16 %v744
        %v2578 = vunpack.c.h.b16 %v744
        %v2579 = vunpack.c.l.b16 %v745
        %v2580 = vunpack.c.h.b16 %v745
        %v2581 = vunpack.c.l.b16 %v746
        %v2582 = vunpack.c.h.b16 %v746
        %v2583 = vunpack.c.l.b16 %v747
        %v2584 = vunpack.c.h.b16 %v747
        %v2585 = vunpack.c.l.b16 %v748
        %v2586 = vunpack.c.h.b16 %v748
        %v2587 = vunpack.c.l.b16 %v749
        %v2588 = vunpack.c.h.b16 %v749
        %v2589 = vunpack.c.l.b16 %v750
        %v2590 = vunpack.c.h.b16 %v750
        %v2591 = vunpack.c.l.b16 %v751
        %v2592 = vunpack.c.h.b16 %v751
        %v2593 = vunpack.c.l.b16 %v752
        %v2594 = vunpack.c.h.b16 %v752
        %v2595 = vunpack.c.l.b16 %v753
        %v2596 = vunpack.c.h.b16 %v753
        %v2597 = vunpack.c.l.b16 %v754
        %v2598 = vunpack.c.h.b16 %v754
        %v2599 = vunpack.c.l.b16 %v755
        %v2600 = vunpack.c.h.b16 %v755
        %v2601 = vunpack.c.l.b16 %v756
        %v2602 = vunpack.c.h.b16 %v756
        %v2603 = vunpack.c.l.b16 %v757
        %v2604 = vunpack.c.h.b16 %v757
        %v2605 = vunpack.c.l.b16 %v758
        %v2606 = vunpack.c.h.b16 %v758
        %v2607 = vunpack.c.l.b16 %v759
        %v2608 = vunpack.c.h.b16 %v759
        %v2609 = vunpack.c.l.b16 %v760
        %v2610 = vunpack.c.h.b16 %v760
        %v2611 = vunpack.c.l.b16 %v761
        %v2612 = vunpack.c.h.b16 %v761
        %v2613 = vunpack.c.l.b16 %v762
        %v2614 = vunpack.c.h.b16 %v762
        %v2615 = vunpack.c.l.b16 %v763
        %v2616 = vunpack.c.h.b16 %v763
        %v2617 = vunpack.c.l.b16 %v764
        %v2618 = vunpack.c.h.b16 %v764
        %v2619 = vunpack.c.l.b16 %v765
        %v2620 = vunpack.c.h.b16 %v765
        %v2621 = vunpack.c.l.b16 %v766
        %v2622 = vunpack.c.h.b16 %v766
        %v2623 = vunpack.c.l.b16 %v767
        %v2624 = vunpack.c.h.b16 %v767
        %v2625 = vunpack.c.l.b16 %v768
        %v2626 = vunpack.c.h.b16 %v768
        %v2627 = vunpack.c.l.b16 %v769
        %v2628 = vunpack.c.h.b16 %v769
        %v2629 = vunpack.c.l.b16 %v770
        %v2630 = vunpack.c.h.b16 %v770
        %v2631 = vunpack.c.l.b16 %v771
        %v2632 = vunpack.c.h.b16 %v771
        %v2633 = vunpack.c.l.b16 %v772
        %v2634 = vunpack.c.h.b16 %v772
        %v2635 = vunpack.c.l.b16 %v773
        %v2636 = vunpack.c.h.b16 %v773
        %v2637 = vunpack.c.l.b16 %v774
        %v2638 = vunpack.c.h.b16 %v774
        %v2639 = vunpack.c.l.b16 %v775
        %v2640 = vunpack.c.h.b16 %v775
        %v2641 = vunpack.c.l.b16 %v776
        %v2642 = vunpack.c.h.b16 %v776
        %v2643 = vunpack.c.l.b16 %v777
        %v2644 = vunpack.c.h.b16 %v777
        %v2645 = vunpack.c.l.b16 %v778
        %v2646 = vunpack.c.h.b16 %v778
        %v2647 = vunpack.c.l.b16 %v779
        %v2648 = vunpack.c.h.b16 %v779
        %v2649 = vunpack.c.l.b16 %v780
        %v2650 = vunpack.c.h.b16 %v780
        %v2651 = vunpack.c.l.b16 %v781
        %v2652 = vunpack.c.h.b16 %v781
        %v2653 = vunpack.c.l.b16 %v782
        %v2654 = vunpack.c.h.b16 %v782
        %v2655 = vunpack.c.l.b16 %v783
        %v2656 = vunpack.c.h.b16 %v783
        %v2657 = vunpack.c.l.b16 %v784
        %v2658 = vunpack.c.h.b16 %v784
        %v2659 = vunpack.c.l.b16 %v785
        %v2660 = vunpack.c.h.b16 %v785
        %v2661 = vunpack.c.l.b16 %v786
        %v2662 = vunpack.c.h.b16 %v786
        %v2663 = vunpack.c.l.b16 %v787
        %v2664 = vunpack.c.h.b16 %v787
        %v2665 = vunpack.c.l.b16 %v788
        %v2666 = vunpack.c.h.b16 %v788
        %v2667 = vunpack.c.l.b16 %v789
        %v2668 = vunpack.c.h.b16 %v789
        %v2669 = vunpack.c.l.b16 %v790
        %v2670 = vunpack.c.h.b16 %v790
        %v2671 = vunpack.c.l.b16 %v791
        %v2672 = vunpack.c.h.b16 %v791
        %v2673 = vunpack.c.l.b16 %v792
        %v2674 = vunpack.c.h.b16 %v792
        %v2675 = vunpack.c.l.b16 %v793
        %v2676 = vunpack.c.h.b16 %v793
        %v2677 = vunpack.c.l.b16 %v794
        %v2678 = vunpack.c.h.b16 %v794
        %v2679 = vunpack.c.l.b16 %v795
        %v2680 = vunpack.c.h.b16 %v795
        %v2681 = vunpack.c.l.b16 %v796
        %v2682 = vunpack.c.h.b16 %v796
        %v2683 = vunpack.c.l.b16 %v797
        %v2684 = vunpack.c.h.b16 %v797
        %v2685 = vunpack.c.l.b16 %v798
        %v2686 = vunpack.c.h.b16 %v798
        %v2687 = vunpack.c.l.b16 %v799
        %v2688 = vunpack.c.h.b16 %v799
        %v2689 = vunpack.c.l.b16 %v800
        %v2690 = vunpack.c.h.b16 %v800
        %v2691 = vunpack.c.l.b16 %v801
        %v2692 = vunpack.c.h.b16 %v801
        %v2693 = vunpack.c.l.b16 %v802
        %v2694 = vunpack.c.h.b16 %v802
        %v2695 = vunpack.c.l.b16 %v803
        %v2696 = vunpack.c.h.b16 %v803
        %v2697 = vunpack.c.l.b16 %v804
        %v2698 = vunpack.c.h.b16 %v804
        %v2699 = vunpack.c.l.b16 %v805
        %v2700 = vunpack.c.h.b16 %v805
        %v2701 = vunpack.c.l.b16 %v806
        %v2702 = vunpack.c.h.b16 %v806
        %v2703 = vunpack.c.l.b16 %v807
        %v2704 = vunpack.c.h.b16 %v807
        %v2705 = vunpack.c.l.b16 %v808
        %v2706 = vunpack.c.h.b16 %v808
        %v2707 = vunpack.c.l.b16 %v809
        %v2708 = vunpack.c.h.b16 %v809
        %v2709 = vunpack.c.l.b16 %v810
        %v2710 = vunpack.c.h.b16 %v810
        %v2711 = vunpack.c.l.b16 %v811
        %v2712 = vunpack.c.h.b16 %v811
        %v2713 = vunpack.c.l.b16 %v812
        %v2714 = vunpack.c.h.b16 %v812
        %v2715 = vunpack.c.l.b16 %v813
        %v2716 = vunpack.c.h.b16 %v813
        %v2717 = vunpack.c.l.b16 %v814
        %v2718 = vunpack.c.h.b16 %v814
        %v2719 = vunpack.c.l.b16 %v815
        %v2720 = vunpack.c.h.b16 %v815
        %v2721 = vunpack.c.l.b16 %v816
        %v2722 = vunpack.c.h.b16 %v816
        %v2723 = vunpack.c.l.b16 %v817
        %v2724 = vunpack.c.h.b16 %v817
        %v2725 = vunpack.c.l.b16 %v818
        %v2726 = vunpack.c.h.b16 %v818
        %v2727 = vunpack.c.l.b16 %v819
        %v2728 = vunpack.c.h.b16 %v819
        %v2729 = vunpack.c.l.b16 %v820
        %v2730 = vunpack.c.h.b16 %v820
        %v2731 = vunpack.c.l.b16 %v821
        %v2732 = vunpack.c.h.b16 %v821
        %v2733 = vunpack.c.l.b16 %v822
        %v2734 = vunpack.c.h.b16 %v822
        %v2735 = vunpack.c.l.b16 %v823
        %v2736 = vunpack.c.h.b16 %v823
        %v2737 = vunpack.c.l.b16 %v824
        %v2738 = vunpack.c.h.b16 %v824
        %v2739 = vunpack.c.l.b16 %v825
        %v2740 = vunpack.c.h.b16 %v825
        %v2741 = vunpack.c.l.b16 %v826
        %v2742 = vunpack.c.h.b16 %v826
        %v2743 = vunpack.c.l.b16 %v827
        %v2744 = vunpack.c.h.b16 %v827
        %v2745 = vunpack.c.l.b16 %v828
        %v2746 = vunpack.c.h.b16 %v828
        %v2747 = vunpack.c.l.b16 %v829
        %v2748 = vunpack.c.h.b16 %v829
        %v2749 = vunpack.c.l.b16 %v830
        %v2750 = vunpack.c.h.b16 %v830
        %v2751 = vunpack.c.l.b16 %v831
        %v2752 = vunpack.c.h.b16 %v831
        %v2753 = vunpack.c.l.b16 %v832
        %v2754 = vunpack.c.h.b16 %v832
        %v2755 = vunpack.c.l.b16 %v833
        %v2756 = vunpack.c.h.b16 %v833
        %v2757 = vunpack.c.l.b16 %v834
        %v2758 = vunpack.c.h.b16 %v834
        %v2759 = vunpack.c.l.b16 %v835
        %v2760 = vunpack.c.h.b16 %v835
        %v2761 = vunpack.c.l.b16 %v836
        %v2762 = vunpack.c.h.b16 %v836
        %v2763 = vunpack.c.l.b16 %v837
        %v2764 = vunpack.c.h.b16 %v837
        %v2765 = vunpack.c.l.b16 %v838
        %v2766 = vunpack.c.h.b16 %v838
        %v2767 = vunpack.c.l.b16 %v839
        %v2768 = vunpack.c.h.b16 %v839
        %v2769 = vunpack.c.l.b16 %v840
        %v2770 = vunpack.c.h.b16 %v840
        %v2771 = vunpack.c.l.b16 %v841
        %v2772 = vunpack.c.h.b16 %v841
        %v2773 = vunpack.c.l.b16 %v842
        %v2774 = vunpack.c.h.b16 %v842
        %v2775 = vunpack.c.l.b16 %v843
        %v2776 = vunpack.c.h.b16 %v843
        %v2777 = vunpack.c.l.b16 %v844
        %v2778 = vunpack.c.h.b16 %v844
        %v2779 = vunpack.c.l.b16 %v845
        %v2780 = vunpack.c.h.b16 %v845
        %v2781 = vunpack.c.l.b16 %v846
        %v2782 = vunpack.c.h.b16 %v846
        %v2783 = vunpack.c.l.b16 %v847
        %v2784 = vunpack.c.h.b16 %v847
        %v2785 = vunpack.c.l.b16 %v848
        %v2786 = vunpack.c.h.b16 %v848
        %v2787 = vunpack.c.l.b16 %v849
        %v2788 = vunpack.c.h.b16 %v849
        %v2789 = vunpack.c.l.b16 %v850
        %v2790 = vunpack.c.h.b16 %v850
        %v2791 = vunpack.c.l.b16 %v851
        %v2792 = vunpack.c.h.b16 %v851
        %v2793 = vunpack.c.l.b16 %v852
        %v2794 = vunpack.c.h.b16 %v852
        %v2795 = vunpack.c.l.b16 %v853
        %v2796 = vunpack.c.h.b16 %v853
        %v2797 = vunpack.c.l.b16 %v854
        %v2798 = vunpack.c.h.b16 %v854
        %v2799 = vunpack.c.l.b16 %v855
        %v2800 = vunpack.c.h.b16 %v855
        %v2801 = vunpack.c.l.b16 %v856
        %v2802 = vunpack.c.h.b16 %v856
        %v2803 = vunpack.c.l.b16 %v857
        %v2804 = vunpack.c.h.b16 %v857
        %v2805 = vunpack.c.l.b16 %v858
        %v2806 = vunpack.c.h.b16 %v858
        %v2807 = vunpack.c.l.b16 %v859
        %v2808 = vunpack.c.h.b16 %v859
        %v2809 = vunpack.c.l.b16 %v860
        %v2810 = vunpack.c.h.b16 %v860
        %v2811 = vunpack.c.l.b16 %v861
        %v2812 = vunpack.c.h.b16 %v861
        %v2813 = vunpack.c.l.b16 %v862
        %v2814 = vunpack.c.h.b16 %v862
        %v2815 = vunpack.c.l.b16 %v863
        %v2816 = vunpack.c.h.b16 %v863
        %v2817 = vunpack.c.l.b16 %v864
        %v2818 = vunpack.c.h.b16 %v864
        %v2819 = vunpack.c.l.b16 %v865
        %v2820 = vunpack.c.h.b16 %v865
        %v2821 = vunpack.c.l.b16 %v866
        %v2822 = vunpack.c.h.b16 %v866
        %v2823 = vunpack.c.l.b16 %v867
        %v2824 = vunpack.c.h.b16 %v867
        %v2825 = vunpack.c.l.b16 %v868
        %v2826 = vunpack.c.h.b16 %v868
        %v2827 = vunpack.c.l.b16 %v869
        %v2828 = vunpack.c.h.b16 %v869
        %v2829 = vunpack.c.l.b16 %v870
        %v2830 = vunpack.c.h.b16 %v870
        %v2831 = vunpack.c.l.b16 %v871
        %v2832 = vunpack.c.h.b16 %v871
        %v2833 = vunpack.c.l.b16 %v872
        %v2834 = vunpack.c.h.b16 %v872
        %v2835 = vunpack.c.l.b16 %v873
        %v2836 = vunpack.c.h.b16 %v873
        %v2837 = vunpack.c.l.b16 %v874
        %v2838 = vunpack.c.h.b16 %v874
        %v2839 = vunpack.c.l.b16 %v875
        %v2840 = vunpack.c.h.b16 %v875
        %v2841 = vunpack.c.l.b16 %v876
        %v2842 = vunpack.c.h.b16 %v876
        %v2843 = vunpack.c.l.b16 %v877
        %v2844 = vunpack.c.h.b16 %v877
        %v2845 = vunpack.c.l.b16 %v878
        %v2846 = vunpack.c.h.b16 %v878
        %v2847 = vunpack.c.l.b16 %v879
        %v2848 = vunpack.c.h.b16 %v879
        %v2849 = vunpack.c.l.b16 %v880
        %v2850 = vunpack.c.h.b16 %v880
        %v2851 = vunpack.c.l.b16 %v881
        %v2852 = vunpack.c.h.b16 %v881
        %v2853 = vunpack.c.l.b16 %v882
        %v2854 = vunpack.c.h.b16 %v882
        %v2855 = vunpack.c.l.b16 %v883
        %v2856 = vunpack.c.h.b16 %v883
        %v2857 = vunpack.c.l.b16 %v884
        %v2858 = vunpack.c.h.b16 %v884
        %v2859 = vunpack.c.l.b16 %v885
        %v2860 = vunpack.c.h.b16 %v885
        %v2861 = vunpack.c.l.b16 %v886
        %v2862 = vunpack.c.h.b16 %v886
        %v2863 = vunpack.c.l.b16 %v887
        %v2864 = vunpack.c.h.b16 %v887
        %v2865 = vunpack.c.l.b16 %v888
        %v2866 = vunpack.c.h.b16 %v888
        %v2867 = vunpack.c.l.b16 %v889
        %v2868 = vunpack.c.h.b16 %v889
        %v2869 = vunpack.c.l.b16 %v890
        %v2870 = vunpack.c.h.b16 %v890
        %v2871 = vunpack.c.l.b16 %v891
        %v2872 = vunpack.c.h.b16 %v891
        %v2873 = vunpack.c.l.b16 %v892
        %v2874 = vunpack.c.h.b16 %v892
        %v2875 = vunpack.c.l.b16 %v893
        %v2876 = vunpack.c.h.b16 %v893
        %v2877 = vunpack.c.l.b16 %v894
        %v2878 = vunpack.c.h.b16 %v894
        %v2879 = vunpack.c.l.b16 %v895
        %v2880 = vunpack.c.h.b16 %v895
        %v2881 = vunpack.c.l.b16 %v896
        %v2882 = vunpack.c.h.b16 %v896
        %v2883 = vunpack.c.l.b16 %v897
        %v2884 = vunpack.c.h.b16 %v897
        %v2885 = vunpack.c.l.b16 %v898
        %v2886 = vunpack.c.h.b16 %v898
        %v2887 = vunpack.c.l.b16 %v899
        %v2888 = vunpack.c.h.b16 %v899
        %v2889 = vunpack.c.l.b16 %v900
        %v2890 = vunpack.c.h.b16 %v900
        %v2891 = vunpack.c.l.b16 %v901
        %v2892 = vunpack.c.h.b16 %v901
        %v2893 = vunpack.c.l.b16 %v902
        %v2894 = vunpack.c.h.b16 %v902
        %v2895 = vunpack.c.l.b16 %v903
        %v2896 = vunpack.c.h.b16 %v903
        %v2897 = vunpack.c.l.b16 %v904
        %v2898 = vunpack.c.h.b16 %v904
        %v2899 = vunpack.c.l.b16 %v905
        %v2900 = vunpack.c.h.b16 %v905
        %v2901 = vunpack.c.l.b16 %v906
        %v2902 = vunpack.c.h.b16 %v906
        %v2903 = vunpack.c.l.b16 %v907
        %v2904 = vunpack.c.h.b16 %v907
        %v2905 = vunpack.c.l.b16 %v908
        %v2906 = vunpack.c.h.b16 %v908
        %v2907 = vunpack.c.l.b16 %v909
        %v2908 = vunpack.c.h.b16 %v909
        %v2909 = vunpack.c.l.b16 %v910
        %v2910 = vunpack.c.h.b16 %v910
        %v2911 = vunpack.c.l.b16 %v911
        %v2912 = vunpack.c.h.b16 %v911
        %v2913 = vunpack.c.l.b16 %v912
        %v2914 = vunpack.c.h.b16 %v912
        %v2915 = vunpack.c.l.b16 %v913
        %v2916 = vunpack.c.h.b16 %v913
        %v2917 = vunpack.c.l.b16 %v914
        %v2918 = vunpack.c.h.b16 %v914
        %v2919 = vunpack.c.l.b16 %v915
        %v2920 = vunpack.c.h.b16 %v915
        %v2921 = vunpack.c.l.b16 %v916
        %v2922 = vunpack.c.h.b16 %v916
        %v2923 = vunpack.c.l.b16 %v917
        %v2924 = vunpack.c.h.b16 %v917
        %v2925 = vunpack.c.l.b16 %v918
        %v2926 = vunpack.c.h.b16 %v918
        %v2927 = vunpack.c.l.b16 %v919
        %v2928 = vunpack.c.h.b16 %v919
        %v2929 = vunpack.c.l.b16 %v920
        %v2930 = vunpack.c.h.b16 %v920
        %v2931 = vunpack.c.l.b16 %v921
        %v2932 = vunpack.c.h.b16 %v921
        %v2933 = vunpack.c.l.b16 %v922
        %v2934 = vunpack.c.h.b16 %v922
        %v2935 = vunpack.c.l.b16 %v923
        %v2936 = vunpack.c.h.b16 %v923
        %v2937 = vunpack.c.l.b16 %v924
        %v2938 = vunpack.c.h.b16 %v924
        %v2939 = vunpack.c.l.b16 %v925
        %v2940 = vunpack.c.h.b16 %v925
        %v2941 = vunpack.c.l.b16 %v926
        %v2942 = vunpack.c.h.b16 %v926
        %v2943 = vunpack.c.l.b16 %v927
        %v2944 = vunpack.c.h.b16 %v927
        %v2945 = vunpack.c.l.b16 %v928
        %v2946 = vunpack.c.h.b16 %v928
        %v2947 = vunpack.c.l.b16 %v929
        %v2948 = vunpack.c.h.b16 %v929
        %v2949 = vunpack.c.l.b16 %v930
        %v2950 = vunpack.c.h.b16 %v930
        %v2951 = vunpack.c.l.b16 %v931
        %v2952 = vunpack.c.h.b16 %v931
        %v2953 = vunpack.c.l.b16 %v932
        %v2954 = vunpack.c.h.b16 %v932
        %v2955 = vunpack.c.l.b16 %v933
        %v2956 = vunpack.c.h.b16 %v933
        %v2957 = vunpack.c.l.b16 %v934
        %v2958 = vunpack.c.h.b16 %v934
        %v2959 = vunpack.c.l.b16 %v935
        %v2960 = vunpack.c.h.b16 %v935
        %v2961 = vunpack.c.l.b16 %v936
        %v2962 = vunpack.c.h.b16 %v936
        %v2963 = vunpack.c.l.b16 %v937
        %v2964 = vunpack.c.h.b16 %v937
        %v2965 = vunpack.c.l.b16 %v938
        %v2966 = vunpack.c.h.b16 %v938
        %v2967 = vunpack.c.l.b16 %v939
        %v2968 = vunpack.c.h.b16 %v939
        %v2969 = vunpack.c.l.b16 %v940
        %v2970 = vunpack.c.h.b16 %v940
        %v2971 = vunpack.c.l.b16 %v941
        %v2972 = vunpack.c.h.b16 %v941
        %v2973 = vunpack.c.l.b16 %v942
        %v2974 = vunpack.c.h.b16 %v942
        %v2975 = vunpack.c.l.b16 %v943
        %v2976 = vunpack.c.h.b16 %v943
        %v2977 = vunpack.c.l.b16 %v944
        %v2978 = vunpack.c.h.b16 %v944
        %v2979 = vunpack.c.l.b16 %v945
        %v2980 = vunpack.c.h.b16 %v945
        %v2981 = vunpack.c.l.b16 %v946
        %v2982 = vunpack.c.h.b16 %v946
        %v2983 = vunpack.c.l.b16 %v947
        %v2984 = vunpack.c.h.b16 %v947
        %v2985 = vunpack.c.l.b16 %v948
        %v2986 = vunpack.c.h.b16 %v948
        %v2987 = vunpack.c.l.b16 %v949
        %v2988 = vunpack.c.h.b16 %v949
        %v2989 = vunpack.c.l.b16 %v950
        %v2990 = vunpack.c.h.b16 %v950
        %v2991 = vunpack.c.l.b16 %v951
        %v2992 = vunpack.c.h.b16 %v951
        %v2993 = vunpack.c.l.b16 %v952
        %v2994 = vunpack.c.h.b16 %v952
        %v2995 = vunpack.c.l.b16 %v953
        %v2996 = vunpack.c.h.b16 %v953
        %v2997 = vunpack.c.l.b16 %v954
        %v2998 = vunpack.c.h.b16 %v954
        %v2999 = vunpack.c.l.b16 %v955
        %v3000 = vunpack.c.h.b16 %v955
        %v3001 = vunpack.c.l.b16 %v956
        %v3002 = vunpack.c.h.b16 %v956
        %v3003 = vunpack.c.l.b16 %v957
        %v3004 = vunpack.c.h.b16 %v957
        %v3005 = vunpack.c.l.b16 %v958
        %v3006 = vunpack.c.h.b16 %v958
        %v3007 = vunpack.c.l.b16 %v959
        %v3008 = vunpack.c.h.b16 %v959
        %v3009 = vunpack.c.l.b16 %v960
        %v3010 = vunpack.c.h.b16 %v960
        %v3011 = vunpack.c.l.b16 %v961
        %v3012 = vunpack.c.h.b16 %v961
        %v3013 = vunpack.c.l.b16 %v962
        %v3014 = vunpack.c.h.b16 %v962
        %v3015 = vunpack.c.l.b16 %v963
        %v3016 = vunpack.c.h.b16 %v963
        %v3017 = vunpack.c.l.b16 %v964
        %v3018 = vunpack.c.h.b16 %v964
        %v3019 = vunpack.c.l.b16 %v965
        %v3020 = vunpack.c.h.b16 %v965
        %v3021 = vunpack.c.l.b16 %v966
        %v3022 = vunpack.c.h.b16 %v966
        %v3023 = vunpack.c.l.b16 %v967
        %v3024 = vunpack.c.h.b16 %v967
        %v3025 = vunpack.c.l.b16 %v968
        %v3026 = vunpack.c.h.b16 %v968
        %v3027 = vunpack.c.l.b16 %v969
        %v3028 = vunpack.c.h.b16 %v969
        %v3029 = vunpack.c.l.b16 %v970
        %v3030 = vunpack.c.h.b16 %v970
        %v3031 = vunpack.c.l.b16 %v971
        %v3032 = vunpack.c.h.b16 %v971
        %v3033 = vunpack.c.l.b16 %v972
        %v3034 = vunpack.c.h.b16 %v972
        %v3035 = vunpack.c.l.b16 %v973
        %v3036 = vunpack.c.h.b16 %v973
        %v3037 = vunpack.c.l.b16 %v974
        %v3038 = vunpack.c.h.b16 %v974
        %v3039 = vunpack.c.l.b16 %v975
        %v3040 = vunpack.c.h.b16 %v975
        %v3041 = vunpack.c.l.b16 %v976
        %v3042 = vunpack.c.h.b16 %v976
        %v3043 = vunpack.c.l.b16 %v977
        %v3044 = vunpack.c.h.b16 %v977
        %v3045 = vunpack.c.l.b16 %v978
        %v3046 = vunpack.c.h.b16 %v978
        %v3047 = vunpack.c.l.b16 %v979
        %v3048 = vunpack.c.h.b16 %v979
        %v3049 = vunpack.c.l.b16 %v980
        %v3050 = vunpack.c.h.b16 %v980
        %v3051 = vunpack.c.l.b16 %v981
        %v3052 = vunpack.c.h.b16 %v981
        %v3053 = vunpack.c.l.b16 %v982
        %v3054 = vunpack.c.h.b16 %v982
        %v3055 = vunpack.c.l.b16 %v983
        %v3056 = vunpack.c.h.b16 %v983
        %v3057 = vunpack.c.l.b16 %v984
        %v3058 = vunpack.c.h.b16 %v984
        %v3059 = vunpack.c.l.b16 %v985
        %v3060 = vunpack.c.h.b16 %v985
        %v3061 = vunpack.c.l.b16 %v986
        %v3062 = vunpack.c.h.b16 %v986
        %v3063 = vunpack.c.l.b16 %v987
        %v3064 = vunpack.c.h.b16 %v987
        %v3065 = vunpack.c.l.b16 %v988
        %v3066 = vunpack.c.h.b16 %v988
        %v3067 = vunpack.c.l.b16 %v989
        %v3068 = vunpack.c.h.b16 %v989
        %v3069 = vunpack.c.l.b16 %v990
        %v3070 = vunpack.c.h.b16 %v990
        %v3071 = vunpack.c.l.b16 %v991
        %v3072 = vunpack.c.h.b16 %v991
        %v3073 = vunpack.c.l.b16 %v992
        %v3074 = vunpack.c.h.b16 %v992
        %v3075 = vunpack.c.l.b16 %v993
        %v3076 = vunpack.c.h.b16 %v993
        %v3077 = vunpack.c.l.b16 %v994
        %v3078 = vunpack.c.h.b16 %v994
        %v3079 = vunpack.c.l.b16 %v995
        %v3080 = vunpack.c.h.b16 %v995
        %v3081 = vunpack.c.l.b16 %v996
        %v3082 = vunpack.c.h.b16 %v996
        %v3083 = vunpack.c.l.b16 %v997
        %v3084 = vunpack.c.h.b16 %v997
        %v3085 = vunpack.c.l.b16 %v998
        %v3086 = vunpack.c.h.b16 %v998
        %v3087 = vunpack.c.l.b16 %v999
        %v3088 = vunpack.c.h.b16 %v999
        %v3089 = vunpack.c.l.b16 %v1000
        %v3090 = vunpack.c.h.b16 %v1000
        %v3091 = vunpack.c.l.b16 %v1001
        %v3092 = vunpack.c.h.b16 %v1001
        %v3093 = vunpack.c.l.b16 %v1002
        %v3094 = vunpack.c.h.b16 %v1002
        %v3095 = vunpack.c.l.b16 %v1003
        %v3096 = vunpack.c.h.b16 %v1003
        %v3097 = vunpack.c.l.b16 %v1004
        %v3098 = vunpack.c.h.b16 %v1004
        %v3099 = vunpack.c.l.b16 %v1005
        %v3100 = vunpack.c.h.b16 %v1005
        %v3101 = vunpack.c.l.b16 %v1006
        %v3102 = vunpack.c.h.b16 %v1006
        %v3103 = vunpack.c.l.b16 %v1007
        %v3104 = vunpack.c.h.b16 %v1007
        %v3105 = vunpack.c.l.b16 %v1008
        %v3106 = vunpack.c.h.b16 %v1008
        %v3107 = vunpack.c.l.b16 %v1009
        %v3108 = vunpack.c.h.b16 %v1009
        %v3109 = vunpack.c.l.b16 %v1010
        %v3110 = vunpack.c.h.b16 %v1010
        %v3111 = vunpack.c.l.b16 %v1011
        %v3112 = vunpack.c.h.b16 %v1011
        %v3113 = vunpack.c.l.b16 %v1012
        %v3114 = vunpack.c.h.b16 %v1012
        %v3115 = vunpack.c.l.b16 %v1013
        %v3116 = vunpack.c.h.b16 %v1013
        %v3117 = vunpack.c.l.b16 %v1014
        %v3118 = vunpack.c.h.b16 %v1014
        %v3119 = vunpack.c.l.b16 %v1015
        %v3120 = vunpack.c.h.b16 %v1015
        %v3121 = vunpack.c.l.b16 %v1016
        %v3122 = vunpack.c.h.b16 %v1016
        %v3123 = vunpack.c.l.b16 %v1017
        %v3124 = vunpack.c.h.b16 %v1017
        %v3125 = vunpack.c.l.b16 %v1018
        %v3126 = vunpack.c.h.b16 %v1018
        %v3127 = vunpack.c.l.b16 %v1019
        %v3128 = vunpack.c.h.b16 %v1019
        %v3129 = vunpack.c.l.b16 %v1020
        %v3130 = vunpack.c.h.b16 %v1020
        %v3131 = vunpack.c.l.b16 %v1021
        %v3132 = vunpack.c.h.b16 %v1021
        %v3133 = vunpack.c.l.b16 %v1022
        %v3134 = vunpack.c.h.b16 %v1022
        %v3135 = vunpack.c.l.b16 %v1023
        %v3136 = vunpack.c.h.b16 %v1023
        %v3137 = vunpack.c.l.b16 %v1024
        %v3138 = vunpack.c.h.b16 %v1024
        %v3139 = vunpack.c.l.b16 %v1025
        %v3140 = vunpack.c.h.b16 %v1025
        %v3141 = vunpack.c.l.b16 %v1026
        %v3142 = vunpack.c.h.b16 %v1026
        %v3143 = vunpack.c.l.b16 %v1027
        %v3144 = vunpack.c.h.b16 %v1027
        %v3145 = vunpack.c.l.b16 %v1028
        %v3146 = vunpack.c.h.b16 %v1028
        %v3147 = vunpack.c.l.b16 %v1029
        %v3148 = vunpack.c.h.b16 %v1029
        %v3149 = vunpack.c.l.b16 %v1030
        %v3150 = vunpack.c.h.b16 %v1030
        %v3151 = vunpack.c.l.b16 %v1031
        %v3152 = vunpack.c.h.b16 %v1031
        %v3153 = vunpack.c.l.b16 %v1032
        %v3154 = vunpack.c.h.b16 %v1032
        %v3155 = vunpack.c.l.b16 %v1033
        %v3156 = vunpack.c.h.b16 %v1033
        %v3157 = vunpack.c.l.b16 %v1034
        %v3158 = vunpack.c.h.b16 %v1034
        %v3159 = vunpack.c.l.b16 %v1035
        %v3160 = vunpack.c.h.b16 %v1035
        %v3161 = vunpack.c.l.b16 %v1036
        %v3162 = vunpack.c.h.b16 %v1036
        %v3163 = vunpack.c.l.b16 %v1037
        %v3164 = vunpack.c.h.b16 %v1037
        %v3165 = vunpack.c.l.b16 %v1038
        %v3166 = vunpack.c.h.b16 %v1038
        %v3167 = vunpack.c.l.b16 %v1039
        %v3168 = vunpack.c.h.b16 %v1039
        %v3169 = vunpack.c.l.b16 %v1040
        %v3170 = vunpack.c.h.b16 %v1040
        %v3171 = vunpack.c.l.b16 %v1041
        %v3172 = vunpack.c.h.b16 %v1041
        %v3173 = vunpack.c.l.b16 %v1042
        %v3174 = vunpack.c.h.b16 %v1042
        %v3175 = vunpack.c.l.b16 %v1043
        %v3176 = vunpack.c.h.b16 %v1043
        %v3177 = vunpack.c.l.b16 %v1044
        %v3178 = vunpack.c.h.b16 %v1044
        %v3179 = vunpack.c.l.b16 %v1045
        %v3180 = vunpack.c.h.b16 %v1045
        %v3181 = vunpack.c.l.b16 %v1046
        %v3182 = vunpack.c.h.b16 %v1046
        %v3183 = vunpack.c.l.b16 %v1047
        %v3184 = vunpack.c.h.b16 %v1047
        %v3185 = vunpack.c.l.b16 %v1048
        %v3186 = vunpack.c.h.b16 %v1048
        %v3187 = vunpack.c.l.b16 %v1049
        %v3188 = vunpack.c.h.b16 %v1049
        %v3189 = vunpack.c.l.b16 %v1050
        %v3190 = vunpack.c.h.b16 %v1050
        %v3191 = vunpack.c.l.b16 %v1051
        %v3192 = vunpack.c.h.b16 %v1051
        %v3193 = vunpack.c.l.b16 %v1052
        %v3194 = vunpack.c.h.b16 %v1052
        %v3195 = vunpack.c.l.b16 %v1053
        %v3196 = vunpack.c.h.b16 %v1053
        %v3197 = vunpack.c.l.b16 %v1054
        %v3198 = vunpack.c.h.b16 %v1054
        %v3199 = vunpack.c.l.b16 %v1055
        %v3200 = vunpack.c.h.b16 %v1055
        %v3201 = vunpack.c.l.b16 %v1056
        %v3202 = vunpack.c.h.b16 %v1056
        %v3203 = vunpack.c.l.b16 %v1057
        %v3204 = vunpack.c.h.b16 %v1057
        %v3205 = vunpack.c.l.b16 %v1058
        %v3206 = vunpack.c.h.b16 %v1058
        %v3207 = vunpack.c.l.b16 %v1059
        %v3208 = vunpack.c.h.b16 %v1059
        %v3209 = vunpack.c.l.b16 %v1060
        %v3210 = vunpack.c.h.b16 %v1060
        %v3211 = vunpack.c.l.b16 %v1061
        %v3212 = vunpack.c.h.b16 %v1061
        %v3213 = vunpack.c.l.b16 %v1062
        %v3214 = vunpack.c.h.b16 %v1062
        %v3215 = vunpack.c.l.b16 %v1063
        %v3216 = vunpack.c.h.b16 %v1063
        %v3217 = vunpack.c.l.b16 %v1064
        %v3218 = vunpack.c.h.b16 %v1064
        %v3219 = vunpack.c.l.b16 %v1065
        %v3220 = vunpack.c.h.b16 %v1065
        %v3221 = vunpack.c.l.b16 %v1066
        %v3222 = vunpack.c.h.b16 %v1066
        %v3223 = vunpack.c.l.b16 %v1067
        %v3224 = vunpack.c.h.b16 %v1067
        %v3225 = vunpack.c.l.b16 %v1068
        %v3226 = vunpack.c.h.b16 %v1068
        %v3227 = vunpack.c.l.b16 %v1069
        %v3228 = vunpack.c.h.b16 %v1069
        %v3229 = vunpack.c.l.b16 %v1070
        %v3230 = vunpack.c.h.b16 %v1070
        %v3231 = vunpack.c.l.b16 %v1071
        %v3232 = vunpack.c.h.b16 %v1071
        %v3233 = vunpack.c.l.b16 %v1072
        %v3234 = vunpack.c.h.b16 %v1072
        %v3235 = vunpack.c.l.b16 %v1073
        %v3236 = vunpack.c.h.b16 %v1073
        %v3237 = vunpack.c.l.b16 %v1074
        %v3238 = vunpack.c.h.b16 %v1074
        %v3239 = vunpack.c.l.b16 %v1075
        %v3240 = vunpack.c.h.b16 %v1075
        %v3241 = vunpack.c.l.b16 %v1076
        %v3242 = vunpack.c.h.b16 %v1076
        %v3243 = vunpack.c.l.b16 %v1077
        %v3244 = vunpack.c.h.b16 %v1077
        %v3245 = vunpack.c.l.b16 %v1078
        %v3246 = vunpack.c.h.b16 %v1078
        %v3247 = vunpack.c.l.b16 %v1079
        %v3248 = vunpack.c.h.b16 %v1079
        %v3249 = vunpack.c.l.b16 %v1080
        %v3250 = vunpack.c.h.b16 %v1080
        %v3251 = vunpack.c.l.b16 %v1081
        %v3252 = vunpack.c.h.b16 %v1081
        %v3253 = vunpack.c.l.b16 %v1082
        %v3254 = vunpack.c.h.b16 %v1082
        %v3255 = vunpack.c.l.b16 %v1083
        %v3256 = vunpack.c.h.b16 %v1083
        %v3257 = vunpack.c.l.b16 %v1084
        %v3258 = vunpack.c.h.b16 %v1084
        %v3259 = vunpack.c.l.b16 %v1085
        %v3260 = vunpack.c.h.b16 %v1085
        %v3261 = vunpack.c.l.b16 %v1086
        %v3262 = vunpack.c.h.b16 %v1086
        %v3263 = vunpack.c.l.b16 %v1087
        %v3264 = vunpack.c.h.b16 %v1087
        %v3265 = vunpack.c.l.b16 %v1088
        %v3266 = vunpack.c.h.b16 %v1088
        %v3267 = vunpack.c.l.b16 %v1089
        %v3268 = vunpack.c.h.b16 %v1089
        %v3269 = vunpack.c.l.b16 %v1090
        %v3270 = vunpack.c.h.b16 %v1090
        %v3271 = vunpack.c.l.b16 %v1091
        %v3272 = vunpack.c.h.b16 %v1091
        %v3273 = vunpack.c.l.b16 %v1092
        %v3274 = vunpack.c.h.b16 %v1092
        %v3275 = vunpack.c.l.b16 %v1093
        %v3276 = vunpack.c.h.b16 %v1093
        %v3277 = vunpack.c.l.b16 %v1094
        %v3278 = vunpack.c.h.b16 %v1094
        %v3279 = vunpack.c.l.b16 %v1095
        %v3280 = vunpack.c.h.b16 %v1095
        %v3281 = vunpack.c.l.b16 %v1096
        %v3282 = vunpack.c.h.b16 %v1096
        %v3283 = vunpack.c.l.b16 %v1097
        %v3284 = vunpack.c.h.b16 %v1097
        %v3285 = vunpack.c.l.b16 %v1098
        %v3286 = vunpack.c.h.b16 %v1098
        %v3287 = vunpack.c.l.b16 %v1099
        %v3288 = vunpack.c.h.b16 %v1099
        %v3289 = vunpack.c.l.b16 %v1100
        %v3290 = vunpack.c.h.b16 %v1100
        %v3291 = vunpack.c.l.b16 %v1101
        %v3292 = vunpack.c.h.b16 %v1101
        %v3293 = vunpack.c.l.b16 %v1102
        %v3294 = vunpack.c.h.b16 %v1102
        %v3295 = vunpack.c.l.b16 %v1103
        %v3296 = vunpack.c.h.b16 %v1103
        %v3297 = vunpack.c.l.b16 %v1104
        %v3298 = vunpack.c.h.b16 %v1104
        %v3299 = vunpack.c.l.b16 %v1105
        %v3300 = vunpack.c.h.b16 %v1105
        %v3301 = vunpack.c.l.b16 %v1106
        %v3302 = vunpack.c.h.b16 %v1106
        %v3303 = vunpack.c.l.b16 %v1107
        %v3304 = vunpack.c.h.b16 %v1107
        %v3305 = vunpack.c.l.b16 %v1108
        %v3306 = vunpack.c.h.b16 %v1108
        %v3307 = vunpack.c.l.b16 %v1109
        %v3308 = vunpack.c.h.b16 %v1109
        %v3309 = vunpack.c.l.b16 %v1110
        %v3310 = vunpack.c.h.b16 %v1110
        %v3311 = vunpack.c.l.b16 %v1111
        %v3312 = vunpack.c.h.b16 %v1111
        %v3313 = vunpack.c.l.b16 %v1112
        %v3314 = vunpack.c.h.b16 %v1112
        %v3315 = vunpack.c.l.b16 %v1113
        %v3316 = vunpack.c.h.b16 %v1113
        %v3317 = vunpack.c.l.b16 %v1114
        %v3318 = vunpack.c.h.b16 %v1114
        %v3319 = vunpack.c.l.b16 %v1115
        %v3320 = vunpack.c.h.b16 %v1115
        %v3321 = vunpack.c.l.b16 %v1116
        %v3322 = vunpack.c.h.b16 %v1116
        %v3323 = vunpack.c.l.b16 %v1117
        %v3324 = vunpack.c.h.b16 %v1117
        %v3325 = vunpack.c.l.b16 %v1118
        %v3326 = vunpack.c.h.b16 %v1118
        %v3327 = vunpack.c.l.b16 %v1119
        %v3328 = vunpack.c.h.b16 %v1119
        %v3329 = vunpack.c.l.b16 %v1120
        %v3330 = vunpack.c.h.b16 %v1120
        %v3331 = vunpack.c.l.b16 %v1121
        %v3332 = vunpack.c.h.b16 %v1121
        %v3333 = vunpack.c.l.b16 %v1122
        %v3334 = vunpack.c.h.b16 %v1122
        %v3335 = vunpack.c.l.b16 %v1123
        %v3336 = vunpack.c.h.b16 %v1123
        %v3337 = vunpack.c.l.b16 %v1124
        %v3338 = vunpack.c.h.b16 %v1124
        %v3339 = vunpack.c.l.b16 %v1125
        %v3340 = vunpack.c.h.b16 %v1125
        %v3341 = vunpack.c.l.b16 %v1126
        %v3342 = vunpack.c.h.b16 %v1126
        %v3343 = vunpack.c.l.b16 %v1127
        %v3344 = vunpack.c.h.b16 %v1127
        %v3345 = vunpack.c.l.b16 %v1128
        %v3346 = vunpack.c.h.b16 %v1128
        %v3347 = vunpack.c.l.b16 %v1129
        %v3348 = vunpack.c.h.b16 %v1129
        %v3349 = vunpack.c.l.b16 %v1130
        %v3350 = vunpack.c.h.b16 %v1130
        %v3351 = vunpack.c.l.b16 %v1131
        %v3352 = vunpack.c.h.b16 %v1131
        %v3353 = vunpack.c.l.b16 %v1132
        %v3354 = vunpack.c.h.b16 %v1132
        %v3355 = vunpack.c.l.b16 %v1133
        %v3356 = vunpack.c.h.b16 %v1133
        %v3357 = vunpack.c.l.b16 %v1134
        %v3358 = vunpack.c.h.b16 %v1134
        %v3359 = vunpack.c.l.b16 %v1135
        %v3360 = vunpack.c.h.b16 %v1135
        %v3361 = vunpack.c.l.b16 %v1136
        %v3362 = vunpack.c.h.b16 %v1136
        %v3363 = vunpack.c.l.b16 %v1137
        %v3364 = vunpack.c.h.b16 %v1137
        %v3365 = vunpack.c.l.b16 %v1138
        %v3366 = vunpack.c.h.b16 %v1138
        %v3367 = vunpack.c.l.b16 %v1139
        %v3368 = vunpack.c.h.b16 %v1139
        %v3369 = vunpack.c.l.b16 %v1140
        %v3370 = vunpack.c.h.b16 %v1140
        %v3371 = vunpack.c.l.b16 %v1141
        %v3372 = vunpack.c.h.b16 %v1141
        %v3373 = vunpack.c.l.b16 %v1142
        %v3374 = vunpack.c.h.b16 %v1142
        %v3375 = vunpack.c.l.b16 %v1143
        %v3376 = vunpack.c.h.b16 %v1143
        %v3377 = vunpack.c.l.b16 %v1144
        %v3378 = vunpack.c.h.b16 %v1144
        %v3379 = vunpack.c.l.b16 %v1145
        %v3380 = vunpack.c.h.b16 %v1145
        %v3381 = vunpack.c.l.b16 %v1146
        %v3382 = vunpack.c.h.b16 %v1146
        %v3383 = vunpack.c.l.b16 %v1147
        %v3384 = vunpack.c.h.b16 %v1147
        %v3385 = vunpack.c.l.b16 %v1148
        %v3386 = vunpack.c.h.b16 %v1148
        %v3387 = vunpack.c.l.b16 %v1149
        %v3388 = vunpack.c.h.b16 %v1149
        %v3389 = vunpack.c.l.b16 %v1150
        %v3390 = vunpack.c.h.b16 %v1150
        %v3391 = vunpack.c.l.b16 %v1151
        %v3392 = vunpack.c.h.b16 %v1151
        %v3393 = vunpack.c.l.b16 %v1152
        %v3394 = vunpack.c.h.b16 %v1152
        %v3395 = vunpack.c.l.b16 %v1153
        %v3396 = vunpack.c.h.b16 %v1153
        %v3397 = vunpack.c.l.b16 %v1154
        %v3398 = vunpack.c.h.b16 %v1154
        %v3399 = vunpack.c.l.b16 %v1155
        %v3400 = vunpack.c.h.b16 %v1155
        %v3401 = vunpack.c.l.b16 %v1156
        %v3402 = vunpack.c.h.b16 %v1156
        %v3403 = vunpack.c.l.b16 %v1157
        %v3404 = vunpack.c.h.b16 %v1157
        %v3405 = vunpack.c.l.b16 %v1158
        %v3406 = vunpack.c.h.b16 %v1158
        %v3407 = vunpack.c.l.b16 %v1159
        %v3408 = vunpack.c.h.b16 %v1159
        %v3409 = vunpack.c.l.b16 %v1160
        %v3410 = vunpack.c.h.b16 %v1160
        %v3411 = vunpack.c.l.b16 %v1161
        %v3412 = vunpack.c.h.b16 %v1161
        %v3413 = vunpack.c.l.b16 %v1162
        %v3414 = vunpack.c.h.b16 %v1162
        %v3415 = vunpack.c.l.b16 %v1163
        %v3416 = vunpack.c.h.b16 %v1163
        %v3417 = vunpack.c.l.b16 %v1164
        %v3418 = vunpack.c.h.b16 %v1164
        %v3419 = vunpack.c.l.b16 %v1165
        %v3420 = vunpack.c.h.b16 %v1165
        %v3421 = vunpack.c.l.b16 %v1166
        %v3422 = vunpack.c.h.b16 %v1166
        %v3423 = vunpack.c.l.b16 %v1167
        %v3424 = vunpack.c.h.b16 %v1167
        %v3425 = vunpack.c.l.b16 %v1168
        %v3426 = vunpack.c.h.b16 %v1168
        %v3427 = vunpack.c.l.b16 %v1169
        %v3428 = vunpack.c.h.b16 %v1169
        %v3429 = vunpack.c.l.b16 %v1170
        %v3430 = vunpack.c.h.b16 %v1170
        %v3431 = vunpack.c.l.b16 %v1171
        %v3432 = vunpack.c.h.b16 %v1171
        %v3433 = vunpack.c.l.b16 %v1172
        %v3434 = vunpack.c.h.b16 %v1172
        %v3435 = vunpack.c.l.b16 %v1173
        %v3436 = vunpack.c.h.b16 %v1173
        %v3437 = vunpack.c.l.b16 %v1174
        %v3438 = vunpack.c.h.b16 %v1174
        %v3439 = vunpack.c.l.b16 %v1175
        %v3440 = vunpack.c.h.b16 %v1175
        %v3441 = vunpack.c.l.b16 %v1176
        %v3442 = vunpack.c.h.b16 %v1176
        %v3443 = vunpack.c.l.b16 %v1177
        %v3444 = vunpack.c.h.b16 %v1177
        %v3445 = vunpack.c.l.b16 %v1178
        %v3446 = vunpack.c.h.b16 %v1178
        %v3447 = vunpack.c.l.b16 %v1179
        %v3448 = vunpack.c.h.b16 %v1179
        %v3449 = vunpack.c.l.b16 %v1180
        %v3450 = vunpack.c.h.b16 %v1180
        %v3451 = vunpack.c.l.b16 %v1181
        %v3452 = vunpack.c.h.b16 %v1181
        %v3453 = vunpack.c.l.b16 %v1182
        %v3454 = vunpack.c.h.b16 %v1182
        %v3455 = vunpack.c.l.b16 %v1183
        %v3456 = vunpack.c.h.b16 %v1183
        %v3457 = vunpack.c.l.b16 %v1184
        %v3458 = vunpack.c.h.b16 %v1184
        %v3459 = vunpack.c.l.b16 %v1185
        %v3460 = vunpack.c.h.b16 %v1185
        %v3461 = vunpack.c.l.b16 %v1186
        %v3462 = vunpack.c.h.b16 %v1186
        %v3463 = vunpack.c.l.b16 %v1187
        %v3464 = vunpack.c.h.b16 %v1187
        %v3465 = vunpack.c.l.b16 %v1188
        %v3466 = vunpack.c.h.b16 %v1188
        %v3467 = vunpack.c.l.b16 %v1189
        %v3468 = vunpack.c.h.b16 %v1189
        %v3469 = vunpack.c.l.b16 %v1190
        %v3470 = vunpack.c.h.b16 %v1190
        %v3471 = vunpack.c.l.b16 %v1191
        %v3472 = vunpack.c.h.b16 %v1191
        %v3473 = vunpack.c.l.b16 %v1192
        %v3474 = vunpack.c.h.b16 %v1192
        %v3475 = vunpack.c.l.b16 %v1193
        %v3476 = vunpack.c.h.b16 %v1193
        %v3477 = vunpack.c.l.b16 %v1194
        %v3478 = vunpack.c.h.b16 %v1194
        %v3479 = vunpack.c.l.b16 %v1195
        %v3480 = vunpack.c.h.b16 %v1195
        %v3481 = vunpack.c.l.b16 %v1196
        %v3482 = vunpack.c.h.b16 %v1196
        %v3483 = vunpack.c.l.b16 %v1197
        %v3484 = vunpack.c.h.b16 %v1197
        %v3485 = vunpack.c.l.b16 %v1198
        %v3486 = vunpack.c.h.b16 %v1198
        %v3487 = vunpack.c.l.b16 %v1199
        %v3488 = vunpack.c.h.b16 %v1199
        %v3489 = vunpack.c.l.b16 %v1200
        %v3490 = vunpack.c.h.b16 %v1200
        %v3491 = vunpack.c.l.b16 %v1201
        %v3492 = vunpack.c.h.b16 %v1201
        %v3493 = vunpack.c.l.b16 %v1202
        %v3494 = vunpack.c.h.b16 %v1202
        %v3495 = vunpack.c.l.b16 %v1203
        %v3496 = vunpack.c.h.b16 %v1203
        %v3497 = vunpack.c.l.b16 %v1204
        %v3498 = vunpack.c.h.b16 %v1204
        %v3499 = vunpack.c.l.b16 %v1205
        %v3500 = vunpack.c.h.b16 %v1205
        %v3501 = vunpack.c.l.b16 %v1206
        %v3502 = vunpack.c.h.b16 %v1206
        %v3503 = vunpack.c.l.b16 %v1207
        %v3504 = vunpack.c.h.b16 %v1207
        %v3505 = vunpack.c.l.b16 %v1208
        %v3506 = vunpack.c.h.b16 %v1208
        %v3507 = vunpack.c.l.b16 %v1209
        %v3508 = vunpack.c.h.b16 %v1209
        %v3509 = vunpack.c.l.b16 %v1210
        %v3510 = vunpack.c.h.b16 %v1210
        %v3511 = vunpack.c.l.b16 %v1211
        %v3512 = vunpack.c.h.b16 %v1211
        %v3513 = vunpack.c.l.b16 %v1212
        %v3514 = vunpack.c.h.b16 %v1212
        %v3515 = vunpack.c.l.b16 %v1213
        %v3516 = vunpack.c.h.b16 %v1213
        %v3517 = vunpack.c.l.b16 %v1214
        %v3518 = vunpack.c.h.b16 %v1214
        %v3519 = vunpack.c.l.b16 %v1215
        %v3520 = vunpack.c.h.b16 %v1215
        %v3521 = vunpack.c.l.b16 %v1216
        %v3522 = vunpack.c.h.b16 %v1216
        %v3523 = vunpack.c.l.b16 %v1217
        %v3524 = vunpack.c.h.b16 %v1217
        %v3525 = vunpack.c.l.b16 %v1218
        %v3526 = vunpack.c.h.b16 %v1218
        %v3527 = vunpack.c.l.b16 %v1219
        %v3528 = vunpack.c.h.b16 %v1219
        %v3529 = vunpack.c.l.b16 %v1220
        %v3530 = vunpack.c.h.b16 %v1220
        %v3531 = vunpack.c.l.b16 %v1221
        %v3532 = vunpack.c.h.b16 %v1221
        %v3533 = vunpack.c.l.b16 %v1222
        %v3534 = vunpack.c.h.b16 %v1222
        %v3535 = vunpack.c.l.b16 %v1223
        %v3536 = vunpack.c.h.b16 %v1223
        %v3537 = vunpack.c.l.b16 %v1224
        %v3538 = vunpack.c.h.b16 %v1224
        %v3539 = vunpack.c.l.b16 %v1225
        %v3540 = vunpack.c.h.b16 %v1225
        %v3541 = vunpack.c.l.b16 %v1226
        %v3542 = vunpack.c.h.b16 %v1226
        %v3543 = vunpack.c.l.b16 %v1227
        %v3544 = vunpack.c.h.b16 %v1227
        %v3545 = vunpack.c.l.b16 %v1228
        %v3546 = vunpack.c.h.b16 %v1228
        %v3547 = vunpack.c.l.b16 %v1229
        %v3548 = vunpack.c.h.b16 %v1229
        %v3549 = vunpack.c.l.b16 %v1230
        %v3550 = vunpack.c.h.b16 %v1230
        %v3551 = vunpack.c.l.b16 %v1231
        %v3552 = vunpack.c.h.b16 %v1231
        %v3553 = vunpack.c.l.b16 %v1232
        %v3554 = vunpack.c.h.b16 %v1232
        %v3555 = vunpack.c.l.b16 %v1233
        %v3556 = vunpack.c.h.b16 %v1233
        %v3557 = vunpack.c.l.b16 %v1234
        %v3558 = vunpack.c.h.b16 %v1234
        %v3559 = vunpack.c.l.b16 %v1235
        %v3560 = vunpack.c.h.b16 %v1235
        %v3561 = vunpack.c.l.b16 %v1236
        %v3562 = vunpack.c.h.b16 %v1236
        %v3563 = vunpack.c.l.b16 %v1237
        %v3564 = vunpack.c.h.b16 %v1237
        %v3565 = vunpack.c.l.b16 %v1238
        %v3566 = vunpack.c.h.b16 %v1238
        %v3567 = vunpack.c.l.b16 %v1239
        %v3568 = vunpack.c.h.b16 %v1239
        %v3569 = vunpack.c.l.b16 %v1240
        %v3570 = vunpack.c.h.b16 %v1240
        %v3571 = vunpack.c.l.b16 %v1241
        %v3572 = vunpack.c.h.b16 %v1241
        %v3573 = vunpack.c.l.b16 %v1242
        %v3574 = vunpack.c.h.b16 %v1242
        %v3575 = vunpack.c.l.b16 %v1243
        %v3576 = vunpack.c.h.b16 %v1243
        %v3577 = vunpack.c.l.b16 %v1244
        %v3578 = vunpack.c.h.b16 %v1244
        %v3579 = vunpack.c.l.b16 %v1245
        %v3580 = vunpack.c.h.b16 %v1245
        %v3581 = vunpack.c.l.b16 %v1246
        %v3582 = vunpack.c.h.b16 %v1246
        %v3583 = vunpack.c.l.b16 %v1247
        %v3584 = vunpack.c.h.b16 %v1247
        %v3585 = vunpack.c.l.b16 %v1248
        %v3586 = vunpack.c.h.b16 %v1248
        %v3587 = vunpack.c.l.b16 %v1249
        %v3588 = vunpack.c.h.b16 %v1249
        %v3589 = vunpack.c.l.b16 %v1250
        %v3590 = vunpack.c.h.b16 %v1250
        %v3591 = vunpack.c.l.b16 %v1251
        %v3592 = vunpack.c.h.b16 %v1251
        %v3593 = vunpack.c.l.b16 %v1252
        %v3594 = vunpack.c.h.b16 %v1252
        %v3595 = vunpack.c.l.b16 %v1253
        %v3596 = vunpack.c.h.b16 %v1253
        %v3597 = vunpack.c.l.b16 %v1254
        %v3598 = vunpack.c.h.b16 %v1254
        %v3599 = vunpack.c.l.b16 %v1255
        %v3600 = vunpack.c.h.b16 %v1255
        %v3601 = vunpack.c.l.b16 %v1256
        %v3602 = vunpack.c.h.b16 %v1256
        %v3603 = vunpack.c.l.b16 %v1257
        %v3604 = vunpack.c.h.b16 %v1257
        %v3605 = vunpack.c.l.b16 %v1258
        %v3606 = vunpack.c.h.b16 %v1258
        %v3607 = vunpack.c.l.b16 %v1259
        %v3608 = vunpack.c.h.b16 %v1259
        %v3609 = vunpack.c.l.b16 %v1260
        %v3610 = vunpack.c.h.b16 %v1260
        %v3611 = vunpack.c.l.b16 %v1261
        %v3612 = vunpack.c.h.b16 %v1261
        %v3613 = vunpack.c.l.b16 %v1262
        %v3614 = vunpack.c.h.b16 %v1262
        %v3615 = vunpack.c.l.b16 %v1263
        %v3616 = vunpack.c.h.b16 %v1263
        %v3617 = vunpack.c.l.b16 %v1264
        %v3618 = vunpack.c.h.b16 %v1264
        %v3619 = vunpack.c.l.b16 %v1265
        %v3620 = vunpack.c.h.b16 %v1265
        %v3621 = vunpack.c.l.b16 %v1266
        %v3622 = vunpack.c.h.b16 %v1266
        %v3623 = vunpack.c.l.b16 %v1267
        %v3624 = vunpack.c.h.b16 %v1267
        %v3625 = vunpack.c.l.b16 %v1268
        %v3626 = vunpack.c.h.b16 %v1268
        %v3627 = vunpack.c.l.b16 %v1269
        %v3628 = vunpack.c.h.b16 %v1269
        %v3629 = vunpack.c.l.b16 %v1270
        %v3630 = vunpack.c.h.b16 %v1270
        %v3631 = vunpack.c.l.b16 %v1271
        %v3632 = vunpack.c.h.b16 %v1271
        %v3633 = vunpack.c.l.b16 %v1272
        %v3634 = vunpack.c.h.b16 %v1272
        %v3635 = vunpack.c.l.b16 %v1273
        %v3636 = vunpack.c.h.b16 %v1273
        %v3637 = vunpack.c.l.b16 %v1274
        %v3638 = vunpack.c.h.b16 %v1274
        %v3639 = vunpack.c.l.b16 %v1275
        %v3640 = vunpack.c.h.b16 %v1275
        %v3641 = vunpack.c.l.b16 %v1276
        %v3642 = vunpack.c.h.b16 %v1276
        %v3643 = vunpack.c.l.b16 %v1277
        %v3644 = vunpack.c.h.b16 %v1277
        %v3645 = vunpack.c.l.b16 %v1278
        %v3646 = vunpack.c.h.b16 %v1278
        %v3647 = vunpack.c.l.b16 %v1279
        %v3648 = vunpack.c.h.b16 %v1279
        %v3649 = vunpack.c.l.b16 %v1280
        %v3650 = vunpack.c.h.b16 %v1280
        %v3651 = vunpack.c.l.b16 %v1281
        %v3652 = vunpack.c.h.b16 %v1281
        %v3653 = vunpack.c.l.b16 %v1282
        %v3654 = vunpack.c.h.b16 %v1282
        %v3655 = vunpack.c.l.b16 %v1283
        %v3656 = vunpack.c.h.b16 %v1283
        %v3657 = vunpack.c.l.b16 %v1284
        %v3658 = vunpack.c.h.b16 %v1284
        %v3659 = vpack.c.b16 %v2095, %v2091
        %v3660 = vpack.c.b16 %v2096, %v2092
        %v3661 = vpack.c.b16 %v2097, %v2093
        %v3662 = vpack.c.b16 %v2098, %v2094
        %v3663 = vpack.c.b16 %v2103, %v2099
        %v3664 = vpack.c.b16 %v2104, %v2100
        %v3665 = vpack.c.b16 %v2105, %v2101
        %v3666 = vpack.c.b16 %v2106, %v2102
        %v3667 = vpack.c.b16 %v2111, %v2107
        %v3668 = vpack.c.b16 %v2112, %v2108
        %v3669 = vpack.c.b16 %v2113, %v2109
        %v3670 = vpack.c.b16 %v2114, %v2110
        %v3671 = vpack.c.b16 %v2119, %v2115
        %v3672 = vpack.c.b16 %v2120, %v2116
        %v3673 = vpack.c.b16 %v2121, %v2117
        %v3674 = vpack.c.b16 %v2122, %v2118
        %v3675 = vpack.c.b16 %v2127, %v2123
        %v3676 = vpack.c.b16 %v2128, %v2124
        %v3677 = vpack.c.b16 %v2129, %v2125
        %v3678 = vpack.c.b16 %v2130, %v2126
        %v3679 = vpack.c.b16 %v2135, %v2131
        %v3680 = vpack.c.b16 %v2136, %v2132
        %v3681 = vpack.c.b16 %v2137, %v2133
        %v3682 = vpack.c.b16 %v2138, %v2134
        %v3683 = vpack.c.b16 %v2143, %v2139
        %v3684 = vpack.c.b16 %v2144, %v2140
        %v3685 = vpack.c.b16 %v2145, %v2141
        %v3686 = vpack.c.b16 %v2146, %v2142
        %v3687 = vpack.c.b16 %v2151, %v2147
        %v3688 = vpack.c.b16 %v2152, %v2148
        %v3689 = vpack.c.b16 %v2153, %v2149
        %v3690 = vpack.c.b16 %v2154, %v2150
        %v3691 = vpack.c.b16 %v2159, %v2155
        %v3692 = vpack.c.b16 %v2160, %v2156
        %v3693 = vpack.c.b16 %v2161, %v2157
        %v3694 = vpack.c.b16 %v2162, %v2158
        %v3695 = vpack.c.b16 %v2167, %v2163
        %v3696 = vpack.c.b16 %v2168, %v2164
        %v3697 = vpack.c.b16 %v2169, %v2165
        %v3698 = vpack.c.b16 %v2170, %v2166
        %v3699 = vpack.c.b16 %v2175, %v2171
        %v3700 = vpack.c.b16 %v2176, %v2172
        %v3701 = vpack.c.b16 %v2177, %v2173
        %v3702 = vpack.c.b16 %v2178, %v2174
        %v3703 = vpack.c.b16 %v2183, %v2179
        %v3704 = vpack.c.b16 %v2184, %v2180
        %v3705 = vpack.c.b16 %v2185, %v2181
        %v3706 = vpack.c.b16 %v2186, %v2182
        %v3707 = vpack.c.b16 %v2191, %v2187
        %v3708 = vpack.c.b16 %v2192, %v2188
        %v3709 = vpack.c.b16 %v2193, %v2189
        %v3710 = vpack.c.b16 %v2194, %v2190
        %v3711 = vpack.c.b16 %v2199, %v2195
        %v3712 = vpack.c.b16 %v2200, %v2196
        %v3713 = vpack.c.b16 %v2201, %v2197
        %v3714 = vpack.c.b16 %v2202, %v2198
        %v3715 = vpack.c.b16 %v2207, %v2203
        %v3716 = vpack.c.b16 %v2208, %v2204
        %v3717 = vpack.c.b16 %v2209, %v2205
        %v3718 = vpack.c.b16 %v2210, %v2206
        %v3719 = vpack.c.b16 %v2215, %v2211
        %v3720 = vpack.c.b16 %v2216, %v2212
        %v3721 = vpack.c.b16 %v2217, %v2213
        %v3722 = vpack.c.b16 %v2218, %v2214
        %v3723 = vpack.c.b16 %v2223, %v2219
        %v3724 = vpack.c.b16 %v2224, %v2220
        %v3725 = vpack.c.b16 %v2225, %v2221
        %v3726 = vpack.c.b16 %v2226, %v2222
        %v3727 = vpack.c.b16 %v2231, %v2227
        %v3728 = vpack.c.b16 %v2232, %v2228
        %v3729 = vpack.c.b16 %v2233, %v2229
        %v3730 = vpack.c.b16 %v2234, %v2230
        %v3731 = vpack.c.b16 %v2239, %v2235
        %v3732 = vpack.c.b16 %v2240, %v2236
        %v3733 = vpack.c.b16 %v2241, %v2237
        %v3734 = vpack.c.b16 %v2242, %v2238
        %v3735 = vpack.c.b16 %v2247, %v2243
        %v3736 = vpack.c.b16 %v2248, %v2244
        %v3737 = vpack.c.b16 %v2249, %v2245
        %v3738 = vpack.c.b16 %v2250, %v2246
        %v3739 = vpack.c.b16 %v2255, %v2251
        %v3740 = vpack.c.b16 %v2256, %v2252
        %v3741 = vpack.c.b16 %v2257, %v2253
        %v3742 = vpack.c.b16 %v2258, %v2254
        %v3743 = vpack.c.b16 %v2263, %v2259
        %v3744 = vpack.c.b16 %v2264, %v2260
        %v3745 = vpack.c.b16 %v2265, %v2261
        %v3746 = vpack.c.b16 %v2266, %v2262
        %v3747 = vpack.c.b16 %v2271, %v2267
        %v3748 = vpack.c.b16 %v2272, %v2268
        %v3749 = vpack.c.b16 %v2273, %v2269
        %v3750 = vpack.c.b16 %v2274, %v2270
        %v3751 = vpack.c.b16 %v2279, %v2275
        %v3752 = vpack.c.b16 %v2280, %v2276
        %v3753 = vpack.c.b16 %v2281, %v2277
        %v3754 = vpack.c.b16 %v2282, %v2278
        %v3755 = vpack.c.b16 %v2287, %v2283
        %v3756 = vpack.c.b16 %v2288, %v2284
        %v3757 = vpack.c.b16 %v2289, %v2285
        %v3758 = vpack.c.b16 %v2290, %v2286
        %v3759 = vpack.c.b16 %v2295, %v2291
        %v3760 = vpack.c.b16 %v2296, %v2292
        %v3761 = vpack.c.b16 %v2297, %v2293
        %v3762 = vpack.c.b16 %v2298, %v2294
        %v3763 = vpack.c.b16 %v2303, %v2299
        %v3764 = vpack.c.b16 %v2304, %v2300
        %v3765 = vpack.c.b16 %v2305, %v2301
        %v3766 = vpack.c.b16 %v2306, %v2302
        %v3767 = vpack.c.b16 %v2311, %v2307
        %v3768 = vpack.c.b16 %v2312, %v2308
        %v3769 = vpack.c.b16 %v2313, %v2309
        %v3770 = vpack.c.b16 %v2314, %v2310
        %v3771 = vpack.c.b16 %v2319, %v2315
        %v3772 = vpack.c.b16 %v2320, %v2316
        %v3773 = vpack.c.b16 %v2321, %v2317
        %v3774 = vpack.c.b16 %v2322, %v2318
        %v3775 = vpack.c.b16 %v2327, %v2323
        %v3776 = vpack.c.b16 %v2328, %v2324
        %v3777 = vpack.c.b16 %v2329, %v2325
        %v3778 = vpack.c.b16 %v2330, %v2326
        %v3779 = vpack.c.b16 %v2335, %v2331
        %v3780 = vpack.c.b16 %v2336, %v2332
        %v3781 = vpack.c.b16 %v2337, %v2333
        %v3782 = vpack.c.b16 %v2338, %v2334
        %v3783 = vpack.c.b16 %v2343, %v2339
        %v3784 = vpack.c.b16 %v2344, %v2340
        %v3785 = vpack.c.b16 %v2345, %v2341
        %v3786 = vpack.c.b16 %v2346, %v2342
        %v3787 = vpack.c.b16 %v2351, %v2347
        %v3788 = vpack.c.b16 %v2352, %v2348
        %v3789 = vpack.c.b16 %v2353, %v2349
        %v3790 = vpack.c.b16 %v2354, %v2350
        %v3791 = vpack.c.b16 %v2359, %v2355
        %v3792 = vpack.c.b16 %v2360, %v2356
        %v3793 = vpack.c.b16 %v2361, %v2357
        %v3794 = vpack.c.b16 %v2362, %v2358
        %v3795 = vpack.c.b16 %v2367, %v2363
        %v3796 = vpack.c.b16 %v2368, %v2364
        %v3797 = vpack.c.b16 %v2369, %v2365
        %v3798 = vpack.c.b16 %v2370, %v2366
        %v3799 = vpack.c.b16 %v2375, %v2371
        %v3800 = vpack.c.b16 %v2376, %v2372
        %v3801 = vpack.c.b16 %v2377, %v2373
        %v3802 = vpack.c.b16 %v2378, %v2374
        %v3803 = vpack.c.b16 %v2383, %v2379
        %v3804 = vpack.c.b16 %v2384, %v2380
        %v3805 = vpack.c.b16 %v2385, %v2381
        %v3806 = vpack.c.b16 %v2386, %v2382
        %v3807 = vpack.c.b16 %v2391, %v2387
        %v3808 = vpack.c.b16 %v2392, %v2388
        %v3809 = vpack.c.b16 %v2393, %v2389
        %v3810 = vpack.c.b16 %v2394, %v2390
        %v3811 = vpack.c.b16 %v2399, %v2395
        %v3812 = vpack.c.b16 %v2400, %v2396
        %v3813 = vpack.c.b16 %v2401, %v2397
        %v3814 = vpack.c.b16 %v2402, %v2398
        %v3815 = vpack.c.b16 %v2407, %v2403
        %v3816 = vpack.c.b16 %v2408, %v2404
        %v3817 = vpack.c.b16 %v2409, %v2405
        %v3818 = vpack.c.b16 %v2410, %v2406
        %v3819 = vpack.c.b16 %v2415, %v2411
        %v3820 = vpack.c.b16 %v2416, %v2412
        %v3821 = vpack.c.b16 %v2417, %v2413
        %v3822 = vpack.c.b16 %v2418, %v2414
        %v3823 = vpack.c.b16 %v2423, %v2419
        %v3824 = vpack.c.b16 %v2424, %v2420
        %v3825 = vpack.c.b16 %v2425, %v2421
        %v3826 = vpack.c.b16 %v2426, %v2422
        %v3827 = vpack.c.b16 %v2431, %v2427
        %v3828 = vpack.c.b16 %v2432, %v2428
        %v3829 = vpack.c.b16 %v2433, %v2429
        %v3830 = vpack.c.b16 %v2434, %v2430
        %v3831 = vpack.c.b16 %v2439, %v2435
        %v3832 = vpack.c.b16 %v2440, %v2436
        %v3833 = vpack.c.b16 %v2441, %v2437
        %v3834 = vpack.c.b16 %v2442, %v2438
        %v3835 = vpack.c.b16 %v2447, %v2443
        %v3836 = vpack.c.b16 %v2448, %v2444
        %v3837 = vpack.c.b16 %v2449, %v2445
        %v3838 = vpack.c.b16 %v2450, %v2446
        %v3839 = vpack.c.b16 %v2455, %v2451
        %v3840 = vpack.c.b16 %v2456, %v2452
        %v3841 = vpack.c.b16 %v2457, %v2453
        %v3842 = vpack.c.b16 %v2458, %v2454
        %v3843 = vpack.c.b16 %v2463, %v2459
        %v3844 = vpack.c.b16 %v2464, %v2460
        %v3845 = vpack.c.b16 %v2465, %v2461
        %v3846 = vpack.c.b16 %v2466, %v2462
        %v3847 = vpack.c.b16 %v2471, %v2467
        %v3848 = vpack.c.b16 %v2472, %v2468
        %v3849 = vpack.c.b16 %v2473, %v2469
        %v3850 = vpack.c.b16 %v2474, %v2470
        %v3851 = vpack.c.b16 %v2479, %v2475
        %v3852 = vpack.c.b16 %v2480, %v2476
        %v3853 = vpack.c.b16 %v2481, %v2477
        %v3854 = vpack.c.b16 %v2482, %v2478
        %v3855 = vpack.c.b16 %v2487, %v2483
        %v3856 = vpack.c.b16 %v2488, %v2484
        %v3857 = vpack.c.b16 %v2489, %v2485
        %v3858 = vpack.c.b16 %v2490, %v2486
        %v3859 = vpack.c.b16 %v2495, %v2491
        %v3860 = vpack.c.b16 %v2496, %v2492
        %v3861 = vpack.c.b16 %v2497, %v2493
        %v3862 = vpack.c.b16 %v2498, %v2494
        %v3863 = vpack.c.b16 %v2503, %v2499
        %v3864 = vpack.c.b16 %v2504, %v2500
        %v3865 = vpack.c.b16 %v2505, %v2501
        %v3866 = vpack.c.b16 %v2506, %v2502
        %v3867 = vpack.c.b16 %v2511, %v2507
        %v3868 = vpack.c.b16 %v2512, %v2508
        %v3869 = vpack.c.b16 %v2513, %v2509
        %v3870 = vpack.c.b16 %v2514, %v2510
        %v3871 = vpack.c.b16 %v2519, %v2515
        %v3872 = vpack.c.b16 %v2520, %v2516
        %v3873 = vpack.c.b16 %v2521, %v2517
        %v3874 = vpack.c.b16 %v2522, %v2518
        %v3875 = vpack.c.b16 %v2527, %v2523
        %v3876 = vpack.c.b16 %v2528, %v2524
        %v3877 = vpack.c.b16 %v2529, %v2525
        %v3878 = vpack.c.b16 %v2530, %v2526
        %v3879 = vpack.c.b16 %v2535, %v2531
        %v3880 = vpack.c.b16 %v2536, %v2532
        %v3881 = vpack.c.b16 %v2537, %v2533
        %v3882 = vpack.c.b16 %v2538, %v2534
        %v3883 = vpack.c.b16 %v2543, %v2539
        %v3884 = vpack.c.b16 %v2544, %v2540
        %v3885 = vpack.c.b16 %v2545, %v2541
        %v3886 = vpack.c.b16 %v2546, %v2542
        %v3887 = vpack.c.b16 %v2551, %v2547
        %v3888 = vpack.c.b16 %v2552, %v2548
        %v3889 = vpack.c.b16 %v2553, %v2549
        %v3890 = vpack.c.b16 %v2554, %v2550
        %v3891 = vpack.c.b16 %v2559, %v2555
        %v3892 = vpack.c.b16 %v2560, %v2556
        %v3893 = vpack.c.b16 %v2561, %v2557
        %v3894 = vpack.c.b16 %v2562, %v2558
        %v3895 = vpack.c.b16 %v2567, %v2563
        %v3896 = vpack.c.b16 %v2568, %v2564
        %v3897 = vpack.c.b16 %v2569, %v2565
        %v3898 = vpack.c.b16 %v2570, %v2566
        %v3899 = vpack.c.b16 %v2575, %v2571
        %v3900 = vpack.c.b16 %v2576, %v2572
        %v3901 = vpack.c.b16 %v2577, %v2573
        %v3902 = vpack.c.b16 %v2578, %v2574
        %v3903 = vpack.c.b16 %v2583, %v2579
        %v3904 = vpack.c.b16 %v2584, %v2580
        %v3905 = vpack.c.b16 %v2585, %v2581
        %v3906 = vpack.c.b16 %v2586, %v2582
        %v3907 = vpack.c.b16 %v2591, %v2587
        %v3908 = vpack.c.b16 %v2592, %v2588
        %v3909 = vpack.c.b16 %v2593, %v2589
        %v3910 = vpack.c.b16 %v2594, %v2590
        %v3911 = vpack.c.b16 %v2599, %v2595
        %v3912 = vpack.c.b16 %v2600, %v2596
        %v3913 = vpack.c.b16 %v2601, %v2597
        %v3914 = vpack.c.b16 %v2602, %v2598
        %v3915 = vpack.c.b16 %v2607, %v2603
        %v3916 = vpack.c.b16 %v2608, %v2604
        %v3917 = vpack.c.b16 %v2609, %v2605
        %v3918 = vpack.c.b16 %v2610, %v2606
        %v3919 = vpack.c.b16 %v2615, %v2611
        %v3920 = vpack.c.b16 %v2616, %v2612
        %v3921 = vpack.c.b16 %v2617, %v2613
        %v3922 = vpack.c.b16 %v2618, %v2614
        %v3923 = vpack.c.b16 %v2623, %v2619
        %v3924 = vpack.c.b16 %v2624, %v2620
        %v3925 = vpack.c.b16 %v2625, %v2621
        %v3926 = vpack.c.b16 %v2626, %v2622
        %v3927 = vpack.c.b16 %v2631, %v2627
        %v3928 = vpack.c.b16 %v2632, %v2628
        %v3929 = vpack.c.b16 %v2633, %v2629
        %v3930 = vpack.c.b16 %v2634, %v2630
        %v3931 = vpack.c.b16 %v2639, %v2635
        %v3932 = vpack.c.b16 %v2640, %v2636
        %v3933 = vpack.c.b16 %v2641, %v2637
        %v3934 = vpack.c.b16 %v2642, %v2638
        %v3935 = vpack.c.b16 %v2647, %v2643
        %v3936 = vpack.c.b16 %v2648, %v2644
        %v3937 = vpack.c.b16 %v2649, %v2645
        %v3938 = vpack.c.b16 %v2650, %v2646
        %v3939 = vpack.c.b16 %v2655, %v2651
        %v3940 = vpack.c.b16 %v2656, %v2652
        %v3941 = vpack.c.b16 %v2657, %v2653
        %v3942 = vpack.c.b16 %v2658, %v2654
        %v3943 = vpack.c.b16 %v2663, %v2659
        %v3944 = vpack.c.b16 %v2664, %v2660
        %v3945 = vpack.c.b16 %v2665, %v2661
        %v3946 = vpack.c.b16 %v2666, %v2662
        %v3947 = vpack.c.b16 %v2671, %v2667
        %v3948 = vpack.c.b16 %v2672, %v2668
        %v3949 = vpack.c.b16 %v2673, %v2669
        %v3950 = vpack.c.b16 %v2674, %v2670
        %v3951 = vpack.c.b16 %v2679, %v2675
        %v3952 = vpack.c.b16 %v2680, %v2676
        %v3953 = vpack.c.b16 %v2681, %v2677
        %v3954 = vpack.c.b16 %v2682, %v2678
        %v3955 = vpack.c.b16 %v2687, %v2683
        %v3956 = vpack.c.b16 %v2688, %v2684
        %v3957 = vpack.c.b16 %v2689, %v2685
        %v3958 = vpack.c.b16 %v2690, %v2686
        %v3959 = vpack.c.b16 %v2695, %v2691
        %v3960 = vpack.c.b16 %v2696, %v2692
        %v3961 = vpack.c.b16 %v2697, %v2693
        %v3962 = vpack.c.b16 %v2698, %v2694
        %v3963 = vpack.c.b16 %v2703, %v2699
        %v3964 = vpack.c.b16 %v2704, %v2700
        %v3965 = vpack.c.b16 %v2705, %v2701
        %v3966 = vpack.c.b16 %v2706, %v2702
        %v3967 = vpack.c.b16 %v2711, %v2707
        %v3968 = vpack.c.b16 %v2712, %v2708
        %v3969 = vpack.c.b16 %v2713, %v2709
        %v3970 = vpack.c.b16 %v2714, %v2710
        %v3971 = vpack.c.b16 %v2719, %v2715
        %v3972 = vpack.c.b16 %v2720, %v2716
        %v3973 = vpack.c.b16 %v2721, %v2717
        %v3974 = vpack.c.b16 %v2722, %v2718
        %v3975 = vpack.c.b16 %v2727, %v2723
        %v3976 = vpack.c.b16 %v2728, %v2724
        %v3977 = vpack.c.b16 %v2729, %v2725
        %v3978 = vpack.c.b16 %v2730, %v2726
        %v3979 = vpack.c.b16 %v2735, %v2731
        %v3980 = vpack.c.b16 %v2736, %v2732
        %v3981 = vpack.c.b16 %v2737, %v2733
        %v3982 = vpack.c.b16 %v2738, %v2734
        %v3983 = vpack.c.b16 %v2743, %v2739
        %v3984 = vpack.c.b16 %v2744, %v2740
        %v3985 = vpack.c.b16 %v2745, %v2741
        %v3986 = vpack.c.b16 %v2746, %v2742
        %v3987 = vpack.c.b16 %v2751, %v2747
        %v3988 = vpack.c.b16 %v2752, %v2748
        %v3989 = vpack.c.b16 %v2753, %v2749
        %v3990 = vpack.c.b16 %v2754, %v2750
        %v3991 = vpack.c.b16 %v2759, %v2755
        %v3992 = vpack.c.b16 %v2760, %v2756
        %v3993 = vpack.c.b16 %v2761, %v2757
        %v3994 = vpack.c.b16 %v2762, %v2758
        %v3995 = vpack.c.b16 %v2767, %v2763
        %v3996 = vpack.c.b16 %v2768, %v2764
        %v3997 = vpack.c.b16 %v2769, %v2765
        %v3998 = vpack.c.b16 %v2770, %v2766
        %v3999 = vpack.c.b16 %v2775, %v2771
        %v4000 = vpack.c.b16 %v2776, %v2772
        %v4001 = vpack.c.b16 %v2777, %v2773
        %v4002 = vpack.c.b16 %v2778, %v2774
        %v4003 = vpack.c.b16 %v2783, %v2779
        %v4004 = vpack.c.b16 %v2784, %v2780
        %v4005 = vpack.c.b16 %v2785, %v2781
        %v4006 = vpack.c.b16 %v2786, %v2782
        %v4007 = vpack.c.b16 %v2791, %v2787
        %v4008 = vpack.c.b16 %v2792, %v2788
        %v4009 = vpack.c.b16 %v2793, %v2789
        %v4010 = vpack.c.b16 %v2794, %v2790
        %v4011 = vpack.c.b16 %v2799, %v2795
        %v4012 = vpack.c.b16 %v2800, %v2796
        %v4013 = vpack.c.b16 %v2801, %v2797
        %v4014 = vpack.c.b16 %v2802, %v2798
        %v4015 = vpack.c.b16 %v2807, %v2803
        %v4016 = vpack.c.b16 %v2808, %v2804
        %v4017 = vpack.c.b16 %v2809, %v2805
        %v4018 = vpack.c.b16 %v2810, %v2806
        %v4019 = vpack.c.b16 %v2815, %v2811
        %v4020 = vpack.c.b16 %v2816, %v2812
        %v4021 = vpack.c.b16 %v2817, %v2813
        %v4022 = vpack.c.b16 %v2818, %v2814
        %v4023 = vpack.c.b16 %v2823, %v2819
        %v4024 = vpack.c.b16 %v2824, %v2820
        %v4025 = vpack.c.b16 %v2825, %v2821
        %v4026 = vpack.c.b16 %v2826, %v2822
        %v4027 = vpack.c.b16 %v2831, %v2827
        %v4028 = vpack.c.b16 %v2832, %v2828
        %v4029 = vpack.c.b16 %v2833, %v2829
        %v4030 = vpack.c.b16 %v2834, %v2830
        %v4031 = vpack.c.b16 %v2839, %v2835
        %v4032 = vpack.c.b16 %v2840, %v2836
        %v4033 = vpack.c.b16 %v2841, %v2837
        %v4034 = vpack.c.b16 %v2842, %v2838
        %v4035 = vpack.c.b16 %v2847, %v2843
        %v4036 = vpack.c.b16 %v2848, %v2844
        %v4037 = vpack.c.b16 %v2849, %v2845
        %v4038 = vpack.c.b16 %v2850, %v2846
        %v4039 = vpack.c.b16 %v2855, %v2851
        %v4040 = vpack.c.b16 %v2856, %v2852
        %v4041 = vpack.c.b16 %v2857, %v2853
        %v4042 = vpack.c.b16 %v2858, %v2854
        %v4043 = vpack.c.b16 %v2863, %v2859
        %v4044 = vpack.c.b16 %v2864, %v2860
        %v4045 = vpack.c.b16 %v2865, %v2861
        %v4046 = vpack.c.b16 %v2866, %v2862
        %v4047 = vpack.c.b16 %v2871, %v2867
        %v4048 = vpack.c.b16 %v2872, %v2868
        %v4049 = vpack.c.b16 %v2873, %v2869
        %v4050 = vpack.c.b16 %v2874, %v2870
        %v4051 = vpack.c.b16 %v2879, %v2875
        %v4052 = vpack.c.b16 %v2880, %v2876
        %v4053 = vpack.c.b16 %v2881, %v2877
        %v4054 = vpack.c.b16 %v2882, %v2878
        %v4055 = vpack.c.b16 %v2887, %v2883
        %v4056 = vpack.c.b16 %v2888, %v2884
        %v4057 = vpack.c.b16 %v2889, %v2885
        %v4058 = vpack.c.b16 %v2890, %v2886
        %v4059 = vpack.c.b16 %v2895, %v2891
        %v4060 = vpack.c.b16 %v2896, %v2892
        %v4061 = vpack.c.b16 %v2897, %v2893
        %v4062 = vpack.c.b16 %v2898, %v2894
        %v4063 = vpack.c.b16 %v2903, %v2899
        %v4064 = vpack.c.b16 %v2904, %v2900
        %v4065 = vpack.c.b16 %v2905, %v2901
        %v4066 = vpack.c.b16 %v2906, %v2902
        %v4067 = vpack.c.b16 %v2911, %v2907
        %v4068 = vpack.c.b16 %v2912, %v2908
        %v4069 = vpack.c.b16 %v2913, %v2909
        %v4070 = vpack.c.b16 %v2914, %v2910
        %v4071 = vpack.c.b16 %v2919, %v2915
        %v4072 = vpack.c.b16 %v2920, %v2916
        %v4073 = vpack.c.b16 %v2921, %v2917
        %v4074 = vpack.c.b16 %v2922, %v2918
        %v4075 = vpack.c.b16 %v2927, %v2923
        %v4076 = vpack.c.b16 %v2928, %v2924
        %v4077 = vpack.c.b16 %v2929, %v2925
        %v4078 = vpack.c.b16 %v2930, %v2926
        %v4079 = vpack.c.b16 %v2935, %v2931
        %v4080 = vpack.c.b16 %v2936, %v2932
        %v4081 = vpack.c.b16 %v2937, %v2933
        %v4082 = vpack.c.b16 %v2938, %v2934
        %v4083 = vpack.c.b16 %v2943, %v2939
        %v4084 = vpack.c.b16 %v2944, %v2940
        %v4085 = vpack.c.b16 %v2945, %v2941
        %v4086 = vpack.c.b16 %v2946, %v2942
        %v4087 = vpack.c.b16 %v2951, %v2947
        %v4088 = vpack.c.b16 %v2952, %v2948
        %v4089 = vpack.c.b16 %v2953, %v2949
        %v4090 = vpack.c.b16 %v2954, %v2950
        %v4091 = vpack.c.b16 %v2959, %v2955
        %v4092 = vpack.c.b16 %v2960, %v2956
        %v4093 = vpack.c.b16 %v2961, %v2957
        %v4094 = vpack.c.b16 %v2962, %v2958
        %v4095 = vpack.c.b16 %v2967, %v2963
        %v4096 = vpack.c.b16 %v2968, %v2964
        %v4097 = vpack.c.b16 %v2969, %v2965
        %v4098 = vpack.c.b16 %v2970, %v2966
        %v4099 = vpack.c.b16 %v2975, %v2971
        %v4100 = vpack.c.b16 %v2976, %v2972
        %v4101 = vpack.c.b16 %v2977, %v2973
        %v4102 = vpack.c.b16 %v2978, %v2974
        %v4103 = vpack.c.b16 %v2983, %v2979
        %v4104 = vpack.c.b16 %v2984, %v2980
        %v4105 = vpack.c.b16 %v2985, %v2981
        %v4106 = vpack.c.b16 %v2986, %v2982
        %v4107 = vpack.c.b16 %v2991, %v2987
        %v4108 = vpack.c.b16 %v2992, %v2988
        %v4109 = vpack.c.b16 %v2993, %v2989
        %v4110 = vpack.c.b16 %v2994, %v2990
        %v4111 = vpack.c.b16 %v2999, %v2995
        %v4112 = vpack.c.b16 %v3000, %v2996
        %v4113 = vpack.c.b16 %v3001, %v2997
        %v4114 = vpack.c.b16 %v3002, %v2998
        %v4115 = vpack.c.b16 %v3007, %v3003
        %v4116 = vpack.c.b16 %v3008, %v3004
        %v4117 = vpack.c.b16 %v3009, %v3005
        %v4118 = vpack.c.b16 %v3010, %v3006
        %v4119 = vpack.c.b16 %v3015, %v3011
        %v4120 = vpack.c.b16 %v3016, %v3012
        %v4121 = vpack.c.b16 %v3017, %v3013
        %v4122 = vpack.c.b16 %v3018, %v3014
        %v4123 = vpack.c.b16 %v3023, %v3019
        %v4124 = vpack.c.b16 %v3024, %v3020
        %v4125 = vpack.c.b16 %v3025, %v3021
        %v4126 = vpack.c.b16 %v3026, %v3022
        %v4127 = vpack.c.b16 %v3031, %v3027
        %v4128 = vpack.c.b16 %v3032, %v3028
        %v4129 = vpack.c.b16 %v3033, %v3029
        %v4130 = vpack.c.b16 %v3034, %v3030
        %v4131 = vpack.c.b16 %v3039, %v3035
        %v4132 = vpack.c.b16 %v3040, %v3036
        %v4133 = vpack.c.b16 %v3041, %v3037
        %v4134 = vpack.c.b16 %v3042, %v3038
        %v4135 = vpack.c.b16 %v3047, %v3043
        %v4136 = vpack.c.b16 %v3048, %v3044
        %v4137 = vpack.c.b16 %v3049, %v3045
        %v4138 = vpack.c.b16 %v3050, %v3046
        %v4139 = vpack.c.b16 %v3055, %v3051
        %v4140 = vpack.c.b16 %v3056, %v3052
        %v4141 = vpack.c.b16 %v3057, %v3053
        %v4142 = vpack.c.b16 %v3058, %v3054
        %v4143 = vpack.c.b16 %v3063, %v3059
        %v4144 = vpack.c.b16 %v3064, %v3060
        %v4145 = vpack.c.b16 %v3065, %v3061
        %v4146 = vpack.c.b16 %v3066, %v3062
        %v4147 = vpack.c.b16 %v3071, %v3067
        %v4148 = vpack.c.b16 %v3072, %v3068
        %v4149 = vpack.c.b16 %v3073, %v3069
        %v4150 = vpack.c.b16 %v3074, %v3070
        %v4151 = vpack.c.b16 %v3079, %v3075
        %v4152 = vpack.c.b16 %v3080, %v3076
        %v4153 = vpack.c.b16 %v3081, %v3077
        %v4154 = vpack.c.b16 %v3082, %v3078
        %v4155 = vpack.c.b16 %v3087, %v3083
        %v4156 = vpack.c.b16 %v3088, %v3084
        %v4157 = vpack.c.b16 %v3089, %v3085
        %v4158 = vpack.c.b16 %v3090, %v3086
        %v4159 = vpack.c.b16 %v3095, %v3091
        %v4160 = vpack.c.b16 %v3096, %v3092
        %v4161 = vpack.c.b16 %v3097, %v3093
        %v4162 = vpack.c.b16 %v3098, %v3094
        %v4163 = vpack.c.b16 %v3103, %v3099
        %v4164 = vpack.c.b16 %v3104, %v3100
        %v4165 = vpack.c.b16 %v3105, %v3101
        %v4166 = vpack.c.b16 %v3106, %v3102
        %v4167 = vpack.c.b16 %v3111, %v3107
        %v4168 = vpack.c.b16 %v3112, %v3108
        %v4169 = vpack.c.b16 %v3113, %v3109
        %v4170 = vpack.c.b16 %v3114, %v3110
        %v4171 = vpack.c.b16 %v3119, %v3115
        %v4172 = vpack.c.b16 %v3120, %v3116
        %v4173 = vpack.c.b16 %v3121, %v3117
        %v4174 = vpack.c.b16 %v3122, %v3118
        %v4175 = vpack.c.b16 %v3127, %v3123
        %v4176 = vpack.c.b16 %v3128, %v3124
        %v4177 = vpack.c.b16 %v3129, %v3125
        %v4178 = vpack.c.b16 %v3130, %v3126
        %v4179 = vpack.c.b16 %v3135, %v3131
        %v4180 = vpack.c.b16 %v3136, %v3132
        %v4181 = vpack.c.b16 %v3137, %v3133
        %v4182 = vpack.c.b16 %v3138, %v3134
        %v4183 = vpack.c.b16 %v3143, %v3139
        %v4184 = vpack.c.b16 %v3144, %v3140
        %v4185 = vpack.c.b16 %v3145, %v3141
        %v4186 = vpack.c.b16 %v3146, %v3142
        %v4187 = vpack.c.b16 %v3151, %v3147
        %v4188 = vpack.c.b16 %v3152, %v3148
        %v4189 = vpack.c.b16 %v3153, %v3149
        %v4190 = vpack.c.b16 %v3154, %v3150
        %v4191 = vpack.c.b16 %v3159, %v3155
        %v4192 = vpack.c.b16 %v3160, %v3156
        %v4193 = vpack.c.b16 %v3161, %v3157
        %v4194 = vpack.c.b16 %v3162, %v3158
        %v4195 = vpack.c.b16 %v3167, %v3163
        %v4196 = vpack.c.b16 %v3168, %v3164
        %v4197 = vpack.c.b16 %v3169, %v3165
        %v4198 = vpack.c.b16 %v3170, %v3166
        %v4199 = vpack.c.b16 %v3175, %v3171
        %v4200 = vpack.c.b16 %v3176, %v3172
        %v4201 = vpack.c.b16 %v3177, %v3173
        %v4202 = vpack.c.b16 %v3178, %v3174
        %v4203 = vpack.c.b16 %v3183, %v3179
        %v4204 = vpack.c.b16 %v3184, %v3180
        %v4205 = vpack.c.b16 %v3185, %v3181
        %v4206 = vpack.c.b16 %v3186, %v3182
        %v4207 = vpack.c.b16 %v3191, %v3187
        %v4208 = vpack.c.b16 %v3192, %v3188
        %v4209 = vpack.c.b16 %v3193, %v3189
        %v4210 = vpack.c.b16 %v3194, %v3190
        %v4211 = vpack.c.b16 %v3199, %v3195
        %v4212 = vpack.c.b16 %v3200, %v3196
        %v4213 = vpack.c.b16 %v3201, %v3197
        %v4214 = vpack.c.b16 %v3202, %v3198
        %v4215 = vpack.c.b16 %v3207, %v3203
        %v4216 = vpack.c.b16 %v3208, %v3204
        %v4217 = vpack.c.b16 %v3209, %v3205
        %v4218 = vpack.c.b16 %v3210, %v3206
        %v4219 = vpack.c.b16 %v3215, %v3211
        %v4220 = vpack.c.b16 %v3216, %v3212
        %v4221 = vpack.c.b16 %v3217, %v3213
        %v4222 = vpack.c.b16 %v3218, %v3214
        %v4223 = vpack.c.b16 %v3223, %v3219
        %v4224 = vpack.c.b16 %v3224, %v3220
        %v4225 = vpack.c.b16 %v3225, %v3221
        %v4226 = vpack.c.b16 %v3226, %v3222
        %v4227 = vpack.c.b16 %v3231, %v3227
        %v4228 = vpack.c.b16 %v3232, %v3228
        %v4229 = vpack.c.b16 %v3233, %v3229
        %v4230 = vpack.c.b16 %v3234, %v3230
        %v4231 = vpack.c.b16 %v3239, %v3235
        %v4232 = vpack.c.b16 %v3240, %v3236
        %v4233 = vpack.c.b16 %v3241, %v3237
        %v4234 = vpack.c.b16 %v3242, %v3238
        %v4235 = vpack.c.b16 %v3247, %v3243
        %v4236 = vpack.c.b16 %v3248, %v3244
        %v4237 = vpack.c.b16 %v3249, %v3245
        %v4238 = vpack.c.b16 %v3250, %v3246
        %v4239 = vpack.c.b16 %v3255, %v3251
        %v4240 = vpack.c.b16 %v3256, %v3252
        %v4241 = vpack.c.b16 %v3257, %v3253
        %v4242 = vpack.c.b16 %v3258, %v3254
        %v4243 = vpack.c.b16 %v3263, %v3259
        %v4244 = vpack.c.b16 %v3264, %v3260
        %v4245 = vpack.c.b16 %v3265, %v3261
        %v4246 = vpack.c.b16 %v3266, %v3262
        %v4247 = vpack.c.b16 %v3271, %v3267
        %v4248 = vpack.c.b16 %v3272, %v3268
        %v4249 = vpack.c.b16 %v3273, %v3269
        %v4250 = vpack.c.b16 %v3274, %v3270
        %v4251 = vpack.c.b16 %v3279, %v3275
        %v4252 = vpack.c.b16 %v3280, %v3276
        %v4253 = vpack.c.b16 %v3281, %v3277
        %v4254 = vpack.c.b16 %v3282, %v3278
        %v4255 = vpack.c.b16 %v3287, %v3283
        %v4256 = vpack.c.b16 %v3288, %v3284
        %v4257 = vpack.c.b16 %v3289, %v3285
        %v4258 = vpack.c.b16 %v3290, %v3286
        %v4259 = vpack.c.b16 %v3295, %v3291
        %v4260 = vpack.c.b16 %v3296, %v3292
        %v4261 = vpack.c.b16 %v3297, %v3293
        %v4262 = vpack.c.b16 %v3298, %v3294
        %v4263 = vpack.c.b16 %v3303, %v3299
        %v4264 = vpack.c.b16 %v3304, %v3300
        %v4265 = vpack.c.b16 %v3305, %v3301
        %v4266 = vpack.c.b16 %v3306, %v3302
        %v4267 = vpack.c.b16 %v3311, %v3307
        %v4268 = vpack.c.b16 %v3312, %v3308
        %v4269 = vpack.c.b16 %v3313, %v3309
        %v4270 = vpack.c.b16 %v3314, %v3310
        %v4271 = vpack.c.b16 %v3319, %v3315
        %v4272 = vpack.c.b16 %v3320, %v3316
        %v4273 = vpack.c.b16 %v3321, %v3317
        %v4274 = vpack.c.b16 %v3322, %v3318
        %v4275 = vpack.c.b16 %v3327, %v3323
        %v4276 = vpack.c.b16 %v3328, %v3324
        %v4277 = vpack.c.b16 %v3329, %v3325
        %v4278 = vpack.c.b16 %v3330, %v3326
        %v4279 = vpack.c.b16 %v3335, %v3331
        %v4280 = vpack.c.b16 %v3336, %v3332
        %v4281 = vpack.c.b16 %v3337, %v3333
        %v4282 = vpack.c.b16 %v3338, %v3334
        %v4283 = vpack.c.b16 %v3343, %v3339
        %v4284 = vpack.c.b16 %v3344, %v3340
        %v4285 = vpack.c.b16 %v3345, %v3341
        %v4286 = vpack.c.b16 %v3346, %v3342
        %v4287 = vpack.c.b16 %v3351, %v3347
        %v4288 = vpack.c.b16 %v3352, %v3348
        %v4289 = vpack.c.b16 %v3353, %v3349
        %v4290 = vpack.c.b16 %v3354, %v3350
        %v4291 = vpack.c.b16 %v3359, %v3355
        %v4292 = vpack.c.b16 %v3360, %v3356
        %v4293 = vpack.c.b16 %v3361, %v3357
        %v4294 = vpack.c.b16 %v3362, %v3358
        %v4295 = vpack.c.b16 %v3367, %v3363
        %v4296 = vpack.c.b16 %v3368, %v3364
        %v4297 = vpack.c.b16 %v3369, %v3365
        %v4298 = vpack.c.b16 %v3370, %v3366
        %v4299 = vpack.c.b16 %v3375, %v3371
        %v4300 = vpack.c.b16 %v3376, %v3372
        %v4301 = vpack.c.b16 %v3377, %v3373
        %v4302 = vpack.c.b16 %v3378, %v3374
        %v4303 = vpack.c.b16 %v3383, %v3379
        %v4304 = vpack.c.b16 %v3384, %v3380
        %v4305 = vpack.c.b16 %v3385, %v3381
        %v4306 = vpack.c.b16 %v3386, %v3382
        %v4307 = vpack.c.b16 %v3391, %v3387
        %v4308 = vpack.c.b16 %v3392, %v3388
        %v4309 = vpack.c.b16 %v3393, %v3389
        %v4310 = vpack.c.b16 %v3394, %v3390
        %v4311 = vpack.c.b16 %v3399, %v3395
        %v4312 = vpack.c.b16 %v3400, %v3396
        %v4313 = vpack.c.b16 %v3401, %v3397
        %v4314 = vpack.c.b16 %v3402, %v3398
        %v4315 = vpack.c.b16 %v3407, %v3403
        %v4316 = vpack.c.b16 %v3408, %v3404
        %v4317 = vpack.c.b16 %v3409, %v3405
        %v4318 = vpack.c.b16 %v3410, %v3406
        %v4319 = vpack.c.b16 %v3415, %v3411
        %v4320 = vpack.c.b16 %v3416, %v3412
        %v4321 = vpack.c.b16 %v3417, %v3413
        %v4322 = vpack.c.b16 %v3418, %v3414
        %v4323 = vpack.c.b16 %v3423, %v3419
        %v4324 = vpack.c.b16 %v3424, %v3420
        %v4325 = vpack.c.b16 %v3425, %v3421
        %v4326 = vpack.c.b16 %v3426, %v3422
        %v4327 = vpack.c.b16 %v3431, %v3427
        %v4328 = vpack.c.b16 %v3432, %v3428
        %v4329 = vpack.c.b16 %v3433, %v3429
        %v4330 = vpack.c.b16 %v3434, %v3430
        %v4331 = vpack.c.b16 %v3439, %v3435
        %v4332 = vpack.c.b16 %v3440, %v3436
        %v4333 = vpack.c.b16 %v3441, %v3437
        %v4334 = vpack.c.b16 %v3442, %v3438
        %v4335 = vpack.c.b16 %v3447, %v3443
        %v4336 = vpack.c.b16 %v3448, %v3444
        %v4337 = vpack.c.b16 %v3449, %v3445
        %v4338 = vpack.c.b16 %v3450, %v3446
        %v4339 = vpack.c.b16 %v3455, %v3451
        %v4340 = vpack.c.b16 %v3456, %v3452
        %v4341 = vpack.c.b16 %v3457, %v3453
        %v4342 = vpack.c.b16 %v3458, %v3454
        %v4343 = vpack.c.b16 %v3463, %v3459
        %v4344 = vpack.c.b16 %v3464, %v3460
        %v4345 = vpack.c.b16 %v3465, %v3461
        %v4346 = vpack.c.b16 %v3466, %v3462
        %v4347 = vpack.c.b16 %v3471, %v3467
        %v4348 = vpack.c.b16 %v3472, %v3468
        %v4349 = vpack.c.b16 %v3473, %v3469
        %v4350 = vpack.c.b16 %v3474, %v3470
        %v4351 = vpack.c.b16 %v3479, %v3475
        %v4352 = vpack.c.b16 %v3480, %v3476
        %v4353 = vpack.c.b16 %v3481, %v3477
        %v4354 = vpack.c.b16 %v3482, %v3478
        %v4355 = vpack.c.b16 %v3487, %v3483
        %v4356 = vpack.c.b16 %v3488, %v3484
        %v4357 = vpack.c.b16 %v3489, %v3485
        %v4358 = vpack.c.b16 %v3490, %v3486
        %v4359 = vpack.c.b16 %v3495, %v3491
        %v4360 = vpack.c.b16 %v3496, %v3492
        %v4361 = vpack.c.b16 %v3497, %v3493
        %v4362 = vpack.c.b16 %v3498, %v3494
        %v4363 = vpack.c.b16 %v3503, %v3499
        %v4364 = vpack.c.b16 %v3504, %v3500
        %v4365 = vpack.c.b16 %v3505, %v3501
        %v4366 = vpack.c.b16 %v3506, %v3502
        %v4367 = vpack.c.b16 %v3511, %v3507
        %v4368 = vpack.c.b16 %v3512, %v3508
        %v4369 = vpack.c.b16 %v3513, %v3509
        %v4370 = vpack.c.b16 %v3514, %v3510
        %v4371 = vpack.c.b16 %v3519, %v3515
        %v4372 = vpack.c.b16 %v3520, %v3516
        %v4373 = vpack.c.b16 %v3521, %v3517
        %v4374 = vpack.c.b16 %v3522, %v3518
        %v4375 = vpack.c.b16 %v3527, %v3523
        %v4376 = vpack.c.b16 %v3528, %v3524
        %v4377 = vpack.c.b16 %v3529, %v3525
        %v4378 = vpack.c.b16 %v3530, %v3526
        %v4379 = vpack.c.b16 %v3535, %v3531
        %v4380 = vpack.c.b16 %v3536, %v3532
        %v4381 = vpack.c.b16 %v3537, %v3533
        %v4382 = vpack.c.b16 %v3538, %v3534
        %v4383 = vpack.c.b16 %v3543, %v3539
        %v4384 = vpack.c.b16 %v3544, %v3540
        %v4385 = vpack.c.b16 %v3545, %v3541
        %v4386 = vpack.c.b16 %v3546, %v3542
        %v4387 = vpack.c.b16 %v3551, %v3547
        %v4388 = vpack.c.b16 %v3552, %v3548
        %v4389 = vpack.c.b16 %v3553, %v3549
        %v4390 = vpack.c.b16 %v3554, %v3550
        %v4391 = vpack.c.b16 %v3559, %v3555
        %v4392 = vpack.c.b16 %v3560, %v3556
        %v4393 = vpack.c.b16 %v3561, %v3557
        %v4394 = vpack.c.b16 %v3562, %v3558
        %v4395 = vpack.c.b16 %v3567, %v3563
        %v4396 = vpack.c.b16 %v3568, %v3564
        %v4397 = vpack.c.b16 %v3569, %v3565
        %v4398 = vpack.c.b16 %v3570, %v3566
        %v4399 = vpack.c.b16 %v3575, %v3571
        %v4400 = vpack.c.b16 %v3576, %v3572
        %v4401 = vpack.c.b16 %v3577, %v3573
        %v4402 = vpack.c.b16 %v3578, %v3574
        %v4403 = vpack.c.b16 %v3583, %v3579
        %v4404 = vpack.c.b16 %v3584, %v3580
        %v4405 = vpack.c.b16 %v3585, %v3581
        %v4406 = vpack.c.b16 %v3586, %v3582
        %v4407 = vpack.c.b16 %v3591, %v3587
        %v4408 = vpack.c.b16 %v3592, %v3588
        %v4409 = vpack.c.b16 %v3593, %v3589
        %v4410 = vpack.c.b16 %v3594, %v3590
        %v4411 = vpack.c.b16 %v3599, %v3595
        %v4412 = vpack.c.b16 %v3600, %v3596
        %v4413 = vpack.c.b16 %v3601, %v3597
        %v4414 = vpack.c.b16 %v3602, %v3598
        %v4415 = vpack.c.b16 %v3607, %v3603
        %v4416 = vpack.c.b16 %v3608, %v3604
        %v4417 = vpack.c.b16 %v3609, %v3605
        %v4418 = vpack.c.b16 %v3610, %v3606
        %v4419 = vpack.c.b16 %v3615, %v3611
        %v4420 = vpack.c.b16 %v3616, %v3612
        %v4421 = vpack.c.b16 %v3617, %v3613
        %v4422 = vpack.c.b16 %v3618, %v3614
        %v4423 = vpack.c.b16 %v3623, %v3619
        %v4424 = vpack.c.b16 %v3624, %v3620
        %v4425 = vpack.c.b16 %v3625, %v3621
        %v4426 = vpack.c.b16 %v3626, %v3622
        %v4427 = vpack.c.b16 %v3631, %v3627
        %v4428 = vpack.c.b16 %v3632, %v3628
        %v4429 = vpack.c.b16 %v3633, %v3629
        %v4430 = vpack.c.b16 %v3634, %v3630
        %v4431 = vpack.c.b16 %v3639, %v3635
        %v4432 = vpack.c.b16 %v3640, %v3636
        %v4433 = vpack.c.b16 %v3641, %v3637
        %v4434 = vpack.c.b16 %v3642, %v3638
        %v4435 = vpack.c.b16 %v3647, %v3643
        %v4436 = vpack.c.b16 %v3648, %v3644
        %v4437 = vpack.c.b16 %v3649, %v3645
        %v4438 = vpack.c.b16 %v3650, %v3646
        %v4439 = vpack.c.b16 %v3655, %v3651
        %v4440 = vpack.c.b16 %v3656, %v3652
        %v4441 = vpack.c.b16 %v3657, %v3653
        %v4442 = vpack.c.b16 %v3658, %v3654
        %vm5227 = vcmask 523264
        %v5229 = vsel %vm5227, %v500, 0
        %5231 = vmatprep.subr.bf16.mxu0 %v3660
        %5232 = vmatpush1.bf16.msra.mxu0 %v3659
        %5233 = vmatprep.subr.bf16.mxu0 %v3664
        %5234 = vmatpush1.bf16.msra.mxu0 %v3663
        %5235 = vmatprep.subr.bf16.mxu0 %v3668
        %5236 = vmatpush1.bf16.msra.mxu0 %v3667
        %5237 = vmatprep.subr.bf16.mxu0 %v3672
        %5238 = vmatpush1.bf16.msra.mxu0 %v3671
        %5239 = vmatprep.subr.bf16.mxu0 %v3676
        %5240 = vmatpush1.bf16.msra.mxu0 %v3675
        %5241 = vmatprep.subr.bf16.mxu0 %v3680
        %5242 = vmatpush1.bf16.msra.mxu0 %v3679
        %5243 = vmatprep.subr.bf16.mxu0 %v3684
        %5244 = vmatpush1.bf16.msra.mxu0 %v3683
        %5245 = vmatprep.subr.bf16.mxu0 %v3688
        %5246 = vmatpush1.bf16.msra.mxu0 %v3687
        %5247 = vmatprep.subr.bf16.mxu0 %v3692
        %5248 = vmatpush1.bf16.msra.mxu0 %v3691
        %5249 = vmatprep.subr.bf16.mxu0 %v3696
        %5250 = vmatpush1.bf16.msra.mxu0 %v3695
        %5251 = vmatprep.subr.bf16.mxu0 %v3700
        %5252 = vmatpush1.bf16.msra.mxu0 %v3699
        %5253 = vmatprep.subr.bf16.mxu0 %v3704
        %5254 = vmatpush1.bf16.msra.mxu0 %v3703
        %5255 = vmatprep.subr.bf16.mxu0 %v3708
        %5256 = vmatpush1.bf16.msra.mxu0 %v3707
        %5257 = vmatprep.subr.bf16.mxu0 %v3712
        %5258 = vmatpush1.bf16.msra.mxu0 %v3711
        %5259 = vmatprep.subr.bf16.mxu0 %v3716
        %5260 = vmatpush1.bf16.msra.mxu0 %v3715
        %5261 = vmatprep.subr.bf16.mxu0 %v3720
        %5262 = vmatpush1.bf16.msra.mxu0 %v3719
        %5263 = vmatprep.mubr.bf16.mxu0 %v477
        %5264 = vmatmul.mubr.bf16.gmra.mrb[0].mxu0 %v476
        %v5265 = vpop.f32.mrb[0].mxu0
        %v5266 = vadd.f32 %v1290, %v5265
        %v5267 = vpop.f32.mrb[0].mxu0
        %v5268 = vadd.f32 %v1294, %v5267
        %v5269 = vpop.f32.mrb[0].mxu0
        %v5270 = vpop.f32.mrb[0].mxu0
        %5271 = vdwg.mxu0
        %5272 = vmatprep.subr.bf16.mxu0 %v3724
        %5273 = vmatpush1.bf16.msra.mxu0 %v3723
        %5274 = vmatprep.subr.bf16.mxu0 %v3728
        %5275 = vmatpush1.bf16.msra.mxu0 %v3727
        %5276 = vmatprep.subr.bf16.mxu0 %v3732
        %5277 = vmatpush1.bf16.msra.mxu0 %v3731
        %5278 = vmatprep.subr.bf16.mxu0 %v3736
        %5279 = vmatpush1.bf16.msra.mxu0 %v3735
        %5280 = vmatprep.subr.bf16.mxu0 %v3740
        %5281 = vmatpush1.bf16.msra.mxu0 %v3739
        %5282 = vmatprep.subr.bf16.mxu0 %v3744
        %5283 = vmatpush1.bf16.msra.mxu0 %v3743
        %5284 = vmatprep.subr.bf16.mxu0 %v3748
        %5285 = vmatpush1.bf16.msra.mxu0 %v3747
        %5286 = vmatprep.subr.bf16.mxu0 %v3752
        %5287 = vmatpush1.bf16.msra.mxu0 %v3751
        %5288 = vmatprep.subr.bf16.mxu0 %v3756
        %5289 = vmatpush1.bf16.msra.mxu0 %v3755
        %5290 = vmatprep.subr.bf16.mxu0 %v3760
        %5291 = vmatpush1.bf16.msra.mxu0 %v3759
        %5292 = vmatprep.subr.bf16.mxu0 %v3764
        %5293 = vmatpush1.bf16.msra.mxu0 %v3763
        %5294 = vmatprep.subr.bf16.mxu0 %v3768
        %5295 = vmatpush1.bf16.msra.mxu0 %v3767
        %5296 = vmatprep.subr.bf16.mxu0 %v3772
        %5297 = vmatpush1.bf16.msra.mxu0 %v3771
        %5298 = vmatprep.subr.bf16.mxu0 %v3776
        %5299 = vmatpush1.bf16.msra.mxu0 %v3775
        %5300 = vmatprep.subr.bf16.mxu0 %v3780
        %5301 = vmatpush1.bf16.msra.mxu0 %v3779
        %5302 = vmatprep.subr.bf16.mxu0 %v3784
        %5303 = vmatpush1.bf16.msra.mxu0 %v3783
        %5304 = vmatprep.mubr.bf16.mxu0 %v479
        %5305 = vmatmul.mubr.bf16.gmra.mrb[0].mxu0 %v478
        %v5306 = vpop.f32.mrb[0].mxu0
        %v5307 = vadd.f32 %v5266, %v5306
        %v5308 = vpop.f32.mrb[0].mxu0
        %v5309 = vadd.f32 %v5268, %v5308
        %v5310 = vpop.f32.mrb[0].mxu0
        %v5311 = vpop.f32.mrb[0].mxu0
        %5312 = vdwg.mxu0
        %5313 = vmatprep.subr.bf16.mxu0 %v3788
        %5314 = vmatpush1.bf16.msra.mxu0 %v3787
        %5315 = vmatprep.subr.bf16.mxu0 %v3792
        %5316 = vmatpush1.bf16.msra.mxu0 %v3791
        %5317 = vmatprep.subr.bf16.mxu0 %v3796
        %5318 = vmatpush1.bf16.msra.mxu0 %v3795
        %5319 = vmatprep.subr.bf16.mxu0 %v3800
        %5320 = vmatpush1.bf16.msra.mxu0 %v3799
        %5321 = vmatprep.subr.bf16.mxu0 %v3804
        %5322 = vmatpush1.bf16.msra.mxu0 %v3803
        %5323 = vmatprep.subr.bf16.mxu0 %v3808
        %5324 = vmatpush1.bf16.msra.mxu0 %v3807
        %5325 = vmatprep.subr.bf16.mxu0 %v3812
        %5326 = vmatpush1.bf16.msra.mxu0 %v3811
        %5327 = vmatprep.subr.bf16.mxu0 %v3816
        %5328 = vmatpush1.bf16.msra.mxu0 %v3815
        %5329 = vmatprep.subr.bf16.mxu0 %v3820
        %5330 = vmatpush1.bf16.msra.mxu0 %v3819
        %5331 = vmatprep.subr.bf16.mxu0 %v3824
        %5332 = vmatpush1.bf16.msra.mxu0 %v3823
        %5333 = vmatprep.subr.bf16.mxu0 %v3828
        %5334 = vmatpush1.bf16.msra.mxu0 %v3827
        %5335 = vmatprep.subr.bf16.mxu0 %v3832
        %5336 = vmatpush1.bf16.msra.mxu0 %v3831
        %5337 = vmatprep.subr.bf16.mxu0 %v3836
        %5338 = vmatpush1.bf16.msra.mxu0 %v3835
        %5339 = vmatprep.subr.bf16.mxu0 %v3840
        %5340 = vmatpush1.bf16.msra.mxu0 %v3839
        %5341 = vmatprep.subr.bf16.mxu0 %v3844
        %5342 = vmatpush1.bf16.msra.mxu0 %v3843
        %5343 = vmatprep.subr.bf16.mxu0 %v3848
        %5344 = vmatpush1.bf16.msra.mxu0 %v3847
        %5345 = vmatprep.mubr.bf16.mxu0 %v481
        %5346 = vmatmul.mubr.bf16.gmra.mrb[0].mxu0 %v480
        %v5347 = vpop.f32.mrb[0].mxu0
        %v5348 = vadd.f32 %v5307, %v5347
        %v5349 = vpop.f32.mrb[0].mxu0
        %v5350 = vadd.f32 %v5309, %v5349
        %v5351 = vpop.f32.mrb[0].mxu0
        %v5352 = vpop.f32.mrb[0].mxu0
        %5353 = vdwg.mxu0
        %5354 = vmatprep.subr.bf16.mxu0 %v3852
        %5355 = vmatpush1.bf16.msra.mxu0 %v3851
        %5356 = vmatprep.subr.bf16.mxu0 %v3856
        %5357 = vmatpush1.bf16.msra.mxu0 %v3855
        %5358 = vmatprep.subr.bf16.mxu0 %v3860
        %5359 = vmatpush1.bf16.msra.mxu0 %v3859
        %5360 = vmatprep.subr.bf16.mxu0 %v3864
        %5361 = vmatpush1.bf16.msra.mxu0 %v3863
        %5362 = vmatprep.subr.bf16.mxu0 %v3868
        %5363 = vmatpush1.bf16.msra.mxu0 %v3867
        %5364 = vmatprep.subr.bf16.mxu0 %v3872
        %5365 = vmatpush1.bf16.msra.mxu0 %v3871
        %5366 = vmatprep.subr.bf16.mxu0 %v3876
        %5367 = vmatpush1.bf16.msra.mxu0 %v3875
        %5368 = vmatprep.subr.bf16.mxu0 %v3880
        %5369 = vmatpush1.bf16.msra.mxu0 %v3879
        %5370 = vmatprep.subr.bf16.mxu0 %v3884
        %5371 = vmatpush1.bf16.msra.mxu0 %v3883
        %5372 = vmatprep.subr.bf16.mxu0 %v3888
        %5373 = vmatpush1.bf16.msra.mxu0 %v3887
        %5374 = vmatprep.subr.bf16.mxu0 %v3892
        %5375 = vmatpush1.bf16.msra.mxu0 %v3891
        %5376 = vmatprep.subr.bf16.mxu0 %v3896
        %5377 = vmatpush1.bf16.msra.mxu0 %v3895
        %5378 = vmatprep.subr.bf16.mxu0 %v3900
        %5379 = vmatpush1.bf16.msra.mxu0 %v3899
        %5380 = vmatprep.subr.bf16.mxu0 %v3904
        %5381 = vmatpush1.bf16.msra.mxu0 %v3903
        %5382 = vmatprep.subr.bf16.mxu0 %v3908
        %5383 = vmatpush1.bf16.msra.mxu0 %v3907
        %5384 = vmatprep.subr.bf16.mxu0 %v3912
        %5385 = vmatpush1.bf16.msra.mxu0 %v3911
        %5386 = vmatprep.mubr.bf16.mxu0 %v483
        %5387 = vmatmul.mubr.bf16.gmra.mrb[0].mxu0 %v482
        %v5388 = vpop.f32.mrb[0].mxu0
        %v5389 = vadd.f32 %v5348, %v5388
        %v5390 = vpop.f32.mrb[0].mxu0
        %v5391 = vadd.f32 %v5350, %v5390
        %v5392 = vpop.f32.mrb[0].mxu0
        %v5393 = vpop.f32.mrb[0].mxu0
        %5394 = vdwg.mxu0
        %5395 = vmatprep.subr.bf16.mxu0 %v3916
        %5396 = vmatpush1.bf16.msra.mxu0 %v3915
        %5397 = vmatprep.subr.bf16.mxu0 %v3920
        %5398 = vmatpush1.bf16.msra.mxu0 %v3919
        %5399 = vmatprep.subr.bf16.mxu0 %v3924
        %5400 = vmatpush1.bf16.msra.mxu0 %v3923
        %5401 = vmatprep.subr.bf16.mxu0 %v3928
        %5402 = vmatpush1.bf16.msra.mxu0 %v3927
        %5403 = vmatprep.subr.bf16.mxu0 %v3932
        %5404 = vmatpush1.bf16.msra.mxu0 %v3931
        %5405 = vmatprep.subr.bf16.mxu0 %v3936
        %5406 = vmatpush1.bf16.msra.mxu0 %v3935
        %5407 = vmatprep.subr.bf16.mxu0 %v3940
        %5408 = vmatpush1.bf16.msra.mxu0 %v3939
        %5409 = vmatprep.subr.bf16.mxu0 %v3944
        %5410 = vmatpush1.bf16.msra.mxu0 %v3943
        %5411 = vmatprep.subr.bf16.mxu0 %v3948
        %5412 = vmatpush1.bf16.msra.mxu0 %v3947
        %5413 = vmatprep.subr.bf16.mxu0 %v3952
        %5414 = vmatpush1.bf16.msra.mxu0 %v3951
        %5415 = vmatprep.subr.bf16.mxu0 %v3956
        %5416 = vmatpush1.bf16.msra.mxu0 %v3955
        %5417 = vmatprep.subr.bf16.mxu0 %v3960
        %5418 = vmatpush1.bf16.msra.mxu0 %v3959
        %5419 = vmatprep.subr.bf16.mxu0 %v3964
        %5420 = vmatpush1.bf16.msra.mxu0 %v3963
        %5421 = vmatprep.subr.bf16.mxu0 %v3968
        %5422 = vmatpush1.bf16.msra.mxu0 %v3967
        %5423 = vmatprep.subr.bf16.mxu0 %v3972
        %5424 = vmatpush1.bf16.msra.mxu0 %v3971
        %5425 = vmatprep.subr.bf16.mxu0 %v3976
        %5426 = vmatpush1.bf16.msra.mxu0 %v3975
        %5427 = vmatprep.mubr.bf16.mxu0 %v485
        %5428 = vmatmul.mubr.bf16.gmra.mrb[0].mxu0 %v484
        %v5429 = vpop.f32.mrb[0].mxu0
        %v5430 = vadd.f32 %v5389, %v5429
        %v5431 = vpop.f32.mrb[0].mxu0
        %v5432 = vadd.f32 %v5391, %v5431
        %v5433 = vpop.f32.mrb[0].mxu0
        %v5434 = vpop.f32.mrb[0].mxu0
        %5435 = vdwg.mxu0
        %5436 = vmatprep.subr.bf16.mxu0 %v3980
        %5437 = vmatpush1.bf16.msra.mxu0 %v3979
        %5438 = vmatprep.subr.bf16.mxu0 %v3984
        %5439 = vmatpush1.bf16.msra.mxu0 %v3983
        %5440 = vmatprep.subr.bf16.mxu0 %v3988
        %5441 = vmatpush1.bf16.msra.mxu0 %v3987
        %5442 = vmatprep.subr.bf16.mxu0 %v3992
        %5443 = vmatpush1.bf16.msra.mxu0 %v3991
        %5444 = vmatprep.subr.bf16.mxu0 %v3996
        %5445 = vmatpush1.bf16.msra.mxu0 %v3995
        %5446 = vmatprep.subr.bf16.mxu0 %v4000
        %5447 = vmatpush1.bf16.msra.mxu0 %v3999
        %5448 = vmatprep.subr.bf16.mxu0 %v4004
        %5449 = vmatpush1.bf16.msra.mxu0 %v4003
        %5450 = vmatprep.subr.bf16.mxu0 %v4008
        %5451 = vmatpush1.bf16.msra.mxu0 %v4007
        %5452 = vmatprep.subr.bf16.mxu0 %v4012
        %5453 = vmatpush1.bf16.msra.mxu0 %v4011
        %5454 = vmatprep.subr.bf16.mxu0 %v4016
        %5455 = vmatpush1.bf16.msra.mxu0 %v4015
        %5456 = vmatprep.subr.bf16.mxu0 %v4020
        %5457 = vmatpush1.bf16.msra.mxu0 %v4019
        %5458 = vmatprep.subr.bf16.mxu0 %v4024
        %5459 = vmatpush1.bf16.msra.mxu0 %v4023
        %5460 = vmatprep.subr.bf16.mxu0 %v4028
        %5461 = vmatpush1.bf16.msra.mxu0 %v4027
        %5462 = vmatprep.subr.bf16.mxu0 %v4032
        %5463 = vmatpush1.bf16.msra.mxu0 %v4031
        %5464 = vmatprep.subr.bf16.mxu0 %v4036
        %5465 = vmatpush1.bf16.msra.mxu0 %v4035
        %5466 = vmatprep.subr.bf16.mxu0 %v4040
        %5467 = vmatpush1.bf16.msra.mxu0 %v4039
        %5468 = vmatprep.mubr.bf16.mxu0 %v487
        %5469 = vmatmul.mubr.bf16.gmra.mrb[0].mxu0 %v486
        %v5470 = vpop.f32.mrb[0].mxu0
        %v5471 = vadd.f32 %v5430, %v5470
        %v5472 = vpop.f32.mrb[0].mxu0
        %v5473 = vadd.f32 %v5432, %v5472
        %v5474 = vpop.f32.mrb[0].mxu0
        %v5475 = vpop.f32.mrb[0].mxu0
        %5476 = vdwg.mxu0
        %5477 = vmatprep.subr.bf16.mxu0 %v4044
        %5478 = vmatpush1.bf16.msra.mxu0 %v4043
        %5479 = vmatprep.subr.bf16.mxu0 %v4048
        %5480 = vmatpush1.bf16.msra.mxu0 %v4047
        %5481 = vmatprep.subr.bf16.mxu0 %v4052
        %5482 = vmatpush1.bf16.msra.mxu0 %v4051
        %5483 = vmatprep.subr.bf16.mxu0 %v4056
        %5484 = vmatpush1.bf16.msra.mxu0 %v4055
        %5485 = vmatprep.subr.bf16.mxu0 %v4060
        %5486 = vmatpush1.bf16.msra.mxu0 %v4059
        %5487 = vmatprep.subr.bf16.mxu0 %v4064
        %5488 = vmatpush1.bf16.msra.mxu0 %v4063
        %5489 = vmatprep.subr.bf16.mxu0 %v4068
        %5490 = vmatpush1.bf16.msra.mxu0 %v4067
        %5491 = vmatprep.subr.bf16.mxu0 %v4072
        %5492 = vmatpush1.bf16.msra.mxu0 %v4071
        %5493 = vmatprep.subr.bf16.mxu0 %v4076
        %5494 = vmatpush1.bf16.msra.mxu0 %v4075
        %5495 = vmatprep.subr.bf16.mxu0 %v4080
        %5496 = vmatpush1.bf16.msra.mxu0 %v4079
        %5497 = vmatprep.subr.bf16.mxu0 %v4084
        %5498 = vmatpush1.bf16.msra.mxu0 %v4083
        %5499 = vmatprep.subr.bf16.mxu0 %v4088
        %5500 = vmatpush1.bf16.msra.mxu0 %v4087
        %5501 = vmatprep.subr.bf16.mxu0 %v4092
        %5502 = vmatpush1.bf16.msra.mxu0 %v4091
        %5503 = vmatprep.subr.bf16.mxu0 %v4096
        %5504 = vmatpush1.bf16.msra.mxu0 %v4095
        %5505 = vmatprep.subr.bf16.mxu0 %v4100
        %5506 = vmatpush1.bf16.msra.mxu0 %v4099
        %5507 = vmatprep.subr.bf16.mxu0 %v4104
        %5508 = vmatpush1.bf16.msra.mxu0 %v4103
        %5509 = vmatprep.mubr.bf16.mxu0 %v489
        %5510 = vmatmul.mubr.bf16.gmra.mrb[0].mxu0 %v488
        %v5511 = vpop.f32.mrb[0].mxu0
        %v5512 = vadd.f32 %v5471, %v5511
        %v5513 = vpop.f32.mrb[0].mxu0
        %v5514 = vadd.f32 %v5473, %v5513
        %v5515 = vpop.f32.mrb[0].mxu0
        %v5516 = vpop.f32.mrb[0].mxu0
        %5517 = vdwg.mxu0
        %5518 = vmatprep.subr.bf16.mxu0 %v4108
        %5519 = vmatpush1.bf16.msra.mxu0 %v4107
        %5520 = vmatprep.subr.bf16.mxu0 %v4112
        %5521 = vmatpush1.bf16.msra.mxu0 %v4111
        %5522 = vmatprep.subr.bf16.mxu0 %v4116
        %5523 = vmatpush1.bf16.msra.mxu0 %v4115
        %5524 = vmatprep.subr.bf16.mxu0 %v4120
        %5525 = vmatpush1.bf16.msra.mxu0 %v4119
        %5526 = vmatprep.subr.bf16.mxu0 %v4124
        %5527 = vmatpush1.bf16.msra.mxu0 %v4123
        %5528 = vmatprep.subr.bf16.mxu0 %v4128
        %5529 = vmatpush1.bf16.msra.mxu0 %v4127
        %5530 = vmatprep.subr.bf16.mxu0 %v4132
        %5531 = vmatpush1.bf16.msra.mxu0 %v4131
        %5532 = vmatprep.subr.bf16.mxu0 %v4136
        %5533 = vmatpush1.bf16.msra.mxu0 %v4135
        %5534 = vmatprep.subr.bf16.mxu0 %v4140
        %5535 = vmatpush1.bf16.msra.mxu0 %v4139
        %5536 = vmatprep.subr.bf16.mxu0 %v4144
        %5537 = vmatpush1.bf16.msra.mxu0 %v4143
        %5538 = vmatprep.subr.bf16.mxu0 %v4148
        %5539 = vmatpush1.bf16.msra.mxu0 %v4147
        %5540 = vmatprep.subr.bf16.mxu0 %v4152
        %5541 = vmatpush1.bf16.msra.mxu0 %v4151
        %5542 = vmatprep.subr.bf16.mxu0 %v4156
        %5543 = vmatpush1.bf16.msra.mxu0 %v4155
        %5544 = vmatprep.subr.bf16.mxu0 %v4160
        %5545 = vmatpush1.bf16.msra.mxu0 %v4159
        %5546 = vmatprep.subr.bf16.mxu0 %v4164
        %5547 = vmatpush1.bf16.msra.mxu0 %v4163
        %5548 = vmatprep.subr.bf16.mxu0 %v4168
        %5549 = vmatpush1.bf16.msra.mxu0 %v4167
        %5550 = vmatprep.mubr.bf16.mxu0 %v491
        %5551 = vmatmul.mubr.bf16.gmra.mrb[0].mxu0 %v490
        %v5552 = vpop.f32.mrb[0].mxu0
        %v5553 = vadd.f32 %v5512, %v5552
        %v5554 = vpop.f32.mrb[0].mxu0
        %v5555 = vadd.f32 %v5514, %v5554
        %v5556 = vpop.f32.mrb[0].mxu0
        %v5557 = vpop.f32.mrb[0].mxu0
        %5558 = vdwg.mxu0
        %5559 = vmatprep.subr.bf16.mxu0 %v4172
        %5560 = vmatpush1.bf16.msra.mxu0 %v4171
        %5561 = vmatprep.subr.bf16.mxu0 %v4176
        %5562 = vmatpush1.bf16.msra.mxu0 %v4175
        %5563 = vmatprep.subr.bf16.mxu0 %v4180
        %5564 = vmatpush1.bf16.msra.mxu0 %v4179
        %5565 = vmatprep.subr.bf16.mxu0 %v4184
        %5566 = vmatpush1.bf16.msra.mxu0 %v4183
        %5567 = vmatprep.subr.bf16.mxu0 %v4188
        %5568 = vmatpush1.bf16.msra.mxu0 %v4187
        %5569 = vmatprep.subr.bf16.mxu0 %v4192
        %5570 = vmatpush1.bf16.msra.mxu0 %v4191
        %5571 = vmatprep.subr.bf16.mxu0 %v4196
        %5572 = vmatpush1.bf16.msra.mxu0 %v4195
        %5573 = vmatprep.subr.bf16.mxu0 %v4200
        %5574 = vmatpush1.bf16.msra.mxu0 %v4199
        %5575 = vmatprep.subr.bf16.mxu0 %v4204
        %5576 = vmatpush1.bf16.msra.mxu0 %v4203
        %5577 = vmatprep.subr.bf16.mxu0 %v4208
        %5578 = vmatpush1.bf16.msra.mxu0 %v4207
        %5579 = vmatprep.subr.bf16.mxu0 %v4212
        %5580 = vmatpush1.bf16.msra.mxu0 %v4211
        %5581 = vmatprep.subr.bf16.mxu0 %v4216
        %5582 = vmatpush1.bf16.msra.mxu0 %v4215
        %5583 = vmatprep.subr.bf16.mxu0 %v4220
        %5584 = vmatpush1.bf16.msra.mxu0 %v4219
        %5585 = vmatprep.subr.bf16.mxu0 %v4224
        %5586 = vmatpush1.bf16.msra.mxu0 %v4223
        %5587 = vmatprep.subr.bf16.mxu0 %v4228
        %5588 = vmatpush1.bf16.msra.mxu0 %v4227
        %5589 = vmatprep.subr.bf16.mxu0 %v4232
        %5590 = vmatpush1.bf16.msra.mxu0 %v4231
        %5591 = vmatprep.mubr.bf16.mxu0 %v493
        %5592 = vmatmul.mubr.bf16.gmra.mrb[0].mxu0 %v492
        %v5593 = vpop.f32.mrb[0].mxu0
        %v5594 = vadd.f32 %v5553, %v5593
        %v5595 = vpop.f32.mrb[0].mxu0
        %v5596 = vadd.f32 %v5555, %v5595
        %v5597 = vpop.f32.mrb[0].mxu0
        %v5598 = vpop.f32.mrb[0].mxu0
        %5599 = vdwg.mxu0
        %5600 = vmatprep.subr.bf16.mxu0 %v4236
        %5601 = vmatpush1.bf16.msra.mxu0 %v4235
        %5602 = vmatprep.subr.bf16.mxu0 %v4240
        %5603 = vmatpush1.bf16.msra.mxu0 %v4239
        %5604 = vmatprep.subr.bf16.mxu0 %v4244
        %5605 = vmatpush1.bf16.msra.mxu0 %v4243
        %5606 = vmatprep.subr.bf16.mxu0 %v4248
        %5607 = vmatpush1.bf16.msra.mxu0 %v4247
        %5608 = vmatprep.subr.bf16.mxu0 %v4252
        %5609 = vmatpush1.bf16.msra.mxu0 %v4251
        %5610 = vmatprep.subr.bf16.mxu0 %v4256
        %5611 = vmatpush1.bf16.msra.mxu0 %v4255
        %5612 = vmatprep.subr.bf16.mxu0 %v4260
        %5613 = vmatpush1.bf16.msra.mxu0 %v4259
        %5614 = vmatprep.subr.bf16.mxu0 %v4264
        %5615 = vmatpush1.bf16.msra.mxu0 %v4263
        %5616 = vmatprep.subr.bf16.mxu0 %v4268
        %5617 = vmatpush1.bf16.msra.mxu0 %v4267
        %5618 = vmatprep.subr.bf16.mxu0 %v4272
        %5619 = vmatpush1.bf16.msra.mxu0 %v4271
        %5620 = vmatprep.subr.bf16.mxu0 %v4276
        %5621 = vmatpush1.bf16.msra.mxu0 %v4275
        %5622 = vmatprep.subr.bf16.mxu0 %v4280
        %5623 = vmatpush1.bf16.msra.mxu0 %v4279
        %5624 = vmatprep.subr.bf16.mxu0 %v4284
        %5625 = vmatpush1.bf16.msra.mxu0 %v4283
        %5626 = vmatprep.subr.bf16.mxu0 %v4288
        %5627 = vmatpush1.bf16.msra.mxu0 %v4287
        %5628 = vmatprep.subr.bf16.mxu0 %v4292
        %5629 = vmatpush1.bf16.msra.mxu0 %v4291
        %5630 = vmatprep.subr.bf16.mxu0 %v4296
        %5631 = vmatpush1.bf16.msra.mxu0 %v4295
        %5632 = vmatprep.mubr.bf16.mxu0 %v495
        %5633 = vmatmul.mubr.bf16.gmra.mrb[0].mxu0 %v494
        %v5634 = vpop.f32.mrb[0].mxu0
        %v5635 = vadd.f32 %v5594, %v5634
        %v5636 = vpop.f32.mrb[0].mxu0
        %v5637 = vadd.f32 %v5596, %v5636
        %v5638 = vpop.f32.mrb[0].mxu0
        %v5639 = vpop.f32.mrb[0].mxu0
        %5640 = vdwg.mxu0
        %5641 = vmatprep.subr.bf16.mxu0 %v4300
        %5642 = vmatpush1.bf16.msra.mxu0 %v4299
        %5643 = vmatprep.subr.bf16.mxu0 %v4304
        %5644 = vmatpush1.bf16.msra.mxu0 %v4303
        %5645 = vmatprep.subr.bf16.mxu0 %v4308
        %5646 = vmatpush1.bf16.msra.mxu0 %v4307
        %5647 = vmatprep.subr.bf16.mxu0 %v4312
        %5648 = vmatpush1.bf16.msra.mxu0 %v4311
        %5649 = vmatprep.subr.bf16.mxu0 %v4316
        %5650 = vmatpush1.bf16.msra.mxu0 %v4315
        %5651 = vmatprep.subr.bf16.mxu0 %v4320
        %5652 = vmatpush1.bf16.msra.mxu0 %v4319
        %5653 = vmatprep.subr.bf16.mxu0 %v4324
        %5654 = vmatpush1.bf16.msra.mxu0 %v4323
        %5655 = vmatprep.subr.bf16.mxu0 %v4328
        %5656 = vmatpush1.bf16.msra.mxu0 %v4327
        %5657 = vmatprep.subr.bf16.mxu0 %v4332
        %5658 = vmatpush1.bf16.msra.mxu0 %v4331
        %5659 = vmatprep.subr.bf16.mxu0 %v4336
        %5660 = vmatpush1.bf16.msra.mxu0 %v4335
        %5661 = vmatprep.subr.bf16.mxu0 %v4340
        %5662 = vmatpush1.bf16.msra.mxu0 %v4339
        %5663 = vmatprep.subr.bf16.mxu0 %v4344
        %5664 = vmatpush1.bf16.msra.mxu0 %v4343
        %5665 = vmatprep.subr.bf16.mxu0 %v4348
        %5666 = vmatpush1.bf16.msra.mxu0 %v4347
        %5667 = vmatprep.subr.bf16.mxu0 %v4352
        %5668 = vmatpush1.bf16.msra.mxu0 %v4351
        %5669 = vmatprep.subr.bf16.mxu0 %v4356
        %5670 = vmatpush1.bf16.msra.mxu0 %v4355
        %5671 = vmatprep.subr.bf16.mxu0 %v4360
        %5672 = vmatpush1.bf16.msra.mxu0 %v4359
        %5673 = vmatprep.mubr.bf16.mxu0 %v497
        %5674 = vmatmul.mubr.bf16.gmra.mrb[0].mxu0 %v496
        %v5675 = vpop.f32.mrb[0].mxu0
        %v5676 = vadd.f32 %v5635, %v5675
        %v5677 = vpop.f32.mrb[0].mxu0
        %v5678 = vadd.f32 %v5637, %v5677
        %v5679 = vpop.f32.mrb[0].mxu0
        %v5680 = vpop.f32.mrb[0].mxu0
        %5681 = vdwg.mxu0
        %5682 = vmatprep.subr.bf16.mxu0 %v4364
        %5683 = vmatpush1.bf16.msra.mxu0 %v4363
        %5684 = vmatprep.subr.bf16.mxu0 %v4368
        %5685 = vmatpush1.bf16.msra.mxu0 %v4367
        %5686 = vmatprep.subr.bf16.mxu0 %v4372
        %5687 = vmatpush1.bf16.msra.mxu0 %v4371
        %5688 = vmatprep.subr.bf16.mxu0 %v4376
        %5689 = vmatpush1.bf16.msra.mxu0 %v4375
        %5690 = vmatprep.subr.bf16.mxu0 %v4380
        %5691 = vmatpush1.bf16.msra.mxu0 %v4379
        %5692 = vmatprep.subr.bf16.mxu0 %v4384
        %5693 = vmatpush1.bf16.msra.mxu0 %v4383
        %5694 = vmatprep.subr.bf16.mxu0 %v4388
        %5695 = vmatpush1.bf16.msra.mxu0 %v4387
        %5696 = vmatprep.subr.bf16.mxu0 %v4392
        %5697 = vmatpush1.bf16.msra.mxu0 %v4391
        %5698 = vmatprep.subr.bf16.mxu0 %v4396
        %5699 = vmatpush1.bf16.msra.mxu0 %v4395
        %5700 = vmatprep.subr.bf16.mxu0 %v4400
        %5701 = vmatpush1.bf16.msra.mxu0 %v4399
        %5702 = vmatprep.subr.bf16.mxu0 %v4404
        %5703 = vmatpush1.bf16.msra.mxu0 %v4403
        %5704 = vmatprep.subr.bf16.mxu0 %v4408
        %5705 = vmatpush1.bf16.msra.mxu0 %v4407
        %5706 = vmatprep.subr.bf16.mxu0 %v4412
        %5707 = vmatpush1.bf16.msra.mxu0 %v4411
        %5708 = vmatprep.subr.bf16.mxu0 %v4416
        %5709 = vmatpush1.bf16.msra.mxu0 %v4415
        %5710 = vmatprep.subr.bf16.mxu0 %v4420
        %5711 = vmatpush1.bf16.msra.mxu0 %v4419
        %5712 = vmatprep.subr.bf16.mxu0 %v4424
        %5713 = vmatpush1.bf16.msra.mxu0 %v4423
        %5714 = vmatprep.mubr.bf16.mxu0 %v499
        %5715 = vmatmul.mubr.bf16.gmra.mrb[0].mxu0 %v498
        %v5716 = vpop.f32.mrb[0].mxu0
        %v5717 = vadd.f32 %v5676, %v5716
        %v5718 = vpop.f32.mrb[0].mxu0
        %v5719 = vadd.f32 %v5678, %v5718
        %v5720 = vpop.f32.mrb[0].mxu0
        %v5721 = vpop.f32.mrb[0].mxu0
        %5722 = vdwg.mxu0
        %5723 = vmatprep.subr.bf16.mxu0 %v4428
        %5724 = vmatpush1.bf16.msra.mxu0 %v4427
        %5725 = vmatprep.subr.bf16.mxu0 %v4432
        %5726 = vmatpush1.bf16.msra.mxu0 %v4431
        %5727 = vmatprep.subr.bf16.mxu0 %v4436
        %5728 = vmatpush1.bf16.msra.mxu0 %v4435
        %5729 = vmatprep.subr.bf16.mxu0 %v4440
        %5730 = vmatpush1.bf16.msra.mxu0 %v4439
        %5731 = vmatprep.subr.bf16.mxu0 0
        %5732 = vmatpush1.bf16.msra.mxu0 0
        %5733 = vmatprep.subr.bf16.mxu0 0
        %5734 = vmatpush1.bf16.msra.mxu0 0
        %5735 = vmatprep.subr.bf16.mxu0 0
        %5736 = vmatpush1.bf16.msra.mxu0 0
        %5737 = vmatprep.subr.bf16.mxu0 0
        %5738 = vmatpush1.bf16.msra.mxu0 0
        %5739 = vmatprep.subr.bf16.mxu0 0
        %5740 = vmatpush1.bf16.msra.mxu0 0
        %5741 = vmatprep.subr.bf16.mxu0 0
        %5742 = vmatpush1.bf16.msra.mxu0 0
        %5743 = vmatprep.subr.bf16.mxu0 0
        %5744 = vmatpush1.bf16.msra.mxu0 0
        %5745 = vmatprep.subr.bf16.mxu0 0
        %5746 = vmatpush1.bf16.msra.mxu0 0
        %5747 = vmatprep.subr.bf16.mxu0 0
        %5748 = vmatpush1.bf16.msra.mxu0 0
        %5749 = vmatprep.subr.bf16.mxu0 0
        %5750 = vmatpush1.bf16.msra.mxu0 0
        %5751 = vmatprep.subr.bf16.mxu0 0
        %5752 = vmatpush1.bf16.msra.mxu0 0
        %5753 = vmatprep.subr.bf16.mxu0 0
        %5754 = vmatpush1.bf16.msra.mxu0 0
        %5755 = vmatprep.mubr.bf16.mxu0 0
        %5756 = vmatmul.mubr.bf16.gmra.mrb[0].mxu0 %v5229
        %v5757 = vpop.f32.mrb[0].mxu0
        %v5758 = vadd.f32 %v5717, %v5757
        %v5759 = vpop.f32.mrb[0].mxu0
        %v5760 = vadd.f32 %v5719, %v5759
        %v5761 = vpop.f32.mrb[0].mxu0
        %v5762 = vpop.f32.mrb[0].mxu0
        %5763 = vdwg.mxu0
        %5764 = vmatprep.subr.bf16.mxu0 %v3662
        %5765 = vmatpush1.bf16.msra.mxu0 %v3661
        %5766 = vmatprep.subr.bf16.mxu0 %v3666
        %5767 = vmatpush1.bf16.msra.mxu0 %v3665
        %5768 = vmatprep.subr.bf16.mxu0 %v3670
        %5769 = vmatpush1.bf16.msra.mxu0 %v3669
        %5770 = vmatprep.subr.bf16.mxu0 %v3674
        %5771 = vmatpush1.bf16.msra.mxu0 %v3673
        %5772 = vmatprep.subr.bf16.mxu0 %v3678
        %5773 = vmatpush1.bf16.msra.mxu0 %v3677
        %5774 = vmatprep.subr.bf16.mxu0 %v3682
        %5775 = vmatpush1.bf16.msra.mxu0 %v3681
        %5776 = vmatprep.subr.bf16.mxu0 %v3686
        %5777 = vmatpush1.bf16.msra.mxu0 %v3685
        %5778 = vmatprep.subr.bf16.mxu0 %v3690
        %5779 = vmatpush1.bf16.msra.mxu0 %v3689
        %5780 = vmatprep.subr.bf16.mxu0 %v3694
        %5781 = vmatpush1.bf16.msra.mxu0 %v3693
        %5782 = vmatprep.subr.bf16.mxu0 %v3698
        %5783 = vmatpush1.bf16.msra.mxu0 %v3697
        %5784 = vmatprep.subr.bf16.mxu0 %v3702
        %5785 = vmatpush1.bf16.msra.mxu0 %v3701
        %5786 = vmatprep.subr.bf16.mxu0 %v3706
        %5787 = vmatpush1.bf16.msra.mxu0 %v3705
        %5788 = vmatprep.subr.bf16.mxu0 %v3710
        %5789 = vmatpush1.bf16.msra.mxu0 %v3709
        %5790 = vmatprep.subr.bf16.mxu0 %v3714
        %5791 = vmatpush1.bf16.msra.mxu0 %v3713
        %5792 = vmatprep.subr.bf16.mxu0 %v3718
        %5793 = vmatpush1.bf16.msra.mxu0 %v3717
        %5794 = vmatprep.subr.bf16.mxu0 %v3722
        %5795 = vmatpush1.bf16.msra.mxu0 %v3721
        %5796 = vmatprep.mubr.bf16.mxu0 %v477
        %5797 = vmatmul.mubr.bf16.gmra.mrb[0].mxu0 %v476
        %v5798 = vpop.f32.mrb[0].mxu0
        %v5799 = vadd.f32 %v1298, %v5798
        %v5800 = vpop.f32.mrb[0].mxu0
        %v5801 = vadd.f32 %v1302, %v5800
        %v5802 = vpop.f32.mrb[0].mxu0
        %v5803 = vpop.f32.mrb[0].mxu0
        %5804 = vdwg.mxu0
        %5805 = vmatprep.subr.bf16.mxu0 %v3726
        %5806 = vmatpush1.bf16.msra.mxu0 %v3725
        %5807 = vmatprep.subr.bf16.mxu0 %v3730
        %5808 = vmatpush1.bf16.msra.mxu0 %v3729
        %5809 = vmatprep.subr.bf16.mxu0 %v3734
        %5810 = vmatpush1.bf16.msra.mxu0 %v3733
        %5811 = vmatprep.subr.bf16.mxu0 %v3738
        %5812 = vmatpush1.bf16.msra.mxu0 %v3737
        %5813 = vmatprep.subr.bf16.mxu0 %v3742
        %5814 = vmatpush1.bf16.msra.mxu0 %v3741
        %5815 = vmatprep.subr.bf16.mxu0 %v3746
        %5816 = vmatpush1.bf16.msra.mxu0 %v3745
        %5817 = vmatprep.subr.bf16.mxu0 %v3750
        %5818 = vmatpush1.bf16.msra.mxu0 %v3749
        %5819 = vmatprep.subr.bf16.mxu0 %v3754
        %5820 = vmatpush1.bf16.msra.mxu0 %v3753
        %5821 = vmatprep.subr.bf16.mxu0 %v3758
        %5822 = vmatpush1.bf16.msra.mxu0 %v3757
        %5823 = vmatprep.subr.bf16.mxu0 %v3762
        %5824 = vmatpush1.bf16.msra.mxu0 %v3761
        %5825 = vmatprep.subr.bf16.mxu0 %v3766
        %5826 = vmatpush1.bf16.msra.mxu0 %v3765
        %5827 = vmatprep.subr.bf16.mxu0 %v3770
        %5828 = vmatpush1.bf16.msra.mxu0 %v3769
        %5829 = vmatprep.subr.bf16.mxu0 %v3774
        %5830 = vmatpush1.bf16.msra.mxu0 %v3773
        %5831 = vmatprep.subr.bf16.mxu0 %v3778
        %5832 = vmatpush1.bf16.msra.mxu0 %v3777
        %5833 = vmatprep.subr.bf16.mxu0 %v3782
        %5834 = vmatpush1.bf16.msra.mxu0 %v3781
        %5835 = vmatprep.subr.bf16.mxu0 %v3786
        %5836 = vmatpush1.bf16.msra.mxu0 %v3785
        %5837 = vmatprep.mubr.bf16.mxu0 %v479
        %5838 = vmatmul.mubr.bf16.gmra.mrb[0].mxu0 %v478
        %v5839 = vpop.f32.mrb[0].mxu0
        %v5840 = vadd.f32 %v5799, %v5839
        %v5841 = vpop.f32.mrb[0].mxu0
        %v5842 = vadd.f32 %v5801, %v5841
        %v5843 = vpop.f32.mrb[0].mxu0
        %v5844 = vpop.f32.mrb[0].mxu0
        %5845 = vdwg.mxu0
        %5846 = vmatprep.subr.bf16.mxu0 %v3790
        %5847 = vmatpush1.bf16.msra.mxu0 %v3789
        %5848 = vmatprep.subr.bf16.mxu0 %v3794
        %5849 = vmatpush1.bf16.msra.mxu0 %v3793
        %5850 = vmatprep.subr.bf16.mxu0 %v3798
        %5851 = vmatpush1.bf16.msra.mxu0 %v3797
        %5852 = vmatprep.subr.bf16.mxu0 %v3802
        %5853 = vmatpush1.bf16.msra.mxu0 %v3801
        %5854 = vmatprep.subr.bf16.mxu0 %v3806
        %5855 = vmatpush1.bf16.msra.mxu0 %v3805
        %5856 = vmatprep.subr.bf16.mxu0 %v3810
        %5857 = vmatpush1.bf16.msra.mxu0 %v3809
        %5858 = vmatprep.subr.bf16.mxu0 %v3814
        %5859 = vmatpush1.bf16.msra.mxu0 %v3813
        %5860 = vmatprep.subr.bf16.mxu0 %v3818
        %5861 = vmatpush1.bf16.msra.mxu0 %v3817
        %5862 = vmatprep.subr.bf16.mxu0 %v3822
        %5863 = vmatpush1.bf16.msra.mxu0 %v3821
        %5864 = vmatprep.subr.bf16.mxu0 %v3826
        %5865 = vmatpush1.bf16.msra.mxu0 %v3825
        %5866 = vmatprep.subr.bf16.mxu0 %v3830
        %5867 = vmatpush1.bf16.msra.mxu0 %v3829
        %5868 = vmatprep.subr.bf16.mxu0 %v3834
        %5869 = vmatpush1.bf16.msra.mxu0 %v3833
        %5870 = vmatprep.subr.bf16.mxu0 %v3838
        %5871 = vmatpush1.bf16.msra.mxu0 %v3837
        %5872 = vmatprep.subr.bf16.mxu0 %v3842
        %5873 = vmatpush1.bf16.msra.mxu0 %v3841
        %5874 = vmatprep.subr.bf16.mxu0 %v3846
        %5875 = vmatpush1.bf16.msra.mxu0 %v3845
        %5876 = vmatprep.subr.bf16.mxu0 %v3850
        %5877 = vmatpush1.bf16.msra.mxu0 %v3849
        %5878 = vmatprep.mubr.bf16.mxu0 %v481
        %5879 = vmatmul.mubr.bf16.gmra.mrb[0].mxu0 %v480
        %v5880 = vpop.f32.mrb[0].mxu0
        %v5881 = vadd.f32 %v5840, %v5880
        %v5882 = vpop.f32.mrb[0].mxu0
        %v5883 = vadd.f32 %v5842, %v5882
        %v5884 = vpop.f32.mrb[0].mxu0
        %v5885 = vpop.f32.mrb[0].mxu0
        %5886 = vdwg.mxu0
        %5887 = vmatprep.subr.bf16.mxu0 %v3854
        %5888 = vmatpush1.bf16.msra.mxu0 %v3853
        %5889 = vmatprep.subr.bf16.mxu0 %v3858
        %5890 = vmatpush1.bf16.msra.mxu0 %v3857
        %5891 = vmatprep.subr.bf16.mxu0 %v3862
        %5892 = vmatpush1.bf16.msra.mxu0 %v3861
        %5893 = vmatprep.subr.bf16.mxu0 %v3866
        %5894 = vmatpush1.bf16.msra.mxu0 %v3865
        %5895 = vmatprep.subr.bf16.mxu0 %v3870
        %5896 = vmatpush1.bf16.msra.mxu0 %v3869
        %5897 = vmatprep.subr.bf16.mxu0 %v3874
        %5898 = vmatpush1.bf16.msra.mxu0 %v3873
        %5899 = vmatprep.subr.bf16.mxu0 %v3878
        %5900 = vmatpush1.bf16.msra.mxu0 %v3877
        %5901 = vmatprep.subr.bf16.mxu0 %v3882
        %5902 = vmatpush1.bf16.msra.mxu0 %v3881
        %5903 = vmatprep.subr.bf16.mxu0 %v3886
        %5904 = vmatpush1.bf16.msra.mxu0 %v3885
        %5905 = vmatprep.subr.bf16.mxu0 %v3890
        %5906 = vmatpush1.bf16.msra.mxu0 %v3889
        %5907 = vmatprep.subr.bf16.mxu0 %v3894
        %5908 = vmatpush1.bf16.msra.mxu0 %v3893
        %5909 = vmatprep.subr.bf16.mxu0 %v3898
        %5910 = vmatpush1.bf16.msra.mxu0 %v3897
        %5911 = vmatprep.subr.bf16.mxu0 %v3902
        %5912 = vmatpush1.bf16.msra.mxu0 %v3901
        %5913 = vmatprep.subr.bf16.mxu0 %v3906
        %5914 = vmatpush1.bf16.msra.mxu0 %v3905
        %5915 = vmatprep.subr.bf16.mxu0 %v3910
        %5916 = vmatpush1.bf16.msra.mxu0 %v3909
        %5917 = vmatprep.subr.bf16.mxu0 %v3914
        %5918 = vmatpush1.bf16.msra.mxu0 %v3913
        %5919 = vmatprep.mubr.bf16.mxu0 %v483
        %5920 = vmatmul.mubr.bf16.gmra.mrb[0].mxu0 %v482
        %v5921 = vpop.f32.mrb[0].mxu0
        %v5922 = vadd.f32 %v5881, %v5921
        %v5923 = vpop.f32.mrb[0].mxu0
        %v5924 = vadd.f32 %v5883, %v5923
        %v5925 = vpop.f32.mrb[0].mxu0
        %v5926 = vpop.f32.mrb[0].mxu0
        %5927 = vdwg.mxu0
        %5928 = vmatprep.subr.bf16.mxu0 %v3918
        %5929 = vmatpush1.bf16.msra.mxu0 %v3917
        %5930 = vmatprep.subr.bf16.mxu0 %v3922
        %5931 = vmatpush1.bf16.msra.mxu0 %v3921
        %5932 = vmatprep.subr.bf16.mxu0 %v3926
        %5933 = vmatpush1.bf16.msra.mxu0 %v3925
        %5934 = vmatprep.subr.bf16.mxu0 %v3930
        %5935 = vmatpush1.bf16.msra.mxu0 %v3929
        %5936 = vmatprep.subr.bf16.mxu0 %v3934
        %5937 = vmatpush1.bf16.msra.mxu0 %v3933
        %5938 = vmatprep.subr.bf16.mxu0 %v3938
        %5939 = vmatpush1.bf16.msra.mxu0 %v3937
        %5940 = vmatprep.subr.bf16.mxu0 %v3942
        %5941 = vmatpush1.bf16.msra.mxu0 %v3941
        %5942 = vmatprep.subr.bf16.mxu0 %v3946
        %5943 = vmatpush1.bf16.msra.mxu0 %v3945
        %5944 = vmatprep.subr.bf16.mxu0 %v3950
        %5945 = vmatpush1.bf16.msra.mxu0 %v3949
        %5946 = vmatprep.subr.bf16.mxu0 %v3954
        %5947 = vmatpush1.bf16.msra.mxu0 %v3953
        %5948 = vmatprep.subr.bf16.mxu0 %v3958
        %5949 = vmatpush1.bf16.msra.mxu0 %v3957
        %5950 = vmatprep.subr.bf16.mxu0 %v3962
        %5951 = vmatpush1.bf16.msra.mxu0 %v3961
        %5952 = vmatprep.subr.bf16.mxu0 %v3966
        %5953 = vmatpush1.bf16.msra.mxu0 %v3965
        %5954 = vmatprep.subr.bf16.mxu0 %v3970
        %5955 = vmatpush1.bf16.msra.mxu0 %v3969
        %5956 = vmatprep.subr.bf16.mxu0 %v3974
        %5957 = vmatpush1.bf16.msra.mxu0 %v3973
        %5958 = vmatprep.subr.bf16.mxu0 %v3978
        %5959 = vmatpush1.bf16.msra.mxu0 %v3977
        %5960 = vmatprep.mubr.bf16.mxu0 %v485
        %5961 = vmatmul.mubr.bf16.gmra.mrb[0].mxu0 %v484
        %v5962 = vpop.f32.mrb[0].mxu0
        %v5963 = vadd.f32 %v5922, %v5962
        %v5964 = vpop.f32.mrb[0].mxu0
        %v5965 = vadd.f32 %v5924, %v5964
        %v5966 = vpop.f32.mrb[0].mxu0
        %v5967 = vpop.f32.mrb[0].mxu0
        %5968 = vdwg.mxu0
        %5969 = vmatprep.subr.bf16.mxu0 %v3982
        %5970 = vmatpush1.bf16.msra.mxu0 %v3981
        %5971 = vmatprep.subr.bf16.mxu0 %v3986
        %5972 = vmatpush1.bf16.msra.mxu0 %v3985
        %5973 = vmatprep.subr.bf16.mxu0 %v3990
        %5974 = vmatpush1.bf16.msra.mxu0 %v3989
        %5975 = vmatprep.subr.bf16.mxu0 %v3994
        %5976 = vmatpush1.bf16.msra.mxu0 %v3993
        %5977 = vmatprep.subr.bf16.mxu0 %v3998
        %5978 = vmatpush1.bf16.msra.mxu0 %v3997
        %5979 = vmatprep.subr.bf16.mxu0 %v4002
        %5980 = vmatpush1.bf16.msra.mxu0 %v4001
        %5981 = vmatprep.subr.bf16.mxu0 %v4006
        %5982 = vmatpush1.bf16.msra.mxu0 %v4005
        %5983 = vmatprep.subr.bf16.mxu0 %v4010
        %5984 = vmatpush1.bf16.msra.mxu0 %v4009
        %5985 = vmatprep.subr.bf16.mxu0 %v4014
        %5986 = vmatpush1.bf16.msra.mxu0 %v4013
        %5987 = vmatprep.subr.bf16.mxu0 %v4018
        %5988 = vmatpush1.bf16.msra.mxu0 %v4017
        %5989 = vmatprep.subr.bf16.mxu0 %v4022
        %5990 = vmatpush1.bf16.msra.mxu0 %v4021
        %5991 = vmatprep.subr.bf16.mxu0 %v4026
        %5992 = vmatpush1.bf16.msra.mxu0 %v4025
        %5993 = vmatprep.subr.bf16.mxu0 %v4030
        %5994 = vmatpush1.bf16.msra.mxu0 %v4029
        %5995 = vmatprep.subr.bf16.mxu0 %v4034
        %5996 = vmatpush1.bf16.msra.mxu0 %v4033
        %5997 = vmatprep.subr.bf16.mxu0 %v4038
        %5998 = vmatpush1.bf16.msra.mxu0 %v4037
        %5999 = vmatprep.subr.bf16.mxu0 %v4042
        %6000 = vmatpush1.bf16.msra.mxu0 %v4041
        %6001 = vmatprep.mubr.bf16.mxu0 %v487
        %6002 = vmatmul.mubr.bf16.gmra.mrb[0].mxu0 %v486
        %v6003 = vpop.f32.mrb[0].mxu0
        %v6004 = vadd.f32 %v5963, %v6003
        %v6005 = vpop.f32.mrb[0].mxu0
        %v6006 = vadd.f32 %v5965, %v6005
        %v6007 = vpop.f32.mrb[0].mxu0
        %v6008 = vpop.f32.mrb[0].mxu0
        %6009 = vdwg.mxu0
        %6010 = vmatprep.subr.bf16.mxu0 %v4046
        %6011 = vmatpush1.bf16.msra.mxu0 %v4045
        %6012 = vmatprep.subr.bf16.mxu0 %v4050
        %6013 = vmatpush1.bf16.msra.mxu0 %v4049
        %6014 = vmatprep.subr.bf16.mxu0 %v4054
        %6015 = vmatpush1.bf16.msra.mxu0 %v4053
        %6016 = vmatprep.subr.bf16.mxu0 %v4058
        %6017 = vmatpush1.bf16.msra.mxu0 %v4057
        %6018 = vmatprep.subr.bf16.mxu0 %v4062
        %6019 = vmatpush1.bf16.msra.mxu0 %v4061
        %6020 = vmatprep.subr.bf16.mxu0 %v4066
        %6021 = vmatpush1.bf16.msra.mxu0 %v4065
        %6022 = vmatprep.subr.bf16.mxu0 %v4070
        %6023 = vmatpush1.bf16.msra.mxu0 %v4069
        %6024 = vmatprep.subr.bf16.mxu0 %v4074
        %6025 = vmatpush1.bf16.msra.mxu0 %v4073
        %6026 = vmatprep.subr.bf16.mxu0 %v4078
        %6027 = vmatpush1.bf16.msra.mxu0 %v4077
        %6028 = vmatprep.subr.bf16.mxu0 %v4082
        %6029 = vmatpush1.bf16.msra.mxu0 %v4081
        %6030 = vmatprep.subr.bf16.mxu0 %v4086
        %6031 = vmatpush1.bf16.msra.mxu0 %v4085
        %6032 = vmatprep.subr.bf16.mxu0 %v4090
        %6033 = vmatpush1.bf16.msra.mxu0 %v4089
        %6034 = vmatprep.subr.bf16.mxu0 %v4094
        %6035 = vmatpush1.bf16.msra.mxu0 %v4093
        %6036 = vmatprep.subr.bf16.mxu0 %v4098
        %6037 = vmatpush1.bf16.msra.mxu0 %v4097
        %6038 = vmatprep.subr.bf16.mxu0 %v4102
        %6039 = vmatpush1.bf16.msra.mxu0 %v4101
        %6040 = vmatprep.subr.bf16.mxu0 %v4106
        %6041 = vmatpush1.bf16.msra.mxu0 %v4105
        %6042 = vmatprep.mubr.bf16.mxu0 %v489
        %6043 = vmatmul.mubr.bf16.gmra.mrb[0].mxu0 %v488
        %v6044 = vpop.f32.mrb[0].mxu0
        %v6045 = vadd.f32 %v6004, %v6044
        %v6046 = vpop.f32.mrb[0].mxu0
        %v6047 = vadd.f32 %v6006, %v6046
        %v6048 = vpop.f32.mrb[0].mxu0
        %v6049 = vpop.f32.mrb[0].mxu0
        %6050 = vdwg.mxu0
        %6051 = vmatprep.subr.bf16.mxu0 %v4110
        %6052 = vmatpush1.bf16.msra.mxu0 %v4109
        %6053 = vmatprep.subr.bf16.mxu0 %v4114
        %6054 = vmatpush1.bf16.msra.mxu0 %v4113
        %6055 = vmatprep.subr.bf16.mxu0 %v4118
        %6056 = vmatpush1.bf16.msra.mxu0 %v4117
        %6057 = vmatprep.subr.bf16.mxu0 %v4122
        %6058 = vmatpush1.bf16.msra.mxu0 %v4121
        %6059 = vmatprep.subr.bf16.mxu0 %v4126
        %6060 = vmatpush1.bf16.msra.mxu0 %v4125
        %6061 = vmatprep.subr.bf16.mxu0 %v4130
        %6062 = vmatpush1.bf16.msra.mxu0 %v4129
        %6063 = vmatprep.subr.bf16.mxu0 %v4134
        %6064 = vmatpush1.bf16.msra.mxu0 %v4133
        %6065 = vmatprep.subr.bf16.mxu0 %v4138
        %6066 = vmatpush1.bf16.msra.mxu0 %v4137
        %6067 = vmatprep.subr.bf16.mxu0 %v4142
        %6068 = vmatpush1.bf16.msra.mxu0 %v4141
        %6069 = vmatprep.subr.bf16.mxu0 %v4146
        %6070 = vmatpush1.bf16.msra.mxu0 %v4145
        %6071 = vmatprep.subr.bf16.mxu0 %v4150
        %6072 = vmatpush1.bf16.msra.mxu0 %v4149
        %6073 = vmatprep.subr.bf16.mxu0 %v4154
        %6074 = vmatpush1.bf16.msra.mxu0 %v4153
        %6075 = vmatprep.subr.bf16.mxu0 %v4158
        %6076 = vmatpush1.bf16.msra.mxu0 %v4157
        %6077 = vmatprep.subr.bf16.mxu0 %v4162
        %6078 = vmatpush1.bf16.msra.mxu0 %v4161
        %6079 = vmatprep.subr.bf16.mxu0 %v4166
        %6080 = vmatpush1.bf16.msra.mxu0 %v4165
        %6081 = vmatprep.subr.bf16.mxu0 %v4170
        %6082 = vmatpush1.bf16.msra.mxu0 %v4169
        %6083 = vmatprep.mubr.bf16.mxu0 %v491
        %6084 = vmatmul.mubr.bf16.gmra.mrb[0].mxu0 %v490
        %v6085 = vpop.f32.mrb[0].mxu0
        %v6086 = vadd.f32 %v6045, %v6085
        %v6087 = vpop.f32.mrb[0].mxu0
        %v6088 = vadd.f32 %v6047, %v6087
        %v6089 = vpop.f32.mrb[0].mxu0
        %v6090 = vpop.f32.mrb[0].mxu0
        %6091 = vdwg.mxu0
        %6092 = vmatprep.subr.bf16.mxu0 %v4174
        %6093 = vmatpush1.bf16.msra.mxu0 %v4173
        %6094 = vmatprep.subr.bf16.mxu0 %v4178
        %6095 = vmatpush1.bf16.msra.mxu0 %v4177
        %6096 = vmatprep.subr.bf16.mxu0 %v4182
        %6097 = vmatpush1.bf16.msra.mxu0 %v4181
        %6098 = vmatprep.subr.bf16.mxu0 %v4186
        %6099 = vmatpush1.bf16.msra.mxu0 %v4185
        %6100 = vmatprep.subr.bf16.mxu0 %v4190
        %6101 = vmatpush1.bf16.msra.mxu0 %v4189
        %6102 = vmatprep.subr.bf16.mxu0 %v4194
        %6103 = vmatpush1.bf16.msra.mxu0 %v4193
        %6104 = vmatprep.subr.bf16.mxu0 %v4198
        %6105 = vmatpush1.bf16.msra.mxu0 %v4197
        %6106 = vmatprep.subr.bf16.mxu0 %v4202
        %6107 = vmatpush1.bf16.msra.mxu0 %v4201
        %6108 = vmatprep.subr.bf16.mxu0 %v4206
        %6109 = vmatpush1.bf16.msra.mxu0 %v4205
        %6110 = vmatprep.subr.bf16.mxu0 %v4210
        %6111 = vmatpush1.bf16.msra.mxu0 %v4209
        %6112 = vmatprep.subr.bf16.mxu0 %v4214
        %6113 = vmatpush1.bf16.msra.mxu0 %v4213
        %6114 = vmatprep.subr.bf16.mxu0 %v4218
        %6115 = vmatpush1.bf16.msra.mxu0 %v4217
        %6116 = vmatprep.subr.bf16.mxu0 %v4222
        %6117 = vmatpush1.bf16.msra.mxu0 %v4221
        %6118 = vmatprep.subr.bf16.mxu0 %v4226
        %6119 = vmatpush1.bf16.msra.mxu0 %v4225
        %6120 = vmatprep.subr.bf16.mxu0 %v4230
        %6121 = vmatpush1.bf16.msra.mxu0 %v4229
        %6122 = vmatprep.subr.bf16.mxu0 %v4234
        %6123 = vmatpush1.bf16.msra.mxu0 %v4233
        %6124 = vmatprep.mubr.bf16.mxu0 %v493
        %6125 = vmatmul.mubr.bf16.gmra.mrb[0].mxu0 %v492
        %v6126 = vpop.f32.mrb[0].mxu0
        %v6127 = vadd.f32 %v6086, %v6126
        %v6128 = vpop.f32.mrb[0].mxu0
        %v6129 = vadd.f32 %v6088, %v6128
        %v6130 = vpop.f32.mrb[0].mxu0
        %v6131 = vpop.f32.mrb[0].mxu0
        %6132 = vdwg.mxu0
        %6133 = vmatprep.subr.bf16.mxu0 %v4238
        %6134 = vmatpush1.bf16.msra.mxu0 %v4237
        %6135 = vmatprep.subr.bf16.mxu0 %v4242
        %6136 = vmatpush1.bf16.msra.mxu0 %v4241
        %6137 = vmatprep.subr.bf16.mxu0 %v4246
        %6138 = vmatpush1.bf16.msra.mxu0 %v4245
        %6139 = vmatprep.subr.bf16.mxu0 %v4250
        %6140 = vmatpush1.bf16.msra.mxu0 %v4249
        %6141 = vmatprep.subr.bf16.mxu0 %v4254
        %6142 = vmatpush1.bf16.msra.mxu0 %v4253
        %6143 = vmatprep.subr.bf16.mxu0 %v4258
        %6144 = vmatpush1.bf16.msra.mxu0 %v4257
        %6145 = vmatprep.subr.bf16.mxu0 %v4262
        %6146 = vmatpush1.bf16.msra.mxu0 %v4261
        %6147 = vmatprep.subr.bf16.mxu0 %v4266
        %6148 = vmatpush1.bf16.msra.mxu0 %v4265
        %6149 = vmatprep.subr.bf16.mxu0 %v4270
        %6150 = vmatpush1.bf16.msra.mxu0 %v4269
        %6151 = vmatprep.subr.bf16.mxu0 %v4274
        %6152 = vmatpush1.bf16.msra.mxu0 %v4273
        %6153 = vmatprep.subr.bf16.mxu0 %v4278
        %6154 = vmatpush1.bf16.msra.mxu0 %v4277
        %6155 = vmatprep.subr.bf16.mxu0 %v4282
        %6156 = vmatpush1.bf16.msra.mxu0 %v4281
        %6157 = vmatprep.subr.bf16.mxu0 %v4286
        %6158 = vmatpush1.bf16.msra.mxu0 %v4285
        %6159 = vmatprep.subr.bf16.mxu0 %v4290
        %6160 = vmatpush1.bf16.msra.mxu0 %v4289
        %6161 = vmatprep.subr.bf16.mxu0 %v4294
        %6162 = vmatpush1.bf16.msra.mxu0 %v4293
        %6163 = vmatprep.subr.bf16.mxu0 %v4298
        %6164 = vmatpush1.bf16.msra.mxu0 %v4297
        %6165 = vmatprep.mubr.bf16.mxu0 %v495
        %6166 = vmatmul.mubr.bf16.gmra.mrb[0].mxu0 %v494
        %v6167 = vpop.f32.mrb[0].mxu0
        %v6168 = vadd.f32 %v6127, %v6167
        %v6169 = vpop.f32.mrb[0].mxu0
        %v6170 = vadd.f32 %v6129, %v6169
        %v6171 = vpop.f32.mrb[0].mxu0
        %v6172 = vpop.f32.mrb[0].mxu0
        %6173 = vdwg.mxu0
        %6174 = vmatprep.subr.bf16.mxu0 %v4302
        %6175 = vmatpush1.bf16.msra.mxu0 %v4301
        %6176 = vmatprep.subr.bf16.mxu0 %v4306
        %6177 = vmatpush1.bf16.msra.mxu0 %v4305
        %6178 = vmatprep.subr.bf16.mxu0 %v4310
        %6179 = vmatpush1.bf16.msra.mxu0 %v4309
        %6180 = vmatprep.subr.bf16.mxu0 %v4314
        %6181 = vmatpush1.bf16.msra.mxu0 %v4313
        %6182 = vmatprep.subr.bf16.mxu0 %v4318
        %6183 = vmatpush1.bf16.msra.mxu0 %v4317
        %6184 = vmatprep.subr.bf16.mxu0 %v4322
        %6185 = vmatpush1.bf16.msra.mxu0 %v4321
        %6186 = vmatprep.subr.bf16.mxu0 %v4326
        %6187 = vmatpush1.bf16.msra.mxu0 %v4325
        %6188 = vmatprep.subr.bf16.mxu0 %v4330
        %6189 = vmatpush1.bf16.msra.mxu0 %v4329
        %6190 = vmatprep.subr.bf16.mxu0 %v4334
        %6191 = vmatpush1.bf16.msra.mxu0 %v4333
        %6192 = vmatprep.subr.bf16.mxu0 %v4338
        %6193 = vmatpush1.bf16.msra.mxu0 %v4337
        %6194 = vmatprep.subr.bf16.mxu0 %v4342
        %6195 = vmatpush1.bf16.msra.mxu0 %v4341
        %6196 = vmatprep.subr.bf16.mxu0 %v4346
        %6197 = vmatpush1.bf16.msra.mxu0 %v4345
        %6198 = vmatprep.subr.bf16.mxu0 %v4350
        %6199 = vmatpush1.bf16.msra.mxu0 %v4349
        %6200 = vmatprep.subr.bf16.mxu0 %v4354
        %6201 = vmatpush1.bf16.msra.mxu0 %v4353
        %6202 = vmatprep.subr.bf16.mxu0 %v4358
        %6203 = vmatpush1.bf16.msra.mxu0 %v4357
        %6204 = vmatprep.subr.bf16.mxu0 %v4362
        %6205 = vmatpush1.bf16.msra.mxu0 %v4361
        %6206 = vmatprep.mubr.bf16.mxu0 %v497
        %6207 = vmatmul.mubr.bf16.gmra.mrb[0].mxu0 %v496
        %v6208 = vpop.f32.mrb[0].mxu0
        %v6209 = vadd.f32 %v6168, %v6208
        %v6210 = vpop.f32.mrb[0].mxu0
        %v6211 = vadd.f32 %v6170, %v6210
        %v6212 = vpop.f32.mrb[0].mxu0
        %v6213 = vpop.f32.mrb[0].mxu0
        %6214 = vdwg.mxu0
        %6215 = vmatprep.subr.bf16.mxu0 %v4366
        %6216 = vmatpush1.bf16.msra.mxu0 %v4365
        %6217 = vmatprep.subr.bf16.mxu0 %v4370
        %6218 = vmatpush1.bf16.msra.mxu0 %v4369
        %6219 = vmatprep.subr.bf16.mxu0 %v4374
        %6220 = vmatpush1.bf16.msra.mxu0 %v4373
        %6221 = vmatprep.subr.bf16.mxu0 %v4378
        %6222 = vmatpush1.bf16.msra.mxu0 %v4377
        %6223 = vmatprep.subr.bf16.mxu0 %v4382
        %6224 = vmatpush1.bf16.msra.mxu0 %v4381
        %6225 = vmatprep.subr.bf16.mxu0 %v4386
        %6226 = vmatpush1.bf16.msra.mxu0 %v4385
        %6227 = vmatprep.subr.bf16.mxu0 %v4390
        %6228 = vmatpush1.bf16.msra.mxu0 %v4389
        %6229 = vmatprep.subr.bf16.mxu0 %v4394
        %6230 = vmatpush1.bf16.msra.mxu0 %v4393
        %6231 = vmatprep.subr.bf16.mxu0 %v4398
        %6232 = vmatpush1.bf16.msra.mxu0 %v4397
        %6233 = vmatprep.subr.bf16.mxu0 %v4402
        %6234 = vmatpush1.bf16.msra.mxu0 %v4401
        %6235 = vmatprep.subr.bf16.mxu0 %v4406
        %6236 = vmatpush1.bf16.msra.mxu0 %v4405
        %6237 = vmatprep.subr.bf16.mxu0 %v4410
        %6238 = vmatpush1.bf16.msra.mxu0 %v4409
        %6239 = vmatprep.subr.bf16.mxu0 %v4414
        %6240 = vmatpush1.bf16.msra.mxu0 %v4413
        %6241 = vmatprep.subr.bf16.mxu0 %v4418
        %6242 = vmatpush1.bf16.msra.mxu0 %v4417
        %6243 = vmatprep.subr.bf16.mxu0 %v4422
        %6244 = vmatpush1.bf16.msra.mxu0 %v4421
        %6245 = vmatprep.subr.bf16.mxu0 %v4426
        %6246 = vmatpush1.bf16.msra.mxu0 %v4425
        %6247 = vmatprep.mubr.bf16.mxu0 %v499
        %6248 = vmatmul.mubr.bf16.gmra.mrb[0].mxu0 %v498
        %v6249 = vpop.f32.mrb[0].mxu0
        %v6250 = vadd.f32 %v6209, %v6249
        %v6251 = vpop.f32.mrb[0].mxu0
        %v6252 = vadd.f32 %v6211, %v6251
        %v6253 = vpop.f32.mrb[0].mxu0
        %v6254 = vpop.f32.mrb[0].mxu0
        %6255 = vdwg.mxu0
        %6256 = vmatprep.subr.bf16.mxu0 %v4430
        %6257 = vmatpush1.bf16.msra.mxu0 %v4429
        %6258 = vmatprep.subr.bf16.mxu0 %v4434
        %6259 = vmatpush1.bf16.msra.mxu0 %v4433
        %6260 = vmatprep.subr.bf16.mxu0 %v4438
        %6261 = vmatpush1.bf16.msra.mxu0 %v4437
        %6262 = vmatprep.subr.bf16.mxu0 %v4442
        %6263 = vmatpush1.bf16.msra.mxu0 %v4441
        %6264 = vmatprep.subr.bf16.mxu0 0
        %6265 = vmatpush1.bf16.msra.mxu0 0
        %6266 = vmatprep.subr.bf16.mxu0 0
        %6267 = vmatpush1.bf16.msra.mxu0 0
        %6268 = vmatprep.subr.bf16.mxu0 0
        %6269 = vmatpush1.bf16.msra.mxu0 0
        %6270 = vmatprep.subr.bf16.mxu0 0
        %6271 = vmatpush1.bf16.msra.mxu0 0
        %6272 = vmatprep.subr.bf16.mxu0 0
        %6273 = vmatpush1.bf16.msra.mxu0 0
        %6274 = vmatprep.subr.bf16.mxu0 0
        %6275 = vmatpush1.bf16.msra.mxu0 0
        %6276 = vmatprep.subr.bf16.mxu0 0
        %6277 = vmatpush1.bf16.msra.mxu0 0
        %6278 = vmatprep.subr.bf16.mxu0 0
        %6279 = vmatpush1.bf16.msra.mxu0 0
        %6280 = vmatprep.subr.bf16.mxu0 0
        %6281 = vmatpush1.bf16.msra.mxu0 0
        %6282 = vmatprep.subr.bf16.mxu0 0
        %6283 = vmatpush1.bf16.msra.mxu0 0
        %6284 = vmatprep.subr.bf16.mxu0 0
        %6285 = vmatpush1.bf16.msra.mxu0 0
        %6286 = vmatprep.subr.bf16.mxu0 0
        %6287 = vmatpush1.bf16.msra.mxu0 0
        %6288 = vmatprep.mubr.bf16.mxu0 0
        %6289 = vmatmul.mubr.bf16.gmra.mrb[0].mxu0 %v5229
        %v6290 = vpop.f32.mrb[0].mxu0
        %v6291 = vadd.f32 %v6250, %v6290
        %v6292 = vpop.f32.mrb[0].mxu0
        %v6293 = vadd.f32 %v6252, %v6292
        %v6294 = vpop.f32.mrb[0].mxu0
        %v6295 = vpop.f32.mrb[0].mxu0
        %6296 = vdwg.mxu0
        %v6297 = vmax.f32 %v5758, 0.0
        %v6298 = vmax.f32 %v5760, 0.0
        %v6299 = vmax.f32 %v6291, 0.0
        %v6300 = vmax.f32 %v6293, 0.0
        %v6301 = vld [vmem:[#allocation10] sm:$0x3]
        %v6302 = vpack.c.bf16 %v6297, %v6297
        %v6303 = vpack.c.bf16 %v6298, %v6298
        %v6304 = vpack.c.bf16 %v6299, %v6299
        %v6305 = vpack.c.bf16 %v6300, %v6300
        %v6306 = vld [vmem:[%s283] sm:$0xf]
        %v6307 = vld [vmem:[%s283 + $0x4] sm:$0xf]
        %v6308 = vld [vmem:[%s283 + $0x8] sm:$0xf]
        %v6309 = vld [vmem:[%s283 + $0xc] sm:$0xf]
        %v6310 = vld [vmem:[%s283 + $0x10] sm:$0xf]
        %v6311 = vld [vmem:[%s283 + $0x14] sm:$0xf]
        %v6312 = vld [vmem:[%s283 + $0x18] sm:$0xf]
        %v6313 = vld [vmem:[%s283 + $0x1c] sm:$0xf]
        %v6314 = vld [vmem:[%s283 + $0x20] sm:$0xf]
        %v6315 = vld [vmem:[%s283 + $0x24] sm:$0xf]
        %v6316 = vld [vmem:[%s283 + $0x28] sm:$0xf]
        %v6317 = vld [vmem:[%s283 + $0x2c] sm:$0xf]
        %v6318 = vld [vmem:[%s283 + $0x30] sm:$0xf]
        %v6319 = vld [vmem:[%s283 + $0x34] sm:$0xf]
        %v6320 = vld [vmem:[%s283 + $0x38] sm:$0xf]
        %v6321 = vld [vmem:[%s283 + $0x3c] sm:$0xf]
        %v6322 = vld [vmem:[%s283 + $0x40] sm:$0xf]
        %v6323 = vld [vmem:[%s283 + $0x44] sm:$0xf]
        %v6324 = vld [vmem:[%s283 + $0x48] sm:$0xf]
        %v6325 = vld [vmem:[%s283 + $0x4c] sm:$0xf]
        %v6326 = vld [vmem:[%s283 + $0x50] sm:$0xf]
        %v6327 = vld [vmem:[%s283 + $0x54] sm:$0xf]
        %v6328 = vld [vmem:[%s283 + $0x58] sm:$0xf]
        %v6329 = vld [vmem:[%s283 + $0x5c] sm:$0xf]
        %v6330 = vld [vmem:[%s283 + $0x60] sm:$0xf]
        %v6331 = vld [vmem:[%s283 + $0x64] sm:$0xf]
        %v6332 = vld [vmem:[%s283 + $0x68] sm:$0xf]
        %v6333 = vld [vmem:[%s283 + $0x6c] sm:$0xf]
        %v6334 = vld [vmem:[%s283 + $0x70] sm:$0xf]
        %v6335 = vld [vmem:[%s283 + $0x74] sm:$0xf]
        %v6336 = vld [vmem:[%s283 + $0x78] sm:$0xf]
        %v6337 = vld [vmem:[%s283 + $0x7c] sm:$0xf]
        %v6338 = vld [vmem:[%s283 + $0x80] sm:$0xf]
        %v6339 = vld [vmem:[%s283 + $0x84] sm:$0xf]
        %v6340 = vld [vmem:[%s283 + $0x88] sm:$0xf]
        %v6341 = vld [vmem:[%s283 + $0x8c] sm:$0xf]
        %v6342 = vld [vmem:[%s283 + $0x90] sm:$0xf]
        %v6343 = vld [vmem:[%s283 + $0x94] sm:$0xf]
        %v6344 = vld [vmem:[%s283 + $0x98] sm:$0xf]
        %v6345 = vld [vmem:[%s283 + $0x9c] sm:$0xf]
        %v6346 = vld [vmem:[%s283 + $0xa0] sm:$0xf]
        %v6347 = vld [vmem:[%s283 + $0xa4] sm:$0xf]
        %v6348 = vld [vmem:[%s283 + $0xa8] sm:$0xf]
        %v6349 = vld [vmem:[%s283 + $0xac] sm:$0xf]
        %v6350 = vld [vmem:[%s283 + $0xb0] sm:$0xf]
        %v6351 = vld [vmem:[%s283 + $0xb4] sm:$0xf]
        %v6352 = vld [vmem:[%s283 + $0xb8] sm:$0xf]
        %v6353 = vld [vmem:[%s283 + $0xbc] sm:$0xf]
        %v6354 = vld [vmem:[%s283 + $0xc0] sm:$0xf]
        %v6355 = vld [vmem:[%s283 + $0xc4] sm:$0xf]
        %v6356 = vld [vmem:[%s283 + $0xc8] sm:$0xf]
        %v6357 = vld [vmem:[%s283 + $0xcc] sm:$0xf]
        %v6358 = vld [vmem:[%s283 + $0xd0] sm:$0xf]
        %v6359 = vld [vmem:[%s283 + $0xd4] sm:$0xf]
        %v6360 = vld [vmem:[%s283 + $0xd8] sm:$0xf]
        %v6361 = vld [vmem:[%s283 + $0xdc] sm:$0xf]
        %v6362 = vld [vmem:[%s283 + $0xe0] sm:$0xf]
        %v6363 = vld [vmem:[%s283 + $0xe4] sm:$0xf]
        %v6364 = vld [vmem:[%s283 + $0xe8] sm:$0xf]
        %v6365 = vld [vmem:[%s283 + $0xec] sm:$0xf]
        %v6366 = vld [vmem:[%s283 + $0xf0] sm:$0xf]
        %v6367 = vld [vmem:[%s283 + $0xf4] sm:$0xf]
        %v6368 = vld [vmem:[%s283 + $0xf8] sm:$0xf]
        %v6369 = vld [vmem:[%s283 + $0xfc] sm:$0xf]
        %v6434 = vunpack.c.l.b16 %v6306
        %v6435 = vunpack.c.l.b16 %v6307
        %v6436 = vunpack.c.l.b16 %v6308
        %v6437 = vunpack.c.l.b16 %v6309
        %v6438 = vunpack.c.l.b16 %v6310
        %v6439 = vunpack.c.l.b16 %v6311
        %v6440 = vunpack.c.l.b16 %v6312
        %v6441 = vunpack.c.l.b16 %v6313
        %v6442 = vunpack.c.l.b16 %v6314
        %v6443 = vunpack.c.l.b16 %v6315
        %v6444 = vunpack.c.l.b16 %v6316
        %v6445 = vunpack.c.l.b16 %v6317
        %v6446 = vunpack.c.l.b16 %v6318
        %v6447 = vunpack.c.l.b16 %v6319
        %v6448 = vunpack.c.l.b16 %v6320
        %v6449 = vunpack.c.l.b16 %v6321
        %v6450 = vunpack.c.l.b16 %v6322
        %v6451 = vunpack.c.l.b16 %v6323
        %v6452 = vunpack.c.l.b16 %v6324
        %v6453 = vunpack.c.l.b16 %v6325
        %v6454 = vunpack.c.l.b16 %v6326
        %v6455 = vunpack.c.l.b16 %v6327
        %v6456 = vunpack.c.l.b16 %v6328
        %v6457 = vunpack.c.l.b16 %v6329
        %v6458 = vunpack.c.l.b16 %v6330
        %v6459 = vunpack.c.l.b16 %v6331
        %v6460 = vunpack.c.l.b16 %v6332
        %v6461 = vunpack.c.l.b16 %v6333
        %v6462 = vunpack.c.l.b16 %v6334
        %v6463 = vunpack.c.l.b16 %v6335
        %v6464 = vunpack.c.l.b16 %v6336
        %v6465 = vunpack.c.l.b16 %v6337
        %v6466 = vunpack.c.l.b16 %v6338
        %v6467 = vunpack.c.l.b16 %v6339
        %v6468 = vunpack.c.l.b16 %v6340
        %v6469 = vunpack.c.l.b16 %v6341
        %v6470 = vunpack.c.l.b16 %v6342
        %v6471 = vunpack.c.l.b16 %v6343
        %v6472 = vunpack.c.l.b16 %v6344
        %v6473 = vunpack.c.l.b16 %v6345
        %v6474 = vunpack.c.l.b16 %v6346
        %v6475 = vunpack.c.l.b16 %v6347
        %v6476 = vunpack.c.l.b16 %v6348
        %v6477 = vunpack.c.l.b16 %v6349
        %v6478 = vunpack.c.l.b16 %v6350
        %v6479 = vunpack.c.l.b16 %v6351
        %v6480 = vunpack.c.l.b16 %v6352
        %v6481 = vunpack.c.l.b16 %v6353
        %v6482 = vunpack.c.l.b16 %v6354
        %v6483 = vunpack.c.l.b16 %v6355
        %v6484 = vunpack.c.l.b16 %v6356
        %v6485 = vunpack.c.l.b16 %v6357
        %v6486 = vunpack.c.l.b16 %v6358
        %v6487 = vunpack.c.l.b16 %v6359
        %v6488 = vunpack.c.l.b16 %v6360
        %v6489 = vunpack.c.l.b16 %v6361
        %v6490 = vunpack.c.l.b16 %v6362
        %v6491 = vunpack.c.l.b16 %v6363
        %v6492 = vunpack.c.l.b16 %v6364
        %v6493 = vunpack.c.l.b16 %v6365
        %v6494 = vunpack.c.l.b16 %v6366
        %v6495 = vunpack.c.l.b16 %v6367
        %v6496 = vunpack.c.l.b16 %v6368
        %v6497 = vunpack.c.l.b16 %v6369
        %v6498 = vpack.c.b16 %v6435, %v6434
        %v6499 = vpack.c.b16 %v6437, %v6436
        %v6500 = vpack.c.b16 %v6439, %v6438
        %v6501 = vpack.c.b16 %v6441, %v6440
        %v6502 = vpack.c.b16 %v6443, %v6442
        %v6503 = vpack.c.b16 %v6445, %v6444
        %v6504 = vpack.c.b16 %v6447, %v6446
        %v6505 = vpack.c.b16 %v6449, %v6448
        %v6506 = vpack.c.b16 %v6451, %v6450
        %v6507 = vpack.c.b16 %v6453, %v6452
        %v6508 = vpack.c.b16 %v6455, %v6454
        %v6509 = vpack.c.b16 %v6457, %v6456
        %v6510 = vpack.c.b16 %v6459, %v6458
        %v6511 = vpack.c.b16 %v6461, %v6460
        %v6512 = vpack.c.b16 %v6463, %v6462
        %v6513 = vpack.c.b16 %v6465, %v6464
        %v6514 = vpack.c.b16 %v6467, %v6466
        %v6515 = vpack.c.b16 %v6469, %v6468
        %v6516 = vpack.c.b16 %v6471, %v6470
        %v6517 = vpack.c.b16 %v6473, %v6472
        %v6518 = vpack.c.b16 %v6475, %v6474
        %v6519 = vpack.c.b16 %v6477, %v6476
        %v6520 = vpack.c.b16 %v6479, %v6478
        %v6521 = vpack.c.b16 %v6481, %v6480
        %v6522 = vpack.c.b16 %v6483, %v6482
        %v6523 = vpack.c.b16 %v6485, %v6484
        %v6524 = vpack.c.b16 %v6487, %v6486
        %v6525 = vpack.c.b16 %v6489, %v6488
        %v6526 = vpack.c.b16 %v6491, %v6490
        %v6527 = vpack.c.b16 %v6493, %v6492
        %v6528 = vpack.c.b16 %v6495, %v6494
        %v6529 = vpack.c.b16 %v6497, %v6496
        %6562 = vmatprep.subr.bf16.mxu0 0
        %6563 = vmatpush1.bf16.msra.mxu0 %v6498
        %6564 = vmatprep.subr.bf16.mxu0 0
        %6565 = vmatpush1.bf16.msra.mxu0 %v6499
        %6566 = vmatprep.subr.bf16.mxu0 0
        %6567 = vmatpush1.bf16.msra.mxu0 %v6500
        %6568 = vmatprep.subr.bf16.mxu0 0
        %6569 = vmatpush1.bf16.msra.mxu0 %v6501
        %6570 = vmatprep.subr.bf16.mxu0 0
        %6571 = vmatpush1.bf16.msra.mxu0 %v6502
        %6572 = vmatprep.subr.bf16.mxu0 0
        %6573 = vmatpush1.bf16.msra.mxu0 %v6503
        %6574 = vmatprep.subr.bf16.mxu0 0
        %6575 = vmatpush1.bf16.msra.mxu0 %v6504
        %6576 = vmatprep.subr.bf16.mxu0 0
        %6577 = vmatpush1.bf16.msra.mxu0 %v6505
        %6578 = vmatprep.subr.bf16.mxu0 0
        %6579 = vmatpush1.bf16.msra.mxu0 %v6506
        %6580 = vmatprep.subr.bf16.mxu0 0
        %6581 = vmatpush1.bf16.msra.mxu0 %v6507
        %6582 = vmatprep.subr.bf16.mxu0 0
        %6583 = vmatpush1.bf16.msra.mxu0 %v6508
        %6584 = vmatprep.subr.bf16.mxu0 0
        %6585 = vmatpush1.bf16.msra.mxu0 %v6509
        %6586 = vmatprep.subr.bf16.mxu0 0
        %6587 = vmatpush1.bf16.msra.mxu0 %v6510
        %6588 = vmatprep.subr.bf16.mxu0 0
        %6589 = vmatpush1.bf16.msra.mxu0 %v6511
        %6590 = vmatprep.subr.bf16.mxu0 0
        %6591 = vmatpush1.bf16.msra.mxu0 %v6512
        %6592 = vmatprep.subr.bf16.mxu0 0
        %6593 = vmatpush1.bf16.msra.mxu0 %v6513
        %6594 = vmatprep.mubr.bf16.mxu0 %v6303
        %6595 = vmatmul.mubr.bf16.gmra.mrb[0].mxu0 %v6302
        %v6596 = vpop.f32.mrb[0].mxu0
        %v6597 = vadd.f32 0.0, %v6596
        %v6598 = vpop.f32.mrb[0].mxu0
        %v6599 = vpop.f32.mrb[0].mxu0
        %v6600 = vpop.f32.mrb[0].mxu0
        %6601 = vdwg.mxu0
        %6602 = vmatprep.subr.bf16.mxu0 0
        %6603 = vmatpush1.bf16.msra.mxu0 %v6514
        %6604 = vmatprep.subr.bf16.mxu0 0
        %6605 = vmatpush1.bf16.msra.mxu0 %v6515
        %6606 = vmatprep.subr.bf16.mxu0 0
        %6607 = vmatpush1.bf16.msra.mxu0 %v6516
        %6608 = vmatprep.subr.bf16.mxu0 0
        %6609 = vmatpush1.bf16.msra.mxu0 %v6517
        %6610 = vmatprep.subr.bf16.mxu0 0
        %6611 = vmatpush1.bf16.msra.mxu0 %v6518
        %6612 = vmatprep.subr.bf16.mxu0 0
        %6613 = vmatpush1.bf16.msra.mxu0 %v6519
        %6614 = vmatprep.subr.bf16.mxu0 0
        %6615 = vmatpush1.bf16.msra.mxu0 %v6520
        %6616 = vmatprep.subr.bf16.mxu0 0
        %6617 = vmatpush1.bf16.msra.mxu0 %v6521
        %6618 = vmatprep.subr.bf16.mxu0 0
        %6619 = vmatpush1.bf16.msra.mxu0 %v6522
        %6620 = vmatprep.subr.bf16.mxu0 0
        %6621 = vmatpush1.bf16.msra.mxu0 %v6523
        %6622 = vmatprep.subr.bf16.mxu0 0
        %6623 = vmatpush1.bf16.msra.mxu0 %v6524
        %6624 = vmatprep.subr.bf16.mxu0 0
        %6625 = vmatpush1.bf16.msra.mxu0 %v6525
        %6626 = vmatprep.subr.bf16.mxu0 0
        %6627 = vmatpush1.bf16.msra.mxu0 %v6526
        %6628 = vmatprep.subr.bf16.mxu0 0
        %6629 = vmatpush1.bf16.msra.mxu0 %v6527
        %6630 = vmatprep.subr.bf16.mxu0 0
        %6631 = vmatpush1.bf16.msra.mxu0 %v6528
        %6632 = vmatprep.subr.bf16.mxu0 0
        %6633 = vmatpush1.bf16.msra.mxu0 %v6529
        %6634 = vmatprep.mubr.bf16.mxu0 %v6305
        %6635 = vmatmul.mubr.bf16.gmra.mrb[0].mxu0 %v6304
        %v6636 = vpop.f32.mrb[0].mxu0
        %v6637 = vadd.f32 %v6597, %v6636
        %v6638 = vpop.f32.mrb[0].mxu0
        %v6639 = vpop.f32.mrb[0].mxu0
        %v6640 = vpop.f32.mrb[0].mxu0
        %6641 = vdwg.mxu0
        %v6642 = vadd.f32 %v6301, %v6637
        %6643 = vst [vmem:[#allocation10] sm:$0x3] %v6642
        %p6644 = scmp.eq.s32.totalorder %s24, 3
        // Predicated region
        $region61: #{emnist_forward.5} parent=39 // pred_check
          %p6645 = pneg %p6644
        $region62: #{emnist_forward.5} parent=39 // pred_check_branch
          %6647 = sbr.rel (%p6645) target = $region64
        $region63: #{emnist_forward.5} parent=39 // pred_region
          %v6648 = vld [vmem:[#allocation10] sm:$0x3]
          %v6649 = vld [vmem:[#allocation8] sm:$0x1]
          %v6651 = vlaneseq
          %v6652 = vshrl.u32 %v6651, 7
          %v6653 = vsub.s32 0, %v6652
          %v6654 = vrot.slane %v6649, %v6653
          %v6656 = vadd.f32 %v6648, %v6654
          %6657 = vst [vmem:[#allocation10] sm:$0x3] %v6656
        $region64: #{emnist_forward.5} parent=39 // pred_fallthru
          _
        // Predicated region
        $region65: #{emnist_forward.5} parent=39 // pred_check
          %p6658 = pneg %p157
        $region66: #{emnist_forward.5} parent=39 // pred_check_branch
          %6660 = sbr.rel (%p6658) target = $region68
        $region67: #{emnist_forward.5} parent=39 // pred_region
          %s6662 = ssub.s32 32, 32
          %6663 = vsyncadd [#allocation4], %s6662
          %s6665 = sshll.u32 [#allocation10], 4
          %s6666 = int_to_ptr.vmem [resolvable:$true] %s6665
          %6668 = dma.vmem_to_hbm [thread:$0]  %s6666, 32, %s5, [#allocation4]
        $region68: #{emnist_forward.5} parent=39 // pred_fallthru
          _
        // Predicated region
        $region69: #{emnist_forward.5} parent=39 // pred_check
          %p6669 = pneg %p157
        $region70: #{emnist_forward.5} parent=39 // pred_check_branch
          %6671 = sbr.rel (%p6669) target = $region72
        $region71: #{emnist_forward.5} parent=39 // pred_region
          %6672 = dma.done [#allocation4], 32
        $region72: #{emnist_forward.5} parent=39 // pred_fallthru
          _
      $region40: #{emnist_forward.5} parent=5 // pred_fallthru
        _
      %p6673 = scmp.le.s32.totalorder 2, %s19
      // Predicated region
      $region73: #{emnist_forward.5} parent=5 // pred_check
        %p6674 = pneg %p6673
      $region74: #{emnist_forward.5} parent=5 // pred_check_branch
        %6676 = sbr.rel (%p6674) target = $region76
      $region75: #{emnist_forward.5} parent=5 // pred_region
        %s6677 = ssub.s32 %s19, 2
      $region76: #{emnist_forward.5} parent=5 // pred_fallthru
        _
    $region6: #{emnist_forward.5} parent=1 // loop_footer
      %s23 = sadd.s32 1, %s19
    $region7: #{emnist_forward.5} parent=1 // loop_footer_branch
      %18 = sbr.rel target = $region3
    $region8: #{emnist_forward.5} parent=1 // loop_exit
      _
    %6678 = vsyncpa [#allocation3], 1
    %s6679 = scalar_lea.sflag [#allocation3], 1
    %6680 = vsyncpa %s6679, 1
    %6681 = vsyncpa [#allocation6], 1
    %s6682 = scalar_lea.sflag [#allocation6], 1
    %6683 = vsyncpa %s6682, 1
    %6684 = vsyncpa [#allocation9], 1
    %6685 = vsyncpa [#allocation4], 1
    %s6686 = scalar_lea.sflag [#allocation4], 1
    %6687 = vsyncpa %s6686, 1

</llo_original>
